<compile_context>
chip_gen: v7x
topology: tpu7x:2x2x1
jax: 0.10.0
libtpu: 0.0.40
codegen_flags: <defaults>
</compile_context>

<pallas_src>
import functools

import jax
import jax.numpy as jnp
from jax.experimental import pallas as pl
from jax.experimental.pallas import tpu as pltpu


def _resdown_kernel(x_ref,
                    projs_ref, projt_ref, projw_ref, projb_ref,
                    c0s_ref, c0t_ref, c0w_ref, c0b_ref,
                    ms_ref, mt_ref, mw_ref, mb_ref,
                    o_ref,
                    pad_in_ref, pad_mid_ref,
                    *, H, W, sz):
    """Whole resdown block for one batch element, fully VMEM-resident.

    x_ref      : (1, H*W, Cin)   f32 input (one batch element)
    proj*      : BN scale/shift (1,Cin), 1x1 weight (Cin,Cout) bf16, bias (1,Cout)
    c0*        : conv0 BN scale/shift (1,Cin), weight (sz*sz*Cin,Cout) bf16, bias
    m{s,t,w,b} : conv1..3 stacked: (3,Cout), (3,Cout), (3,sz*sz*Cout,Cout) bf16, (3,Cout)
    o_ref      : (1, H*W, Cout)  f32 output
    pad_in_ref : (H+2p, W+2p, Cin)  VMEM scratch (zero-padded activations)
    pad_mid_ref: (H+2p, W+2p, Cout) VMEM scratch
    """
    pad = sz // 2
    HW = H * W
    Cin = x_ref.shape[-1]
    Cout = o_ref.shape[-1]

    def conv_same(pad_ref, w_bf16, C):
        # im2col: gather the sz*sz shifted views along the channel axis and do a
        # single bf16 MXU matmul with f32 accumulation.
        cols = [pad_ref[dy:dy + H, dx:dx + W, :].reshape(HW, C)
                for dy in range(sz) for dx in range(sz)]
        lhs = jnp.concatenate(cols, axis=-1).astype(jnp.bfloat16)
        return jnp.dot(lhs, w_bf16, preferred_element_type=jnp.float32)

    # Zero-fill the padded scratch; every stage only overwrites the interior, so
    # the zero border (== nn.Conv2d zero padding) is preserved. No mask needed.
    pad_in_ref[...] = jnp.zeros_like(pad_in_ref)
    pad_mid_ref[...] = jnp.zeros_like(pad_mid_ref)

    x2d = x_ref[0]                                            # (HW, Cin) f32

    # ---- proj: BN -> 1x1 conv (no ReLU, no padding) -------------------------
    xp = x2d * projs_ref[...] + projt_ref[...]
    proj = jnp.dot(xp.astype(jnp.bfloat16), projw_ref[...],
                   preferred_element_type=jnp.float32) + projb_ref[...]

    # ---- conv0: BN -> ReLU -> conv ------------------------------------------
    a = jnp.maximum(x2d * c0s_ref[...] + c0t_ref[...], 0.0)
    pad_in_ref[pad:pad + H, pad:pad + W, :] = a.reshape(H, W, Cin)
    y0 = conv_same(pad_in_ref, c0w_ref[...], Cin) + c0b_ref[...]

    # ---- conv1 (+ proj residual) --------------------------------------------
    a = jnp.maximum(y0 * ms_ref[0:1] + mt_ref[0:1], 0.0)
    pad_mid_ref[pad:pad + H, pad:pad + W, :] = a.reshape(H, W, Cout)
    x1 = proj + conv_same(pad_mid_ref, mw_ref[0], Cout) + mb_ref[0:1]

    # ---- conv2 ---------------------------------------------------------------
    a = jnp.maximum(x1 * ms_ref[1:2] + mt_ref[1:2], 0.0)
    pad_mid_ref[pad:pad + H, pad:pad + W, :] = a.reshape(H, W, Cout)
    y2 = conv_same(pad_mid_ref, mw_ref[1], Cout) + mb_ref[1:2]

    # ---- conv3 (+ x1 residual) ------------------------------------------------
    a = jnp.maximum(y2 * ms_ref[2:3] + mt_ref[2:3], 0.0)
    pad_mid_ref[pad:pad + H, pad:pad + W, :] = a.reshape(H, W, Cout)
    x2 = x1 + conv_same(pad_mid_ref, mw_ref[2], Cout) + mb_ref[2:3]

    o_ref[...] = x2[None]


def resdown_forward(x_nchw, params):
    """PyTorch resdown forward:
        x = proj(x) + conv[1](conv[0](x));  x = x + conv[3](conv[2](x))
    """
    N, Cin, H, W = x_nchw.shape
    sz = params["conv0"]["w"].shape[0]
    Cout = params["conv0"]["w"].shape[-1]
    pad = sz // 2
    bf16 = jnp.bfloat16

    x = jnp.transpose(x_nchw, (0, 2, 3, 1)).reshape(N, H * W, Cin)

    pp, p0 = params["proj"], params["conv0"]
    projs = pp["scale"].reshape(1, Cin)
    projt = pp["shift"].reshape(1, Cin)
    projw = pp["w"].reshape(Cin, Cout).astype(bf16)
    projb = pp["b"].reshape(1, Cout)
    c0s = p0["scale"].reshape(1, Cin)
    c0t = p0["shift"].reshape(1, Cin)
    c0w = p0["w"].reshape(sz * sz * Cin, Cout).astype(bf16)
    c0b = p0["b"].reshape(1, Cout)
    mids = [params["conv1"], params["conv2"], params["conv3"]]
    ms = jnp.stack([m["scale"].reshape(Cout) for m in mids])           # (3, Cout)
    mt = jnp.stack([m["shift"].reshape(Cout) for m in mids])           # (3, Cout)
    mw = jnp.stack([m["w"].reshape(sz * sz * Cout, Cout)
                    for m in mids]).astype(bf16)                       # (3, K, Cout)
    mb = jnp.stack([m["b"].reshape(Cout) for m in mids])               # (3, Cout)

    kernel = functools.partial(_resdown_kernel, H=H, W=W, sz=sz)
    const2 = lambda n: (0, 0)
    const3 = lambda n: (0, 0, 0)

    out = pl.pallas_call(
        kernel,
        out_shape=jax.ShapeDtypeStruct((N, H * W, Cout), jnp.float32),
        grid=(N,),
        in_specs=[
            pl.BlockSpec((1, H * W, Cin), lambda n: (n, 0, 0)),          # x
            pl.BlockSpec((1, Cin), const2),                              # proj scale
            pl.BlockSpec((1, Cin), const2),                              # proj shift
            pl.BlockSpec((Cin, Cout), const2),                           # proj w
            pl.BlockSpec((1, Cout), const2),                             # proj b
            pl.BlockSpec((1, Cin), const2),                              # conv0 scale
            pl.BlockSpec((1, Cin), const2),                              # conv0 shift
            pl.BlockSpec((sz * sz * Cin, Cout), const2),                 # conv0 w
            pl.BlockSpec((1, Cout), const2),                             # conv0 b
            pl.BlockSpec((3, Cout), const2),                             # conv1..3 scale
            pl.BlockSpec((3, Cout), const2),                             # conv1..3 shift
            pl.BlockSpec((3, sz * sz * Cout, Cout), const3),             # conv1..3 w
            pl.BlockSpec((3, Cout), const2),                             # conv1..3 b
        ],
        out_specs=pl.BlockSpec((1, H * W, Cout), lambda n: (n, 0, 0)),
        scratch_shapes=[
            pltpu.VMEM((H + 2 * pad, W + 2 * pad, Cin), jnp.float32),
            pltpu.VMEM((H + 2 * pad, W + 2 * pad, Cout), jnp.float32),
        ],
        compiler_params=pltpu.CompilerParams(
            dimension_semantics=("parallel",)),
    )(x, projs, projt, projw, projb, c0s, c0t, c0w, c0b, ms, mt, mw, mb)

    return jnp.transpose(out.reshape(N, H, W, Cout), (0, 3, 1, 2))


# ----------------------------- pure-JAX reference ----------------------------
def _ref_bn_conv(x, scale, shift, w, b, relu):
    xn = x * scale + shift
    if relu:
        xn = jnp.maximum(xn, 0.0)
    p = w.shape[0] // 2
    y = jax.lax.conv_general_dilated(
        xn, w, (1, 1), [(p, p), (p, p)],
        dimension_numbers=("NHWC", "HWIO", "NHWC"),
        precision=jax.lax.Precision.HIGHEST)
    return y + b


def ref_forward(x_nchw, params):
    x = jnp.transpose(x_nchw, (0, 2, 3, 1))
    p = params
    proj = _ref_bn_conv(x, relu=False, **p["proj"])
    t0 = _ref_bn_conv(x, relu=True, **p["conv0"])
    x1 = proj + _ref_bn_conv(t0, relu=True, **p["conv1"])
    t2 = _ref_bn_conv(x1, relu=True, **p["conv2"])
    x2 = x1 + _ref_bn_conv(t2, relu=True, **p["conv3"])
    return jnp.transpose(x2, (0, 3, 1, 2))


# ----------------------------- deterministic params ---------------------------
def make_bn_conv_params(key, cin, cout, sz):
    ks = jax.random.split(key, 6)
    gamma = 1.0 + 0.1 * jax.random.normal(ks[0], (cin,), jnp.float32)
    beta = 0.1 * jax.random.normal(ks[1], (cin,), jnp.float32)
    mean = 0.1 * jax.random.normal(ks[2], (cin,), jnp.float32)
    var = 1.0 + 0.1 * jax.random.uniform(ks[3], (cin,), jnp.float32)
    eps = 1e-5
    inv = gamma / jnp.sqrt(var + eps)
    scale = inv.reshape(1, 1, 1, cin)
    shift = (beta - mean * inv).reshape(1, 1, 1, cin)
    # Kaiming-ish scale (matches nn.Conv2d defaults) keeps activations O(1).
    wstd = (sz * sz * cin) ** -0.5
    w = wstd * jax.random.normal(ks[4], (sz, sz, cin, cout), jnp.float32)
    b = 0.1 * jax.random.normal(ks[5], (cout,), jnp.float32).reshape(1, 1, 1, cout)
    return dict(scale=scale, shift=shift, w=w, b=b)


if __name__ == "__main__":
    in_channels, out_channels, sz = 8, 16, 3
    N, H, W = 2, 16, 16

    key = jax.random.PRNGKey(0)
    kx, kp, k0, k1, k2, k3 = jax.random.split(key, 6)
    x = jax.random.normal(kx, (N, in_channels, H, W), jnp.float32)

    params = {
        "proj":  make_bn_conv_params(kp, in_channels, out_channels, 1),
        "conv0": make_bn_conv_params(k0, in_channels, out_channels, sz),
        "conv1": make_bn_conv_params(k1, out_channels, out_channels, sz),
        "conv2": make_bn_conv_params(k2, out_channels, out_channels, sz),
        "conv3": make_bn_conv_params(k3, out_channels, out_channels, sz),
    }

    out = jax.block_until_ready(resdown_forward(x, params))
    ref = jax.block_until_ready(ref_forward(x, params))

    assert out.shape == (N, out_channels, H, W), out.shape
    # Kernel uses bf16 MXU operands with f32 accumulation; reference is f32
    # HIGHEST precision, so compare at bf16-level tolerance.
    if not jnp.allclose(out, ref, atol=5e-2, rtol=5e-2):
        raise AssertionError(
            f"mismatch vs reference, max abs err = {jnp.max(jnp.abs(out - ref))}")
    print("KERNEL_OK")
</pallas_src>

<mosaic_0001>
module attributes {stable_mosaic.version = 11 : i64} {
  func.func @_resdown_kernel(%arg0: i32, %arg1: memref<1x256x8xf32, #tpu.memory_space<vmem>>, %arg2: memref<1x8xf32, #tpu.memory_space<vmem>>, %arg3: memref<1x8xf32, #tpu.memory_space<vmem>>, %arg4: memref<8x16xbf16, #tpu.memory_space<vmem>>, %arg5: memref<1x16xf32, #tpu.memory_space<vmem>>, %arg6: memref<1x8xf32, #tpu.memory_space<vmem>>, %arg7: memref<1x8xf32, #tpu.memory_space<vmem>>, %arg8: memref<72x16xbf16, #tpu.memory_space<vmem>>, %arg9: memref<1x16xf32, #tpu.memory_space<vmem>>, %arg10: memref<3x16xf32, #tpu.memory_space<vmem>>, %arg11: memref<3x16xf32, #tpu.memory_space<vmem>>, %arg12: memref<3x144x16xbf16, #tpu.memory_space<vmem>>, %arg13: memref<3x16xf32, #tpu.memory_space<vmem>>, %arg14: memref<1x256x16xf32, #tpu.memory_space<vmem>>, %arg15: memref<18x18x8xf32, #tpu.memory_space<vmem>>, %arg16: memref<18x18x16xf32, #tpu.memory_space<vmem>>) attributes {dimension_semantics = [#tpu.dimension_semantics<parallel>], iteration_bounds = array<i64: 2>, scalar_prefetch = 0 : i64, scratch_operands = 2 : i64, tpu.core_type = #tpu.core_type<tc>, window_params = [{transform_indices = @transform_0, window_bounds = array<i64: 1, 256, 8>}, {pipeline_mode = #tpu.pipeline_mode<synchronous>, transform_indices = @transform_1, window_bounds = array<i64: 1, 8>}, {pipeline_mode = #tpu.pipeline_mode<synchronous>, transform_indices = @transform_2, window_bounds = array<i64: 1, 8>}, {pipeline_mode = #tpu.pipeline_mode<synchronous>, transform_indices = @transform_3, window_bounds = array<i64: 8, 16>}, {pipeline_mode = #tpu.pipeline_mode<synchronous>, transform_indices = @transform_4, window_bounds = array<i64: 1, 16>}, {pipeline_mode = #tpu.pipeline_mode<synchronous>, transform_indices = @transform_5, window_bounds = array<i64: 1, 8>}, {pipeline_mode = #tpu.pipeline_mode<synchronous>, transform_indices = @transform_6, window_bounds = array<i64: 1, 8>}, {pipeline_mode = #tpu.pipeline_mode<synchronous>, transform_indices = @transform_7, window_bounds = array<i64: 72, 16>}, {pipeline_mode = #tpu.pipeline_mode<synchronous>, transform_indices = @transform_8, window_bounds = array<i64: 1, 16>}, {pipeline_mode = #tpu.pipeline_mode<synchronous>, transform_indices = @transform_9, window_bounds = array<i64: 3, 16>}, {pipeline_mode = #tpu.pipeline_mode<synchronous>, transform_indices = @transform_10, window_bounds = array<i64: 3, 16>}, {pipeline_mode = #tpu.pipeline_mode<synchronous>, transform_indices = @transform_11, window_bounds = array<i64: 3, 144, 16>}, {pipeline_mode = #tpu.pipeline_mode<synchronous>, transform_indices = @transform_12, window_bounds = array<i64: 3, 16>}, {transform_indices = @transform_13, window_bounds = array<i64: 1, 256, 16>}]} {
    %cst = arith.constant 0.000000e+00 : f32
    %0 = vector.broadcast %cst : f32 to vector<18x18x8xf32>
    %c0 = arith.constant 0 : index
    %c0_0 = arith.constant 0 : index
    %c0_1 = arith.constant 0 : index
    %1 = vector.load %arg15[%c0, %c0_0, %c0_1] : memref<18x18x8xf32, #tpu.memory_space<vmem>>, vector<18x18x8xf32>
    tpu.vector_store %arg15[%c0, %c0_0, %c0_1], %0 {strides = array<i32>} : memref<18x18x8xf32, #tpu.memory_space<vmem>>, vector<18x18x8xf32>,
    %cst_2 = arith.constant 0.000000e+00 : f32
    %2 = vector.broadcast %cst_2 : f32 to vector<18x18x16xf32>
    %c0_3 = arith.constant 0 : index
    %c0_4 = arith.constant 0 : index
    %c0_5 = arith.constant 0 : index
    %3 = vector.load %arg16[%c0_3, %c0_4, %c0_5] : memref<18x18x16xf32, #tpu.memory_space<vmem>>, vector<18x18x16xf32>
    tpu.vector_store %arg16[%c0_3, %c0_4, %c0_5], %2 {strides = array<i32>} : memref<18x18x16xf32, #tpu.memory_space<vmem>>, vector<18x18x16xf32>,
    %c0_6 = arith.constant 0 : index
    %c0_7 = arith.constant 0 : index
    %c0_8 = arith.constant 0 : index
    %4 = vector.load %arg1[%c0_6, %c0_7, %c0_8] : memref<1x256x8xf32, #tpu.memory_space<vmem>>, vector<1x256x8xf32>
    %5 = vector.shape_cast %4 : vector<1x256x8xf32> to vector<256x8xf32>
    %c0_9 = arith.constant 0 : index
    %c0_10 = arith.constant 0 : index
    %6 = vector.load %arg2[%c0_9, %c0_10] : memref<1x8xf32, #tpu.memory_space<vmem>>, vector<1x8xf32>
    %7 = vector.broadcast %6 : vector<1x8xf32> to vector<256x8xf32>
    %8 = arith.mulf %5, %7 : vector<256x8xf32>
    %c0_11 = arith.constant 0 : index
    %c0_12 = arith.constant 0 : index
    %9 = vector.load %arg3[%c0_11, %c0_12] : memref<1x8xf32, #tpu.memory_space<vmem>>, vector<1x8xf32>
    %10 = vector.broadcast %9 : vector<1x8xf32> to vector<256x8xf32>
    %11 = arith.addf %8, %10 : vector<256x8xf32>
    %12 = arith.truncf %11 : vector<256x8xf32> to vector<256x8xbf16>
    %c0_13 = arith.constant 0 : index
    %c0_14 = arith.constant 0 : index
    %13 = vector.load %arg4[%c0_13, %c0_14] : memref<8x16xbf16, #tpu.memory_space<vmem>>, vector<8x16xbf16>
    %cst_15 = arith.constant dense<0.000000e+00> : vector<256x16xf32>
    %14 = tpu.matmul %12, %13, %cst_15 {dimension_numbers = #tpu.dot_dimension_numbers<[1], [0], [0], [1], [0, 0, 1, 1], [], []>} : vector<256x8xbf16>, vector<8x16xbf16>, vector<256x16xf32> -> vector<256x16xf32>
    %c0_16 = arith.constant 0 : index
    %c0_17 = arith.constant 0 : index
    %15 = vector.load %arg5[%c0_16, %c0_17] : memref<1x16xf32, #tpu.memory_space<vmem>>, vector<1x16xf32>
    %16 = vector.broadcast %15 : vector<1x16xf32> to vector<256x16xf32>
    %17 = arith.addf %14, %16 : vector<256x16xf32>
    %c0_18 = arith.constant 0 : index
    %c0_19 = arith.constant 0 : index
    %18 = vector.load %arg6[%c0_18, %c0_19] : memref<1x8xf32, #tpu.memory_space<vmem>>, vector<1x8xf32>
    %19 = vector.broadcast %18 : vector<1x8xf32> to vector<256x8xf32>
    %20 = arith.mulf %5, %19 : vector<256x8xf32>
    %c0_20 = arith.constant 0 : index
    %c0_21 = arith.constant 0 : index
    %21 = vector.load %arg7[%c0_20, %c0_21] : memref<1x8xf32, #tpu.memory_space<vmem>>, vector<1x8xf32>
    %22 = vector.broadcast %21 : vector<1x8xf32> to vector<256x8xf32>
    %23 = arith.addf %20, %22 : vector<256x8xf32>
    %cst_22 = arith.constant 0.000000e+00 : f32
    %24 = vector.broadcast %cst_22 : f32 to vector<256x8xf32>
    %25 = arith.maximumf %23, %24 : vector<256x8xf32>
    %26 = vector.shape_cast %25 : vector<256x8xf32> to vector<16x16x8xf32>
    %c1 = arith.constant 1 : index
    %c1_23 = arith.constant 1 : index
    %c0_24 = arith.constant 0 : index
    %27 = vector.load %arg15[%c1, %c1_23, %c0_24] : memref<18x18x8xf32, #tpu.memory_space<vmem>>, vector<16x16x8xf32>
    tpu.vector_store %arg15[%c1, %c1_23, %c0_24], %26 {strides = array<i32>} : memref<18x18x8xf32, #tpu.memory_space<vmem>>, vector<16x16x8xf32>,
    %c0_25 = arith.constant 0 : index
    %c0_26 = arith.constant 0 : index
    %28 = vector.load %arg8[%c0_25, %c0_26] : memref<72x16xbf16, #tpu.memory_space<vmem>>, vector<72x16xbf16>
    %c0_27 = arith.constant 0 : index
    %c0_28 = arith.constant 0 : index
    %c0_29 = arith.constant 0 : index
    %29 = vector.load %arg15[%c0_27, %c0_28, %c0_29] : memref<18x18x8xf32, #tpu.memory_space<vmem>>, vector<16x16x8xf32>
    %30 = vector.shape_cast %29 : vector<16x16x8xf32> to vector<256x8xf32>
    %c0_30 = arith.constant 0 : index
    %c1_31 = arith.constant 1 : index
    %c0_32 = arith.constant 0 : index
    %31 = vector.load %arg15[%c0_30, %c1_31, %c0_32] : memref<18x18x8xf32, #tpu.memory_space<vmem>>, vector<16x16x8xf32>
    %32 = vector.shape_cast %31 : vector<16x16x8xf32> to vector<256x8xf32>
    %c0_33 = arith.constant 0 : index
    %c2 = arith.constant 2 : index
    %c0_34 = arith.constant 0 : index
    %33 = vector.load %arg15[%c0_33, %c2, %c0_34] : memref<18x18x8xf32, #tpu.memory_space<vmem>>, vector<16x16x8xf32>
    %34 = vector.shape_cast %33 : vector<16x16x8xf32> to vector<256x8xf32>
    %c1_35 = arith.constant 1 : index
    %c0_36 = arith.constant 0 : index
    %c0_37 = arith.constant 0 : index
    %35 = vector.load %arg15[%c1_35, %c0_36, %c0_37] : memref<18x18x8xf32, #tpu.memory_space<vmem>>, vector<16x16x8xf32>
    %36 = vector.shape_cast %35 : vector<16x16x8xf32> to vector<256x8xf32>
    %c1_38 = arith.constant 1 : index
    %c1_39 = arith.constant 1 : index
    %c0_40 = arith.constant 0 : index
    %37 = vector.load %arg15[%c1_38, %c1_39, %c0_40] : memref<18x18x8xf32, #tpu.memory_space<vmem>>, vector<16x16x8xf32>
    %38 = vector.shape_cast %37 : vector<16x16x8xf32> to vector<256x8xf32>
    %c1_41 = arith.constant 1 : index
    %c2_42 = arith.constant 2 : index
    %c0_43 = arith.constant 0 : index
    %39 = vector.load %arg15[%c1_41, %c2_42, %c0_43] : memref<18x18x8xf32, #tpu.memory_space<vmem>>, vector<16x16x8xf32>
    %40 = vector.shape_cast %39 : vector<16x16x8xf32> to vector<256x8xf32>
    %c2_44 = arith.constant 2 : index
    %c0_45 = arith.constant 0 : index
    %c0_46 = arith.constant 0 : index
    %41 = vector.load %arg15[%c2_44, %c0_45, %c0_46] : memref<18x18x8xf32, #tpu.memory_space<vmem>>, vector<16x16x8xf32>
    %42 = vector.shape_cast %41 : vector<16x16x8xf32> to vector<256x8xf32>
    %c2_47 = arith.constant 2 : index
    %c1_48 = arith.constant 1 : index
    %c0_49 = arith.constant 0 : index
    %43 = vector.load %arg15[%c2_47, %c1_48, %c0_49] : memref<18x18x8xf32, #tpu.memory_space<vmem>>, vector<16x16x8xf32>
    %44 = vector.shape_cast %43 : vector<16x16x8xf32> to vector<256x8xf32>
    %c2_50 = arith.constant 2 : index
    %c2_51 = arith.constant 2 : index
    %c0_52 = arith.constant 0 : index
    %45 = vector.load %arg15[%c2_50, %c2_51, %c0_52] : memref<18x18x8xf32, #tpu.memory_space<vmem>>, vector<16x16x8xf32>
    %46 = vector.shape_cast %45 : vector<16x16x8xf32> to vector<256x8xf32>
    %47 = tpu.concatenate %30, %32, %34, %36, %38, %40, %42, %44, %46 in 1 : vector<256x8xf32>, vector<256x8xf32>, vector<256x8xf32>, vector<256x8xf32>, vector<256x8xf32>, vector<256x8xf32>, vector<256x8xf32>, vector<256x8xf32>, vector<256x8xf32> -> vector<256x72xf32>
    %48 = arith.truncf %47 : vector<256x72xf32> to vector<256x72xbf16>
    %cst_53 = arith.constant dense<0.000000e+00> : vector<256x16xf32>
    %49 = tpu.matmul %48, %28, %cst_53 {dimension_numbers = #tpu.dot_dimension_numbers<[1], [0], [0], [1], [0, 0, 1, 1], [], []>} : vector<256x72xbf16>, vector<72x16xbf16>, vector<256x16xf32> -> vector<256x16xf32>
    %c0_54 = arith.constant 0 : index
    %c0_55 = arith.constant 0 : index
    %50 = vector.load %arg9[%c0_54, %c0_55] : memref<1x16xf32, #tpu.memory_space<vmem>>, vector<1x16xf32>
    %51 = vector.broadcast %50 : vector<1x16xf32> to vector<256x16xf32>
    %52 = arith.addf %49, %51 : vector<256x16xf32>
    %c0_56 = arith.constant 0 : index
    %c0_57 = arith.constant 0 : index
    %53 = vector.load %arg10[%c0_56, %c0_57] : memref<3x16xf32, #tpu.memory_space<vmem>>, vector<1x16xf32>
    %54 = vector.broadcast %53 : vector<1x16xf32> to vector<256x16xf32>
    %55 = arith.mulf %52, %54 : vector<256x16xf32>
    %c0_58 = arith.constant 0 : index
    %c0_59 = arith.constant 0 : index
    %56 = vector.load %arg11[%c0_58, %c0_59] : memref<3x16xf32, #tpu.memory_space<vmem>>, vector<1x16xf32>
    %57 = vector.broadcast %56 : vector<1x16xf32> to vector<256x16xf32>
    %58 = arith.addf %55, %57 : vector<256x16xf32>
    %cst_60 = arith.constant 0.000000e+00 : f32
    %59 = vector.broadcast %cst_60 : f32 to vector<256x16xf32>
    %60 = arith.maximumf %58, %59 : vector<256x16xf32>
    %61 = vector.shape_cast %60 : vector<256x16xf32> to vector<16x16x16xf32>
    %c1_61 = arith.constant 1 : index
    %c1_62 = arith.constant 1 : index
    %c0_63 = arith.constant 0 : index
    %62 = vector.load %arg16[%c1_61, %c1_62, %c0_63] : memref<18x18x16xf32, #tpu.memory_space<vmem>>, vector<16x16x16xf32>
    tpu.vector_store %arg16[%c1_61, %c1_62, %c0_63], %61 {strides = array<i32>} : memref<18x18x16xf32, #tpu.memory_space<vmem>>, vector<16x16x16xf32>,
    %c0_64 = arith.constant 0 : index
    %c0_65 = arith.constant 0 : index
    %c0_66 = arith.constant 0 : index
    %63 = vector.load %arg12[%c0_64, %c0_65, %c0_66] : memref<3x144x16xbf16, #tpu.memory_space<vmem>>, vector<1x144x16xbf16>
    %64 = vector.shape_cast %63 : vector<1x144x16xbf16> to vector<144x16xbf16>
    %c0_67 = arith.constant 0 : index
    %c0_68 = arith.constant 0 : index
    %c0_69 = arith.constant 0 : index
    %65 = vector.load %arg16[%c0_67, %c0_68, %c0_69] : memref<18x18x16xf32, #tpu.memory_space<vmem>>, vector<16x16x16xf32>
    %66 = vector.shape_cast %65 : vector<16x16x16xf32> to vector<256x16xf32>
    %c0_70 = arith.constant 0 : index
    %c1_71 = arith.constant 1 : index
    %c0_72 = arith.constant 0 : index
    %67 = vector.load %arg16[%c0_70, %c1_71, %c0_72] : memref<18x18x16xf32, #tpu.memory_space<vmem>>, vector<16x16x16xf32>
    %68 = vector.shape_cast %67 : vector<16x16x16xf32> to vector<256x16xf32>
    %c0_73 = arith.constant 0 : index
    %c2_74 = arith.constant 2 : index
    %c0_75 = arith.constant 0 : index
    %69 = vector.load %arg16[%c0_73, %c2_74, %c0_75] : memref<18x18x16xf32, #tpu.memory_space<vmem>>, vector<16x16x16xf32>
    %70 = vector.shape_cast %69 : vector<16x16x16xf32> to vector<256x16xf32>
    %c1_76 = arith.constant 1 : index
    %c0_77 = arith.constant 0 : index
    %c0_78 = arith.constant 0 : index
    %71 = vector.load %arg16[%c1_76, %c0_77, %c0_78] : memref<18x18x16xf32, #tpu.memory_space<vmem>>, vector<16x16x16xf32>
    %72 = vector.shape_cast %71 : vector<16x16x16xf32> to vector<256x16xf32>
    %c1_79 = arith.constant 1 : index
    %c1_80 = arith.constant 1 : index
    %c0_81 = arith.constant 0 : index
    %73 = vector.load %arg16[%c1_79, %c1_80, %c0_81] : memref<18x18x16xf32, #tpu.memory_space<vmem>>, vector<16x16x16xf32>
    %74 = vector.shape_cast %73 : vector<16x16x16xf32> to vector<256x16xf32>
    %c1_82 = arith.constant 1 : index
    %c2_83 = arith.constant 2 : index
    %c0_84 = arith.constant 0 : index
    %75 = vector.load %arg16[%c1_82, %c2_83, %c0_84] : memref<18x18x16xf32, #tpu.memory_space<vmem>>, vector<16x16x16xf32>
    %76 = vector.shape_cast %75 : vector<16x16x16xf32> to vector<256x16xf32>
    %c2_85 = arith.constant 2 : index
    %c0_86 = arith.constant 0 : index
    %c0_87 = arith.constant 0 : index
    %77 = vector.load %arg16[%c2_85, %c0_86, %c0_87] : memref<18x18x16xf32, #tpu.memory_space<vmem>>, vector<16x16x16xf32>
    %78 = vector.shape_cast %77 : vector<16x16x16xf32> to vector<256x16xf32>
    %c2_88 = arith.constant 2 : index
    %c1_89 = arith.constant 1 : index
    %c0_90 = arith.constant 0 : index
    %79 = vector.load %arg16[%c2_88, %c1_89, %c0_90] : memref<18x18x16xf32, #tpu.memory_space<vmem>>, vector<16x16x16xf32>
    %80 = vector.shape_cast %79 : vector<16x16x16xf32> to vector<256x16xf32>
    %c2_91 = arith.constant 2 : index
    %c2_92 = arith.constant 2 : index
    %c0_93 = arith.constant 0 : index
    %81 = vector.load %arg16[%c2_91, %c2_92, %c0_93] : memref<18x18x16xf32, #tpu.memory_space<vmem>>, vector<16x16x16xf32>
    %82 = vector.shape_cast %81 : vector<16x16x16xf32> to vector<256x16xf32>
    %83 = tpu.concatenate %66, %68, %70, %72, %74, %76, %78, %80, %82 in 1 : vector<256x16xf32>, vector<256x16xf32>, vector<256x16xf32>, vector<256x16xf32>, vector<256x16xf32>, vector<256x16xf32>, vector<256x16xf32>, vector<256x16xf32>, vector<256x16xf32> -> vector<256x144xf32>
    %84 = arith.truncf %83 : vector<256x144xf32> to vector<256x144xbf16>
    %cst_94 = arith.constant dense<0.000000e+00> : vector<256x16xf32>
    %85 = tpu.matmul %84, %64, %cst_94 {dimension_numbers = #tpu.dot_dimension_numbers<[1], [0], [0], [1], [0, 0, 1, 1], [], []>} : vector<256x144xbf16>, vector<144x16xbf16>, vector<256x16xf32> -> vector<256x16xf32>
    %86 = arith.addf %17, %85 : vector<256x16xf32>
    %c0_95 = arith.constant 0 : index
    %c0_96 = arith.constant 0 : index
    %87 = vector.load %arg13[%c0_95, %c0_96] : memref<3x16xf32, #tpu.memory_space<vmem>>, vector<1x16xf32>
    %88 = vector.broadcast %87 : vector<1x16xf32> to vector<256x16xf32>
    %89 = arith.addf %86, %88 : vector<256x16xf32>
    %c1_97 = arith.constant 1 : index
    %c0_98 = arith.constant 0 : index
    %90 = vector.load %arg10[%c1_97, %c0_98] : memref<3x16xf32, #tpu.memory_space<vmem>>, vector<1x16xf32>
    %91 = vector.broadcast %90 : vector<1x16xf32> to vector<256x16xf32>
    %92 = arith.mulf %89, %91 : vector<256x16xf32>
    %c1_99 = arith.constant 1 : index
    %c0_100 = arith.constant 0 : index
    %93 = vector.load %arg11[%c1_99, %c0_100] : memref<3x16xf32, #tpu.memory_space<vmem>>, vector<1x16xf32>
    %94 = vector.broadcast %93 : vector<1x16xf32> to vector<256x16xf32>
    %95 = arith.addf %92, %94 : vector<256x16xf32>
    %cst_101 = arith.constant 0.000000e+00 : f32
    %96 = vector.broadcast %cst_101 : f32 to vector<256x16xf32>
    %97 = arith.maximumf %95, %96 : vector<256x16xf32>
    %98 = vector.shape_cast %97 : vector<256x16xf32> to vector<16x16x16xf32>
    %c1_102 = arith.constant 1 : index
    %c1_103 = arith.constant 1 : index
    %c0_104 = arith.constant 0 : index
    %99 = vector.load %arg16[%c1_102, %c1_103, %c0_104] : memref<18x18x16xf32, #tpu.memory_space<vmem>>, vector<16x16x16xf32>
    tpu.vector_store %arg16[%c1_102, %c1_103, %c0_104], %98 {strides = array<i32>} : memref<18x18x16xf32, #tpu.memory_space<vmem>>, vector<16x16x16xf32>,
    %c1_105 = arith.constant 1 : index
    %c0_106 = arith.constant 0 : index
    %c0_107 = arith.constant 0 : index
    %100 = vector.load %arg12[%c1_105, %c0_106, %c0_107] : memref<3x144x16xbf16, #tpu.memory_space<vmem>>, vector<1x144x16xbf16>
    %101 = vector.shape_cast %100 : vector<1x144x16xbf16> to vector<144x16xbf16>
    %c0_108 = arith.constant 0 : index
    %c0_109 = arith.constant 0 : index
    %c0_110 = arith.constant 0 : index
    %102 = vector.load %arg16[%c0_108, %c0_109, %c0_110] : memref<18x18x16xf32, #tpu.memory_space<vmem>>, vector<16x16x16xf32>
    %103 = vector.shape_cast %102 : vector<16x16x16xf32> to vector<256x16xf32>
    %c0_111 = arith.constant 0 : index
    %c1_112 = arith.constant 1 : index
    %c0_113 = arith.constant 0 : index
    %104 = vector.load %arg16[%c0_111, %c1_112, %c0_113] : memref<18x18x16xf32, #tpu.memory_space<vmem>>, vector<16x16x16xf32>
    %105 = vector.shape_cast %104 : vector<16x16x16xf32> to vector<256x16xf32>
    %c0_114 = arith.constant 0 : index
    %c2_115 = arith.constant 2 : index
    %c0_116 = arith.constant 0 : index
    %106 = vector.load %arg16[%c0_114, %c2_115, %c0_116] : memref<18x18x16xf32, #tpu.memory_space<vmem>>, vector<16x16x16xf32>
    %107 = vector.shape_cast %106 : vector<16x16x16xf32> to vector<256x16xf32>
    %c1_117 = arith.constant 1 : index
    %c0_118 = arith.constant 0 : index
    %c0_119 = arith.constant 0 : index
    %108 = vector.load %arg16[%c1_117, %c0_118, %c0_119] : memref<18x18x16xf32, #tpu.memory_space<vmem>>, vector<16x16x16xf32>
    %109 = vector.shape_cast %108 : vector<16x16x16xf32> to vector<256x16xf32>
    %c1_120 = arith.constant 1 : index
    %c1_121 = arith.constant 1 : index
    %c0_122 = arith.constant 0 : index
    %110 = vector.load %arg16[%c1_120, %c1_121, %c0_122] : memref<18x18x16xf32, #tpu.memory_space<vmem>>, vector<16x16x16xf32>
    %111 = vector.shape_cast %110 : vector<16x16x16xf32> to vector<256x16xf32>
    %c1_123 = arith.constant 1 : index
    %c2_124 = arith.constant 2 : index
    %c0_125 = arith.constant 0 : index
    %112 = vector.load %arg16[%c1_123, %c2_124, %c0_125] : memref<18x18x16xf32, #tpu.memory_space<vmem>>, vector<16x16x16xf32>
    %113 = vector.shape_cast %112 : vector<16x16x16xf32> to vector<256x16xf32>
    %c2_126 = arith.constant 2 : index
    %c0_127 = arith.constant 0 : index
    %c0_128 = arith.constant 0 : index
    %114 = vector.load %arg16[%c2_126, %c0_127, %c0_128] : memref<18x18x16xf32, #tpu.memory_space<vmem>>, vector<16x16x16xf32>
    %115 = vector.shape_cast %114 : vector<16x16x16xf32> to vector<256x16xf32>
    %c2_129 = arith.constant 2 : index
    %c1_130 = arith.constant 1 : index
    %c0_131 = arith.constant 0 : index
    %116 = vector.load %arg16[%c2_129, %c1_130, %c0_131] : memref<18x18x16xf32, #tpu.memory_space<vmem>>, vector<16x16x16xf32>
    %117 = vector.shape_cast %116 : vector<16x16x16xf32> to vector<256x16xf32>
    %c2_132 = arith.constant 2 : index
    %c2_133 = arith.constant 2 : index
    %c0_134 = arith.constant 0 : index
    %118 = vector.load %arg16[%c2_132, %c2_133, %c0_134] : memref<18x18x16xf32, #tpu.memory_space<vmem>>, vector<16x16x16xf32>
    %119 = vector.shape_cast %118 : vector<16x16x16xf32> to vector<256x16xf32>
    %120 = tpu.concatenate %103, %105, %107, %109, %111, %113, %115, %117, %119 in 1 : vector<256x16xf32>, vector<256x16xf32>, vector<256x16xf32>, vector<256x16xf32>, vector<256x16xf32>, vector<256x16xf32>, vector<256x16xf32>, vector<256x16xf32>, vector<256x16xf32> -> vector<256x144xf32>
    %121 = arith.truncf %120 : vector<256x144xf32> to vector<256x144xbf16>
    %cst_135 = arith.constant dense<0.000000e+00> : vector<256x16xf32>
    %122 = tpu.matmul %121, %101, %cst_135 {dimension_numbers = #tpu.dot_dimension_numbers<[1], [0], [0], [1], [0, 0, 1, 1], [], []>} : vector<256x144xbf16>, vector<144x16xbf16>, vector<256x16xf32> -> vector<256x16xf32>
    %c1_136 = arith.constant 1 : index
    %c0_137 = arith.constant 0 : index
    %123 = vector.load %arg13[%c1_136, %c0_137] : memref<3x16xf32, #tpu.memory_space<vmem>>, vector<1x16xf32>
    %124 = vector.broadcast %123 : vector<1x16xf32> to vector<256x16xf32>
    %125 = arith.addf %122, %124 : vector<256x16xf32>
    %c2_138 = arith.constant 2 : index
    %c0_139 = arith.constant 0 : index
    %126 = vector.load %arg10[%c2_138, %c0_139] : memref<3x16xf32, #tpu.memory_space<vmem>>, vector<1x16xf32>
    %127 = vector.broadcast %126 : vector<1x16xf32> to vector<256x16xf32>
    %128 = arith.mulf %125, %127 : vector<256x16xf32>
    %c2_140 = arith.constant 2 : index
    %c0_141 = arith.constant 0 : index
    %129 = vector.load %arg11[%c2_140, %c0_141] : memref<3x16xf32, #tpu.memory_space<vmem>>, vector<1x16xf32>
    %130 = vector.broadcast %129 : vector<1x16xf32> to vector<256x16xf32>
    %131 = arith.addf %128, %130 : vector<256x16xf32>
    %cst_142 = arith.constant 0.000000e+00 : f32
    %132 = vector.broadcast %cst_142 : f32 to vector<256x16xf32>
    %133 = arith.maximumf %131, %132 : vector<256x16xf32>
    %134 = vector.shape_cast %133 : vector<256x16xf32> to vector<16x16x16xf32>
    %c1_143 = arith.constant 1 : index
    %c1_144 = arith.constant 1 : index
    %c0_145 = arith.constant 0 : index
    %135 = vector.load %arg16[%c1_143, %c1_144, %c0_145] : memref<18x18x16xf32, #tpu.memory_space<vmem>>, vector<16x16x16xf32>
    tpu.vector_store %arg16[%c1_143, %c1_144, %c0_145], %134 {strides = array<i32>} : memref<18x18x16xf32, #tpu.memory_space<vmem>>, vector<16x16x16xf32>,
    %c2_146 = arith.constant 2 : index
    %c0_147 = arith.constant 0 : index
    %c0_148 = arith.constant 0 : index
    %136 = vector.load %arg12[%c2_146, %c0_147, %c0_148] : memref<3x144x16xbf16, #tpu.memory_space<vmem>>, vector<1x144x16xbf16>
    %137 = vector.shape_cast %136 : vector<1x144x16xbf16> to vector<144x16xbf16>
    %c0_149 = arith.constant 0 : index
    %c0_150 = arith.constant 0 : index
    %c0_151 = arith.constant 0 : index
    %138 = vector.load %arg16[%c0_149, %c0_150, %c0_151] : memref<18x18x16xf32, #tpu.memory_space<vmem>>, vector<16x16x16xf32>
    %139 = vector.shape_cast %138 : vector<16x16x16xf32> to vector<256x16xf32>
    %c0_152 = arith.constant 0 : index
    %c1_153 = arith.constant 1 : index
    %c0_154 = arith.constant 0 : index
    %140 = vector.load %arg16[%c0_152, %c1_153, %c0_154] : memref<18x18x16xf32, #tpu.memory_space<vmem>>, vector<16x16x16xf32>
    %141 = vector.shape_cast %140 : vector<16x16x16xf32> to vector<256x16xf32>
    %c0_155 = arith.constant 0 : index
    %c2_156 = arith.constant 2 : index
    %c0_157 = arith.constant 0 : index
    %142 = vector.load %arg16[%c0_155, %c2_156, %c0_157] : memref<18x18x16xf32, #tpu.memory_space<vmem>>, vector<16x16x16xf32>
    %143 = vector.shape_cast %142 : vector<16x16x16xf32> to vector<256x16xf32>
    %c1_158 = arith.constant 1 : index
    %c0_159 = arith.constant 0 : index
    %c0_160 = arith.constant 0 : index
    %144 = vector.load %arg16[%c1_158, %c0_159, %c0_160] : memref<18x18x16xf32, #tpu.memory_space<vmem>>, vector<16x16x16xf32>
    %145 = vector.shape_cast %144 : vector<16x16x16xf32> to vector<256x16xf32>
    %c1_161 = arith.constant 1 : index
    %c1_162 = arith.constant 1 : index
    %c0_163 = arith.constant 0 : index
    %146 = vector.load %arg16[%c1_161, %c1_162, %c0_163] : memref<18x18x16xf32, #tpu.memory_space<vmem>>, vector<16x16x16xf32>
    %147 = vector.shape_cast %146 : vector<16x16x16xf32> to vector<256x16xf32>
    %c1_164 = arith.constant 1 : index
    %c2_165 = arith.constant 2 : index
    %c0_166 = arith.constant 0 : index
    %148 = vector.load %arg16[%c1_164, %c2_165, %c0_166] : memref<18x18x16xf32, #tpu.memory_space<vmem>>, vector<16x16x16xf32>
    %149 = vector.shape_cast %148 : vector<16x16x16xf32> to vector<256x16xf32>
    %c2_167 = arith.constant 2 : index
    %c0_168 = arith.constant 0 : index
    %c0_169 = arith.constant 0 : index
    %150 = vector.load %arg16[%c2_167, %c0_168, %c0_169] : memref<18x18x16xf32, #tpu.memory_space<vmem>>, vector<16x16x16xf32>
    %151 = vector.shape_cast %150 : vector<16x16x16xf32> to vector<256x16xf32>
    %c2_170 = arith.constant 2 : index
    %c1_171 = arith.constant 1 : index
    %c0_172 = arith.constant 0 : index
    %152 = vector.load %arg16[%c2_170, %c1_171, %c0_172] : memref<18x18x16xf32, #tpu.memory_space<vmem>>, vector<16x16x16xf32>
    %153 = vector.shape_cast %152 : vector<16x16x16xf32> to vector<256x16xf32>
    %c2_173 = arith.constant 2 : index
    %c2_174 = arith.constant 2 : index
    %c0_175 = arith.constant 0 : index
    %154 = vector.load %arg16[%c2_173, %c2_174, %c0_175] : memref<18x18x16xf32, #tpu.memory_space<vmem>>, vector<16x16x16xf32>
    %155 = vector.shape_cast %154 : vector<16x16x16xf32> to vector<256x16xf32>
    %156 = tpu.concatenate %139, %141, %143, %145, %147, %149, %151, %153, %155 in 1 : vector<256x16xf32>, vector<256x16xf32>, vector<256x16xf32>, vector<256x16xf32>, vector<256x16xf32>, vector<256x16xf32>, vector<256x16xf32>, vector<256x16xf32>, vector<256x16xf32> -> vector<256x144xf32>
    %157 = arith.truncf %156 : vector<256x144xf32> to vector<256x144xbf16>
    %cst_176 = arith.constant dense<0.000000e+00> : vector<256x16xf32>
    %158 = tpu.matmul %157, %137, %cst_176 {dimension_numbers = #tpu.dot_dimension_numbers<[1], [0], [0], [1], [0, 0, 1, 1], [], []>} : vector<256x144xbf16>, vector<144x16xbf16>, vector<256x16xf32> -> vector<256x16xf32>
    %159 = arith.addf %89, %158 : vector<256x16xf32>
    %c2_177 = arith.constant 2 : index
    %c0_178 = arith.constant 0 : index
    %160 = vector.load %arg13[%c2_177, %c0_178] : memref<3x16xf32, #tpu.memory_space<vmem>>, vector<1x16xf32>
    %161 = vector.broadcast %160 : vector<1x16xf32> to vector<256x16xf32>
    %162 = arith.addf %159, %161 : vector<256x16xf32>
    %163 = vector.shape_cast %162 : vector<256x16xf32> to vector<1x256x16xf32>
    %c0_179 = arith.constant 0 : index
    %c0_180 = arith.constant 0 : index
    %c0_181 = arith.constant 0 : index
    %164 = vector.load %arg14[%c0_179, %c0_180, %c0_181] : memref<1x256x16xf32, #tpu.memory_space<vmem>>, vector<1x256x16xf32>
    tpu.vector_store %arg14[%c0_179, %c0_180, %c0_181], %163 {strides = array<i32>} : memref<1x256x16xf32, #tpu.memory_space<vmem>>, vector<1x256x16xf32>,
    return
  }
  func.func @transform_0(%arg0: i32) -> (i32, i32, i32) {
    %c0_i32 = arith.constant 0 : i32
    %c0_i32_0 = arith.constant 0 : i32
    %c0_i32_1 = arith.constant 0 : i32
    return %arg0, %c0_i32, %c0_i32_0 : i32, i32, i32
  }
  func.func @transform_1(%arg0: i32) -> (i32, i32) {
    %c0_i32 = arith.constant 0 : i32
    %c0_i32_0 = arith.constant 0 : i32
    %c0_i32_1 = arith.constant 0 : i32
    return %c0_i32, %c0_i32_0 : i32, i32
  }
  func.func @transform_2(%arg0: i32) -> (i32, i32) {
    %c0_i32 = arith.constant 0 : i32
    %c0_i32_0 = arith.constant 0 : i32
    %c0_i32_1 = arith.constant 0 : i32
    return %c0_i32, %c0_i32_0 : i32, i32
  }
  func.func @transform_3(%arg0: i32) -> (i32, i32) {
    %c0_i32 = arith.constant 0 : i32
    %c0_i32_0 = arith.constant 0 : i32
    %c0_i32_1 = arith.constant 0 : i32
    return %c0_i32, %c0_i32_0 : i32, i32
  }
  func.func @transform_4(%arg0: i32) -> (i32, i32) {
    %c0_i32 = arith.constant 0 : i32
    %c0_i32_0 = arith.constant 0 : i32
    %c0_i32_1 = arith.constant 0 : i32
    return %c0_i32, %c0_i32_0 : i32, i32
  }
  func.func @transform_5(%arg0: i32) -> (i32, i32) {
    %c0_i32 = arith.constant 0 : i32
    %c0_i32_0 = arith.constant 0 : i32
    %c0_i32_1 = arith.constant 0 : i32
    return %c0_i32, %c0_i32_0 : i32, i32
  }
  func.func @transform_6(%arg0: i32) -> (i32, i32) {
    %c0_i32 = arith.constant 0 : i32
    %c0_i32_0 = arith.constant 0 : i32
    %c0_i32_1 = arith.constant 0 : i32
    return %c0_i32, %c0_i32_0 : i32, i32
  }
  func.func @transform_7(%arg0: i32) -> (i32, i32) {
    %c0_i32 = arith.constant 0 : i32
    %c0_i32_0 = arith.constant 0 : i32
    %c0_i32_1 = arith.constant 0 : i32
    return %c0_i32, %c0_i32_0 : i32, i32
  }
  func.func @transform_8(%arg0: i32) -> (i32, i32) {
    %c0_i32 = arith.constant 0 : i32
    %c0_i32_0 = arith.constant 0 : i32
    %c0_i32_1 = arith.constant 0 : i32
    return %c0_i32, %c0_i32_0 : i32, i32
  }
  func.func @transform_9(%arg0: i32) -> (i32, i32) {
    %c0_i32 = arith.constant 0 : i32
    %c0_i32_0 = arith.constant 0 : i32
    %c0_i32_1 = arith.constant 0 : i32
    return %c0_i32, %c0_i32_0 : i32, i32
  }
  func.func @transform_10(%arg0: i32) -> (i32, i32) {
    %c0_i32 = arith.constant 0 : i32
    %c0_i32_0 = arith.constant 0 : i32
    %c0_i32_1 = arith.constant 0 : i32
    return %c0_i32, %c0_i32_0 : i32, i32
  }
  func.func @transform_11(%arg0: i32) -> (i32, i32, i32) {
    %c0_i32 = arith.constant 0 : i32
    %c0_i32_0 = arith.constant 0 : i32
    %c0_i32_1 = arith.constant 0 : i32
    %c0_i32_2 = arith.constant 0 : i32
    return %c0_i32, %c0_i32_0, %c0_i32_1 : i32, i32, i32
  }
  func.func @transform_12(%arg0: i32) -> (i32, i32) {
    %c0_i32 = arith.constant 0 : i32
    %c0_i32_0 = arith.constant 0 : i32
    %c0_i32_1 = arith.constant 0 : i32
    return %c0_i32, %c0_i32_0 : i32, i32
  }
  func.func @transform_13(%arg0: i32) -> (i32, i32, i32) {
    %c0_i32 = arith.constant 0 : i32
    %c0_i32_0 = arith.constant 0 : i32
    %c0_i32_1 = arith.constant 0 : i32
    return %arg0, %c0_i32, %c0_i32_0 : i32, i32, i32
  }
}

</mosaic_0001>

<llo_original>
// kernel: tpu_custom_call.1
$region0: #{tpu_custom_call.1}
  #allocation0 [shape = 'u32[]', space=smem, size = 0x4, offset = 0x4, fixed_abs, tag = 'smem constant byte address 0x4 - core index']
  #allocation1 [shape = 'u32[144,128]{1,0:T(1,128)}', space=vmem, size = 0x12000, scoped, tag = 'internal scratch']
  #allocation2 [shape = 'f32[18,18,8]{2,1,0:T(8,128)}', space=vmem, size = 0x36000, scoped, tag = 'scratch operand']
  #allocation3 [shape = 'f32[18,18,16]{2,1,0:T(8,128)}', space=vmem, size = 0x36000, scoped, tag = 'scratch operand']
  %s0 = inlined_call_operand.vmem [shape: f32[2,256,8], index: 0, kind: input, shape index: {}]
  %s1 = inlined_call_operand.vmem [shape: f32[1,8], index: 1, kind: input, shape index: {}]
  %s2 = inlined_call_operand.vmem [shape: f32[1,8], index: 2, kind: input, shape index: {}]
  %s3 = inlined_call_operand.vmem [shape: bf16[8,16], index: 3, kind: input, shape index: {}]
  %s4 = inlined_call_operand.vmem [shape: f32[1,16], index: 4, kind: input, shape index: {}]
  %s5 = inlined_call_operand.vmem [shape: f32[1,8], index: 5, kind: input, shape index: {}]
  %s6 = inlined_call_operand.vmem [shape: f32[1,8], index: 6, kind: input, shape index: {}]
  %s7 = inlined_call_operand.vmem [shape: bf16[72,16], index: 7, kind: input, shape index: {}]
  %s8 = inlined_call_operand.vmem [shape: f32[1,16], index: 8, kind: input, shape index: {}]
  %s9 = inlined_call_operand.vmem [shape: f32[3,16], index: 9, kind: input, shape index: {}]
  %s10 = inlined_call_operand.vmem [shape: f32[3,16], index: 10, kind: input, shape index: {}]
  %s11 = inlined_call_operand.vmem [shape: bf16[3,144,16], index: 11, kind: input, shape index: {}]
  %s12 = inlined_call_operand.vmem [shape: f32[3,16], index: 12, kind: input, shape index: {}]
  %s13 = inlined_call_operand.vmem [shape: f32[2,256,16], index: 13, kind: output, shape index: {}]
  %s14 = sld [smem:[#allocation0]]
  $region85: #{tpu_custom_call.1} parent=0
    _
  %s16 = ssub.s32 1, %s14
  %s17 = scalar_select 0, %s16, %s14
  loop: start=0, step=1, limit=4
  $region2: #{tpu_custom_call.1} parent=0 // loop_pre_header
    _
  $region3: #{tpu_custom_call.1} parent=0 // loop_header
    %s19 = sphi 0, %s23
    %p20 = scmp.ge.s32.totalorder %s19, 4
    %s29 = sphi 0, %s31
    %s32 = sphi 0, %s29
    %s33 = sphi 0, %s32
    %s49 = sphi 0, %s33
    %s53 = sphi 0, %s53
    %s55 = sphi 0, %s53
    %s56 = sphi 0, %s55
    %s70 = sphi 0, %s56
    %s74 = sphi 0, %s74
    %s76 = sphi 0, %s74
    %s77 = sphi 0, %s76
    %s91 = sphi 0, %s77
    %s95 = sphi 0, %s95
    %s97 = sphi 0, %s95
    %s98 = sphi 0, %s97
    %s112 = sphi 0, %s98
    %s116 = sphi 0, %s116
    %s118 = sphi 0, %s116
    %s119 = sphi 0, %s118
    %s133 = sphi 0, %s119
    %s137 = sphi 0, %s137
    %s139 = sphi 0, %s137
    %s140 = sphi 0, %s139
    %s154 = sphi 0, %s140
    %s158 = sphi 0, %s158
    %s160 = sphi 0, %s158
    %s161 = sphi 0, %s160
    %s175 = sphi 0, %s161
    %s179 = sphi 0, %s179
    %s181 = sphi 0, %s179
    %s182 = sphi 0, %s181
    %s196 = sphi 0, %s182
    %s200 = sphi 0, %s200
    %s202 = sphi 0, %s200
    %s203 = sphi 0, %s202
    %s217 = sphi 0, %s203
    %s221 = sphi 0, %s221
    %s223 = sphi 0, %s221
    %s224 = sphi 0, %s223
    %s238 = sphi 0, %s224
    %s242 = sphi 0, %s242
    %s244 = sphi 0, %s242
    %s245 = sphi 0, %s244
    %s259 = sphi 0, %s245
    %s263 = sphi 0, %s263
    %s265 = sphi 0, %s263
    %s266 = sphi 0, %s265
    %s280 = sphi 0, %s266
    %s284 = sphi 0, %s284
    %s286 = sphi 0, %s284
    %s287 = sphi 0, %s286
    %s301 = sphi 0, %s287
    %s307 = sphi 0, %s309
    %s310 = sphi 0, %s307
    %s311 = sphi 0, %s310
    %s327 = sphi 0, %s311
  $region4: #{tpu_custom_call.1} parent=0 // loop_header_branch
    %22 = sbr.rel (%p20) target = $region8
  $region5: #{tpu_custom_call.1} parent=0 // loop_body
    %s24 = ssub.s32 %s19, 1
    %s25 = ssub.s32 %s19, 2
    %s26 = sadd.s32 %s19, 1
    %s27 = ssub.s32 %s19, %s26
    %p28 = scmp.eq.s32.totalorder %s27, 0
    %s30 = sadd.s32 %s29, 1
    %s31 = scalar_select %p28, %s29, %s30
    %p34 = pneg %p28
    %p35 = scmp.eq.s32.totalorder %s19, 1
    %p36 = por %p34, %p35
    %p37 = scmp.ne.s32.totalorder %s29, %s32
    %p38 = scmp.eq.s32.totalorder %s19, 0
    %p39 = por %p37, %p38
    %p40 = scmp.ne.s32.totalorder %s29, %s32
    %p41 = scmp.eq.s32.totalorder %s24, 1
    %p42 = por %p40, %p41
    %p43 = scmp.ne.s32.totalorder %s32, %s33
    %p44 = scmp.eq.s32.totalorder %s24, 0
    %p45 = por %p43, %p44
    %p46 = scmp.ne.s32.totalorder %s32, %s33
    %p47 = scmp.eq.s32.totalorder %s25, 1
    %p48 = por %p46, %p47
    %p50 = scmp.ne.s32.totalorder %s33, %s49
    %p51 = scmp.eq.s32.totalorder %s25, 0
    %p52 = por %p50, %p51
    %s54 = sadd.s32 %s53, 1
    %p57 = scmp.eq.s32.totalorder %s19, 1
    %p58 = scmp.ne.s32.totalorder %s53, %s55
    %p59 = scmp.eq.s32.totalorder %s19, 0
    %p60 = por %p58, %p59
    %p61 = scmp.ne.s32.totalorder %s53, %s55
    %p62 = scmp.eq.s32.totalorder %s24, 1
    %p63 = por %p61, %p62
    %p64 = scmp.ne.s32.totalorder %s55, %s56
    %p65 = scmp.eq.s32.totalorder %s24, 0
    %p66 = por %p64, %p65
    %p67 = scmp.ne.s32.totalorder %s55, %s56
    %p68 = scmp.eq.s32.totalorder %s25, 1
    %p69 = por %p67, %p68
    %p71 = scmp.ne.s32.totalorder %s56, %s70
    %p72 = scmp.eq.s32.totalorder %s25, 0
    %p73 = por %p71, %p72
    %s75 = sadd.s32 %s74, 1
    %p78 = scmp.eq.s32.totalorder %s19, 1
    %p79 = scmp.ne.s32.totalorder %s74, %s76
    %p80 = scmp.eq.s32.totalorder %s19, 0
    %p81 = por %p79, %p80
    %p82 = scmp.ne.s32.totalorder %s74, %s76
    %p83 = scmp.eq.s32.totalorder %s24, 1
    %p84 = por %p82, %p83
    %p85 = scmp.ne.s32.totalorder %s76, %s77
    %p86 = scmp.eq.s32.totalorder %s24, 0
    %p87 = por %p85, %p86
    %p88 = scmp.ne.s32.totalorder %s76, %s77
    %p89 = scmp.eq.s32.totalorder %s25, 1
    %p90 = por %p88, %p89
    %p92 = scmp.ne.s32.totalorder %s77, %s91
    %p93 = scmp.eq.s32.totalorder %s25, 0
    %p94 = por %p92, %p93
    %s96 = sadd.s32 %s95, 1
    %p99 = scmp.eq.s32.totalorder %s19, 1
    %p100 = scmp.ne.s32.totalorder %s95, %s97
    %p101 = scmp.eq.s32.totalorder %s19, 0
    %p102 = por %p100, %p101
    %p103 = scmp.ne.s32.totalorder %s95, %s97
    %p104 = scmp.eq.s32.totalorder %s24, 1
    %p105 = por %p103, %p104
    %p106 = scmp.ne.s32.totalorder %s97, %s98
    %p107 = scmp.eq.s32.totalorder %s24, 0
    %p108 = por %p106, %p107
    %p109 = scmp.ne.s32.totalorder %s97, %s98
    %p110 = scmp.eq.s32.totalorder %s25, 1
    %p111 = por %p109, %p110
    %p113 = scmp.ne.s32.totalorder %s98, %s112
    %p114 = scmp.eq.s32.totalorder %s25, 0
    %p115 = por %p113, %p114
    %s117 = sadd.s32 %s116, 1
    %p120 = scmp.eq.s32.totalorder %s19, 1
    %p121 = scmp.ne.s32.totalorder %s116, %s118
    %p122 = scmp.eq.s32.totalorder %s19, 0
    %p123 = por %p121, %p122
    %p124 = scmp.ne.s32.totalorder %s116, %s118
    %p125 = scmp.eq.s32.totalorder %s24, 1
    %p126 = por %p124, %p125
    %p127 = scmp.ne.s32.totalorder %s118, %s119
    %p128 = scmp.eq.s32.totalorder %s24, 0
    %p129 = por %p127, %p128
    %p130 = scmp.ne.s32.totalorder %s118, %s119
    %p131 = scmp.eq.s32.totalorder %s25, 1
    %p132 = por %p130, %p131
    %p134 = scmp.ne.s32.totalorder %s119, %s133
    %p135 = scmp.eq.s32.totalorder %s25, 0
    %p136 = por %p134, %p135
    %s138 = sadd.s32 %s137, 1
    %p141 = scmp.eq.s32.totalorder %s19, 1
    %p142 = scmp.ne.s32.totalorder %s137, %s139
    %p143 = scmp.eq.s32.totalorder %s19, 0
    %p144 = por %p142, %p143
    %p145 = scmp.ne.s32.totalorder %s137, %s139
    %p146 = scmp.eq.s32.totalorder %s24, 1
    %p147 = por %p145, %p146
    %p148 = scmp.ne.s32.totalorder %s139, %s140
    %p149 = scmp.eq.s32.totalorder %s24, 0
    %p150 = por %p148, %p149
    %p151 = scmp.ne.s32.totalorder %s139, %s140
    %p152 = scmp.eq.s32.totalorder %s25, 1
    %p153 = por %p151, %p152
    %p155 = scmp.ne.s32.totalorder %s140, %s154
    %p156 = scmp.eq.s32.totalorder %s25, 0
    %p157 = por %p155, %p156
    %s159 = sadd.s32 %s158, 1
    %p162 = scmp.eq.s32.totalorder %s19, 1
    %p163 = scmp.ne.s32.totalorder %s158, %s160
    %p164 = scmp.eq.s32.totalorder %s19, 0
    %p165 = por %p163, %p164
    %p166 = scmp.ne.s32.totalorder %s158, %s160
    %p167 = scmp.eq.s32.totalorder %s24, 1
    %p168 = por %p166, %p167
    %p169 = scmp.ne.s32.totalorder %s160, %s161
    %p170 = scmp.eq.s32.totalorder %s24, 0
    %p171 = por %p169, %p170
    %p172 = scmp.ne.s32.totalorder %s160, %s161
    %p173 = scmp.eq.s32.totalorder %s25, 1
    %p174 = por %p172, %p173
    %p176 = scmp.ne.s32.totalorder %s161, %s175
    %p177 = scmp.eq.s32.totalorder %s25, 0
    %p178 = por %p176, %p177
    %s180 = sadd.s32 %s179, 1
    %p183 = scmp.eq.s32.totalorder %s19, 1
    %p184 = scmp.ne.s32.totalorder %s179, %s181
    %p185 = scmp.eq.s32.totalorder %s19, 0
    %p186 = por %p184, %p185
    %p187 = scmp.ne.s32.totalorder %s179, %s181
    %p188 = scmp.eq.s32.totalorder %s24, 1
    %p189 = por %p187, %p188
    %p190 = scmp.ne.s32.totalorder %s181, %s182
    %p191 = scmp.eq.s32.totalorder %s24, 0
    %p192 = por %p190, %p191
    %p193 = scmp.ne.s32.totalorder %s181, %s182
    %p194 = scmp.eq.s32.totalorder %s25, 1
    %p195 = por %p193, %p194
    %p197 = scmp.ne.s32.totalorder %s182, %s196
    %p198 = scmp.eq.s32.totalorder %s25, 0
    %p199 = por %p197, %p198
    %s201 = sadd.s32 %s200, 1
    %p204 = scmp.eq.s32.totalorder %s19, 1
    %p205 = scmp.ne.s32.totalorder %s200, %s202
    %p206 = scmp.eq.s32.totalorder %s19, 0
    %p207 = por %p205, %p206
    %p208 = scmp.ne.s32.totalorder %s200, %s202
    %p209 = scmp.eq.s32.totalorder %s24, 1
    %p210 = por %p208, %p209
    %p211 = scmp.ne.s32.totalorder %s202, %s203
    %p212 = scmp.eq.s32.totalorder %s24, 0
    %p213 = por %p211, %p212
    %p214 = scmp.ne.s32.totalorder %s202, %s203
    %p215 = scmp.eq.s32.totalorder %s25, 1
    %p216 = por %p214, %p215
    %p218 = scmp.ne.s32.totalorder %s203, %s217
    %p219 = scmp.eq.s32.totalorder %s25, 0
    %p220 = por %p218, %p219
    %s222 = sadd.s32 %s221, 1
    %p225 = scmp.eq.s32.totalorder %s19, 1
    %p226 = scmp.ne.s32.totalorder %s221, %s223
    %p227 = scmp.eq.s32.totalorder %s19, 0
    %p228 = por %p226, %p227
    %p229 = scmp.ne.s32.totalorder %s221, %s223
    %p230 = scmp.eq.s32.totalorder %s24, 1
    %p231 = por %p229, %p230
    %p232 = scmp.ne.s32.totalorder %s223, %s224
    %p233 = scmp.eq.s32.totalorder %s24, 0
    %p234 = por %p232, %p233
    %p235 = scmp.ne.s32.totalorder %s223, %s224
    %p236 = scmp.eq.s32.totalorder %s25, 1
    %p237 = por %p235, %p236
    %p239 = scmp.ne.s32.totalorder %s224, %s238
    %p240 = scmp.eq.s32.totalorder %s25, 0
    %p241 = por %p239, %p240
    %s243 = sadd.s32 %s242, 1
    %p246 = scmp.eq.s32.totalorder %s19, 1
    %p247 = scmp.ne.s32.totalorder %s242, %s244
    %p248 = scmp.eq.s32.totalorder %s19, 0
    %p249 = por %p247, %p248
    %p250 = scmp.ne.s32.totalorder %s242, %s244
    %p251 = scmp.eq.s32.totalorder %s24, 1
    %p252 = por %p250, %p251
    %p253 = scmp.ne.s32.totalorder %s244, %s245
    %p254 = scmp.eq.s32.totalorder %s24, 0
    %p255 = por %p253, %p254
    %p256 = scmp.ne.s32.totalorder %s244, %s245
    %p257 = scmp.eq.s32.totalorder %s25, 1
    %p258 = por %p256, %p257
    %p260 = scmp.ne.s32.totalorder %s245, %s259
    %p261 = scmp.eq.s32.totalorder %s25, 0
    %p262 = por %p260, %p261
    %s264 = sadd.s32 %s263, 1
    %p267 = scmp.eq.s32.totalorder %s19, 1
    %p268 = scmp.ne.s32.totalorder %s263, %s265
    %p269 = scmp.eq.s32.totalorder %s19, 0
    %p270 = por %p268, %p269
    %p271 = scmp.ne.s32.totalorder %s263, %s265
    %p272 = scmp.eq.s32.totalorder %s24, 1
    %p273 = por %p271, %p272
    %p274 = scmp.ne.s32.totalorder %s265, %s266
    %p275 = scmp.eq.s32.totalorder %s24, 0
    %p276 = por %p274, %p275
    %p277 = scmp.ne.s32.totalorder %s265, %s266
    %p278 = scmp.eq.s32.totalorder %s25, 1
    %p279 = por %p277, %p278
    %p281 = scmp.ne.s32.totalorder %s266, %s280
    %p282 = scmp.eq.s32.totalorder %s25, 0
    %p283 = por %p281, %p282
    %s285 = sadd.s32 %s284, 1
    %p288 = scmp.eq.s32.totalorder %s19, 1
    %p289 = scmp.ne.s32.totalorder %s284, %s286
    %p290 = scmp.eq.s32.totalorder %s19, 0
    %p291 = por %p289, %p290
    %p292 = scmp.ne.s32.totalorder %s284, %s286
    %p293 = scmp.eq.s32.totalorder %s24, 1
    %p294 = por %p292, %p293
    %p295 = scmp.ne.s32.totalorder %s286, %s287
    %p296 = scmp.eq.s32.totalorder %s24, 0
    %p297 = por %p295, %p296
    %p298 = scmp.ne.s32.totalorder %s286, %s287
    %p299 = scmp.eq.s32.totalorder %s25, 1
    %p300 = por %p298, %p299
    %p302 = scmp.ne.s32.totalorder %s287, %s301
    %p303 = scmp.eq.s32.totalorder %s25, 0
    %p304 = por %p302, %p303
    %s305 = ssub.s32 %s19, %s26
    %p306 = scmp.eq.s32.totalorder %s305, 0
    %s308 = sadd.s32 %s307, 1
    %s309 = scalar_select %p306, %s307, %s308
    %p312 = pneg %p306
    %p313 = scmp.eq.s32.totalorder %s19, 1
    %p314 = por %p312, %p313
    %p315 = scmp.ne.s32.totalorder %s307, %s310
    %p316 = scmp.eq.s32.totalorder %s19, 0
    %p317 = por %p315, %p316
    %p318 = scmp.ne.s32.totalorder %s307, %s310
    %p319 = scmp.eq.s32.totalorder %s24, 1
    %p320 = por %p318, %p319
    %p321 = scmp.ne.s32.totalorder %s310, %s311
    %p322 = scmp.eq.s32.totalorder %s24, 0
    %p323 = por %p321, %p322
    %p324 = scmp.ne.s32.totalorder %s310, %s311
    %p325 = scmp.eq.s32.totalorder %s25, 1
    %p326 = por %p324, %p325
    %p328 = scmp.ne.s32.totalorder %s311, %s327
    %p329 = scmp.eq.s32.totalorder %s25, 0
    %p330 = por %p328, %p329
    %p331 = scmp.le.s32.totalorder 1, %s19
    %p332 = scmp.lt.s32.totalorder %s19, 3
    %p333 = pnand %p331, %p332
    %p334 = pneg %p333
    // Predicated region
    $region9: #{tpu_custom_call.1} parent=5 // pred_check
      _
    $region10: #{tpu_custom_call.1} parent=5 // pred_check_branch
      %336 = sbr.rel (%p333) target = $region12
    $region11: #{tpu_custom_call.1} parent=5 // pred_region
      %s337 = ssub.s32 %s19, 1
      // Predicated region
      $region13: #{tpu_custom_call.1} parent=11 // pred_check
        %p338 = pneg %p66
      $region14: #{tpu_custom_call.1} parent=11 // pred_check_branch
        %340 = sbr.rel (%p338) target = $region16
      $region15: #{tpu_custom_call.1} parent=11 // pred_region
        _
      $region16: #{tpu_custom_call.1} parent=11 // pred_fallthru
        _
      // Predicated region
      $region17: #{tpu_custom_call.1} parent=11 // pred_check
        %p341 = pneg %p87
      $region18: #{tpu_custom_call.1} parent=11 // pred_check_branch
        %343 = sbr.rel (%p341) target = $region20
      $region19: #{tpu_custom_call.1} parent=11 // pred_region
        _
      $region20: #{tpu_custom_call.1} parent=11 // pred_fallthru
        _
      // Predicated region
      $region21: #{tpu_custom_call.1} parent=11 // pred_check
        %p344 = pneg %p108
      $region22: #{tpu_custom_call.1} parent=11 // pred_check_branch
        %346 = sbr.rel (%p344) target = $region24
      $region23: #{tpu_custom_call.1} parent=11 // pred_region
        _
      $region24: #{tpu_custom_call.1} parent=11 // pred_fallthru
        _
      // Predicated region
      $region25: #{tpu_custom_call.1} parent=11 // pred_check
        %p347 = pneg %p129
      $region26: #{tpu_custom_call.1} parent=11 // pred_check_branch
        %349 = sbr.rel (%p347) target = $region28
      $region27: #{tpu_custom_call.1} parent=11 // pred_region
        _
      $region28: #{tpu_custom_call.1} parent=11 // pred_fallthru
        _
      // Predicated region
      $region29: #{tpu_custom_call.1} parent=11 // pred_check
        %p350 = pneg %p150
      $region30: #{tpu_custom_call.1} parent=11 // pred_check_branch
        %352 = sbr.rel (%p350) target = $region32
      $region31: #{tpu_custom_call.1} parent=11 // pred_region
        _
      $region32: #{tpu_custom_call.1} parent=11 // pred_fallthru
        _
      // Predicated region
      $region33: #{tpu_custom_call.1} parent=11 // pred_check
        %p353 = pneg %p171
      $region34: #{tpu_custom_call.1} parent=11 // pred_check_branch
        %355 = sbr.rel (%p353) target = $region36
      $region35: #{tpu_custom_call.1} parent=11 // pred_region
        _
      $region36: #{tpu_custom_call.1} parent=11 // pred_fallthru
        _
      // Predicated region
      $region37: #{tpu_custom_call.1} parent=11 // pred_check
        %p356 = pneg %p192
      $region38: #{tpu_custom_call.1} parent=11 // pred_check_branch
        %358 = sbr.rel (%p356) target = $region40
      $region39: #{tpu_custom_call.1} parent=11 // pred_region
        _
      $region40: #{tpu_custom_call.1} parent=11 // pred_fallthru
        _
      // Predicated region
      $region41: #{tpu_custom_call.1} parent=11 // pred_check
        %p359 = pneg %p213
      $region42: #{tpu_custom_call.1} parent=11 // pred_check_branch
        %361 = sbr.rel (%p359) target = $region44
      $region43: #{tpu_custom_call.1} parent=11 // pred_region
        _
      $region44: #{tpu_custom_call.1} parent=11 // pred_fallthru
        _
      // Predicated region
      $region45: #{tpu_custom_call.1} parent=11 // pred_check
        %p362 = pneg %p234
      $region46: #{tpu_custom_call.1} parent=11 // pred_check_branch
        %364 = sbr.rel (%p362) target = $region48
      $region47: #{tpu_custom_call.1} parent=11 // pred_region
        _
      $region48: #{tpu_custom_call.1} parent=11 // pred_fallthru
        _
      // Predicated region
      $region49: #{tpu_custom_call.1} parent=11 // pred_check
        %p365 = pneg %p255
      $region50: #{tpu_custom_call.1} parent=11 // pred_check_branch
        %367 = sbr.rel (%p365) target = $region52
      $region51: #{tpu_custom_call.1} parent=11 // pred_region
        _
      $region52: #{tpu_custom_call.1} parent=11 // pred_fallthru
        _
      // Predicated region
      $region53: #{tpu_custom_call.1} parent=11 // pred_check
        %p368 = pneg %p276
      $region54: #{tpu_custom_call.1} parent=11 // pred_check_branch
        %370 = sbr.rel (%p368) target = $region56
      $region55: #{tpu_custom_call.1} parent=11 // pred_region
        _
      $region56: #{tpu_custom_call.1} parent=11 // pred_fallthru
        _
      // Predicated region
      $region57: #{tpu_custom_call.1} parent=11 // pred_check
        %p371 = pneg %p297
      $region58: #{tpu_custom_call.1} parent=11 // pred_check_branch
        %373 = sbr.rel (%p371) target = $region60
      $region59: #{tpu_custom_call.1} parent=11 // pred_region
        _
      $region60: #{tpu_custom_call.1} parent=11 // pred_fallthru
        _
    $region12: #{tpu_custom_call.1} parent=5 // pred_fallthru
      _
    %p374 = scmp.lt.s32.totalorder %s19, 2
    // Predicated region
    $region61: #{tpu_custom_call.1} parent=5 // pred_check
      %p375 = pneg %p374
    $region62: #{tpu_custom_call.1} parent=5 // pred_check_branch
      %377 = sbr.rel (%p375) target = $region64
    $region63: #{tpu_custom_call.1} parent=5 // pred_region
      // Predicated region
      $region65: #{tpu_custom_call.1} parent=63 // pred_check
        %p378 = pneg %p39
      $region66: #{tpu_custom_call.1} parent=63 // pred_check_branch
        %380 = sbr.rel (%p378) target = $region68
      $region67: #{tpu_custom_call.1} parent=63 // pred_region
        %p381 = scmp.lt.s32.totalorder %s19, 1
        %s382 = scalar_select %p381, %s19, 1
        %s383 = smul.addr %s382, 32
        %s384 = smul.addr %s383, 8
        %s385 = scalar_lea.vmem %s0, %s384
      $region68: #{tpu_custom_call.1} parent=63 // pred_fallthru
        _
    $region64: #{tpu_custom_call.1} parent=5 // pred_fallthru
      _
    %p386 = scmp.le.s32.totalorder 1, %s19
    %p387 = scmp.lt.s32.totalorder %s19, 3
    %p388 = pnand %p386, %p387
    %p389 = pneg %p388
    // Predicated region
    $region69: #{tpu_custom_call.1} parent=5 // pred_check
      _
    $region70: #{tpu_custom_call.1} parent=5 // pred_check_branch
      %391 = sbr.rel (%p388) target = $region72
    $region71: #{tpu_custom_call.1} parent=5 // pred_region
      %s392 = ssub.s32 %s19, 1
      %p393 = scmp.lt.s32.totalorder %s24, 1
      %s394 = scalar_select %p393, %s24, 1
      %s395 = smul.addr %s394, 32
      %s396 = smul.addr %s395, 8
      %s397 = scalar_lea.vmem %s0, %s396
      %p398 = pneg %p45
      %p399 = pneg %p42
      %p400 = pneg %p66
      %p401 = pneg %p63
      %p402 = pneg %p87
      %p403 = pneg %p84
      %p404 = pneg %p108
      %p405 = pneg %p105
      %p406 = pneg %p129
      %p407 = pneg %p126
      %p408 = pneg %p150
      %p409 = pneg %p147
      %p410 = pneg %p171
      %p411 = pneg %p168
      %p412 = pneg %p192
      %p413 = pneg %p189
      %p414 = pneg %p213
      %p415 = pneg %p210
      %p416 = pneg %p234
      %p417 = pneg %p231
      %p418 = pneg %p255
      %p419 = pneg %p252
      %p420 = pneg %p276
      %p421 = pneg %p273
      %p422 = pneg %p297
      %p423 = pneg %p294
      %p424 = pneg %p323
      %p425 = pneg %p320
      %p426 = scmp.lt.s32.totalorder %s24, 1
      %s427 = scalar_select %p426, %s24, 1
      %s428 = smul.addr %s427, 32
      %s429 = smul.addr %s428, 8
      %s430 = scalar_lea.vmem %s13, %s429
      %p431 = scmp.lt.s32.totalorder %s24, 1
      %s432 = scalar_select %p431, %s24, 1
      %s433 = smul.addr %s432, 32
      %s434 = smul.addr %s433, 8
      %s435 = scalar_lea.vmem %s0, %s434
      %p436 = scmp.lt.s32.totalorder %s24, 1
      %s437 = scalar_select %p436, %s24, 1
      %s438 = smul.addr %s437, 32
      %s439 = smul.addr %s438, 8
      %s440 = scalar_lea.vmem %s13, %s439
      %vm442 = vcmask 64512
      %443 = vst.msk [vmem:[#allocation2] sm:$0xff] %vm442, 0.0
      %444 = vst.msk [vmem:[#allocation2 + $0x8] sm:$0xff] %vm442, 0.0
      %vm445 = vcmask 58368
      %446 = vst.msk [vmem:[#allocation2 + $0x10] sm:$0x3] %vm445, 0.0
      %447 = vst.msk [vmem:[#allocation2 + $0x18] sm:$0xff] %vm442, 0.0
      %448 = vst.msk [vmem:[#allocation2 + $0x20] sm:$0xff] %vm442, 0.0
      %449 = vst.msk [vmem:[#allocation2 + $0x28] sm:$0x3] %vm445, 0.0
      %450 = vst.msk [vmem:[#allocation2 + $0x30] sm:$0xff] %vm442, 0.0
      %451 = vst.msk [vmem:[#allocation2 + $0x38] sm:$0xff] %vm442, 0.0
      %452 = vst.msk [vmem:[#allocation2 + $0x40] sm:$0x3] %vm445, 0.0
      %453 = vst.msk [vmem:[#allocation2 + $0x48] sm:$0xff] %vm442, 0.0
      %454 = vst.msk [vmem:[#allocation2 + $0x50] sm:$0xff] %vm442, 0.0
      %455 = vst.msk [vmem:[#allocation2 + $0x58] sm:$0x3] %vm445, 0.0
      %456 = vst.msk [vmem:[#allocation2 + $0x60] sm:$0xff] %vm442, 0.0
      %457 = vst.msk [vmem:[#allocation2 + $0x68] sm:$0xff] %vm442, 0.0
      %458 = vst.msk [vmem:[#allocation2 + $0x70] sm:$0x3] %vm445, 0.0
      %459 = vst.msk [vmem:[#allocation2 + $0x78] sm:$0xff] %vm442, 0.0
      %460 = vst.msk [vmem:[#allocation2 + $0x80] sm:$0xff] %vm442, 0.0
      %461 = vst.msk [vmem:[#allocation2 + $0x88] sm:$0x3] %vm445, 0.0
      %462 = vst.msk [vmem:[#allocation2 + $0x90] sm:$0xff] %vm442, 0.0
      %463 = vst.msk [vmem:[#allocation2 + $0x98] sm:$0xff] %vm442, 0.0
      %464 = vst.msk [vmem:[#allocation2 + $0xa0] sm:$0x3] %vm445, 0.0
      %465 = vst.msk [vmem:[#allocation2 + $0xa8] sm:$0xff] %vm442, 0.0
      %466 = vst.msk [vmem:[#allocation2 + $0xb0] sm:$0xff] %vm442, 0.0
      %467 = vst.msk [vmem:[#allocation2 + $0xb8] sm:$0x3] %vm445, 0.0
      %468 = vst.msk [vmem:[#allocation2 + $0xc0] sm:$0xff] %vm442, 0.0
      %469 = vst.msk [vmem:[#allocation2 + $0xc8] sm:$0xff] %vm442, 0.0
      %470 = vst.msk [vmem:[#allocation2 + $0xd0] sm:$0x3] %vm445, 0.0
      %471 = vst.msk [vmem:[#allocation2 + $0xd8] sm:$0xff] %vm442, 0.0
      %472 = vst.msk [vmem:[#allocation2 + $0xe0] sm:$0xff] %vm442, 0.0
      %473 = vst.msk [vmem:[#allocation2 + $0xe8] sm:$0x3] %vm445, 0.0
      %474 = vst.msk [vmem:[#allocation2 + $0xf0] sm:$0xff] %vm442, 0.0
      %475 = vst.msk [vmem:[#allocation2 + $0xf8] sm:$0xff] %vm442, 0.0
      %476 = vst.msk [vmem:[#allocation2 + $0x100] sm:$0x3] %vm445, 0.0
      %477 = vst.msk [vmem:[#allocation2 + $0x108] sm:$0xff] %vm442, 0.0
      %478 = vst.msk [vmem:[#allocation2 + $0x110] sm:$0xff] %vm442, 0.0
      %479 = vst.msk [vmem:[#allocation2 + $0x118] sm:$0x3] %vm445, 0.0
      %480 = vst.msk [vmem:[#allocation2 + $0x120] sm:$0xff] %vm442, 0.0
      %481 = vst.msk [vmem:[#allocation2 + $0x128] sm:$0xff] %vm442, 0.0
      %482 = vst.msk [vmem:[#allocation2 + $0x130] sm:$0x3] %vm445, 0.0
      %483 = vst.msk [vmem:[#allocation2 + $0x138] sm:$0xff] %vm442, 0.0
      %484 = vst.msk [vmem:[#allocation2 + $0x140] sm:$0xff] %vm442, 0.0
      %485 = vst.msk [vmem:[#allocation2 + $0x148] sm:$0x3] %vm445, 0.0
      %486 = vst.msk [vmem:[#allocation2 + $0x150] sm:$0xff] %vm442, 0.0
      %487 = vst.msk [vmem:[#allocation2 + $0x158] sm:$0xff] %vm442, 0.0
      %488 = vst.msk [vmem:[#allocation2 + $0x160] sm:$0x3] %vm445, 0.0
      %489 = vst.msk [vmem:[#allocation2 + $0x168] sm:$0xff] %vm442, 0.0
      %490 = vst.msk [vmem:[#allocation2 + $0x170] sm:$0xff] %vm442, 0.0
      %491 = vst.msk [vmem:[#allocation2 + $0x178] sm:$0x3] %vm445, 0.0
      %492 = vst.msk [vmem:[#allocation2 + $0x180] sm:$0xff] %vm442, 0.0
      %493 = vst.msk [vmem:[#allocation2 + $0x188] sm:$0xff] %vm442, 0.0
      %494 = vst.msk [vmem:[#allocation2 + $0x190] sm:$0x3] %vm445, 0.0
      %495 = vst.msk [vmem:[#allocation2 + $0x198] sm:$0xff] %vm442, 0.0
      %496 = vst.msk [vmem:[#allocation2 + $0x1a0] sm:$0xff] %vm442, 0.0
      %497 = vst.msk [vmem:[#allocation2 + $0x1a8] sm:$0x3] %vm445, 0.0
      %vm498 = vcmask 130048
      %499 = vst.msk [vmem:[#allocation3] sm:$0xff] %vm498, 0.0
      %500 = vst.msk [vmem:[#allocation3 + $0x8] sm:$0xff] %vm498, 0.0
      %vm501 = vcmask 123904
      %502 = vst.msk [vmem:[#allocation3 + $0x10] sm:$0x3] %vm501, 0.0
      %503 = vst.msk [vmem:[#allocation3 + $0x18] sm:$0xff] %vm498, 0.0
      %504 = vst.msk [vmem:[#allocation3 + $0x20] sm:$0xff] %vm498, 0.0
      %505 = vst.msk [vmem:[#allocation3 + $0x28] sm:$0x3] %vm501, 0.0
      %506 = vst.msk [vmem:[#allocation3 + $0x30] sm:$0xff] %vm498, 0.0
      %507 = vst.msk [vmem:[#allocation3 + $0x38] sm:$0xff] %vm498, 0.0
      %508 = vst.msk [vmem:[#allocation3 + $0x40] sm:$0x3] %vm501, 0.0
      %509 = vst.msk [vmem:[#allocation3 + $0x48] sm:$0xff] %vm498, 0.0
      %510 = vst.msk [vmem:[#allocation3 + $0x50] sm:$0xff] %vm498, 0.0
      %511 = vst.msk [vmem:[#allocation3 + $0x58] sm:$0x3] %vm501, 0.0
      %512 = vst.msk [vmem:[#allocation3 + $0x60] sm:$0xff] %vm498, 0.0
      %513 = vst.msk [vmem:[#allocation3 + $0x68] sm:$0xff] %vm498, 0.0
      %514 = vst.msk [vmem:[#allocation3 + $0x70] sm:$0x3] %vm501, 0.0
      %515 = vst.msk [vmem:[#allocation3 + $0x78] sm:$0xff] %vm498, 0.0
      %516 = vst.msk [vmem:[#allocation3 + $0x80] sm:$0xff] %vm498, 0.0
      %517 = vst.msk [vmem:[#allocation3 + $0x88] sm:$0x3] %vm501, 0.0
      %518 = vst.msk [vmem:[#allocation3 + $0x90] sm:$0xff] %vm498, 0.0
      %519 = vst.msk [vmem:[#allocation3 + $0x98] sm:$0xff] %vm498, 0.0
      %520 = vst.msk [vmem:[#allocation3 + $0xa0] sm:$0x3] %vm501, 0.0
      %521 = vst.msk [vmem:[#allocation3 + $0xa8] sm:$0xff] %vm498, 0.0
      %522 = vst.msk [vmem:[#allocation3 + $0xb0] sm:$0xff] %vm498, 0.0
      %523 = vst.msk [vmem:[#allocation3 + $0xb8] sm:$0x3] %vm501, 0.0
      %524 = vst.msk [vmem:[#allocation3 + $0xc0] sm:$0xff] %vm498, 0.0
      %525 = vst.msk [vmem:[#allocation3 + $0xc8] sm:$0xff] %vm498, 0.0
      %526 = vst.msk [vmem:[#allocation3 + $0xd0] sm:$0x3] %vm501, 0.0
      %527 = vst.msk [vmem:[#allocation3 + $0xd8] sm:$0xff] %vm498, 0.0
      %528 = vst.msk [vmem:[#allocation3 + $0xe0] sm:$0xff] %vm498, 0.0
      %529 = vst.msk [vmem:[#allocation3 + $0xe8] sm:$0x3] %vm501, 0.0
      %530 = vst.msk [vmem:[#allocation3 + $0xf0] sm:$0xff] %vm498, 0.0
      %531 = vst.msk [vmem:[#allocation3 + $0xf8] sm:$0xff] %vm498, 0.0
      %532 = vst.msk [vmem:[#allocation3 + $0x100] sm:$0x3] %vm501, 0.0
      %533 = vst.msk [vmem:[#allocation3 + $0x108] sm:$0xff] %vm498, 0.0
      %534 = vst.msk [vmem:[#allocation3 + $0x110] sm:$0xff] %vm498, 0.0
      %535 = vst.msk [vmem:[#allocation3 + $0x118] sm:$0x3] %vm501, 0.0
      %536 = vst.msk [vmem:[#allocation3 + $0x120] sm:$0xff] %vm498, 0.0
      %537 = vst.msk [vmem:[#allocation3 + $0x128] sm:$0xff] %vm498, 0.0
      %538 = vst.msk [vmem:[#allocation3 + $0x130] sm:$0x3] %vm501, 0.0
      %539 = vst.msk [vmem:[#allocation3 + $0x138] sm:$0xff] %vm498, 0.0
      %540 = vst.msk [vmem:[#allocation3 + $0x140] sm:$0xff] %vm498, 0.0
      %541 = vst.msk [vmem:[#allocation3 + $0x148] sm:$0x3] %vm501, 0.0
      %542 = vst.msk [vmem:[#allocation3 + $0x150] sm:$0xff] %vm498, 0.0
      %543 = vst.msk [vmem:[#allocation3 + $0x158] sm:$0xff] %vm498, 0.0
      %544 = vst.msk [vmem:[#allocation3 + $0x160] sm:$0x3] %vm501, 0.0
      %545 = vst.msk [vmem:[#allocation3 + $0x168] sm:$0xff] %vm498, 0.0
      %546 = vst.msk [vmem:[#allocation3 + $0x170] sm:$0xff] %vm498, 0.0
      %547 = vst.msk [vmem:[#allocation3 + $0x178] sm:$0x3] %vm501, 0.0
      %548 = vst.msk [vmem:[#allocation3 + $0x180] sm:$0xff] %vm498, 0.0
      %549 = vst.msk [vmem:[#allocation3 + $0x188] sm:$0xff] %vm498, 0.0
      %550 = vst.msk [vmem:[#allocation3 + $0x190] sm:$0x3] %vm501, 0.0
      %551 = vst.msk [vmem:[#allocation3 + $0x198] sm:$0xff] %vm498, 0.0
      %552 = vst.msk [vmem:[#allocation3 + $0x1a0] sm:$0xff] %vm498, 0.0
      %553 = vst.msk [vmem:[#allocation3 + $0x1a8] sm:$0x3] %vm501, 0.0
      %v554 = vld [vmem:[%s435] sm:$0xff]
      %v555 = vld [vmem:[%s435 + $0x8] sm:$0xff]
      %v556 = vld [vmem:[%s435 + $0x10] sm:$0xff]
      %v557 = vld [vmem:[%s435 + $0x18] sm:$0xff]
      %v558 = vld [vmem:[%s435 + $0x20] sm:$0xff]
      %v559 = vld [vmem:[%s435 + $0x28] sm:$0xff]
      %v560 = vld [vmem:[%s435 + $0x30] sm:$0xff]
      %v561 = vld [vmem:[%s435 + $0x38] sm:$0xff]
      %v562 = vld [vmem:[%s435 + $0x40] sm:$0xff]
      %v563 = vld [vmem:[%s435 + $0x48] sm:$0xff]
      %v564 = vld [vmem:[%s435 + $0x50] sm:$0xff]
      %v565 = vld [vmem:[%s435 + $0x58] sm:$0xff]
      %v566 = vld [vmem:[%s435 + $0x60] sm:$0xff]
      %v567 = vld [vmem:[%s435 + $0x68] sm:$0xff]
      %v568 = vld [vmem:[%s435 + $0x70] sm:$0xff]
      %v569 = vld [vmem:[%s435 + $0x78] sm:$0xff]
      %v570 = vld [vmem:[%s435 + $0x80] sm:$0xff]
      %v571 = vld [vmem:[%s435 + $0x88] sm:$0xff]
      %v572 = vld [vmem:[%s435 + $0x90] sm:$0xff]
      %v573 = vld [vmem:[%s435 + $0x98] sm:$0xff]
      %v574 = vld [vmem:[%s435 + $0xa0] sm:$0xff]
      %v575 = vld [vmem:[%s435 + $0xa8] sm:$0xff]
      %v576 = vld [vmem:[%s435 + $0xb0] sm:$0xff]
      %v577 = vld [vmem:[%s435 + $0xb8] sm:$0xff]
      %v578 = vld [vmem:[%s435 + $0xc0] sm:$0xff]
      %v579 = vld [vmem:[%s435 + $0xc8] sm:$0xff]
      %v580 = vld [vmem:[%s435 + $0xd0] sm:$0xff]
      %v581 = vld [vmem:[%s435 + $0xd8] sm:$0xff]
      %v582 = vld [vmem:[%s435 + $0xe0] sm:$0xff]
      %v583 = vld [vmem:[%s435 + $0xe8] sm:$0xff]
      %v584 = vld [vmem:[%s435 + $0xf0] sm:$0xff]
      %v585 = vld [vmem:[%s435 + $0xf8] sm:$0xff]
      %v586 = vld [vmem:[%s1] sm:$0x1]
      %v588 = vlaneseq
      %v589 = vshrl.u32 %v588, 7
      %v590 = vsub.s32 0, %v589
      %v591 = vrot.slane %v586, %v590
      %v593 = vmul.f32 %v554, %v591
      %v594 = vmul.f32 %v555, %v591
      %v595 = vmul.f32 %v556, %v591
      %v596 = vmul.f32 %v557, %v591
      %v597 = vmul.f32 %v558, %v591
      %v598 = vmul.f32 %v559, %v591
      %v599 = vmul.f32 %v560, %v591
      %v600 = vmul.f32 %v561, %v591
      %v601 = vmul.f32 %v562, %v591
      %v602 = vmul.f32 %v563, %v591
      %v603 = vmul.f32 %v564, %v591
      %v604 = vmul.f32 %v565, %v591
      %v605 = vmul.f32 %v566, %v591
      %v606 = vmul.f32 %v567, %v591
      %v607 = vmul.f32 %v568, %v591
      %v608 = vmul.f32 %v569, %v591
      %v609 = vmul.f32 %v570, %v591
      %v610 = vmul.f32 %v571, %v591
      %v611 = vmul.f32 %v572, %v591
      %v612 = vmul.f32 %v573, %v591
      %v613 = vmul.f32 %v574, %v591
      %v614 = vmul.f32 %v575, %v591
      %v615 = vmul.f32 %v576, %v591
      %v616 = vmul.f32 %v577, %v591
      %v617 = vmul.f32 %v578, %v591
      %v618 = vmul.f32 %v579, %v591
      %v619 = vmul.f32 %v580, %v591
      %v620 = vmul.f32 %v581, %v591
      %v621 = vmul.f32 %v582, %v591
      %v622 = vmul.f32 %v583, %v591
      %v623 = vmul.f32 %v584, %v591
      %v624 = vmul.f32 %v585, %v591
      %v625 = vld [vmem:[%s2] sm:$0x1]
      %v627 = vlaneseq
      %v628 = vshrl.u32 %v627, 7
      %v629 = vsub.s32 0, %v628
      %v630 = vrot.slane %v625, %v629
      %v632 = vadd.f32 %v593, %v630
      %v633 = vadd.f32 %v594, %v630
      %v634 = vadd.f32 %v595, %v630
      %v635 = vadd.f32 %v596, %v630
      %v636 = vadd.f32 %v597, %v630
      %v637 = vadd.f32 %v598, %v630
      %v638 = vadd.f32 %v599, %v630
      %v639 = vadd.f32 %v600, %v630
      %v640 = vadd.f32 %v601, %v630
      %v641 = vadd.f32 %v602, %v630
      %v642 = vadd.f32 %v603, %v630
      %v643 = vadd.f32 %v604, %v630
      %v644 = vadd.f32 %v605, %v630
      %v645 = vadd.f32 %v606, %v630
      %v646 = vadd.f32 %v607, %v630
      %v647 = vadd.f32 %v608, %v630
      %v648 = vadd.f32 %v609, %v630
      %v649 = vadd.f32 %v610, %v630
      %v650 = vadd.f32 %v611, %v630
      %v651 = vadd.f32 %v612, %v630
      %v652 = vadd.f32 %v613, %v630
      %v653 = vadd.f32 %v614, %v630
      %v654 = vadd.f32 %v615, %v630
      %v655 = vadd.f32 %v616, %v630
      %v656 = vadd.f32 %v617, %v630
      %v657 = vadd.f32 %v618, %v630
      %v658 = vadd.f32 %v619, %v630
      %v659 = vadd.f32 %v620, %v630
      %v660 = vadd.f32 %v621, %v630
      %v661 = vadd.f32 %v622, %v630
      %v662 = vadd.f32 %v623, %v630
      %v663 = vadd.f32 %v624, %v630
      %v664 = vpack.c.bf16 %v633, %v632
      %v665 = vpack.c.bf16 %v635, %v634
      %v666 = vpack.c.bf16 %v637, %v636
      %v667 = vpack.c.bf16 %v639, %v638
      %v668 = vpack.c.bf16 %v641, %v640
      %v669 = vpack.c.bf16 %v643, %v642
      %v670 = vpack.c.bf16 %v645, %v644
      %v671 = vpack.c.bf16 %v647, %v646
      %v672 = vpack.c.bf16 %v649, %v648
      %v673 = vpack.c.bf16 %v651, %v650
      %v674 = vpack.c.bf16 %v653, %v652
      %v675 = vpack.c.bf16 %v655, %v654
      %v676 = vpack.c.bf16 %v657, %v656
      %v677 = vpack.c.bf16 %v659, %v658
      %v678 = vpack.c.bf16 %v661, %v660
      %v679 = vpack.c.bf16 %v663, %v662
      %v680 = vld [vmem:[%s3] sm:$0xf]
      %v681 = vld [vmem:[%s4] sm:$0x1]
      %v683 = vlaneseq
      %v684 = vshrl.u32 %v683, 7
      %v685 = vsub.s32 0, %v684
      %v686 = vrot.slane %v681, %v685
      %v689 = vsel %vm442, %v664, 0
      %v692 = vsel %vm442, %v665, 0
      %v695 = vsel %vm442, %v666, 0
      %v698 = vsel %vm442, %v667, 0
      %v701 = vsel %vm442, %v668, 0
      %v704 = vsel %vm442, %v669, 0
      %v707 = vsel %vm442, %v670, 0
      %v710 = vsel %vm442, %v671, 0
      %v713 = vsel %vm442, %v672, 0
      %v716 = vsel %vm442, %v673, 0
      %v719 = vsel %vm442, %v674, 0
      %v722 = vsel %vm442, %v675, 0
      %v725 = vsel %vm442, %v676, 0
      %v728 = vsel %vm442, %v677, 0
      %v731 = vsel %vm442, %v678, 0
      %v734 = vsel %vm442, %v679, 0
      %vm736 = vcmask 1043456
      %v738 = vsel %vm736, %v680, 0
      %740 = vmatprep.subr.bf16.mxu0 0
      %741 = vmatpush1.bf16.msra.mxu0 %v738
      %742 = vmatprep.subr.bf16.mxu0 0
      %743 = vmatpush1.bf16.msra.mxu0 0
      %744 = vmatprep.subr.bf16.mxu0 0
      %745 = vmatpush1.bf16.msra.mxu0 0
      %746 = vmatprep.subr.bf16.mxu0 0
      %747 = vmatpush1.bf16.msra.mxu0 0
      %748 = vmatprep.subr.bf16.mxu0 0
      %749 = vmatpush1.bf16.msra.mxu0 0
      %750 = vmatprep.subr.bf16.mxu0 0
      %751 = vmatpush1.bf16.msra.mxu0 0
      %752 = vmatprep.subr.bf16.mxu0 0
      %753 = vmatpush1.bf16.msra.mxu0 0
      %754 = vmatprep.subr.bf16.mxu0 0
      %755 = vmatpush1.bf16.msra.mxu0 0
      %756 = vmatprep.subr.bf16.mxu0 0
      %757 = vmatpush1.bf16.msra.mxu0 0
      %758 = vmatprep.subr.bf16.mxu0 0
      %759 = vmatpush1.bf16.msra.mxu0 0
      %760 = vmatprep.subr.bf16.mxu0 0
      %761 = vmatpush1.bf16.msra.mxu0 0
      %762 = vmatprep.subr.bf16.mxu0 0
      %763 = vmatpush1.bf16.msra.mxu0 0
      %764 = vmatprep.subr.bf16.mxu0 0
      %765 = vmatpush1.bf16.msra.mxu0 0
      %766 = vmatprep.subr.bf16.mxu0 0
      %767 = vmatpush1.bf16.msra.mxu0 0
      %768 = vmatprep.subr.bf16.mxu0 0
      %769 = vmatpush1.bf16.msra.mxu0 0
      %770 = vmatprep.subr.bf16.mxu0 0
      %771 = vmatpush1.bf16.msra.mxu0 0
      %772 = vmatprep.mubr.bf16.mxu0 0
      %773 = vmatmul.mubr.bf16.gmra.mrb[0].mxu0 %v689
      %v774 = vpop.f32.mrb[0].mxu0
      %v775 = vadd.f32 %v686, %v774
      %v776 = vpop.f32.mrb[0].mxu0
      %v777 = vpop.f32.mrb[0].mxu0
      %v778 = vadd.f32 %v686, %v777
      %v779 = vpop.f32.mrb[0].mxu0
      %780 = vmatprep.mubr.bf16.mxu0 0
      %781 = vmatmul.mubr.bf16.gmra.mrb[0].mxu0 %v692
      %v782 = vpop.f32.mrb[0].mxu0
      %v783 = vadd.f32 %v686, %v782
      %v784 = vpop.f32.mrb[0].mxu0
      %v785 = vpop.f32.mrb[0].mxu0
      %v786 = vadd.f32 %v686, %v785
      %v787 = vpop.f32.mrb[0].mxu0
      %788 = vmatprep.mubr.bf16.mxu0 0
      %789 = vmatmul.mubr.bf16.gmra.mrb[0].mxu0 %v695
      %v790 = vpop.f32.mrb[0].mxu0
      %v791 = vadd.f32 %v686, %v790
      %v792 = vpop.f32.mrb[0].mxu0
      %v793 = vpop.f32.mrb[0].mxu0
      %v794 = vadd.f32 %v686, %v793
      %v795 = vpop.f32.mrb[0].mxu0
      %796 = vmatprep.mubr.bf16.mxu0 0
      %797 = vmatmul.mubr.bf16.gmra.mrb[0].mxu0 %v698
      %v798 = vpop.f32.mrb[0].mxu0
      %v799 = vadd.f32 %v686, %v798
      %v800 = vpop.f32.mrb[0].mxu0
      %v801 = vpop.f32.mrb[0].mxu0
      %v802 = vadd.f32 %v686, %v801
      %v803 = vpop.f32.mrb[0].mxu0
      %804 = vmatprep.mubr.bf16.mxu0 0
      %805 = vmatmul.mubr.bf16.gmra.mrb[0].mxu0 %v701
      %v806 = vpop.f32.mrb[0].mxu0
      %v807 = vadd.f32 %v686, %v806
      %v808 = vpop.f32.mrb[0].mxu0
      %v809 = vpop.f32.mrb[0].mxu0
      %v810 = vadd.f32 %v686, %v809
      %v811 = vpop.f32.mrb[0].mxu0
      %812 = vmatprep.mubr.bf16.mxu0 0
      %813 = vmatmul.mubr.bf16.gmra.mrb[0].mxu0 %v704
      %v814 = vpop.f32.mrb[0].mxu0
      %v815 = vadd.f32 %v686, %v814
      %v816 = vpop.f32.mrb[0].mxu0
      %v817 = vpop.f32.mrb[0].mxu0
      %v818 = vadd.f32 %v686, %v817
      %v819 = vpop.f32.mrb[0].mxu0
      %820 = vmatprep.mubr.bf16.mxu0 0
      %821 = vmatmul.mubr.bf16.gmra.mrb[0].mxu0 %v707
      %v822 = vpop.f32.mrb[0].mxu0
      %v823 = vadd.f32 %v686, %v822
      %v824 = vpop.f32.mrb[0].mxu0
      %v825 = vpop.f32.mrb[0].mxu0
      %v826 = vadd.f32 %v686, %v825
      %v827 = vpop.f32.mrb[0].mxu0
      %828 = vmatprep.mubr.bf16.mxu0 0
      %829 = vmatmul.mubr.bf16.gmra.mrb[0].mxu0 %v710
      %v830 = vpop.f32.mrb[0].mxu0
      %v831 = vadd.f32 %v686, %v830
      %v832 = vpop.f32.mrb[0].mxu0
      %v833 = vpop.f32.mrb[0].mxu0
      %v834 = vadd.f32 %v686, %v833
      %v835 = vpop.f32.mrb[0].mxu0
      %836 = vmatprep.mubr.bf16.mxu0 0
      %837 = vmatmul.mubr.bf16.gmra.mrb[0].mxu0 %v713
      %v838 = vpop.f32.mrb[0].mxu0
      %v839 = vadd.f32 %v686, %v838
      %v840 = vpop.f32.mrb[0].mxu0
      %v841 = vpop.f32.mrb[0].mxu0
      %v842 = vadd.f32 %v686, %v841
      %v843 = vpop.f32.mrb[0].mxu0
      %844 = vmatprep.mubr.bf16.mxu0 0
      %845 = vmatmul.mubr.bf16.gmra.mrb[0].mxu0 %v716
      %v846 = vpop.f32.mrb[0].mxu0
      %v847 = vadd.f32 %v686, %v846
      %v848 = vpop.f32.mrb[0].mxu0
      %v849 = vpop.f32.mrb[0].mxu0
      %v850 = vadd.f32 %v686, %v849
      %v851 = vpop.f32.mrb[0].mxu0
      %852 = vmatprep.mubr.bf16.mxu0 0
      %853 = vmatmul.mubr.bf16.gmra.mrb[0].mxu0 %v719
      %v854 = vpop.f32.mrb[0].mxu0
      %v855 = vadd.f32 %v686, %v854
      %v856 = vpop.f32.mrb[0].mxu0
      %v857 = vpop.f32.mrb[0].mxu0
      %v858 = vadd.f32 %v686, %v857
      %v859 = vpop.f32.mrb[0].mxu0
      %860 = vmatprep.mubr.bf16.mxu0 0
      %861 = vmatmul.mubr.bf16.gmra.mrb[0].mxu0 %v722
      %v862 = vpop.f32.mrb[0].mxu0
      %v863 = vadd.f32 %v686, %v862
      %v864 = vpop.f32.mrb[0].mxu0
      %v865 = vpop.f32.mrb[0].mxu0
      %v866 = vadd.f32 %v686, %v865
      %v867 = vpop.f32.mrb[0].mxu0
      %868 = vmatprep.mubr.bf16.mxu0 0
      %869 = vmatmul.mubr.bf16.gmra.mrb[0].mxu0 %v725
      %v870 = vpop.f32.mrb[0].mxu0
      %v871 = vadd.f32 %v686, %v870
      %v872 = vpop.f32.mrb[0].mxu0
      %v873 = vpop.f32.mrb[0].mxu0
      %v874 = vadd.f32 %v686, %v873
      %v875 = vpop.f32.mrb[0].mxu0
      %876 = vmatprep.mubr.bf16.mxu0 0
      %877 = vmatmul.mubr.bf16.gmra.mrb[0].mxu0 %v728
      %v878 = vpop.f32.mrb[0].mxu0
      %v879 = vadd.f32 %v686, %v878
      %v880 = vpop.f32.mrb[0].mxu0
      %v881 = vpop.f32.mrb[0].mxu0
      %v882 = vadd.f32 %v686, %v881
      %v883 = vpop.f32.mrb[0].mxu0
      %884 = vmatprep.mubr.bf16.mxu0 0
      %885 = vmatmul.mubr.bf16.gmra.mrb[0].mxu0 %v731
      %v886 = vpop.f32.mrb[0].mxu0
      %v887 = vadd.f32 %v686, %v886
      %v888 = vpop.f32.mrb[0].mxu0
      %v889 = vpop.f32.mrb[0].mxu0
      %v890 = vadd.f32 %v686, %v889
      %v891 = vpop.f32.mrb[0].mxu0
      %892 = vmatprep.mubr.bf16.mxu0 0
      %893 = vmatmul.mubr.bf16.gmra.mrb[0].mxu0 %v734
      %v894 = vpop.f32.mrb[0].mxu0
      %v895 = vadd.f32 %v686, %v894
      %v896 = vpop.f32.mrb[0].mxu0
      %v897 = vpop.f32.mrb[0].mxu0
      %v898 = vadd.f32 %v686, %v897
      %v899 = vpop.f32.mrb[0].mxu0
      %900 = vdwg.mxu0
      %v901 = vld [vmem:[%s5] sm:$0x1]
      %v903 = vlaneseq
      %v904 = vshrl.u32 %v903, 7
      %v905 = vsub.s32 0, %v904
      %v906 = vrot.slane %v901, %v905
      %v908 = vmul.f32 %v554, %v906
      %v909 = vmul.f32 %v555, %v906
      %v910 = vmul.f32 %v556, %v906
      %v911 = vmul.f32 %v557, %v906
      %v912 = vmul.f32 %v558, %v906
      %v913 = vmul.f32 %v559, %v906
      %v914 = vmul.f32 %v560, %v906
      %v915 = vmul.f32 %v561, %v906
      %v916 = vmul.f32 %v562, %v906
      %v917 = vmul.f32 %v563, %v906
      %v918 = vmul.f32 %v564, %v906
      %v919 = vmul.f32 %v565, %v906
      %v920 = vmul.f32 %v566, %v906
      %v921 = vmul.f32 %v567, %v906
      %v922 = vmul.f32 %v568, %v906
      %v923 = vmul.f32 %v569, %v906
      %v924 = vmul.f32 %v570, %v906
      %v925 = vmul.f32 %v571, %v906
      %v926 = vmul.f32 %v572, %v906
      %v927 = vmul.f32 %v573, %v906
      %v928 = vmul.f32 %v574, %v906
      %v929 = vmul.f32 %v575, %v906
      %v930 = vmul.f32 %v576, %v906
      %v931 = vmul.f32 %v577, %v906
      %v932 = vmul.f32 %v578, %v906
      %v933 = vmul.f32 %v579, %v906
      %v934 = vmul.f32 %v580, %v906
      %v935 = vmul.f32 %v581, %v906
      %v936 = vmul.f32 %v582, %v906
      %v937 = vmul.f32 %v583, %v906
      %v938 = vmul.f32 %v584, %v906
      %v939 = vmul.f32 %v585, %v906
      %v940 = vld [vmem:[%s6] sm:$0x1]
      %v942 = vlaneseq
      %v943 = vshrl.u32 %v942, 7
      %v944 = vsub.s32 0, %v943
      %v945 = vrot.slane %v940, %v944
      %v947 = vadd.f32 %v908, %v945
      %v948 = vadd.f32 %v909, %v945
      %v949 = vadd.f32 %v910, %v945
      %v950 = vadd.f32 %v911, %v945
      %v951 = vadd.f32 %v912, %v945
      %v952 = vadd.f32 %v913, %v945
      %v953 = vadd.f32 %v914, %v945
      %v954 = vadd.f32 %v915, %v945
      %v955 = vadd.f32 %v916, %v945
      %v956 = vadd.f32 %v917, %v945
      %v957 = vadd.f32 %v918, %v945
      %v958 = vadd.f32 %v919, %v945
      %v959 = vadd.f32 %v920, %v945
      %v960 = vadd.f32 %v921, %v945
      %v961 = vadd.f32 %v922, %v945
      %v962 = vadd.f32 %v923, %v945
      %v963 = vadd.f32 %v924, %v945
      %v964 = vadd.f32 %v925, %v945
      %v965 = vadd.f32 %v926, %v945
      %v966 = vadd.f32 %v927, %v945
      %v967 = vadd.f32 %v928, %v945
      %v968 = vadd.f32 %v929, %v945
      %v969 = vadd.f32 %v930, %v945
      %v970 = vadd.f32 %v931, %v945
      %v971 = vadd.f32 %v932, %v945
      %v972 = vadd.f32 %v933, %v945
      %v973 = vadd.f32 %v934, %v945
      %v974 = vadd.f32 %v935, %v945
      %v975 = vadd.f32 %v936, %v945
      %v976 = vadd.f32 %v937, %v945
      %v977 = vadd.f32 %v938, %v945
      %v978 = vadd.f32 %v939, %v945
      %v979 = vmax.f32 %v947, 0.0
      %v980 = vmax.f32 %v948, 0.0
      %v981 = vmax.f32 %v949, 0.0
      %v982 = vmax.f32 %v950, 0.0
      %v983 = vmax.f32 %v951, 0.0
      %v984 = vmax.f32 %v952, 0.0
      %v985 = vmax.f32 %v953, 0.0
      %v986 = vmax.f32 %v954, 0.0
      %v987 = vmax.f32 %v955, 0.0
      %v988 = vmax.f32 %v956, 0.0
      %v989 = vmax.f32 %v957, 0.0
      %v990 = vmax.f32 %v958, 0.0
      %v991 = vmax.f32 %v959, 0.0
      %v992 = vmax.f32 %v960, 0.0
      %v993 = vmax.f32 %v961, 0.0
      %v994 = vmax.f32 %v962, 0.0
      %v995 = vmax.f32 %v963, 0.0
      %v996 = vmax.f32 %v964, 0.0
      %v997 = vmax.f32 %v965, 0.0
      %v998 = vmax.f32 %v966, 0.0
      %v999 = vmax.f32 %v967, 0.0
      %v1000 = vmax.f32 %v968, 0.0
      %v1001 = vmax.f32 %v969, 0.0
      %v1002 = vmax.f32 %v970, 0.0
      %v1003 = vmax.f32 %v971, 0.0
      %v1004 = vmax.f32 %v972, 0.0
      %v1005 = vmax.f32 %v973, 0.0
      %v1006 = vmax.f32 %v974, 0.0
      %v1007 = vmax.f32 %v975, 0.0
      %v1008 = vmax.f32 %v976, 0.0
      %v1009 = vmax.f32 %v977, 0.0
      %v1010 = vmax.f32 %v978, 0.0
      %s1011 = scalar_lea.vmem [#allocation2], 24
      %1012 = vst.msk [vmem:[%s1011 + $0x1] sm:$0xff] %vm442, %v979
      %1013 = vst.msk [vmem:[%s1011 + $0x9] sm:$0xff] %vm442, %v980
      %1014 = vst.msk [vmem:[%s1011 + $0x19] sm:$0xff] %vm442, %v981
      %1015 = vst.msk [vmem:[%s1011 + $0x21] sm:$0xff] %vm442, %v982
      %1016 = vst.msk [vmem:[%s1011 + $0x31] sm:$0xff] %vm442, %v983
      %1017 = vst.msk [vmem:[%s1011 + $0x39] sm:$0xff] %vm442, %v984
      %1018 = vst.msk [vmem:[%s1011 + $0x49] sm:$0xff] %vm442, %v985
      %1019 = vst.msk [vmem:[%s1011 + $0x51] sm:$0xff] %vm442, %v986
      %1020 = vst.msk [vmem:[%s1011 + $0x61] sm:$0xff] %vm442, %v987
      %1021 = vst.msk [vmem:[%s1011 + $0x69] sm:$0xff] %vm442, %v988
      %1022 = vst.msk [vmem:[%s1011 + $0x79] sm:$0xff] %vm442, %v989
      %1023 = vst.msk [vmem:[%s1011 + $0x81] sm:$0xff] %vm442, %v990
      %1024 = vst.msk [vmem:[%s1011 + $0x91] sm:$0xff] %vm442, %v991
      %1025 = vst.msk [vmem:[%s1011 + $0x99] sm:$0xff] %vm442, %v992
      %1026 = vst.msk [vmem:[%s1011 + $0xa9] sm:$0xff] %vm442, %v993
      %1027 = vst.msk [vmem:[%s1011 + $0xb1] sm:$0xff] %vm442, %v994
      %1028 = vst.msk [vmem:[%s1011 + $0xc1] sm:$0xff] %vm442, %v995
      %1029 = vst.msk [vmem:[%s1011 + $0xc9] sm:$0xff] %vm442, %v996
      %1030 = vst.msk [vmem:[%s1011 + $0xd9] sm:$0xff] %vm442, %v997
      %1031 = vst.msk [vmem:[%s1011 + $0xe1] sm:$0xff] %vm442, %v998
      %1032 = vst.msk [vmem:[%s1011 + $0xf1] sm:$0xff] %vm442, %v999
      %1033 = vst.msk [vmem:[%s1011 + $0xf9] sm:$0xff] %vm442, %v1000
      %1034 = vst.msk [vmem:[%s1011 + $0x109] sm:$0xff] %vm442, %v1001
      %1035 = vst.msk [vmem:[%s1011 + $0x111] sm:$0xff] %vm442, %v1002
      %1036 = vst.msk [vmem:[%s1011 + $0x121] sm:$0xff] %vm442, %v1003
      %1037 = vst.msk [vmem:[%s1011 + $0x129] sm:$0xff] %vm442, %v1004
      %1038 = vst.msk [vmem:[%s1011 + $0x139] sm:$0xff] %vm442, %v1005
      %1039 = vst.msk [vmem:[%s1011 + $0x141] sm:$0xff] %vm442, %v1006
      %1040 = vst.msk [vmem:[%s1011 + $0x151] sm:$0xff] %vm442, %v1007
      %1041 = vst.msk [vmem:[%s1011 + $0x159] sm:$0xff] %vm442, %v1008
      %1042 = vst.msk [vmem:[%s1011 + $0x169] sm:$0xff] %vm442, %v1009
      %1043 = vst.msk [vmem:[%s1011 + $0x171] sm:$0xff] %vm442, %v1010
      %v1044 = vld [vmem:[%s7] sm:$0xf]
      %v1045 = vld [vmem:[%s7 + $0x4] sm:$0xf]
      %v1046 = vld [vmem:[%s7 + $0x8] sm:$0xf]
      %v1047 = vld [vmem:[%s7 + $0xc] sm:$0xf]
      %v1048 = vld [vmem:[%s7 + $0x10] sm:$0xf]
      %v1049 = vld [vmem:[%s7 + $0x14] sm:$0xf]
      %v1050 = vld [vmem:[%s7 + $0x18] sm:$0xf]
      %v1051 = vld [vmem:[%s7 + $0x1c] sm:$0xf]
      %v1052 = vld [vmem:[%s7 + $0x20] sm:$0xf]
      %v1053 = vld [vmem:[#allocation2] sm:$0xff]
      %v1054 = vld [vmem:[#allocation2 + $0x8] sm:$0xff]
      %v1055 = vld [vmem:[#allocation2 + $0x18] sm:$0xff]
      %v1056 = vld [vmem:[#allocation2 + $0x20] sm:$0xff]
      %v1057 = vld [vmem:[#allocation2 + $0x30] sm:$0xff]
      %v1058 = vld [vmem:[#allocation2 + $0x38] sm:$0xff]
      %v1059 = vld [vmem:[#allocation2 + $0x48] sm:$0xff]
      %v1060 = vld [vmem:[#allocation2 + $0x50] sm:$0xff]
      %v1061 = vld [vmem:[#allocation2 + $0x60] sm:$0xff]
      %v1062 = vld [vmem:[#allocation2 + $0x68] sm:$0xff]
      %v1063 = vld [vmem:[#allocation2 + $0x78] sm:$0xff]
      %v1064 = vld [vmem:[#allocation2 + $0x80] sm:$0xff]
      %v1065 = vld [vmem:[#allocation2 + $0x90] sm:$0xff]
      %v1066 = vld [vmem:[#allocation2 + $0x98] sm:$0xff]
      %v1067 = vld [vmem:[#allocation2 + $0xa8] sm:$0xff]
      %v1068 = vld [vmem:[#allocation2 + $0xb0] sm:$0xff]
      %v1069 = vld [vmem:[#allocation2 + $0xc0] sm:$0xff]
      %v1070 = vld [vmem:[#allocation2 + $0xc8] sm:$0xff]
      %v1071 = vld [vmem:[#allocation2 + $0xd8] sm:$0xff]
      %v1072 = vld [vmem:[#allocation2 + $0xe0] sm:$0xff]
      %v1073 = vld [vmem:[#allocation2 + $0xf0] sm:$0xff]
      %v1074 = vld [vmem:[#allocation2 + $0xf8] sm:$0xff]
      %v1075 = vld [vmem:[#allocation2 + $0x108] sm:$0xff]
      %v1076 = vld [vmem:[#allocation2 + $0x110] sm:$0xff]
      %v1077 = vld [vmem:[#allocation2 + $0x120] sm:$0xff]
      %v1078 = vld [vmem:[#allocation2 + $0x128] sm:$0xff]
      %v1079 = vld [vmem:[#allocation2 + $0x138] sm:$0xff]
      %v1080 = vld [vmem:[#allocation2 + $0x140] sm:$0xff]
      %v1081 = vld [vmem:[#allocation2 + $0x150] sm:$0xff]
      %v1082 = vld [vmem:[#allocation2 + $0x158] sm:$0xff]
      %v1083 = vld [vmem:[#allocation2 + $0x168] sm:$0xff]
      %v1084 = vld [vmem:[#allocation2 + $0x170] sm:$0xff]
      %v1085 = vld [vmem:[#allocation2 + $0x1] sm:$0xff]
      %v1086 = vld [vmem:[#allocation2 + $0x9] sm:$0xff]
      %v1087 = vld [vmem:[#allocation2 + $0x19] sm:$0xff]
      %v1088 = vld [vmem:[#allocation2 + $0x21] sm:$0xff]
      %v1089 = vld [vmem:[#allocation2 + $0x31] sm:$0xff]
      %v1090 = vld [vmem:[#allocation2 + $0x39] sm:$0xff]
      %v1091 = vld [vmem:[#allocation2 + $0x49] sm:$0xff]
      %v1092 = vld [vmem:[#allocation2 + $0x51] sm:$0xff]
      %v1093 = vld [vmem:[#allocation2 + $0x61] sm:$0xff]
      %v1094 = vld [vmem:[#allocation2 + $0x69] sm:$0xff]
      %v1095 = vld [vmem:[#allocation2 + $0x79] sm:$0xff]
      %v1096 = vld [vmem:[#allocation2 + $0x81] sm:$0xff]
      %v1097 = vld [vmem:[#allocation2 + $0x91] sm:$0xff]
      %v1098 = vld [vmem:[#allocation2 + $0x99] sm:$0xff]
      %v1099 = vld [vmem:[#allocation2 + $0xa9] sm:$0xff]
      %v1100 = vld [vmem:[#allocation2 + $0xb1] sm:$0xff]
      %v1101 = vld [vmem:[#allocation2 + $0xc1] sm:$0xff]
      %v1102 = vld [vmem:[#allocation2 + $0xc9] sm:$0xff]
      %v1103 = vld [vmem:[#allocation2 + $0xd9] sm:$0xff]
      %v1104 = vld [vmem:[#allocation2 + $0xe1] sm:$0xff]
      %v1105 = vld [vmem:[#allocation2 + $0xf1] sm:$0xff]
      %v1106 = vld [vmem:[#allocation2 + $0xf9] sm:$0xff]
      %v1107 = vld [vmem:[#allocation2 + $0x109] sm:$0xff]
      %v1108 = vld [vmem:[#allocation2 + $0x111] sm:$0xff]
      %v1109 = vld [vmem:[#allocation2 + $0x121] sm:$0xff]
      %v1110 = vld [vmem:[#allocation2 + $0x129] sm:$0xff]
      %v1111 = vld [vmem:[#allocation2 + $0x139] sm:$0xff]
      %v1112 = vld [vmem:[#allocation2 + $0x141] sm:$0xff]
      %v1113 = vld [vmem:[#allocation2 + $0x151] sm:$0xff]
      %v1114 = vld [vmem:[#allocation2 + $0x159] sm:$0xff]
      %v1115 = vld [vmem:[#allocation2 + $0x169] sm:$0xff]
      %v1116 = vld [vmem:[#allocation2 + $0x171] sm:$0xff]
      %v1117 = vld [vmem:[#allocation2 + $0x2] sm:$0xff]
      %v1118 = vld [vmem:[#allocation2 + $0xa] sm:$0xff]
      %v1119 = vld [vmem:[#allocation2 + $0x1a] sm:$0xff]
      %v1120 = vld [vmem:[#allocation2 + $0x22] sm:$0xff]
      %v1121 = vld [vmem:[#allocation2 + $0x32] sm:$0xff]
      %v1122 = vld [vmem:[#allocation2 + $0x3a] sm:$0xff]
      %v1123 = vld [vmem:[#allocation2 + $0x4a] sm:$0xff]
      %v1124 = vld [vmem:[#allocation2 + $0x52] sm:$0xff]
      %v1125 = vld [vmem:[#allocation2 + $0x62] sm:$0xff]
      %v1126 = vld [vmem:[#allocation2 + $0x6a] sm:$0xff]
      %v1127 = vld [vmem:[#allocation2 + $0x7a] sm:$0xff]
      %v1128 = vld [vmem:[#allocation2 + $0x82] sm:$0xff]
      %v1129 = vld [vmem:[#allocation2 + $0x92] sm:$0xff]
      %v1130 = vld [vmem:[#allocation2 + $0x9a] sm:$0xff]
      %v1131 = vld [vmem:[#allocation2 + $0xaa] sm:$0xff]
      %v1132 = vld [vmem:[#allocation2 + $0xb2] sm:$0xff]
      %v1133 = vld [vmem:[#allocation2 + $0xc2] sm:$0xff]
      %v1134 = vld [vmem:[#allocation2 + $0xca] sm:$0xff]
      %v1135 = vld [vmem:[#allocation2 + $0xda] sm:$0xff]
      %v1136 = vld [vmem:[#allocation2 + $0xe2] sm:$0xff]
      %v1137 = vld [vmem:[#allocation2 + $0xf2] sm:$0xff]
      %v1138 = vld [vmem:[#allocation2 + $0xfa] sm:$0xff]
      %v1139 = vld [vmem:[#allocation2 + $0x10a] sm:$0xff]
      %v1140 = vld [vmem:[#allocation2 + $0x112] sm:$0xff]
      %v1141 = vld [vmem:[#allocation2 + $0x122] sm:$0xff]
      %v1142 = vld [vmem:[#allocation2 + $0x12a] sm:$0xff]
      %v1143 = vld [vmem:[#allocation2 + $0x13a] sm:$0xff]
      %v1144 = vld [vmem:[#allocation2 + $0x142] sm:$0xff]
      %v1145 = vld [vmem:[#allocation2 + $0x152] sm:$0xff]
      %v1146 = vld [vmem:[#allocation2 + $0x15a] sm:$0xff]
      %v1147 = vld [vmem:[#allocation2 + $0x16a] sm:$0xff]
      %v1148 = vld [vmem:[#allocation2 + $0x172] sm:$0xff]
      %v1149 = vld [vmem:[%s1011] sm:$0xff]
      %v1150 = vld [vmem:[%s1011 + $0x8] sm:$0xff]
      %v1151 = vld [vmem:[%s1011 + $0x18] sm:$0xff]
      %v1152 = vld [vmem:[%s1011 + $0x20] sm:$0xff]
      %v1153 = vld [vmem:[%s1011 + $0x30] sm:$0xff]
      %v1154 = vld [vmem:[%s1011 + $0x38] sm:$0xff]
      %v1155 = vld [vmem:[%s1011 + $0x48] sm:$0xff]
      %v1156 = vld [vmem:[%s1011 + $0x50] sm:$0xff]
      %v1157 = vld [vmem:[%s1011 + $0x60] sm:$0xff]
      %v1158 = vld [vmem:[%s1011 + $0x68] sm:$0xff]
      %v1159 = vld [vmem:[%s1011 + $0x78] sm:$0xff]
      %v1160 = vld [vmem:[%s1011 + $0x80] sm:$0xff]
      %v1161 = vld [vmem:[%s1011 + $0x90] sm:$0xff]
      %v1162 = vld [vmem:[%s1011 + $0x98] sm:$0xff]
      %v1163 = vld [vmem:[%s1011 + $0xa8] sm:$0xff]
      %v1164 = vld [vmem:[%s1011 + $0xb0] sm:$0xff]
      %v1165 = vld [vmem:[%s1011 + $0xc0] sm:$0xff]
      %v1166 = vld [vmem:[%s1011 + $0xc8] sm:$0xff]
      %v1167 = vld [vmem:[%s1011 + $0xd8] sm:$0xff]
      %v1168 = vld [vmem:[%s1011 + $0xe0] sm:$0xff]
      %v1169 = vld [vmem:[%s1011 + $0xf0] sm:$0xff]
      %v1170 = vld [vmem:[%s1011 + $0xf8] sm:$0xff]
      %v1171 = vld [vmem:[%s1011 + $0x108] sm:$0xff]
      %v1172 = vld [vmem:[%s1011 + $0x110] sm:$0xff]
      %v1173 = vld [vmem:[%s1011 + $0x120] sm:$0xff]
      %v1174 = vld [vmem:[%s1011 + $0x128] sm:$0xff]
      %v1175 = vld [vmem:[%s1011 + $0x138] sm:$0xff]
      %v1176 = vld [vmem:[%s1011 + $0x140] sm:$0xff]
      %v1177 = vld [vmem:[%s1011 + $0x150] sm:$0xff]
      %v1178 = vld [vmem:[%s1011 + $0x158] sm:$0xff]
      %v1179 = vld [vmem:[%s1011 + $0x168] sm:$0xff]
      %v1180 = vld [vmem:[%s1011 + $0x170] sm:$0xff]
      %v1181 = vld [vmem:[%s1011 + $0x1] sm:$0xff]
      %v1182 = vld [vmem:[%s1011 + $0x9] sm:$0xff]
      %v1183 = vld [vmem:[%s1011 + $0x19] sm:$0xff]
      %v1184 = vld [vmem:[%s1011 + $0x21] sm:$0xff]
      %v1185 = vld [vmem:[%s1011 + $0x31] sm:$0xff]
      %v1186 = vld [vmem:[%s1011 + $0x39] sm:$0xff]
      %v1187 = vld [vmem:[%s1011 + $0x49] sm:$0xff]
      %v1188 = vld [vmem:[%s1011 + $0x51] sm:$0xff]
      %v1189 = vld [vmem:[%s1011 + $0x61] sm:$0xff]
      %v1190 = vld [vmem:[%s1011 + $0x69] sm:$0xff]
      %v1191 = vld [vmem:[%s1011 + $0x79] sm:$0xff]
      %v1192 = vld [vmem:[%s1011 + $0x81] sm:$0xff]
      %v1193 = vld [vmem:[%s1011 + $0x91] sm:$0xff]
      %v1194 = vld [vmem:[%s1011 + $0x99] sm:$0xff]
      %v1195 = vld [vmem:[%s1011 + $0xa9] sm:$0xff]
      %v1196 = vld [vmem:[%s1011 + $0xb1] sm:$0xff]
      %v1197 = vld [vmem:[%s1011 + $0xc1] sm:$0xff]
      %v1198 = vld [vmem:[%s1011 + $0xc9] sm:$0xff]
      %v1199 = vld [vmem:[%s1011 + $0xd9] sm:$0xff]
      %v1200 = vld [vmem:[%s1011 + $0xe1] sm:$0xff]
      %v1201 = vld [vmem:[%s1011 + $0xf1] sm:$0xff]
      %v1202 = vld [vmem:[%s1011 + $0xf9] sm:$0xff]
      %v1203 = vld [vmem:[%s1011 + $0x109] sm:$0xff]
      %v1204 = vld [vmem:[%s1011 + $0x111] sm:$0xff]
      %v1205 = vld [vmem:[%s1011 + $0x121] sm:$0xff]
      %v1206 = vld [vmem:[%s1011 + $0x129] sm:$0xff]
      %v1207 = vld [vmem:[%s1011 + $0x139] sm:$0xff]
      %v1208 = vld [vmem:[%s1011 + $0x141] sm:$0xff]
      %v1209 = vld [vmem:[%s1011 + $0x151] sm:$0xff]
      %v1210 = vld [vmem:[%s1011 + $0x159] sm:$0xff]
      %v1211 = vld [vmem:[%s1011 + $0x169] sm:$0xff]
      %v1212 = vld [vmem:[%s1011 + $0x171] sm:$0xff]
      %v1213 = vld [vmem:[%s1011 + $0x2] sm:$0xff]
      %v1214 = vld [vmem:[%s1011 + $0xa] sm:$0xff]
      %v1215 = vld [vmem:[%s1011 + $0x1a] sm:$0xff]
      %v1216 = vld [vmem:[%s1011 + $0x22] sm:$0xff]
      %v1217 = vld [vmem:[%s1011 + $0x32] sm:$0xff]
      %v1218 = vld [vmem:[%s1011 + $0x3a] sm:$0xff]
      %v1219 = vld [vmem:[%s1011 + $0x4a] sm:$0xff]
      %v1220 = vld [vmem:[%s1011 + $0x52] sm:$0xff]
      %v1221 = vld [vmem:[%s1011 + $0x62] sm:$0xff]
      %v1222 = vld [vmem:[%s1011 + $0x6a] sm:$0xff]
      %v1223 = vld [vmem:[%s1011 + $0x7a] sm:$0xff]
      %v1224 = vld [vmem:[%s1011 + $0x82] sm:$0xff]
      %v1225 = vld [vmem:[%s1011 + $0x92] sm:$0xff]
      %v1226 = vld [vmem:[%s1011 + $0x9a] sm:$0xff]
      %v1227 = vld [vmem:[%s1011 + $0xaa] sm:$0xff]
      %v1228 = vld [vmem:[%s1011 + $0xb2] sm:$0xff]
      %v1229 = vld [vmem:[%s1011 + $0xc2] sm:$0xff]
      %v1230 = vld [vmem:[%s1011 + $0xca] sm:$0xff]
      %v1231 = vld [vmem:[%s1011 + $0xda] sm:$0xff]
      %v1232 = vld [vmem:[%s1011 + $0xe2] sm:$0xff]
      %v1233 = vld [vmem:[%s1011 + $0xf2] sm:$0xff]
      %v1234 = vld [vmem:[%s1011 + $0xfa] sm:$0xff]
      %v1235 = vld [vmem:[%s1011 + $0x10a] sm:$0xff]
      %v1236 = vld [vmem:[%s1011 + $0x112] sm:$0xff]
      %v1237 = vld [vmem:[%s1011 + $0x122] sm:$0xff]
      %v1238 = vld [vmem:[%s1011 + $0x12a] sm:$0xff]
      %v1239 = vld [vmem:[%s1011 + $0x13a] sm:$0xff]
      %v1240 = vld [vmem:[%s1011 + $0x142] sm:$0xff]
      %v1241 = vld [vmem:[%s1011 + $0x152] sm:$0xff]
      %v1242 = vld [vmem:[%s1011 + $0x15a] sm:$0xff]
      %v1243 = vld [vmem:[%s1011 + $0x16a] sm:$0xff]
      %v1244 = vld [vmem:[%s1011 + $0x172] sm:$0xff]
      %s1245 = scalar_lea.vmem [#allocation2], 48
      %v1246 = vld [vmem:[%s1245] sm:$0xff]
      %v1247 = vld [vmem:[%s1245 + $0x8] sm:$0xff]
      %v1248 = vld [vmem:[%s1245 + $0x18] sm:$0xff]
      %v1249 = vld [vmem:[%s1245 + $0x20] sm:$0xff]
      %v1250 = vld [vmem:[%s1245 + $0x30] sm:$0xff]
      %v1251 = vld [vmem:[%s1245 + $0x38] sm:$0xff]
      %v1252 = vld [vmem:[%s1245 + $0x48] sm:$0xff]
      %v1253 = vld [vmem:[%s1245 + $0x50] sm:$0xff]
      %v1254 = vld [vmem:[%s1245 + $0x60] sm:$0xff]
      %v1255 = vld [vmem:[%s1245 + $0x68] sm:$0xff]
      %v1256 = vld [vmem:[%s1245 + $0x78] sm:$0xff]
      %v1257 = vld [vmem:[%s1245 + $0x80] sm:$0xff]
      %v1258 = vld [vmem:[%s1245 + $0x90] sm:$0xff]
      %v1259 = vld [vmem:[%s1245 + $0x98] sm:$0xff]
      %v1260 = vld [vmem:[%s1245 + $0xa8] sm:$0xff]
      %v1261 = vld [vmem:[%s1245 + $0xb0] sm:$0xff]
      %v1262 = vld [vmem:[%s1245 + $0xc0] sm:$0xff]
      %v1263 = vld [vmem:[%s1245 + $0xc8] sm:$0xff]
      %v1264 = vld [vmem:[%s1245 + $0xd8] sm:$0xff]
      %v1265 = vld [vmem:[%s1245 + $0xe0] sm:$0xff]
      %v1266 = vld [vmem:[%s1245 + $0xf0] sm:$0xff]
      %v1267 = vld [vmem:[%s1245 + $0xf8] sm:$0xff]
      %v1268 = vld [vmem:[%s1245 + $0x108] sm:$0xff]
      %v1269 = vld [vmem:[%s1245 + $0x110] sm:$0xff]
      %v1270 = vld [vmem:[%s1245 + $0x120] sm:$0xff]
      %v1271 = vld [vmem:[%s1245 + $0x128] sm:$0xff]
      %v1272 = vld [vmem:[%s1245 + $0x138] sm:$0xff]
      %v1273 = vld [vmem:[%s1245 + $0x140] sm:$0xff]
      %v1274 = vld [vmem:[%s1245 + $0x150] sm:$0xff]
      %v1275 = vld [vmem:[%s1245 + $0x158] sm:$0xff]
      %v1276 = vld [vmem:[%s1245 + $0x168] sm:$0xff]
      %v1277 = vld [vmem:[%s1245 + $0x170] sm:$0xff]
      %v1278 = vld [vmem:[%s1245 + $0x1] sm:$0xff]
      %v1279 = vld [vmem:[%s1245 + $0x9] sm:$0xff]
      %v1280 = vld [vmem:[%s1245 + $0x19] sm:$0xff]
      %v1281 = vld [vmem:[%s1245 + $0x21] sm:$0xff]
      %v1282 = vld [vmem:[%s1245 + $0x31] sm:$0xff]
      %v1283 = vld [vmem:[%s1245 + $0x39] sm:$0xff]
      %v1284 = vld [vmem:[%s1245 + $0x49] sm:$0xff]
      %v1285 = vld [vmem:[%s1245 + $0x51] sm:$0xff]
      %v1286 = vld [vmem:[%s1245 + $0x61] sm:$0xff]
      %v1287 = vld [vmem:[%s1245 + $0x69] sm:$0xff]
      %v1288 = vld [vmem:[%s1245 + $0x79] sm:$0xff]
      %v1289 = vld [vmem:[%s1245 + $0x81] sm:$0xff]
      %v1290 = vld [vmem:[%s1245 + $0x91] sm:$0xff]
      %v1291 = vld [vmem:[%s1245 + $0x99] sm:$0xff]
      %v1292 = vld [vmem:[%s1245 + $0xa9] sm:$0xff]
      %v1293 = vld [vmem:[%s1245 + $0xb1] sm:$0xff]
      %v1294 = vld [vmem:[%s1245 + $0xc1] sm:$0xff]
      %v1295 = vld [vmem:[%s1245 + $0xc9] sm:$0xff]
      %v1296 = vld [vmem:[%s1245 + $0xd9] sm:$0xff]
      %v1297 = vld [vmem:[%s1245 + $0xe1] sm:$0xff]
      %v1298 = vld [vmem:[%s1245 + $0xf1] sm:$0xff]
      %v1299 = vld [vmem:[%s1245 + $0xf9] sm:$0xff]
      %v1300 = vld [vmem:[%s1245 + $0x109] sm:$0xff]
      %v1301 = vld [vmem:[%s1245 + $0x111] sm:$0xff]
      %v1302 = vld [vmem:[%s1245 + $0x121] sm:$0xff]
      %v1303 = vld [vmem:[%s1245 + $0x129] sm:$0xff]
      %v1304 = vld [vmem:[%s1245 + $0x139] sm:$0xff]
      %v1305 = vld [vmem:[%s1245 + $0x141] sm:$0xff]
      %v1306 = vld [vmem:[%s1245 + $0x151] sm:$0xff]
      %v1307 = vld [vmem:[%s1245 + $0x159] sm:$0xff]
      %v1308 = vld [vmem:[%s1245 + $0x169] sm:$0xff]
      %v1309 = vld [vmem:[%s1245 + $0x171] sm:$0xff]
      %v1310 = vld [vmem:[%s1245 + $0x2] sm:$0xff]
      %v1311 = vld [vmem:[%s1245 + $0xa] sm:$0xff]
      %v1312 = vld [vmem:[%s1245 + $0x1a] sm:$0xff]
      %v1313 = vld [vmem:[%s1245 + $0x22] sm:$0xff]
      %v1314 = vld [vmem:[%s1245 + $0x32] sm:$0xff]
      %v1315 = vld [vmem:[%s1245 + $0x3a] sm:$0xff]
      %v1316 = vld [vmem:[%s1245 + $0x4a] sm:$0xff]
      %v1317 = vld [vmem:[%s1245 + $0x52] sm:$0xff]
      %v1318 = vld [vmem:[%s1245 + $0x62] sm:$0xff]
      %v1319 = vld [vmem:[%s1245 + $0x6a] sm:$0xff]
      %v1320 = vld [vmem:[%s1245 + $0x7a] sm:$0xff]
      %v1321 = vld [vmem:[%s1245 + $0x82] sm:$0xff]
      %v1322 = vld [vmem:[%s1245 + $0x92] sm:$0xff]
      %v1323 = vld [vmem:[%s1245 + $0x9a] sm:$0xff]
      %v1324 = vld [vmem:[%s1245 + $0xaa] sm:$0xff]
      %v1325 = vld [vmem:[%s1245 + $0xb2] sm:$0xff]
      %v1326 = vld [vmem:[%s1245 + $0xc2] sm:$0xff]
      %v1327 = vld [vmem:[%s1245 + $0xca] sm:$0xff]
      %v1328 = vld [vmem:[%s1245 + $0xda] sm:$0xff]
      %v1329 = vld [vmem:[%s1245 + $0xe2] sm:$0xff]
      %v1330 = vld [vmem:[%s1245 + $0xf2] sm:$0xff]
      %v1331 = vld [vmem:[%s1245 + $0xfa] sm:$0xff]
      %v1332 = vld [vmem:[%s1245 + $0x10a] sm:$0xff]
      %v1333 = vld [vmem:[%s1245 + $0x112] sm:$0xff]
      %v1334 = vld [vmem:[%s1245 + $0x122] sm:$0xff]
      %v1335 = vld [vmem:[%s1245 + $0x12a] sm:$0xff]
      %v1336 = vld [vmem:[%s1245 + $0x13a] sm:$0xff]
      %v1337 = vld [vmem:[%s1245 + $0x142] sm:$0xff]
      %v1338 = vld [vmem:[%s1245 + $0x152] sm:$0xff]
      %v1339 = vld [vmem:[%s1245 + $0x15a] sm:$0xff]
      %v1340 = vld [vmem:[%s1245 + $0x16a] sm:$0xff]
      %v1341 = vld [vmem:[%s1245 + $0x172] sm:$0xff]
      %1374 = vrot.lane.b32.xlu0 %v1085, 8
      %v1375 = vpop.permute.xlu0 %1374
      %1376 = vrot.lane.b32.xlu0 %v1086, 8
      %v1377 = vpop.permute.xlu0 %1376
      %1378 = vrot.lane.b32.xlu0 %v1087, 8
      %v1379 = vpop.permute.xlu0 %1378
      %1380 = vrot.lane.b32.xlu0 %v1088, 8
      %v1381 = vpop.permute.xlu0 %1380
      %1382 = vrot.lane.b32.xlu0 %v1089, 8
      %v1383 = vpop.permute.xlu0 %1382
      %1384 = vrot.lane.b32.xlu0 %v1090, 8
      %v1385 = vpop.permute.xlu0 %1384
      %1386 = vrot.lane.b32.xlu0 %v1091, 8
      %v1387 = vpop.permute.xlu0 %1386
      %1388 = vrot.lane.b32.xlu0 %v1092, 8
      %v1389 = vpop.permute.xlu0 %1388
      %1390 = vrot.lane.b32.xlu0 %v1093, 8
      %v1391 = vpop.permute.xlu0 %1390
      %1392 = vrot.lane.b32.xlu0 %v1094, 8
      %v1393 = vpop.permute.xlu0 %1392
      %1394 = vrot.lane.b32.xlu0 %v1095, 8
      %v1395 = vpop.permute.xlu0 %1394
      %1396 = vrot.lane.b32.xlu0 %v1096, 8
      %v1397 = vpop.permute.xlu0 %1396
      %1398 = vrot.lane.b32.xlu0 %v1097, 8
      %v1399 = vpop.permute.xlu0 %1398
      %1400 = vrot.lane.b32.xlu0 %v1098, 8
      %v1401 = vpop.permute.xlu0 %1400
      %1402 = vrot.lane.b32.xlu0 %v1099, 8
      %v1403 = vpop.permute.xlu0 %1402
      %1404 = vrot.lane.b32.xlu0 %v1100, 8
      %v1405 = vpop.permute.xlu0 %1404
      %1406 = vrot.lane.b32.xlu0 %v1101, 8
      %v1407 = vpop.permute.xlu0 %1406
      %1408 = vrot.lane.b32.xlu0 %v1102, 8
      %v1409 = vpop.permute.xlu0 %1408
      %1410 = vrot.lane.b32.xlu0 %v1103, 8
      %v1411 = vpop.permute.xlu0 %1410
      %1412 = vrot.lane.b32.xlu0 %v1104, 8
      %v1413 = vpop.permute.xlu0 %1412
      %1414 = vrot.lane.b32.xlu0 %v1105, 8
      %v1415 = vpop.permute.xlu0 %1414
      %1416 = vrot.lane.b32.xlu0 %v1106, 8
      %v1417 = vpop.permute.xlu0 %1416
      %1418 = vrot.lane.b32.xlu0 %v1107, 8
      %v1419 = vpop.permute.xlu0 %1418
      %1420 = vrot.lane.b32.xlu0 %v1108, 8
      %v1421 = vpop.permute.xlu0 %1420
      %1422 = vrot.lane.b32.xlu0 %v1109, 8
      %v1423 = vpop.permute.xlu0 %1422
      %1424 = vrot.lane.b32.xlu0 %v1110, 8
      %v1425 = vpop.permute.xlu0 %1424
      %1426 = vrot.lane.b32.xlu0 %v1111, 8
      %v1427 = vpop.permute.xlu0 %1426
      %1428 = vrot.lane.b32.xlu0 %v1112, 8
      %v1429 = vpop.permute.xlu0 %1428
      %1430 = vrot.lane.b32.xlu0 %v1113, 8
      %v1431 = vpop.permute.xlu0 %1430
      %1432 = vrot.lane.b32.xlu0 %v1114, 8
      %v1433 = vpop.permute.xlu0 %1432
      %1434 = vrot.lane.b32.xlu0 %v1115, 8
      %v1435 = vpop.permute.xlu0 %1434
      %1436 = vrot.lane.b32.xlu0 %v1116, 8
      %v1437 = vpop.permute.xlu0 %1436
      %1502 = vrot.lane.b32.xlu0 %v1117, 16
      %v1503 = vpop.permute.xlu0 %1502
      %1504 = vrot.lane.b32.xlu0 %v1118, 16
      %v1505 = vpop.permute.xlu0 %1504
      %1506 = vrot.lane.b32.xlu0 %v1119, 16
      %v1507 = vpop.permute.xlu0 %1506
      %1508 = vrot.lane.b32.xlu0 %v1120, 16
      %v1509 = vpop.permute.xlu0 %1508
      %1510 = vrot.lane.b32.xlu0 %v1121, 16
      %v1511 = vpop.permute.xlu0 %1510
      %1512 = vrot.lane.b32.xlu0 %v1122, 16
      %v1513 = vpop.permute.xlu0 %1512
      %1514 = vrot.lane.b32.xlu0 %v1123, 16
      %v1515 = vpop.permute.xlu0 %1514
      %1516 = vrot.lane.b32.xlu0 %v1124, 16
      %v1517 = vpop.permute.xlu0 %1516
      %1518 = vrot.lane.b32.xlu0 %v1125, 16
      %v1519 = vpop.permute.xlu0 %1518
      %1520 = vrot.lane.b32.xlu0 %v1126, 16
      %v1521 = vpop.permute.xlu0 %1520
      %1522 = vrot.lane.b32.xlu0 %v1127, 16
      %v1523 = vpop.permute.xlu0 %1522
      %1524 = vrot.lane.b32.xlu0 %v1128, 16
      %v1525 = vpop.permute.xlu0 %1524
      %1526 = vrot.lane.b32.xlu0 %v1129, 16
      %v1527 = vpop.permute.xlu0 %1526
      %1528 = vrot.lane.b32.xlu0 %v1130, 16
      %v1529 = vpop.permute.xlu0 %1528
      %1530 = vrot.lane.b32.xlu0 %v1131, 16
      %v1531 = vpop.permute.xlu0 %1530
      %1532 = vrot.lane.b32.xlu0 %v1132, 16
      %v1533 = vpop.permute.xlu0 %1532
      %1534 = vrot.lane.b32.xlu0 %v1133, 16
      %v1535 = vpop.permute.xlu0 %1534
      %1536 = vrot.lane.b32.xlu0 %v1134, 16
      %v1537 = vpop.permute.xlu0 %1536
      %1538 = vrot.lane.b32.xlu0 %v1135, 16
      %v1539 = vpop.permute.xlu0 %1538
      %1540 = vrot.lane.b32.xlu0 %v1136, 16
      %v1541 = vpop.permute.xlu0 %1540
      %1542 = vrot.lane.b32.xlu0 %v1137, 16
      %v1543 = vpop.permute.xlu0 %1542
      %1544 = vrot.lane.b32.xlu0 %v1138, 16
      %v1545 = vpop.permute.xlu0 %1544
      %1546 = vrot.lane.b32.xlu0 %v1139, 16
      %v1547 = vpop.permute.xlu0 %1546
      %1548 = vrot.lane.b32.xlu0 %v1140, 16
      %v1549 = vpop.permute.xlu0 %1548
      %1550 = vrot.lane.b32.xlu0 %v1141, 16
      %v1551 = vpop.permute.xlu0 %1550
      %1552 = vrot.lane.b32.xlu0 %v1142, 16
      %v1553 = vpop.permute.xlu0 %1552
      %1554 = vrot.lane.b32.xlu0 %v1143, 16
      %v1555 = vpop.permute.xlu0 %1554
      %1556 = vrot.lane.b32.xlu0 %v1144, 16
      %v1557 = vpop.permute.xlu0 %1556
      %1558 = vrot.lane.b32.xlu0 %v1145, 16
      %v1559 = vpop.permute.xlu0 %1558
      %1560 = vrot.lane.b32.xlu0 %v1146, 16
      %v1561 = vpop.permute.xlu0 %1560
      %1562 = vrot.lane.b32.xlu0 %v1147, 16
      %v1563 = vpop.permute.xlu0 %1562
      %1564 = vrot.lane.b32.xlu0 %v1148, 16
      %v1565 = vpop.permute.xlu0 %1564
      %1630 = vrot.lane.b32.xlu0 %v1149, 24
      %v1631 = vpop.permute.xlu0 %1630
      %1632 = vrot.lane.b32.xlu0 %v1150, 24
      %v1633 = vpop.permute.xlu0 %1632
      %1634 = vrot.lane.b32.xlu0 %v1151, 24
      %v1635 = vpop.permute.xlu0 %1634
      %1636 = vrot.lane.b32.xlu0 %v1152, 24
      %v1637 = vpop.permute.xlu0 %1636
      %1638 = vrot.lane.b32.xlu0 %v1153, 24
      %v1639 = vpop.permute.xlu0 %1638
      %1640 = vrot.lane.b32.xlu0 %v1154, 24
      %v1641 = vpop.permute.xlu0 %1640
      %1642 = vrot.lane.b32.xlu0 %v1155, 24
      %v1643 = vpop.permute.xlu0 %1642
      %1644 = vrot.lane.b32.xlu0 %v1156, 24
      %v1645 = vpop.permute.xlu0 %1644
      %1646 = vrot.lane.b32.xlu0 %v1157, 24
      %v1647 = vpop.permute.xlu0 %1646
      %1648 = vrot.lane.b32.xlu0 %v1158, 24
      %v1649 = vpop.permute.xlu0 %1648
      %1650 = vrot.lane.b32.xlu0 %v1159, 24
      %v1651 = vpop.permute.xlu0 %1650
      %1652 = vrot.lane.b32.xlu0 %v1160, 24
      %v1653 = vpop.permute.xlu0 %1652
      %1654 = vrot.lane.b32.xlu0 %v1161, 24
      %v1655 = vpop.permute.xlu0 %1654
      %1656 = vrot.lane.b32.xlu0 %v1162, 24
      %v1657 = vpop.permute.xlu0 %1656
      %1658 = vrot.lane.b32.xlu0 %v1163, 24
      %v1659 = vpop.permute.xlu0 %1658
      %1660 = vrot.lane.b32.xlu0 %v1164, 24
      %v1661 = vpop.permute.xlu0 %1660
      %1662 = vrot.lane.b32.xlu0 %v1165, 24
      %v1663 = vpop.permute.xlu0 %1662
      %1664 = vrot.lane.b32.xlu0 %v1166, 24
      %v1665 = vpop.permute.xlu0 %1664
      %1666 = vrot.lane.b32.xlu0 %v1167, 24
      %v1667 = vpop.permute.xlu0 %1666
      %1668 = vrot.lane.b32.xlu0 %v1168, 24
      %v1669 = vpop.permute.xlu0 %1668
      %1670 = vrot.lane.b32.xlu0 %v1169, 24
      %v1671 = vpop.permute.xlu0 %1670
      %1672 = vrot.lane.b32.xlu0 %v1170, 24
      %v1673 = vpop.permute.xlu0 %1672
      %1674 = vrot.lane.b32.xlu0 %v1171, 24
      %v1675 = vpop.permute.xlu0 %1674
      %1676 = vrot.lane.b32.xlu0 %v1172, 24
      %v1677 = vpop.permute.xlu0 %1676
      %1678 = vrot.lane.b32.xlu0 %v1173, 24
      %v1679 = vpop.permute.xlu0 %1678
      %1680 = vrot.lane.b32.xlu0 %v1174, 24
      %v1681 = vpop.permute.xlu0 %1680
      %1682 = vrot.lane.b32.xlu0 %v1175, 24
      %v1683 = vpop.permute.xlu0 %1682
      %1684 = vrot.lane.b32.xlu0 %v1176, 24
      %v1685 = vpop.permute.xlu0 %1684
      %1686 = vrot.lane.b32.xlu0 %v1177, 24
      %v1687 = vpop.permute.xlu0 %1686
      %1688 = vrot.lane.b32.xlu0 %v1178, 24
      %v1689 = vpop.permute.xlu0 %1688
      %1690 = vrot.lane.b32.xlu0 %v1179, 24
      %v1691 = vpop.permute.xlu0 %1690
      %1692 = vrot.lane.b32.xlu0 %v1180, 24
      %v1693 = vpop.permute.xlu0 %1692
      %1758 = vrot.lane.b32.xlu0 %v1181, 32
      %v1759 = vpop.permute.xlu0 %1758
      %1760 = vrot.lane.b32.xlu0 %v1182, 32
      %v1761 = vpop.permute.xlu0 %1760
      %1762 = vrot.lane.b32.xlu0 %v1183, 32
      %v1763 = vpop.permute.xlu0 %1762
      %1764 = vrot.lane.b32.xlu0 %v1184, 32
      %v1765 = vpop.permute.xlu0 %1764
      %1766 = vrot.lane.b32.xlu0 %v1185, 32
      %v1767 = vpop.permute.xlu0 %1766
      %1768 = vrot.lane.b32.xlu0 %v1186, 32
      %v1769 = vpop.permute.xlu0 %1768
      %1770 = vrot.lane.b32.xlu0 %v1187, 32
      %v1771 = vpop.permute.xlu0 %1770
      %1772 = vrot.lane.b32.xlu0 %v1188, 32
      %v1773 = vpop.permute.xlu0 %1772
      %1774 = vrot.lane.b32.xlu0 %v1189, 32
      %v1775 = vpop.permute.xlu0 %1774
      %1776 = vrot.lane.b32.xlu0 %v1190, 32
      %v1777 = vpop.permute.xlu0 %1776
      %1778 = vrot.lane.b32.xlu0 %v1191, 32
      %v1779 = vpop.permute.xlu0 %1778
      %1780 = vrot.lane.b32.xlu0 %v1192, 32
      %v1781 = vpop.permute.xlu0 %1780
      %1782 = vrot.lane.b32.xlu0 %v1193, 32
      %v1783 = vpop.permute.xlu0 %1782
      %1784 = vrot.lane.b32.xlu0 %v1194, 32
      %v1785 = vpop.permute.xlu0 %1784
      %1786 = vrot.lane.b32.xlu0 %v1195, 32
      %v1787 = vpop.permute.xlu0 %1786
      %1788 = vrot.lane.b32.xlu0 %v1196, 32
      %v1789 = vpop.permute.xlu0 %1788
      %1790 = vrot.lane.b32.xlu0 %v1197, 32
      %v1791 = vpop.permute.xlu0 %1790
      %1792 = vrot.lane.b32.xlu0 %v1198, 32
      %v1793 = vpop.permute.xlu0 %1792
      %1794 = vrot.lane.b32.xlu0 %v1199, 32
      %v1795 = vpop.permute.xlu0 %1794
      %1796 = vrot.lane.b32.xlu0 %v1200, 32
      %v1797 = vpop.permute.xlu0 %1796
      %1798 = vrot.lane.b32.xlu0 %v1201, 32
      %v1799 = vpop.permute.xlu0 %1798
      %1800 = vrot.lane.b32.xlu0 %v1202, 32
      %v1801 = vpop.permute.xlu0 %1800
      %1802 = vrot.lane.b32.xlu0 %v1203, 32
      %v1803 = vpop.permute.xlu0 %1802
      %1804 = vrot.lane.b32.xlu0 %v1204, 32
      %v1805 = vpop.permute.xlu0 %1804
      %1806 = vrot.lane.b32.xlu0 %v1205, 32
      %v1807 = vpop.permute.xlu0 %1806
      %1808 = vrot.lane.b32.xlu0 %v1206, 32
      %v1809 = vpop.permute.xlu0 %1808
      %1810 = vrot.lane.b32.xlu0 %v1207, 32
      %v1811 = vpop.permute.xlu0 %1810
      %1812 = vrot.lane.b32.xlu0 %v1208, 32
      %v1813 = vpop.permute.xlu0 %1812
      %1814 = vrot.lane.b32.xlu0 %v1209, 32
      %v1815 = vpop.permute.xlu0 %1814
      %1816 = vrot.lane.b32.xlu0 %v1210, 32
      %v1817 = vpop.permute.xlu0 %1816
      %1818 = vrot.lane.b32.xlu0 %v1211, 32
      %v1819 = vpop.permute.xlu0 %1818
      %1820 = vrot.lane.b32.xlu0 %v1212, 32
      %v1821 = vpop.permute.xlu0 %1820
      %1886 = vrot.lane.b32.xlu0 %v1213, 40
      %v1887 = vpop.permute.xlu0 %1886
      %1888 = vrot.lane.b32.xlu0 %v1214, 40
      %v1889 = vpop.permute.xlu0 %1888
      %1890 = vrot.lane.b32.xlu0 %v1215, 40
      %v1891 = vpop.permute.xlu0 %1890
      %1892 = vrot.lane.b32.xlu0 %v1216, 40
      %v1893 = vpop.permute.xlu0 %1892
      %1894 = vrot.lane.b32.xlu0 %v1217, 40
      %v1895 = vpop.permute.xlu0 %1894
      %1896 = vrot.lane.b32.xlu0 %v1218, 40
      %v1897 = vpop.permute.xlu0 %1896
      %1898 = vrot.lane.b32.xlu0 %v1219, 40
      %v1899 = vpop.permute.xlu0 %1898
      %1900 = vrot.lane.b32.xlu0 %v1220, 40
      %v1901 = vpop.permute.xlu0 %1900
      %1902 = vrot.lane.b32.xlu0 %v1221, 40
      %v1903 = vpop.permute.xlu0 %1902
      %1904 = vrot.lane.b32.xlu0 %v1222, 40
      %v1905 = vpop.permute.xlu0 %1904
      %1906 = vrot.lane.b32.xlu0 %v1223, 40
      %v1907 = vpop.permute.xlu0 %1906
      %1908 = vrot.lane.b32.xlu0 %v1224, 40
      %v1909 = vpop.permute.xlu0 %1908
      %1910 = vrot.lane.b32.xlu0 %v1225, 40
      %v1911 = vpop.permute.xlu0 %1910
      %1912 = vrot.lane.b32.xlu0 %v1226, 40
      %v1913 = vpop.permute.xlu0 %1912
      %1914 = vrot.lane.b32.xlu0 %v1227, 40
      %v1915 = vpop.permute.xlu0 %1914
      %1916 = vrot.lane.b32.xlu0 %v1228, 40
      %v1917 = vpop.permute.xlu0 %1916
      %1918 = vrot.lane.b32.xlu0 %v1229, 40
      %v1919 = vpop.permute.xlu0 %1918
      %1920 = vrot.lane.b32.xlu0 %v1230, 40
      %v1921 = vpop.permute.xlu0 %1920
      %1922 = vrot.lane.b32.xlu0 %v1231, 40
      %v1923 = vpop.permute.xlu0 %1922
      %1924 = vrot.lane.b32.xlu0 %v1232, 40
      %v1925 = vpop.permute.xlu0 %1924
      %1926 = vrot.lane.b32.xlu0 %v1233, 40
      %v1927 = vpop.permute.xlu0 %1926
      %1928 = vrot.lane.b32.xlu0 %v1234, 40
      %v1929 = vpop.permute.xlu0 %1928
      %1930 = vrot.lane.b32.xlu0 %v1235, 40
      %v1931 = vpop.permute.xlu0 %1930
      %1932 = vrot.lane.b32.xlu0 %v1236, 40
      %v1933 = vpop.permute.xlu0 %1932
      %1934 = vrot.lane.b32.xlu0 %v1237, 40
      %v1935 = vpop.permute.xlu0 %1934
      %1936 = vrot.lane.b32.xlu0 %v1238, 40
      %v1937 = vpop.permute.xlu0 %1936
      %1938 = vrot.lane.b32.xlu0 %v1239, 40
      %v1939 = vpop.permute.xlu0 %1938
      %1940 = vrot.lane.b32.xlu0 %v1240, 40
      %v1941 = vpop.permute.xlu0 %1940
      %1942 = vrot.lane.b32.xlu0 %v1241, 40
      %v1943 = vpop.permute.xlu0 %1942
      %1944 = vrot.lane.b32.xlu0 %v1242, 40
      %v1945 = vpop.permute.xlu0 %1944
      %1946 = vrot.lane.b32.xlu0 %v1243, 40
      %v1947 = vpop.permute.xlu0 %1946
      %1948 = vrot.lane.b32.xlu0 %v1244, 40
      %v1949 = vpop.permute.xlu0 %1948
      %2014 = vrot.lane.b32.xlu0 %v1246, 48
      %v2015 = vpop.permute.xlu0 %2014
      %2016 = vrot.lane.b32.xlu0 %v1247, 48
      %v2017 = vpop.permute.xlu0 %2016
      %2018 = vrot.lane.b32.xlu0 %v1248, 48
      %v2019 = vpop.permute.xlu0 %2018
      %2020 = vrot.lane.b32.xlu0 %v1249, 48
      %v2021 = vpop.permute.xlu0 %2020
      %2022 = vrot.lane.b32.xlu0 %v1250, 48
      %v2023 = vpop.permute.xlu0 %2022
      %2024 = vrot.lane.b32.xlu0 %v1251, 48
      %v2025 = vpop.permute.xlu0 %2024
      %2026 = vrot.lane.b32.xlu0 %v1252, 48
      %v2027 = vpop.permute.xlu0 %2026
      %2028 = vrot.lane.b32.xlu0 %v1253, 48
      %v2029 = vpop.permute.xlu0 %2028
      %2030 = vrot.lane.b32.xlu0 %v1254, 48
      %v2031 = vpop.permute.xlu0 %2030
      %2032 = vrot.lane.b32.xlu0 %v1255, 48
      %v2033 = vpop.permute.xlu0 %2032
      %2034 = vrot.lane.b32.xlu0 %v1256, 48
      %v2035 = vpop.permute.xlu0 %2034
      %2036 = vrot.lane.b32.xlu0 %v1257, 48
      %v2037 = vpop.permute.xlu0 %2036
      %2038 = vrot.lane.b32.xlu0 %v1258, 48
      %v2039 = vpop.permute.xlu0 %2038
      %2040 = vrot.lane.b32.xlu0 %v1259, 48
      %v2041 = vpop.permute.xlu0 %2040
      %2042 = vrot.lane.b32.xlu0 %v1260, 48
      %v2043 = vpop.permute.xlu0 %2042
      %2044 = vrot.lane.b32.xlu0 %v1261, 48
      %v2045 = vpop.permute.xlu0 %2044
      %2046 = vrot.lane.b32.xlu0 %v1262, 48
      %v2047 = vpop.permute.xlu0 %2046
      %2048 = vrot.lane.b32.xlu0 %v1263, 48
      %v2049 = vpop.permute.xlu0 %2048
      %2050 = vrot.lane.b32.xlu0 %v1264, 48
      %v2051 = vpop.permute.xlu0 %2050
      %2052 = vrot.lane.b32.xlu0 %v1265, 48
      %v2053 = vpop.permute.xlu0 %2052
      %2054 = vrot.lane.b32.xlu0 %v1266, 48
      %v2055 = vpop.permute.xlu0 %2054
      %2056 = vrot.lane.b32.xlu0 %v1267, 48
      %v2057 = vpop.permute.xlu0 %2056
      %2058 = vrot.lane.b32.xlu0 %v1268, 48
      %v2059 = vpop.permute.xlu0 %2058
      %2060 = vrot.lane.b32.xlu0 %v1269, 48
      %v2061 = vpop.permute.xlu0 %2060
      %2062 = vrot.lane.b32.xlu0 %v1270, 48
      %v2063 = vpop.permute.xlu0 %2062
      %2064 = vrot.lane.b32.xlu0 %v1271, 48
      %v2065 = vpop.permute.xlu0 %2064
      %2066 = vrot.lane.b32.xlu0 %v1272, 48
      %v2067 = vpop.permute.xlu0 %2066
      %2068 = vrot.lane.b32.xlu0 %v1273, 48
      %v2069 = vpop.permute.xlu0 %2068
      %2070 = vrot.lane.b32.xlu0 %v1274, 48
      %v2071 = vpop.permute.xlu0 %2070
      %2072 = vrot.lane.b32.xlu0 %v1275, 48
      %v2073 = vpop.permute.xlu0 %2072
      %2074 = vrot.lane.b32.xlu0 %v1276, 48
      %v2075 = vpop.permute.xlu0 %2074
      %2076 = vrot.lane.b32.xlu0 %v1277, 48
      %v2077 = vpop.permute.xlu0 %2076
      %2142 = vrot.lane.b32.xlu0 %v1278, 56
      %v2143 = vpop.permute.xlu0 %2142
      %2144 = vrot.lane.b32.xlu0 %v1279, 56
      %v2145 = vpop.permute.xlu0 %2144
      %2146 = vrot.lane.b32.xlu0 %v1280, 56
      %v2147 = vpop.permute.xlu0 %2146
      %2148 = vrot.lane.b32.xlu0 %v1281, 56
      %v2149 = vpop.permute.xlu0 %2148
      %2150 = vrot.lane.b32.xlu0 %v1282, 56
      %v2151 = vpop.permute.xlu0 %2150
      %2152 = vrot.lane.b32.xlu0 %v1283, 56
      %v2153 = vpop.permute.xlu0 %2152
      %2154 = vrot.lane.b32.xlu0 %v1284, 56
      %v2155 = vpop.permute.xlu0 %2154
      %2156 = vrot.lane.b32.xlu0 %v1285, 56
      %v2157 = vpop.permute.xlu0 %2156
      %2158 = vrot.lane.b32.xlu0 %v1286, 56
      %v2159 = vpop.permute.xlu0 %2158
      %2160 = vrot.lane.b32.xlu0 %v1287, 56
      %v2161 = vpop.permute.xlu0 %2160
      %2162 = vrot.lane.b32.xlu0 %v1288, 56
      %v2163 = vpop.permute.xlu0 %2162
      %2164 = vrot.lane.b32.xlu0 %v1289, 56
      %v2165 = vpop.permute.xlu0 %2164
      %2166 = vrot.lane.b32.xlu0 %v1290, 56
      %v2167 = vpop.permute.xlu0 %2166
      %2168 = vrot.lane.b32.xlu0 %v1291, 56
      %v2169 = vpop.permute.xlu0 %2168
      %2170 = vrot.lane.b32.xlu0 %v1292, 56
      %v2171 = vpop.permute.xlu0 %2170
      %2172 = vrot.lane.b32.xlu0 %v1293, 56
      %v2173 = vpop.permute.xlu0 %2172
      %2174 = vrot.lane.b32.xlu0 %v1294, 56
      %v2175 = vpop.permute.xlu0 %2174
      %2176 = vrot.lane.b32.xlu0 %v1295, 56
      %v2177 = vpop.permute.xlu0 %2176
      %2178 = vrot.lane.b32.xlu0 %v1296, 56
      %v2179 = vpop.permute.xlu0 %2178
      %2180 = vrot.lane.b32.xlu0 %v1297, 56
      %v2181 = vpop.permute.xlu0 %2180
      %2182 = vrot.lane.b32.xlu0 %v1298, 56
      %v2183 = vpop.permute.xlu0 %2182
      %2184 = vrot.lane.b32.xlu0 %v1299, 56
      %v2185 = vpop.permute.xlu0 %2184
      %2186 = vrot.lane.b32.xlu0 %v1300, 56
      %v2187 = vpop.permute.xlu0 %2186
      %2188 = vrot.lane.b32.xlu0 %v1301, 56
      %v2189 = vpop.permute.xlu0 %2188
      %2190 = vrot.lane.b32.xlu0 %v1302, 56
      %v2191 = vpop.permute.xlu0 %2190
      %2192 = vrot.lane.b32.xlu0 %v1303, 56
      %v2193 = vpop.permute.xlu0 %2192
      %2194 = vrot.lane.b32.xlu0 %v1304, 56
      %v2195 = vpop.permute.xlu0 %2194
      %2196 = vrot.lane.b32.xlu0 %v1305, 56
      %v2197 = vpop.permute.xlu0 %2196
      %2198 = vrot.lane.b32.xlu0 %v1306, 56
      %v2199 = vpop.permute.xlu0 %2198
      %2200 = vrot.lane.b32.xlu0 %v1307, 56
      %v2201 = vpop.permute.xlu0 %2200
      %2202 = vrot.lane.b32.xlu0 %v1308, 56
      %v2203 = vpop.permute.xlu0 %2202
      %2204 = vrot.lane.b32.xlu0 %v1309, 56
      %v2205 = vpop.permute.xlu0 %2204
      %2270 = vrot.lane.b32.xlu0 %v1310, 64
      %v2271 = vpop.permute.xlu0 %2270
      %2272 = vrot.lane.b32.xlu0 %v1311, 64
      %v2273 = vpop.permute.xlu0 %2272
      %2274 = vrot.lane.b32.xlu0 %v1312, 64
      %v2275 = vpop.permute.xlu0 %2274
      %2276 = vrot.lane.b32.xlu0 %v1313, 64
      %v2277 = vpop.permute.xlu0 %2276
      %2278 = vrot.lane.b32.xlu0 %v1314, 64
      %v2279 = vpop.permute.xlu0 %2278
      %2280 = vrot.lane.b32.xlu0 %v1315, 64
      %v2281 = vpop.permute.xlu0 %2280
      %2282 = vrot.lane.b32.xlu0 %v1316, 64
      %v2283 = vpop.permute.xlu0 %2282
      %2284 = vrot.lane.b32.xlu0 %v1317, 64
      %v2285 = vpop.permute.xlu0 %2284
      %2286 = vrot.lane.b32.xlu0 %v1318, 64
      %v2287 = vpop.permute.xlu0 %2286
      %2288 = vrot.lane.b32.xlu0 %v1319, 64
      %v2289 = vpop.permute.xlu0 %2288
      %2290 = vrot.lane.b32.xlu0 %v1320, 64
      %v2291 = vpop.permute.xlu0 %2290
      %2292 = vrot.lane.b32.xlu0 %v1321, 64
      %v2293 = vpop.permute.xlu0 %2292
      %2294 = vrot.lane.b32.xlu0 %v1322, 64
      %v2295 = vpop.permute.xlu0 %2294
      %2296 = vrot.lane.b32.xlu0 %v1323, 64
      %v2297 = vpop.permute.xlu0 %2296
      %2298 = vrot.lane.b32.xlu0 %v1324, 64
      %v2299 = vpop.permute.xlu0 %2298
      %2300 = vrot.lane.b32.xlu0 %v1325, 64
      %v2301 = vpop.permute.xlu0 %2300
      %2302 = vrot.lane.b32.xlu0 %v1326, 64
      %v2303 = vpop.permute.xlu0 %2302
      %2304 = vrot.lane.b32.xlu0 %v1327, 64
      %v2305 = vpop.permute.xlu0 %2304
      %2306 = vrot.lane.b32.xlu0 %v1328, 64
      %v2307 = vpop.permute.xlu0 %2306
      %2308 = vrot.lane.b32.xlu0 %v1329, 64
      %v2309 = vpop.permute.xlu0 %2308
      %2310 = vrot.lane.b32.xlu0 %v1330, 64
      %v2311 = vpop.permute.xlu0 %2310
      %2312 = vrot.lane.b32.xlu0 %v1331, 64
      %v2313 = vpop.permute.xlu0 %2312
      %2314 = vrot.lane.b32.xlu0 %v1332, 64
      %v2315 = vpop.permute.xlu0 %2314
      %2316 = vrot.lane.b32.xlu0 %v1333, 64
      %v2317 = vpop.permute.xlu0 %2316
      %2318 = vrot.lane.b32.xlu0 %v1334, 64
      %v2319 = vpop.permute.xlu0 %2318
      %2320 = vrot.lane.b32.xlu0 %v1335, 64
      %v2321 = vpop.permute.xlu0 %2320
      %2322 = vrot.lane.b32.xlu0 %v1336, 64
      %v2323 = vpop.permute.xlu0 %2322
      %2324 = vrot.lane.b32.xlu0 %v1337, 64
      %v2325 = vpop.permute.xlu0 %2324
      %2326 = vrot.lane.b32.xlu0 %v1338, 64
      %v2327 = vpop.permute.xlu0 %2326
      %2328 = vrot.lane.b32.xlu0 %v1339, 64
      %v2329 = vpop.permute.xlu0 %2328
      %2330 = vrot.lane.b32.xlu0 %v1340, 64
      %v2331 = vpop.permute.xlu0 %2330
      %2332 = vrot.lane.b32.xlu0 %v1341, 64
      %v2333 = vpop.permute.xlu0 %2332
      %v2366 = vsel %vm442, %v1053, %v1375
      %v2367 = vsel %vm442, %v1054, %v1377
      %v2368 = vsel %vm442, %v1055, %v1379
      %v2369 = vsel %vm442, %v1056, %v1381
      %v2370 = vsel %vm442, %v1057, %v1383
      %v2371 = vsel %vm442, %v1058, %v1385
      %v2372 = vsel %vm442, %v1059, %v1387
      %v2373 = vsel %vm442, %v1060, %v1389
      %v2374 = vsel %vm442, %v1061, %v1391
      %v2375 = vsel %vm442, %v1062, %v1393
      %v2376 = vsel %vm442, %v1063, %v1395
      %v2377 = vsel %vm442, %v1064, %v1397
      %v2378 = vsel %vm442, %v1065, %v1399
      %v2379 = vsel %vm442, %v1066, %v1401
      %v2380 = vsel %vm442, %v1067, %v1403
      %v2381 = vsel %vm442, %v1068, %v1405
      %v2382 = vsel %vm442, %v1069, %v1407
      %v2383 = vsel %vm442, %v1070, %v1409
      %v2384 = vsel %vm442, %v1071, %v1411
      %v2385 = vsel %vm442, %v1072, %v1413
      %v2386 = vsel %vm442, %v1073, %v1415
      %v2387 = vsel %vm442, %v1074, %v1417
      %v2388 = vsel %vm442, %v1075, %v1419
      %v2389 = vsel %vm442, %v1076, %v1421
      %v2390 = vsel %vm442, %v1077, %v1423
      %v2391 = vsel %vm442, %v1078, %v1425
      %v2392 = vsel %vm442, %v1079, %v1427
      %v2393 = vsel %vm442, %v1080, %v1429
      %v2394 = vsel %vm442, %v1081, %v1431
      %v2395 = vsel %vm442, %v1082, %v1433
      %v2396 = vsel %vm442, %v1083, %v1435
      %v2397 = vsel %vm442, %v1084, %v1437
      %v2398 = vsel %vm498, %v2366, %v1503
      %v2399 = vsel %vm498, %v2367, %v1505
      %v2400 = vsel %vm498, %v2368, %v1507
      %v2401 = vsel %vm498, %v2369, %v1509
      %v2402 = vsel %vm498, %v2370, %v1511
      %v2403 = vsel %vm498, %v2371, %v1513
      %v2404 = vsel %vm498, %v2372, %v1515
      %v2405 = vsel %vm498, %v2373, %v1517
      %v2406 = vsel %vm498, %v2374, %v1519
      %v2407 = vsel %vm498, %v2375, %v1521
      %v2408 = vsel %vm498, %v2376, %v1523
      %v2409 = vsel %vm498, %v2377, %v1525
      %v2410 = vsel %vm498, %v2378, %v1527
      %v2411 = vsel %vm498, %v2379, %v1529
      %v2412 = vsel %vm498, %v2380, %v1531
      %v2413 = vsel %vm498, %v2381, %v1533
      %v2414 = vsel %vm498, %v2382, %v1535
      %v2415 = vsel %vm498, %v2383, %v1537
      %v2416 = vsel %vm498, %v2384, %v1539
      %v2417 = vsel %vm498, %v2385, %v1541
      %v2418 = vsel %vm498, %v2386, %v1543
      %v2419 = vsel %vm498, %v2387, %v1545
      %v2420 = vsel %vm498, %v2388, %v1547
      %v2421 = vsel %vm498, %v2389, %v1549
      %v2422 = vsel %vm498, %v2390, %v1551
      %v2423 = vsel %vm498, %v2391, %v1553
      %v2424 = vsel %vm498, %v2392, %v1555
      %v2425 = vsel %vm498, %v2393, %v1557
      %v2426 = vsel %vm498, %v2394, %v1559
      %v2427 = vsel %vm498, %v2395, %v1561
      %v2428 = vsel %vm498, %v2396, %v1563
      %v2429 = vsel %vm498, %v2397, %v1565
      %vm2430 = vcmask 195584
      %v2431 = vsel %vm2430, %v2398, %v1631
      %v2432 = vsel %vm2430, %v2399, %v1633
      %v2433 = vsel %vm2430, %v2400, %v1635
      %v2434 = vsel %vm2430, %v2401, %v1637
      %v2435 = vsel %vm2430, %v2402, %v1639
      %v2436 = vsel %vm2430, %v2403, %v1641
      %v2437 = vsel %vm2430, %v2404, %v1643
      %v2438 = vsel %vm2430, %v2405, %v1645
      %v2439 = vsel %vm2430, %v2406, %v1647
      %v2440 = vsel %vm2430, %v2407, %v1649
      %v2441 = vsel %vm2430, %v2408, %v1651
      %v2442 = vsel %vm2430, %v2409, %v1653
      %v2443 = vsel %vm2430, %v2410, %v1655
      %v2444 = vsel %vm2430, %v2411, %v1657
      %v2445 = vsel %vm2430, %v2412, %v1659
      %v2446 = vsel %vm2430, %v2413, %v1661
      %v2447 = vsel %vm2430, %v2414, %v1663
      %v2448 = vsel %vm2430, %v2415, %v1665
      %v2449 = vsel %vm2430, %v2416, %v1667
      %v2450 = vsel %vm2430, %v2417, %v1669
      %v2451 = vsel %vm2430, %v2418, %v1671
      %v2452 = vsel %vm2430, %v2419, %v1673
      %v2453 = vsel %vm2430, %v2420, %v1675
      %v2454 = vsel %vm2430, %v2421, %v1677
      %v2455 = vsel %vm2430, %v2422, %v1679
      %v2456 = vsel %vm2430, %v2423, %v1681
      %v2457 = vsel %vm2430, %v2424, %v1683
      %v2458 = vsel %vm2430, %v2425, %v1685
      %v2459 = vsel %vm2430, %v2426, %v1687
      %v2460 = vsel %vm2430, %v2427, %v1689
      %v2461 = vsel %vm2430, %v2428, %v1691
      %v2462 = vsel %vm2430, %v2429, %v1693
      %vm2463 = vcmask 261120
      %v2464 = vsel %vm2463, %v2431, %v1759
      %v2465 = vsel %vm2463, %v2432, %v1761
      %v2466 = vsel %vm2463, %v2433, %v1763
      %v2467 = vsel %vm2463, %v2434, %v1765
      %v2468 = vsel %vm2463, %v2435, %v1767
      %v2469 = vsel %vm2463, %v2436, %v1769
      %v2470 = vsel %vm2463, %v2437, %v1771
      %v2471 = vsel %vm2463, %v2438, %v1773
      %v2472 = vsel %vm2463, %v2439, %v1775
      %v2473 = vsel %vm2463, %v2440, %v1777
      %v2474 = vsel %vm2463, %v2441, %v1779
      %v2475 = vsel %vm2463, %v2442, %v1781
      %v2476 = vsel %vm2463, %v2443, %v1783
      %v2477 = vsel %vm2463, %v2444, %v1785
      %v2478 = vsel %vm2463, %v2445, %v1787
      %v2479 = vsel %vm2463, %v2446, %v1789
      %v2480 = vsel %vm2463, %v2447, %v1791
      %v2481 = vsel %vm2463, %v2448, %v1793
      %v2482 = vsel %vm2463, %v2449, %v1795
      %v2483 = vsel %vm2463, %v2450, %v1797
      %v2484 = vsel %vm2463, %v2451, %v1799
      %v2485 = vsel %vm2463, %v2452, %v1801
      %v2486 = vsel %vm2463, %v2453, %v1803
      %v2487 = vsel %vm2463, %v2454, %v1805
      %v2488 = vsel %vm2463, %v2455, %v1807
      %v2489 = vsel %vm2463, %v2456, %v1809
      %v2490 = vsel %vm2463, %v2457, %v1811
      %v2491 = vsel %vm2463, %v2458, %v1813
      %v2492 = vsel %vm2463, %v2459, %v1815
      %v2493 = vsel %vm2463, %v2460, %v1817
      %v2494 = vsel %vm2463, %v2461, %v1819
      %v2495 = vsel %vm2463, %v2462, %v1821
      %vm2496 = vcmask 326656
      %v2497 = vsel %vm2496, %v2464, %v1887
      %v2498 = vsel %vm2496, %v2465, %v1889
      %v2499 = vsel %vm2496, %v2466, %v1891
      %v2500 = vsel %vm2496, %v2467, %v1893
      %v2501 = vsel %vm2496, %v2468, %v1895
      %v2502 = vsel %vm2496, %v2469, %v1897
      %v2503 = vsel %vm2496, %v2470, %v1899
      %v2504 = vsel %vm2496, %v2471, %v1901
      %v2505 = vsel %vm2496, %v2472, %v1903
      %v2506 = vsel %vm2496, %v2473, %v1905
      %v2507 = vsel %vm2496, %v2474, %v1907
      %v2508 = vsel %vm2496, %v2475, %v1909
      %v2509 = vsel %vm2496, %v2476, %v1911
      %v2510 = vsel %vm2496, %v2477, %v1913
      %v2511 = vsel %vm2496, %v2478, %v1915
      %v2512 = vsel %vm2496, %v2479, %v1917
      %v2513 = vsel %vm2496, %v2480, %v1919
      %v2514 = vsel %vm2496, %v2481, %v1921
      %v2515 = vsel %vm2496, %v2482, %v1923
      %v2516 = vsel %vm2496, %v2483, %v1925
      %v2517 = vsel %vm2496, %v2484, %v1927
      %v2518 = vsel %vm2496, %v2485, %v1929
      %v2519 = vsel %vm2496, %v2486, %v1931
      %v2520 = vsel %vm2496, %v2487, %v1933
      %v2521 = vsel %vm2496, %v2488, %v1935
      %v2522 = vsel %vm2496, %v2489, %v1937
      %v2523 = vsel %vm2496, %v2490, %v1939
      %v2524 = vsel %vm2496, %v2491, %v1941
      %v2525 = vsel %vm2496, %v2492, %v1943
      %v2526 = vsel %vm2496, %v2493, %v1945
      %v2527 = vsel %vm2496, %v2494, %v1947
      %v2528 = vsel %vm2496, %v2495, %v1949
      %vm2529 = vcmask 392192
      %v2530 = vsel %vm2529, %v2497, %v2015
      %v2531 = vsel %vm2529, %v2498, %v2017
      %v2532 = vsel %vm2529, %v2499, %v2019
      %v2533 = vsel %vm2529, %v2500, %v2021
      %v2534 = vsel %vm2529, %v2501, %v2023
      %v2535 = vsel %vm2529, %v2502, %v2025
      %v2536 = vsel %vm2529, %v2503, %v2027
      %v2537 = vsel %vm2529, %v2504, %v2029
      %v2538 = vsel %vm2529, %v2505, %v2031
      %v2539 = vsel %vm2529, %v2506, %v2033
      %v2540 = vsel %vm2529, %v2507, %v2035
      %v2541 = vsel %vm2529, %v2508, %v2037
      %v2542 = vsel %vm2529, %v2509, %v2039
      %v2543 = vsel %vm2529, %v2510, %v2041
      %v2544 = vsel %vm2529, %v2511, %v2043
      %v2545 = vsel %vm2529, %v2512, %v2045
      %v2546 = vsel %vm2529, %v2513, %v2047
      %v2547 = vsel %vm2529, %v2514, %v2049
      %v2548 = vsel %vm2529, %v2515, %v2051
      %v2549 = vsel %vm2529, %v2516, %v2053
      %v2550 = vsel %vm2529, %v2517, %v2055
      %v2551 = vsel %vm2529, %v2518, %v2057
      %v2552 = vsel %vm2529, %v2519, %v2059
      %v2553 = vsel %vm2529, %v2520, %v2061
      %v2554 = vsel %vm2529, %v2521, %v2063
      %v2555 = vsel %vm2529, %v2522, %v2065
      %v2556 = vsel %vm2529, %v2523, %v2067
      %v2557 = vsel %vm2529, %v2524, %v2069
      %v2558 = vsel %vm2529, %v2525, %v2071
      %v2559 = vsel %vm2529, %v2526, %v2073
      %v2560 = vsel %vm2529, %v2527, %v2075
      %v2561 = vsel %vm2529, %v2528, %v2077
      %vm2562 = vcmask 457728
      %v2563 = vsel %vm2562, %v2530, %v2143
      %v2564 = vsel %vm2562, %v2531, %v2145
      %v2565 = vsel %vm2562, %v2532, %v2147
      %v2566 = vsel %vm2562, %v2533, %v2149
      %v2567 = vsel %vm2562, %v2534, %v2151
      %v2568 = vsel %vm2562, %v2535, %v2153
      %v2569 = vsel %vm2562, %v2536, %v2155
      %v2570 = vsel %vm2562, %v2537, %v2157
      %v2571 = vsel %vm2562, %v2538, %v2159
      %v2572 = vsel %vm2562, %v2539, %v2161
      %v2573 = vsel %vm2562, %v2540, %v2163
      %v2574 = vsel %vm2562, %v2541, %v2165
      %v2575 = vsel %vm2562, %v2542, %v2167
      %v2576 = vsel %vm2562, %v2543, %v2169
      %v2577 = vsel %vm2562, %v2544, %v2171
      %v2578 = vsel %vm2562, %v2545, %v2173
      %v2579 = vsel %vm2562, %v2546, %v2175
      %v2580 = vsel %vm2562, %v2547, %v2177
      %v2581 = vsel %vm2562, %v2548, %v2179
      %v2582 = vsel %vm2562, %v2549, %v2181
      %v2583 = vsel %vm2562, %v2550, %v2183
      %v2584 = vsel %vm2562, %v2551, %v2185
      %v2585 = vsel %vm2562, %v2552, %v2187
      %v2586 = vsel %vm2562, %v2553, %v2189
      %v2587 = vsel %vm2562, %v2554, %v2191
      %v2588 = vsel %vm2562, %v2555, %v2193
      %v2589 = vsel %vm2562, %v2556, %v2195
      %v2590 = vsel %vm2562, %v2557, %v2197
      %v2591 = vsel %vm2562, %v2558, %v2199
      %v2592 = vsel %vm2562, %v2559, %v2201
      %v2593 = vsel %vm2562, %v2560, %v2203
      %v2594 = vsel %vm2562, %v2561, %v2205
      %vm2595 = vcmask 523264
      %v2596 = vsel %vm2595, %v2563, %v2271
      %v2597 = vsel %vm2595, %v2564, %v2273
      %v2598 = vsel %vm2595, %v2565, %v2275
      %v2599 = vsel %vm2595, %v2566, %v2277
      %v2600 = vsel %vm2595, %v2567, %v2279
      %v2601 = vsel %vm2595, %v2568, %v2281
      %v2602 = vsel %vm2595, %v2569, %v2283
      %v2603 = vsel %vm2595, %v2570, %v2285
      %v2604 = vsel %vm2595, %v2571, %v2287
      %v2605 = vsel %vm2595, %v2572, %v2289
      %v2606 = vsel %vm2595, %v2573, %v2291
      %v2607 = vsel %vm2595, %v2574, %v2293
      %v2608 = vsel %vm2595, %v2575, %v2295
      %v2609 = vsel %vm2595, %v2576, %v2297
      %v2610 = vsel %vm2595, %v2577, %v2299
      %v2611 = vsel %vm2595, %v2578, %v2301
      %v2612 = vsel %vm2595, %v2579, %v2303
      %v2613 = vsel %vm2595, %v2580, %v2305
      %v2614 = vsel %vm2595, %v2581, %v2307
      %v2615 = vsel %vm2595, %v2582, %v2309
      %v2616 = vsel %vm2595, %v2583, %v2311
      %v2617 = vsel %vm2595, %v2584, %v2313
      %v2618 = vsel %vm2595, %v2585, %v2315
      %v2619 = vsel %vm2595, %v2586, %v2317
      %v2620 = vsel %vm2595, %v2587, %v2319
      %v2621 = vsel %vm2595, %v2588, %v2321
      %v2622 = vsel %vm2595, %v2589, %v2323
      %v2623 = vsel %vm2595, %v2590, %v2325
      %v2624 = vsel %vm2595, %v2591, %v2327
      %v2625 = vsel %vm2595, %v2592, %v2329
      %v2626 = vsel %vm2595, %v2593, %v2331
      %v2627 = vsel %vm2595, %v2594, %v2333
      %v2628 = vpack.c.bf16 %v2597, %v2596
      %v2629 = vpack.c.bf16 %v2599, %v2598
      %v2630 = vpack.c.bf16 %v2601, %v2600
      %v2631 = vpack.c.bf16 %v2603, %v2602
      %v2632 = vpack.c.bf16 %v2605, %v2604
      %v2633 = vpack.c.bf16 %v2607, %v2606
      %v2634 = vpack.c.bf16 %v2609, %v2608
      %v2635 = vpack.c.bf16 %v2611, %v2610
      %v2636 = vpack.c.bf16 %v2613, %v2612
      %v2637 = vpack.c.bf16 %v2615, %v2614
      %v2638 = vpack.c.bf16 %v2617, %v2616
      %v2639 = vpack.c.bf16 %v2619, %v2618
      %v2640 = vpack.c.bf16 %v2621, %v2620
      %v2641 = vpack.c.bf16 %v2623, %v2622
      %v2642 = vpack.c.bf16 %v2625, %v2624
      %v2643 = vpack.c.bf16 %v2627, %v2626
      %v2644 = vld [vmem:[%s8] sm:$0x1]
      %v2646 = vlaneseq
      %v2647 = vshrl.u32 %v2646, 7
      %v2648 = vsub.s32 0, %v2647
      %v2649 = vrot.slane %v2644, %v2648
      %v2660 = vunpack.c.l.b16 %v1044
      %v2661 = vunpack.c.l.b16 %v1045
      %v2662 = vunpack.c.l.b16 %v1046
      %v2663 = vunpack.c.l.b16 %v1047
      %v2664 = vunpack.c.l.b16 %v1048
      %v2665 = vunpack.c.l.b16 %v1049
      %v2666 = vunpack.c.l.b16 %v1050
      %v2667 = vunpack.c.l.b16 %v1051
      %v2668 = vunpack.c.l.b16 %v1052
      %v2669 = vpack.c.b16 %v2661, %v2660
      %v2670 = vpack.c.b16 %v2663, %v2662
      %v2671 = vpack.c.b16 %v2665, %v2664
      %v2672 = vpack.c.b16 %v2667, %v2666
      %v2673 = vpack.c.b16 %v2668, %v2668
      %vm2678 = vcmask 588800
      %v2680 = vsel %vm2678, %v2628, 0
      %v2683 = vsel %vm2678, %v2629, 0
      %v2686 = vsel %vm2678, %v2630, 0
      %v2689 = vsel %vm2678, %v2631, 0
      %v2692 = vsel %vm2678, %v2632, 0
      %v2695 = vsel %vm2678, %v2633, 0
      %v2698 = vsel %vm2678, %v2634, 0
      %v2701 = vsel %vm2678, %v2635, 0
      %v2704 = vsel %vm2678, %v2636, 0
      %v2707 = vsel %vm2678, %v2637, 0
      %v2710 = vsel %vm2678, %v2638, 0
      %v2713 = vsel %vm2678, %v2639, 0
      %v2716 = vsel %vm2678, %v2640, 0
      %v2719 = vsel %vm2678, %v2641, 0
      %v2722 = vsel %vm2678, %v2642, 0
      %v2725 = vsel %vm2678, %v2643, 0
      %v2728 = vsel %vm736, %v2673, 0
      %2730 = vmatprep.subr.bf16.mxu0 0
      %2731 = vmatpush1.bf16.msra.mxu0 %v2669
      %2732 = vmatprep.subr.bf16.mxu0 0
      %2733 = vmatpush1.bf16.msra.mxu0 %v2670
      %2734 = vmatprep.subr.bf16.mxu0 0
      %2735 = vmatpush1.bf16.msra.mxu0 %v2671
      %2736 = vmatprep.subr.bf16.mxu0 0
      %2737 = vmatpush1.bf16.msra.mxu0 %v2672
      %2738 = vmatprep.subr.bf16.mxu0 0
      %2739 = vmatpush1.bf16.msra.mxu0 %v2728
      %2740 = vmatprep.subr.bf16.mxu0 0
      %2741 = vmatpush1.bf16.msra.mxu0 0
      %2742 = vmatprep.subr.bf16.mxu0 0
      %2743 = vmatpush1.bf16.msra.mxu0 0
      %2744 = vmatprep.subr.bf16.mxu0 0
      %2745 = vmatpush1.bf16.msra.mxu0 0
      %2746 = vmatprep.subr.bf16.mxu0 0
      %2747 = vmatpush1.bf16.msra.mxu0 0
      %2748 = vmatprep.subr.bf16.mxu0 0
      %2749 = vmatpush1.bf16.msra.mxu0 0
      %2750 = vmatprep.subr.bf16.mxu0 0
      %2751 = vmatpush1.bf16.msra.mxu0 0
      %2752 = vmatprep.subr.bf16.mxu0 0
      %2753 = vmatpush1.bf16.msra.mxu0 0
      %2754 = vmatprep.subr.bf16.mxu0 0
      %2755 = vmatpush1.bf16.msra.mxu0 0
      %2756 = vmatprep.subr.bf16.mxu0 0
      %2757 = vmatpush1.bf16.msra.mxu0 0
      %2758 = vmatprep.subr.bf16.mxu0 0
      %2759 = vmatpush1.bf16.msra.mxu0 0
      %2760 = vmatprep.subr.bf16.mxu0 0
      %2761 = vmatpush1.bf16.msra.mxu0 0
      %2762 = vmatprep.mubr.bf16.mxu0 0
      %2763 = vmatmul.mubr.bf16.gmra.mrb[0].mxu0 %v2680
      %v2764 = vpop.f32.mrb[0].mxu0
      %v2765 = vadd.f32 %v2649, %v2764
      %v2766 = vpop.f32.mrb[0].mxu0
      %v2767 = vpop.f32.mrb[0].mxu0
      %v2768 = vadd.f32 %v2649, %v2767
      %v2769 = vpop.f32.mrb[0].mxu0
      %2770 = vmatprep.mubr.bf16.mxu0 0
      %2771 = vmatmul.mubr.bf16.gmra.mrb[0].mxu0 %v2683
      %v2772 = vpop.f32.mrb[0].mxu0
      %v2773 = vadd.f32 %v2649, %v2772
      %v2774 = vpop.f32.mrb[0].mxu0
      %v2775 = vpop.f32.mrb[0].mxu0
      %v2776 = vadd.f32 %v2649, %v2775
      %v2777 = vpop.f32.mrb[0].mxu0
      %2778 = vmatprep.mubr.bf16.mxu0 0
      %2779 = vmatmul.mubr.bf16.gmra.mrb[0].mxu0 %v2686
      %v2780 = vpop.f32.mrb[0].mxu0
      %v2781 = vadd.f32 %v2649, %v2780
      %v2782 = vpop.f32.mrb[0].mxu0
      %v2783 = vpop.f32.mrb[0].mxu0
      %v2784 = vadd.f32 %v2649, %v2783
      %v2785 = vpop.f32.mrb[0].mxu0
      %2786 = vmatprep.mubr.bf16.mxu0 0
      %2787 = vmatmul.mubr.bf16.gmra.mrb[0].mxu0 %v2689
      %v2788 = vpop.f32.mrb[0].mxu0
      %v2789 = vadd.f32 %v2649, %v2788
      %v2790 = vpop.f32.mrb[0].mxu0
      %v2791 = vpop.f32.mrb[0].mxu0
      %v2792 = vadd.f32 %v2649, %v2791
      %v2793 = vpop.f32.mrb[0].mxu0
      %2794 = vmatprep.mubr.bf16.mxu0 0
      %2795 = vmatmul.mubr.bf16.gmra.mrb[0].mxu0 %v2692
      %v2796 = vpop.f32.mrb[0].mxu0
      %v2797 = vadd.f32 %v2649, %v2796
      %v2798 = vpop.f32.mrb[0].mxu0
      %v2799 = vpop.f32.mrb[0].mxu0
      %v2800 = vadd.f32 %v2649, %v2799
      %v2801 = vpop.f32.mrb[0].mxu0
      %2802 = vmatprep.mubr.bf16.mxu0 0
      %2803 = vmatmul.mubr.bf16.gmra.mrb[0].mxu0 %v2695
      %v2804 = vpop.f32.mrb[0].mxu0
      %v2805 = vadd.f32 %v2649, %v2804
      %v2806 = vpop.f32.mrb[0].mxu0
      %v2807 = vpop.f32.mrb[0].mxu0
      %v2808 = vadd.f32 %v2649, %v2807
      %v2809 = vpop.f32.mrb[0].mxu0
      %2810 = vmatprep.mubr.bf16.mxu0 0
      %2811 = vmatmul.mubr.bf16.gmra.mrb[0].mxu0 %v2698
      %v2812 = vpop.f32.mrb[0].mxu0
      %v2813 = vadd.f32 %v2649, %v2812
      %v2814 = vpop.f32.mrb[0].mxu0
      %v2815 = vpop.f32.mrb[0].mxu0
      %v2816 = vadd.f32 %v2649, %v2815
      %v2817 = vpop.f32.mrb[0].mxu0
      %2818 = vmatprep.mubr.bf16.mxu0 0
      %2819 = vmatmul.mubr.bf16.gmra.mrb[0].mxu0 %v2701
      %v2820 = vpop.f32.mrb[0].mxu0
      %v2821 = vadd.f32 %v2649, %v2820
      %v2822 = vpop.f32.mrb[0].mxu0
      %v2823 = vpop.f32.mrb[0].mxu0
      %v2824 = vadd.f32 %v2649, %v2823
      %v2825 = vpop.f32.mrb[0].mxu0
      %2826 = vmatprep.mubr.bf16.mxu0 0
      %2827 = vmatmul.mubr.bf16.gmra.mrb[0].mxu0 %v2704
      %v2828 = vpop.f32.mrb[0].mxu0
      %v2829 = vadd.f32 %v2649, %v2828
      %v2830 = vpop.f32.mrb[0].mxu0
      %v2831 = vpop.f32.mrb[0].mxu0
      %v2832 = vadd.f32 %v2649, %v2831
      %v2833 = vpop.f32.mrb[0].mxu0
      %2834 = vmatprep.mubr.bf16.mxu0 0
      %2835 = vmatmul.mubr.bf16.gmra.mrb[0].mxu0 %v2707
      %v2836 = vpop.f32.mrb[0].mxu0
      %v2837 = vadd.f32 %v2649, %v2836
      %v2838 = vpop.f32.mrb[0].mxu0
      %v2839 = vpop.f32.mrb[0].mxu0
      %v2840 = vadd.f32 %v2649, %v2839
      %v2841 = vpop.f32.mrb[0].mxu0
      %2842 = vmatprep.mubr.bf16.mxu0 0
      %2843 = vmatmul.mubr.bf16.gmra.mrb[0].mxu0 %v2710
      %v2844 = vpop.f32.mrb[0].mxu0
      %v2845 = vadd.f32 %v2649, %v2844
      %v2846 = vpop.f32.mrb[0].mxu0
      %v2847 = vpop.f32.mrb[0].mxu0
      %v2848 = vadd.f32 %v2649, %v2847
      %v2849 = vpop.f32.mrb[0].mxu0
      %2850 = vmatprep.mubr.bf16.mxu0 0
      %2851 = vmatmul.mubr.bf16.gmra.mrb[0].mxu0 %v2713
      %v2852 = vpop.f32.mrb[0].mxu0
      %v2853 = vadd.f32 %v2649, %v2852
      %v2854 = vpop.f32.mrb[0].mxu0
      %v2855 = vpop.f32.mrb[0].mxu0
      %v2856 = vadd.f32 %v2649, %v2855
      %v2857 = vpop.f32.mrb[0].mxu0
      %2858 = vmatprep.mubr.bf16.mxu0 0
      %2859 = vmatmul.mubr.bf16.gmra.mrb[0].mxu0 %v2716
      %v2860 = vpop.f32.mrb[0].mxu0
      %v2861 = vadd.f32 %v2649, %v2860
      %v2862 = vpop.f32.mrb[0].mxu0
      %v2863 = vpop.f32.mrb[0].mxu0
      %v2864 = vadd.f32 %v2649, %v2863
      %v2865 = vpop.f32.mrb[0].mxu0
      %2866 = vmatprep.mubr.bf16.mxu0 0
      %2867 = vmatmul.mubr.bf16.gmra.mrb[0].mxu0 %v2719
      %v2868 = vpop.f32.mrb[0].mxu0
      %v2869 = vadd.f32 %v2649, %v2868
      %v2870 = vpop.f32.mrb[0].mxu0
      %v2871 = vpop.f32.mrb[0].mxu0
      %v2872 = vadd.f32 %v2649, %v2871
      %v2873 = vpop.f32.mrb[0].mxu0
      %2874 = vmatprep.mubr.bf16.mxu0 0
      %2875 = vmatmul.mubr.bf16.gmra.mrb[0].mxu0 %v2722
      %v2876 = vpop.f32.mrb[0].mxu0
      %v2877 = vadd.f32 %v2649, %v2876
      %v2878 = vpop.f32.mrb[0].mxu0
      %v2879 = vpop.f32.mrb[0].mxu0
      %v2880 = vadd.f32 %v2649, %v2879
      %v2881 = vpop.f32.mrb[0].mxu0
      %2882 = vmatprep.mubr.bf16.mxu0 0
      %2883 = vmatmul.mubr.bf16.gmra.mrb[0].mxu0 %v2725
      %v2884 = vpop.f32.mrb[0].mxu0
      %v2885 = vadd.f32 %v2649, %v2884
      %v2886 = vpop.f32.mrb[0].mxu0
      %v2887 = vpop.f32.mrb[0].mxu0
      %v2888 = vadd.f32 %v2649, %v2887
      %v2889 = vpop.f32.mrb[0].mxu0
      %2890 = vdwg.mxu0
      %v2891 = vld [vmem:[%s9] sm:$0x1]
      %v2892 = vlaneseq
      %v2893 = vshrl.u32 %v2892, 7
      %v2894 = vsub.s32 0, %v2893
      %v2895 = vrot.slane %v2891, %v2894
      %v2896 = vmul.f32 %v2765, %v2895
      %v2897 = vmul.f32 %v2768, %v2895
      %v2898 = vmul.f32 %v2773, %v2895
      %v2899 = vmul.f32 %v2776, %v2895
      %v2900 = vmul.f32 %v2781, %v2895
      %v2901 = vmul.f32 %v2784, %v2895
      %v2902 = vmul.f32 %v2789, %v2895
      %v2903 = vmul.f32 %v2792, %v2895
      %v2904 = vmul.f32 %v2797, %v2895
      %v2905 = vmul.f32 %v2800, %v2895
      %v2906 = vmul.f32 %v2805, %v2895
      %v2907 = vmul.f32 %v2808, %v2895
      %v2908 = vmul.f32 %v2813, %v2895
      %v2909 = vmul.f32 %v2816, %v2895
      %v2910 = vmul.f32 %v2821, %v2895
      %v2911 = vmul.f32 %v2824, %v2895
      %v2912 = vmul.f32 %v2829, %v2895
      %v2913 = vmul.f32 %v2832, %v2895
      %v2914 = vmul.f32 %v2837, %v2895
      %v2915 = vmul.f32 %v2840, %v2895
      %v2916 = vmul.f32 %v2845, %v2895
      %v2917 = vmul.f32 %v2848, %v2895
      %v2918 = vmul.f32 %v2853, %v2895
      %v2919 = vmul.f32 %v2856, %v2895
      %v2920 = vmul.f32 %v2861, %v2895
      %v2921 = vmul.f32 %v2864, %v2895
      %v2922 = vmul.f32 %v2869, %v2895
      %v2923 = vmul.f32 %v2872, %v2895
      %v2924 = vmul.f32 %v2877, %v2895
      %v2925 = vmul.f32 %v2880, %v2895
      %v2926 = vmul.f32 %v2885, %v2895
      %v2927 = vmul.f32 %v2888, %v2895
      %v2928 = vld [vmem:[%s10] sm:$0x1]
      %v2929 = vlaneseq
      %v2930 = vshrl.u32 %v2929, 7
      %v2931 = vsub.s32 0, %v2930
      %v2932 = vrot.slane %v2928, %v2931
      %v2933 = vadd.f32 %v2896, %v2932
      %v2934 = vadd.f32 %v2897, %v2932
      %v2935 = vadd.f32 %v2898, %v2932
      %v2936 = vadd.f32 %v2899, %v2932
      %v2937 = vadd.f32 %v2900, %v2932
      %v2938 = vadd.f32 %v2901, %v2932
      %v2939 = vadd.f32 %v2902, %v2932
      %v2940 = vadd.f32 %v2903, %v2932
      %v2941 = vadd.f32 %v2904, %v2932
      %v2942 = vadd.f32 %v2905, %v2932
      %v2943 = vadd.f32 %v2906, %v2932
      %v2944 = vadd.f32 %v2907, %v2932
      %v2945 = vadd.f32 %v2908, %v2932
      %v2946 = vadd.f32 %v2909, %v2932
      %v2947 = vadd.f32 %v2910, %v2932
      %v2948 = vadd.f32 %v2911, %v2932
      %v2949 = vadd.f32 %v2912, %v2932
      %v2950 = vadd.f32 %v2913, %v2932
      %v2951 = vadd.f32 %v2914, %v2932
      %v2952 = vadd.f32 %v2915, %v2932
      %v2953 = vadd.f32 %v2916, %v2932
      %v2954 = vadd.f32 %v2917, %v2932
      %v2955 = vadd.f32 %v2918, %v2932
      %v2956 = vadd.f32 %v2919, %v2932
      %v2957 = vadd.f32 %v2920, %v2932
      %v2958 = vadd.f32 %v2921, %v2932
      %v2959 = vadd.f32 %v2922, %v2932
      %v2960 = vadd.f32 %v2923, %v2932
      %v2961 = vadd.f32 %v2924, %v2932
      %v2962 = vadd.f32 %v2925, %v2932
      %v2963 = vadd.f32 %v2926, %v2932
      %v2964 = vadd.f32 %v2927, %v2932
      %v2965 = vmax.f32 %v2933, 0.0
      %v2966 = vmax.f32 %v2934, 0.0
      %v2967 = vmax.f32 %v2935, 0.0
      %v2968 = vmax.f32 %v2936, 0.0
      %v2969 = vmax.f32 %v2937, 0.0
      %v2970 = vmax.f32 %v2938, 0.0
      %v2971 = vmax.f32 %v2939, 0.0
      %v2972 = vmax.f32 %v2940, 0.0
      %v2973 = vmax.f32 %v2941, 0.0
      %v2974 = vmax.f32 %v2942, 0.0
      %v2975 = vmax.f32 %v2943, 0.0
      %v2976 = vmax.f32 %v2944, 0.0
      %v2977 = vmax.f32 %v2945, 0.0
      %v2978 = vmax.f32 %v2946, 0.0
      %v2979 = vmax.f32 %v2947, 0.0
      %v2980 = vmax.f32 %v2948, 0.0
      %v2981 = vmax.f32 %v2949, 0.0
      %v2982 = vmax.f32 %v2950, 0.0
      %v2983 = vmax.f32 %v2951, 0.0
      %v2984 = vmax.f32 %v2952, 0.0
      %v2985 = vmax.f32 %v2953, 0.0
      %v2986 = vmax.f32 %v2954, 0.0
      %v2987 = vmax.f32 %v2955, 0.0
      %v2988 = vmax.f32 %v2956, 0.0
      %v2989 = vmax.f32 %v2957, 0.0
      %v2990 = vmax.f32 %v2958, 0.0
      %v2991 = vmax.f32 %v2959, 0.0
      %v2992 = vmax.f32 %v2960, 0.0
      %v2993 = vmax.f32 %v2961, 0.0
      %v2994 = vmax.f32 %v2962, 0.0
      %v2995 = vmax.f32 %v2963, 0.0
      %v2996 = vmax.f32 %v2964, 0.0
      %s2997 = scalar_lea.vmem [#allocation3], 24
      %2998 = vst.msk [vmem:[%s2997 + $0x1] sm:$0xff] %vm498, %v2965
      %2999 = vst.msk [vmem:[%s2997 + $0x9] sm:$0xff] %vm498, %v2966
      %3000 = vst.msk [vmem:[%s2997 + $0x19] sm:$0xff] %vm498, %v2967
      %3001 = vst.msk [vmem:[%s2997 + $0x21] sm:$0xff] %vm498, %v2968
      %3002 = vst.msk [vmem:[%s2997 + $0x31] sm:$0xff] %vm498, %v2969
      %3003 = vst.msk [vmem:[%s2997 + $0x39] sm:$0xff] %vm498, %v2970
      %3004 = vst.msk [vmem:[%s2997 + $0x49] sm:$0xff] %vm498, %v2971
      %3005 = vst.msk [vmem:[%s2997 + $0x51] sm:$0xff] %vm498, %v2972
      %3006 = vst.msk [vmem:[%s2997 + $0x61] sm:$0xff] %vm498, %v2973
      %3007 = vst.msk [vmem:[%s2997 + $0x69] sm:$0xff] %vm498, %v2974
      %3008 = vst.msk [vmem:[%s2997 + $0x79] sm:$0xff] %vm498, %v2975
      %3009 = vst.msk [vmem:[%s2997 + $0x81] sm:$0xff] %vm498, %v2976
      %3010 = vst.msk [vmem:[%s2997 + $0x91] sm:$0xff] %vm498, %v2977
      %3011 = vst.msk [vmem:[%s2997 + $0x99] sm:$0xff] %vm498, %v2978
      %3012 = vst.msk [vmem:[%s2997 + $0xa9] sm:$0xff] %vm498, %v2979
      %3013 = vst.msk [vmem:[%s2997 + $0xb1] sm:$0xff] %vm498, %v2980
      %3014 = vst.msk [vmem:[%s2997 + $0xc1] sm:$0xff] %vm498, %v2981
      %3015 = vst.msk [vmem:[%s2997 + $0xc9] sm:$0xff] %vm498, %v2982
      %3016 = vst.msk [vmem:[%s2997 + $0xd9] sm:$0xff] %vm498, %v2983
      %3017 = vst.msk [vmem:[%s2997 + $0xe1] sm:$0xff] %vm498, %v2984
      %3018 = vst.msk [vmem:[%s2997 + $0xf1] sm:$0xff] %vm498, %v2985
      %3019 = vst.msk [vmem:[%s2997 + $0xf9] sm:$0xff] %vm498, %v2986
      %3020 = vst.msk [vmem:[%s2997 + $0x109] sm:$0xff] %vm498, %v2987
      %3021 = vst.msk [vmem:[%s2997 + $0x111] sm:$0xff] %vm498, %v2988
      %3022 = vst.msk [vmem:[%s2997 + $0x121] sm:$0xff] %vm498, %v2989
      %3023 = vst.msk [vmem:[%s2997 + $0x129] sm:$0xff] %vm498, %v2990
      %3024 = vst.msk [vmem:[%s2997 + $0x139] sm:$0xff] %vm498, %v2991
      %3025 = vst.msk [vmem:[%s2997 + $0x141] sm:$0xff] %vm498, %v2992
      %3026 = vst.msk [vmem:[%s2997 + $0x151] sm:$0xff] %vm498, %v2993
      %3027 = vst.msk [vmem:[%s2997 + $0x159] sm:$0xff] %vm498, %v2994
      %3028 = vst.msk [vmem:[%s2997 + $0x169] sm:$0xff] %vm498, %v2995
      %3029 = vst.msk [vmem:[%s2997 + $0x171] sm:$0xff] %vm498, %v2996
      %v3030 = vld [vmem:[%s11] sm:$0xf]
      %v3031 = vld [vmem:[%s11 + $0x4] sm:$0xf]
      %v3032 = vld [vmem:[%s11 + $0x8] sm:$0xf]
      %v3033 = vld [vmem:[%s11 + $0xc] sm:$0xf]
      %v3034 = vld [vmem:[%s11 + $0x10] sm:$0xf]
      %v3035 = vld [vmem:[%s11 + $0x14] sm:$0xf]
      %v3036 = vld [vmem:[%s11 + $0x18] sm:$0xf]
      %v3037 = vld [vmem:[%s11 + $0x1c] sm:$0xf]
      %v3038 = vld [vmem:[%s11 + $0x20] sm:$0xf]
      %v3039 = vld [vmem:[%s11 + $0x24] sm:$0xf]
      %v3040 = vld [vmem:[%s11 + $0x28] sm:$0xf]
      %v3041 = vld [vmem:[%s11 + $0x2c] sm:$0xf]
      %v3042 = vld [vmem:[%s11 + $0x30] sm:$0xf]
      %v3043 = vld [vmem:[%s11 + $0x34] sm:$0xf]
      %v3044 = vld [vmem:[%s11 + $0x38] sm:$0xf]
      %v3045 = vld [vmem:[%s11 + $0x3c] sm:$0xf]
      %v3046 = vld [vmem:[%s11 + $0x40] sm:$0xf]
      %v3047 = vld [vmem:[%s11 + $0x44] sm:$0xf]
      %v3048 = vld [vmem:[#allocation3] sm:$0xff]
      %v3049 = vld [vmem:[#allocation3 + $0x8] sm:$0xff]
      %v3050 = vld [vmem:[#allocation3 + $0x18] sm:$0xff]
      %v3051 = vld [vmem:[#allocation3 + $0x20] sm:$0xff]
      %v3052 = vld [vmem:[#allocation3 + $0x30] sm:$0xff]
      %v3053 = vld [vmem:[#allocation3 + $0x38] sm:$0xff]
      %v3054 = vld [vmem:[#allocation3 + $0x48] sm:$0xff]
      %v3055 = vld [vmem:[#allocation3 + $0x50] sm:$0xff]
      %v3056 = vld [vmem:[#allocation3 + $0x60] sm:$0xff]
      %v3057 = vld [vmem:[#allocation3 + $0x68] sm:$0xff]
      %v3058 = vld [vmem:[#allocation3 + $0x78] sm:$0xff]
      %v3059 = vld [vmem:[#allocation3 + $0x80] sm:$0xff]
      %v3060 = vld [vmem:[#allocation3 + $0x90] sm:$0xff]
      %v3061 = vld [vmem:[#allocation3 + $0x98] sm:$0xff]
      %v3062 = vld [vmem:[#allocation3 + $0xa8] sm:$0xff]
      %v3063 = vld [vmem:[#allocation3 + $0xb0] sm:$0xff]
      %v3064 = vld [vmem:[#allocation3 + $0xc0] sm:$0xff]
      %v3065 = vld [vmem:[#allocation3 + $0xc8] sm:$0xff]
      %v3066 = vld [vmem:[#allocation3 + $0xd8] sm:$0xff]
      %v3067 = vld [vmem:[#allocation3 + $0xe0] sm:$0xff]
      %v3068 = vld [vmem:[#allocation3 + $0xf0] sm:$0xff]
      %v3069 = vld [vmem:[#allocation3 + $0xf8] sm:$0xff]
      %v3070 = vld [vmem:[#allocation3 + $0x108] sm:$0xff]
      %v3071 = vld [vmem:[#allocation3 + $0x110] sm:$0xff]
      %v3072 = vld [vmem:[#allocation3 + $0x120] sm:$0xff]
      %v3073 = vld [vmem:[#allocation3 + $0x128] sm:$0xff]
      %v3074 = vld [vmem:[#allocation3 + $0x138] sm:$0xff]
      %v3075 = vld [vmem:[#allocation3 + $0x140] sm:$0xff]
      %v3076 = vld [vmem:[#allocation3 + $0x150] sm:$0xff]
      %v3077 = vld [vmem:[#allocation3 + $0x158] sm:$0xff]
      %v3078 = vld [vmem:[#allocation3 + $0x168] sm:$0xff]
      %v3079 = vld [vmem:[#allocation3 + $0x170] sm:$0xff]
      %v3080 = vld [vmem:[#allocation3 + $0x1] sm:$0xff]
      %v3081 = vld [vmem:[#allocation3 + $0x9] sm:$0xff]
      %v3082 = vld [vmem:[#allocation3 + $0x19] sm:$0xff]
      %v3083 = vld [vmem:[#allocation3 + $0x21] sm:$0xff]
      %v3084 = vld [vmem:[#allocation3 + $0x31] sm:$0xff]
      %v3085 = vld [vmem:[#allocation3 + $0x39] sm:$0xff]
      %v3086 = vld [vmem:[#allocation3 + $0x49] sm:$0xff]
      %v3087 = vld [vmem:[#allocation3 + $0x51] sm:$0xff]
      %v3088 = vld [vmem:[#allocation3 + $0x61] sm:$0xff]
      %v3089 = vld [vmem:[#allocation3 + $0x69] sm:$0xff]
      %v3090 = vld [vmem:[#allocation3 + $0x79] sm:$0xff]
      %v3091 = vld [vmem:[#allocation3 + $0x81] sm:$0xff]
      %v3092 = vld [vmem:[#allocation3 + $0x91] sm:$0xff]
      %v3093 = vld [vmem:[#allocation3 + $0x99] sm:$0xff]
      %v3094 = vld [vmem:[#allocation3 + $0xa9] sm:$0xff]
      %v3095 = vld [vmem:[#allocation3 + $0xb1] sm:$0xff]
      %v3096 = vld [vmem:[#allocation3 + $0xc1] sm:$0xff]
      %v3097 = vld [vmem:[#allocation3 + $0xc9] sm:$0xff]
      %v3098 = vld [vmem:[#allocation3 + $0xd9] sm:$0xff]
      %v3099 = vld [vmem:[#allocation3 + $0xe1] sm:$0xff]
      %v3100 = vld [vmem:[#allocation3 + $0xf1] sm:$0xff]
      %v3101 = vld [vmem:[#allocation3 + $0xf9] sm:$0xff]
      %v3102 = vld [vmem:[#allocation3 + $0x109] sm:$0xff]
      %v3103 = vld [vmem:[#allocation3 + $0x111] sm:$0xff]
      %v3104 = vld [vmem:[#allocation3 + $0x121] sm:$0xff]
      %v3105 = vld [vmem:[#allocation3 + $0x129] sm:$0xff]
      %v3106 = vld [vmem:[#allocation3 + $0x139] sm:$0xff]
      %v3107 = vld [vmem:[#allocation3 + $0x141] sm:$0xff]
      %v3108 = vld [vmem:[#allocation3 + $0x151] sm:$0xff]
      %v3109 = vld [vmem:[#allocation3 + $0x159] sm:$0xff]
      %v3110 = vld [vmem:[#allocation3 + $0x169] sm:$0xff]
      %v3111 = vld [vmem:[#allocation3 + $0x171] sm:$0xff]
      %v3112 = vld [vmem:[#allocation3 + $0x2] sm:$0xff]
      %v3113 = vld [vmem:[#allocation3 + $0xa] sm:$0xff]
      %v3114 = vld [vmem:[#allocation3 + $0x1a] sm:$0xff]
      %v3115 = vld [vmem:[#allocation3 + $0x22] sm:$0xff]
      %v3116 = vld [vmem:[#allocation3 + $0x32] sm:$0xff]
      %v3117 = vld [vmem:[#allocation3 + $0x3a] sm:$0xff]
      %v3118 = vld [vmem:[#allocation3 + $0x4a] sm:$0xff]
      %v3119 = vld [vmem:[#allocation3 + $0x52] sm:$0xff]
      %v3120 = vld [vmem:[#allocation3 + $0x62] sm:$0xff]
      %v3121 = vld [vmem:[#allocation3 + $0x6a] sm:$0xff]
      %v3122 = vld [vmem:[#allocation3 + $0x7a] sm:$0xff]
      %v3123 = vld [vmem:[#allocation3 + $0x82] sm:$0xff]
      %v3124 = vld [vmem:[#allocation3 + $0x92] sm:$0xff]
      %v3125 = vld [vmem:[#allocation3 + $0x9a] sm:$0xff]
      %v3126 = vld [vmem:[#allocation3 + $0xaa] sm:$0xff]
      %v3127 = vld [vmem:[#allocation3 + $0xb2] sm:$0xff]
      %v3128 = vld [vmem:[#allocation3 + $0xc2] sm:$0xff]
      %v3129 = vld [vmem:[#allocation3 + $0xca] sm:$0xff]
      %v3130 = vld [vmem:[#allocation3 + $0xda] sm:$0xff]
      %v3131 = vld [vmem:[#allocation3 + $0xe2] sm:$0xff]
      %v3132 = vld [vmem:[#allocation3 + $0xf2] sm:$0xff]
      %v3133 = vld [vmem:[#allocation3 + $0xfa] sm:$0xff]
      %v3134 = vld [vmem:[#allocation3 + $0x10a] sm:$0xff]
      %v3135 = vld [vmem:[#allocation3 + $0x112] sm:$0xff]
      %v3136 = vld [vmem:[#allocation3 + $0x122] sm:$0xff]
      %v3137 = vld [vmem:[#allocation3 + $0x12a] sm:$0xff]
      %v3138 = vld [vmem:[#allocation3 + $0x13a] sm:$0xff]
      %v3139 = vld [vmem:[#allocation3 + $0x142] sm:$0xff]
      %v3140 = vld [vmem:[#allocation3 + $0x152] sm:$0xff]
      %v3141 = vld [vmem:[#allocation3 + $0x15a] sm:$0xff]
      %v3142 = vld [vmem:[#allocation3 + $0x16a] sm:$0xff]
      %v3143 = vld [vmem:[#allocation3 + $0x172] sm:$0xff]
      %v3144 = vld [vmem:[%s2997] sm:$0xff]
      %v3145 = vld [vmem:[%s2997 + $0x8] sm:$0xff]
      %v3146 = vld [vmem:[%s2997 + $0x18] sm:$0xff]
      %v3147 = vld [vmem:[%s2997 + $0x20] sm:$0xff]
      %v3148 = vld [vmem:[%s2997 + $0x30] sm:$0xff]
      %v3149 = vld [vmem:[%s2997 + $0x38] sm:$0xff]
      %v3150 = vld [vmem:[%s2997 + $0x48] sm:$0xff]
      %v3151 = vld [vmem:[%s2997 + $0x50] sm:$0xff]
      %v3152 = vld [vmem:[%s2997 + $0x60] sm:$0xff]
      %v3153 = vld [vmem:[%s2997 + $0x68] sm:$0xff]
      %v3154 = vld [vmem:[%s2997 + $0x78] sm:$0xff]
      %v3155 = vld [vmem:[%s2997 + $0x80] sm:$0xff]
      %v3156 = vld [vmem:[%s2997 + $0x90] sm:$0xff]
      %v3157 = vld [vmem:[%s2997 + $0x98] sm:$0xff]
      %v3158 = vld [vmem:[%s2997 + $0xa8] sm:$0xff]
      %v3159 = vld [vmem:[%s2997 + $0xb0] sm:$0xff]
      %v3160 = vld [vmem:[%s2997 + $0xc0] sm:$0xff]
      %v3161 = vld [vmem:[%s2997 + $0xc8] sm:$0xff]
      %v3162 = vld [vmem:[%s2997 + $0xd8] sm:$0xff]
      %v3163 = vld [vmem:[%s2997 + $0xe0] sm:$0xff]
      %v3164 = vld [vmem:[%s2997 + $0xf0] sm:$0xff]
      %v3165 = vld [vmem:[%s2997 + $0xf8] sm:$0xff]
      %v3166 = vld [vmem:[%s2997 + $0x108] sm:$0xff]
      %v3167 = vld [vmem:[%s2997 + $0x110] sm:$0xff]
      %v3168 = vld [vmem:[%s2997 + $0x120] sm:$0xff]
      %v3169 = vld [vmem:[%s2997 + $0x128] sm:$0xff]
      %v3170 = vld [vmem:[%s2997 + $0x138] sm:$0xff]
      %v3171 = vld [vmem:[%s2997 + $0x140] sm:$0xff]
      %v3172 = vld [vmem:[%s2997 + $0x150] sm:$0xff]
      %v3173 = vld [vmem:[%s2997 + $0x158] sm:$0xff]
      %v3174 = vld [vmem:[%s2997 + $0x168] sm:$0xff]
      %v3175 = vld [vmem:[%s2997 + $0x170] sm:$0xff]
      %v3176 = vld [vmem:[%s2997 + $0x1] sm:$0xff]
      %v3177 = vld [vmem:[%s2997 + $0x9] sm:$0xff]
      %v3178 = vld [vmem:[%s2997 + $0x19] sm:$0xff]
      %v3179 = vld [vmem:[%s2997 + $0x21] sm:$0xff]
      %v3180 = vld [vmem:[%s2997 + $0x31] sm:$0xff]
      %v3181 = vld [vmem:[%s2997 + $0x39] sm:$0xff]
      %v3182 = vld [vmem:[%s2997 + $0x49] sm:$0xff]
      %v3183 = vld [vmem:[%s2997 + $0x51] sm:$0xff]
      %v3184 = vld [vmem:[%s2997 + $0x61] sm:$0xff]
      %v3185 = vld [vmem:[%s2997 + $0x69] sm:$0xff]
      %v3186 = vld [vmem:[%s2997 + $0x79] sm:$0xff]
      %v3187 = vld [vmem:[%s2997 + $0x81] sm:$0xff]
      %v3188 = vld [vmem:[%s2997 + $0x91] sm:$0xff]
      %v3189 = vld [vmem:[%s2997 + $0x99] sm:$0xff]
      %v3190 = vld [vmem:[%s2997 + $0xa9] sm:$0xff]
      %v3191 = vld [vmem:[%s2997 + $0xb1] sm:$0xff]
      %v3192 = vld [vmem:[%s2997 + $0xc1] sm:$0xff]
      %v3193 = vld [vmem:[%s2997 + $0xc9] sm:$0xff]
      %v3194 = vld [vmem:[%s2997 + $0xd9] sm:$0xff]
      %v3195 = vld [vmem:[%s2997 + $0xe1] sm:$0xff]
      %v3196 = vld [vmem:[%s2997 + $0xf1] sm:$0xff]
      %v3197 = vld [vmem:[%s2997 + $0xf9] sm:$0xff]
      %v3198 = vld [vmem:[%s2997 + $0x109] sm:$0xff]
      %v3199 = vld [vmem:[%s2997 + $0x111] sm:$0xff]
      %v3200 = vld [vmem:[%s2997 + $0x121] sm:$0xff]
      %v3201 = vld [vmem:[%s2997 + $0x129] sm:$0xff]
      %v3202 = vld [vmem:[%s2997 + $0x139] sm:$0xff]
      %v3203 = vld [vmem:[%s2997 + $0x141] sm:$0xff]
      %v3204 = vld [vmem:[%s2997 + $0x151] sm:$0xff]
      %v3205 = vld [vmem:[%s2997 + $0x159] sm:$0xff]
      %v3206 = vld [vmem:[%s2997 + $0x169] sm:$0xff]
      %v3207 = vld [vmem:[%s2997 + $0x171] sm:$0xff]
      %v3208 = vld [vmem:[%s2997 + $0x2] sm:$0xff]
      %v3209 = vld [vmem:[%s2997 + $0xa] sm:$0xff]
      %v3210 = vld [vmem:[%s2997 + $0x1a] sm:$0xff]
      %v3211 = vld [vmem:[%s2997 + $0x22] sm:$0xff]
      %v3212 = vld [vmem:[%s2997 + $0x32] sm:$0xff]
      %v3213 = vld [vmem:[%s2997 + $0x3a] sm:$0xff]
      %v3214 = vld [vmem:[%s2997 + $0x4a] sm:$0xff]
      %v3215 = vld [vmem:[%s2997 + $0x52] sm:$0xff]
      %v3216 = vld [vmem:[%s2997 + $0x62] sm:$0xff]
      %v3217 = vld [vmem:[%s2997 + $0x6a] sm:$0xff]
      %v3218 = vld [vmem:[%s2997 + $0x7a] sm:$0xff]
      %v3219 = vld [vmem:[%s2997 + $0x82] sm:$0xff]
      %v3220 = vld [vmem:[%s2997 + $0x92] sm:$0xff]
      %v3221 = vld [vmem:[%s2997 + $0x9a] sm:$0xff]
      %v3222 = vld [vmem:[%s2997 + $0xaa] sm:$0xff]
      %v3223 = vld [vmem:[%s2997 + $0xb2] sm:$0xff]
      %v3224 = vld [vmem:[%s2997 + $0xc2] sm:$0xff]
      %v3225 = vld [vmem:[%s2997 + $0xca] sm:$0xff]
      %v3226 = vld [vmem:[%s2997 + $0xda] sm:$0xff]
      %v3227 = vld [vmem:[%s2997 + $0xe2] sm:$0xff]
      %v3228 = vld [vmem:[%s2997 + $0xf2] sm:$0xff]
      %v3229 = vld [vmem:[%s2997 + $0xfa] sm:$0xff]
      %v3230 = vld [vmem:[%s2997 + $0x10a] sm:$0xff]
      %v3231 = vld [vmem:[%s2997 + $0x112] sm:$0xff]
      %v3232 = vld [vmem:[%s2997 + $0x122] sm:$0xff]
      %v3233 = vld [vmem:[%s2997 + $0x12a] sm:$0xff]
      %v3234 = vld [vmem:[%s2997 + $0x13a] sm:$0xff]
      %v3235 = vld [vmem:[%s2997 + $0x142] sm:$0xff]
      %v3236 = vld [vmem:[%s2997 + $0x152] sm:$0xff]
      %v3237 = vld [vmem:[%s2997 + $0x15a] sm:$0xff]
      %v3238 = vld [vmem:[%s2997 + $0x16a] sm:$0xff]
      %v3239 = vld [vmem:[%s2997 + $0x172] sm:$0xff]
      %s3240 = scalar_lea.vmem [#allocation3], 48
      %v3241 = vld [vmem:[%s3240] sm:$0xff]
      %v3242 = vld [vmem:[%s3240 + $0x8] sm:$0xff]
      %v3243 = vld [vmem:[%s3240 + $0x18] sm:$0xff]
      %v3244 = vld [vmem:[%s3240 + $0x20] sm:$0xff]
      %v3245 = vld [vmem:[%s3240 + $0x30] sm:$0xff]
      %v3246 = vld [vmem:[%s3240 + $0x38] sm:$0xff]
      %v3247 = vld [vmem:[%s3240 + $0x48] sm:$0xff]
      %v3248 = vld [vmem:[%s3240 + $0x50] sm:$0xff]
      %v3249 = vld [vmem:[%s3240 + $0x60] sm:$0xff]
      %v3250 = vld [vmem:[%s3240 + $0x68] sm:$0xff]
      %v3251 = vld [vmem:[%s3240 + $0x78] sm:$0xff]
      %v3252 = vld [vmem:[%s3240 + $0x80] sm:$0xff]
      %v3253 = vld [vmem:[%s3240 + $0x90] sm:$0xff]
      %v3254 = vld [vmem:[%s3240 + $0x98] sm:$0xff]
      %v3255 = vld [vmem:[%s3240 + $0xa8] sm:$0xff]
      %v3256 = vld [vmem:[%s3240 + $0xb0] sm:$0xff]
      %v3257 = vld [vmem:[%s3240 + $0xc0] sm:$0xff]
      %v3258 = vld [vmem:[%s3240 + $0xc8] sm:$0xff]
      %v3259 = vld [vmem:[%s3240 + $0xd8] sm:$0xff]
      %v3260 = vld [vmem:[%s3240 + $0xe0] sm:$0xff]
      %v3261 = vld [vmem:[%s3240 + $0xf0] sm:$0xff]
      %v3262 = vld [vmem:[%s3240 + $0xf8] sm:$0xff]
      %v3263 = vld [vmem:[%s3240 + $0x108] sm:$0xff]
      %v3264 = vld [vmem:[%s3240 + $0x110] sm:$0xff]
      %v3265 = vld [vmem:[%s3240 + $0x120] sm:$0xff]
      %v3266 = vld [vmem:[%s3240 + $0x128] sm:$0xff]
      %v3267 = vld [vmem:[%s3240 + $0x138] sm:$0xff]
      %v3268 = vld [vmem:[%s3240 + $0x140] sm:$0xff]
      %v3269 = vld [vmem:[%s3240 + $0x150] sm:$0xff]
      %v3270 = vld [vmem:[%s3240 + $0x158] sm:$0xff]
      %v3271 = vld [vmem:[%s3240 + $0x168] sm:$0xff]
      %v3272 = vld [vmem:[%s3240 + $0x170] sm:$0xff]
      %v3273 = vld [vmem:[%s3240 + $0x1] sm:$0xff]
      %v3274 = vld [vmem:[%s3240 + $0x9] sm:$0xff]
      %v3275 = vld [vmem:[%s3240 + $0x19] sm:$0xff]
      %v3276 = vld [vmem:[%s3240 + $0x21] sm:$0xff]
      %v3277 = vld [vmem:[%s3240 + $0x31] sm:$0xff]
      %v3278 = vld [vmem:[%s3240 + $0x39] sm:$0xff]
      %v3279 = vld [vmem:[%s3240 + $0x49] sm:$0xff]
      %v3280 = vld [vmem:[%s3240 + $0x51] sm:$0xff]
      %v3281 = vld [vmem:[%s3240 + $0x61] sm:$0xff]
      %v3282 = vld [vmem:[%s3240 + $0x69] sm:$0xff]
      %v3283 = vld [vmem:[%s3240 + $0x79] sm:$0xff]
      %v3284 = vld [vmem:[%s3240 + $0x81] sm:$0xff]
      %v3285 = vld [vmem:[%s3240 + $0x91] sm:$0xff]
      %v3286 = vld [vmem:[%s3240 + $0x99] sm:$0xff]
      %v3287 = vld [vmem:[%s3240 + $0xa9] sm:$0xff]
      %v3288 = vld [vmem:[%s3240 + $0xb1] sm:$0xff]
      %v3289 = vld [vmem:[%s3240 + $0xc1] sm:$0xff]
      %v3290 = vld [vmem:[%s3240 + $0xc9] sm:$0xff]
      %v3291 = vld [vmem:[%s3240 + $0xd9] sm:$0xff]
      %v3292 = vld [vmem:[%s3240 + $0xe1] sm:$0xff]
      %v3293 = vld [vmem:[%s3240 + $0xf1] sm:$0xff]
      %v3294 = vld [vmem:[%s3240 + $0xf9] sm:$0xff]
      %v3295 = vld [vmem:[%s3240 + $0x109] sm:$0xff]
      %v3296 = vld [vmem:[%s3240 + $0x111] sm:$0xff]
      %v3297 = vld [vmem:[%s3240 + $0x121] sm:$0xff]
      %v3298 = vld [vmem:[%s3240 + $0x129] sm:$0xff]
      %v3299 = vld [vmem:[%s3240 + $0x139] sm:$0xff]
      %v3300 = vld [vmem:[%s3240 + $0x141] sm:$0xff]
      %v3301 = vld [vmem:[%s3240 + $0x151] sm:$0xff]
      %v3302 = vld [vmem:[%s3240 + $0x159] sm:$0xff]
      %v3303 = vld [vmem:[%s3240 + $0x169] sm:$0xff]
      %v3304 = vld [vmem:[%s3240 + $0x171] sm:$0xff]
      %v3305 = vld [vmem:[%s3240 + $0x2] sm:$0xff]
      %v3306 = vld [vmem:[%s3240 + $0xa] sm:$0xff]
      %v3307 = vld [vmem:[%s3240 + $0x1a] sm:$0xff]
      %v3308 = vld [vmem:[%s3240 + $0x22] sm:$0xff]
      %v3309 = vld [vmem:[%s3240 + $0x32] sm:$0xff]
      %v3310 = vld [vmem:[%s3240 + $0x3a] sm:$0xff]
      %v3311 = vld [vmem:[%s3240 + $0x4a] sm:$0xff]
      %v3312 = vld [vmem:[%s3240 + $0x52] sm:$0xff]
      %v3313 = vld [vmem:[%s3240 + $0x62] sm:$0xff]
      %v3314 = vld [vmem:[%s3240 + $0x6a] sm:$0xff]
      %v3315 = vld [vmem:[%s3240 + $0x7a] sm:$0xff]
      %v3316 = vld [vmem:[%s3240 + $0x82] sm:$0xff]
      %v3317 = vld [vmem:[%s3240 + $0x92] sm:$0xff]
      %v3318 = vld [vmem:[%s3240 + $0x9a] sm:$0xff]
      %v3319 = vld [vmem:[%s3240 + $0xaa] sm:$0xff]
      %v3320 = vld [vmem:[%s3240 + $0xb2] sm:$0xff]
      %v3321 = vld [vmem:[%s3240 + $0xc2] sm:$0xff]
      %v3322 = vld [vmem:[%s3240 + $0xca] sm:$0xff]
      %v3323 = vld [vmem:[%s3240 + $0xda] sm:$0xff]
      %v3324 = vld [vmem:[%s3240 + $0xe2] sm:$0xff]
      %v3325 = vld [vmem:[%s3240 + $0xf2] sm:$0xff]
      %v3326 = vld [vmem:[%s3240 + $0xfa] sm:$0xff]
      %v3327 = vld [vmem:[%s3240 + $0x10a] sm:$0xff]
      %v3328 = vld [vmem:[%s3240 + $0x112] sm:$0xff]
      %v3329 = vld [vmem:[%s3240 + $0x122] sm:$0xff]
      %v3330 = vld [vmem:[%s3240 + $0x12a] sm:$0xff]
      %v3331 = vld [vmem:[%s3240 + $0x13a] sm:$0xff]
      %v3332 = vld [vmem:[%s3240 + $0x142] sm:$0xff]
      %v3333 = vld [vmem:[%s3240 + $0x152] sm:$0xff]
      %v3334 = vld [vmem:[%s3240 + $0x15a] sm:$0xff]
      %v3335 = vld [vmem:[%s3240 + $0x16a] sm:$0xff]
      %v3336 = vld [vmem:[%s3240 + $0x172] sm:$0xff]
      %3369 = vrot.lane.b32.xlu0 %v3080, 16
      %v3370 = vpop.permute.xlu0 %3369
      %3371 = vrot.lane.b32.xlu0 %v3081, 16
      %v3372 = vpop.permute.xlu0 %3371
      %3373 = vrot.lane.b32.xlu0 %v3082, 16
      %v3374 = vpop.permute.xlu0 %3373
      %3375 = vrot.lane.b32.xlu0 %v3083, 16
      %v3376 = vpop.permute.xlu0 %3375
      %3377 = vrot.lane.b32.xlu0 %v3084, 16
      %v3378 = vpop.permute.xlu0 %3377
      %3379 = vrot.lane.b32.xlu0 %v3085, 16
      %v3380 = vpop.permute.xlu0 %3379
      %3381 = vrot.lane.b32.xlu0 %v3086, 16
      %v3382 = vpop.permute.xlu0 %3381
      %3383 = vrot.lane.b32.xlu0 %v3087, 16
      %v3384 = vpop.permute.xlu0 %3383
      %3385 = vrot.lane.b32.xlu0 %v3088, 16
      %v3386 = vpop.permute.xlu0 %3385
      %3387 = vrot.lane.b32.xlu0 %v3089, 16
      %v3388 = vpop.permute.xlu0 %3387
      %3389 = vrot.lane.b32.xlu0 %v3090, 16
      %v3390 = vpop.permute.xlu0 %3389
      %3391 = vrot.lane.b32.xlu0 %v3091, 16
      %v3392 = vpop.permute.xlu0 %3391
      %3393 = vrot.lane.b32.xlu0 %v3092, 16
      %v3394 = vpop.permute.xlu0 %3393
      %3395 = vrot.lane.b32.xlu0 %v3093, 16
      %v3396 = vpop.permute.xlu0 %3395
      %3397 = vrot.lane.b32.xlu0 %v3094, 16
      %v3398 = vpop.permute.xlu0 %3397
      %3399 = vrot.lane.b32.xlu0 %v3095, 16
      %v3400 = vpop.permute.xlu0 %3399
      %3401 = vrot.lane.b32.xlu0 %v3096, 16
      %v3402 = vpop.permute.xlu0 %3401
      %3403 = vrot.lane.b32.xlu0 %v3097, 16
      %v3404 = vpop.permute.xlu0 %3403
      %3405 = vrot.lane.b32.xlu0 %v3098, 16
      %v3406 = vpop.permute.xlu0 %3405
      %3407 = vrot.lane.b32.xlu0 %v3099, 16
      %v3408 = vpop.permute.xlu0 %3407
      %3409 = vrot.lane.b32.xlu0 %v3100, 16
      %v3410 = vpop.permute.xlu0 %3409
      %3411 = vrot.lane.b32.xlu0 %v3101, 16
      %v3412 = vpop.permute.xlu0 %3411
      %3413 = vrot.lane.b32.xlu0 %v3102, 16
      %v3414 = vpop.permute.xlu0 %3413
      %3415 = vrot.lane.b32.xlu0 %v3103, 16
      %v3416 = vpop.permute.xlu0 %3415
      %3417 = vrot.lane.b32.xlu0 %v3104, 16
      %v3418 = vpop.permute.xlu0 %3417
      %3419 = vrot.lane.b32.xlu0 %v3105, 16
      %v3420 = vpop.permute.xlu0 %3419
      %3421 = vrot.lane.b32.xlu0 %v3106, 16
      %v3422 = vpop.permute.xlu0 %3421
      %3423 = vrot.lane.b32.xlu0 %v3107, 16
      %v3424 = vpop.permute.xlu0 %3423
      %3425 = vrot.lane.b32.xlu0 %v3108, 16
      %v3426 = vpop.permute.xlu0 %3425
      %3427 = vrot.lane.b32.xlu0 %v3109, 16
      %v3428 = vpop.permute.xlu0 %3427
      %3429 = vrot.lane.b32.xlu0 %v3110, 16
      %v3430 = vpop.permute.xlu0 %3429
      %3431 = vrot.lane.b32.xlu0 %v3111, 16
      %v3432 = vpop.permute.xlu0 %3431
      %3497 = vrot.lane.b32.xlu0 %v3112, 32
      %v3498 = vpop.permute.xlu0 %3497
      %3499 = vrot.lane.b32.xlu0 %v3113, 32
      %v3500 = vpop.permute.xlu0 %3499
      %3501 = vrot.lane.b32.xlu0 %v3114, 32
      %v3502 = vpop.permute.xlu0 %3501
      %3503 = vrot.lane.b32.xlu0 %v3115, 32
      %v3504 = vpop.permute.xlu0 %3503
      %3505 = vrot.lane.b32.xlu0 %v3116, 32
      %v3506 = vpop.permute.xlu0 %3505
      %3507 = vrot.lane.b32.xlu0 %v3117, 32
      %v3508 = vpop.permute.xlu0 %3507
      %3509 = vrot.lane.b32.xlu0 %v3118, 32
      %v3510 = vpop.permute.xlu0 %3509
      %3511 = vrot.lane.b32.xlu0 %v3119, 32
      %v3512 = vpop.permute.xlu0 %3511
      %3513 = vrot.lane.b32.xlu0 %v3120, 32
      %v3514 = vpop.permute.xlu0 %3513
      %3515 = vrot.lane.b32.xlu0 %v3121, 32
      %v3516 = vpop.permute.xlu0 %3515
      %3517 = vrot.lane.b32.xlu0 %v3122, 32
      %v3518 = vpop.permute.xlu0 %3517
      %3519 = vrot.lane.b32.xlu0 %v3123, 32
      %v3520 = vpop.permute.xlu0 %3519
      %3521 = vrot.lane.b32.xlu0 %v3124, 32
      %v3522 = vpop.permute.xlu0 %3521
      %3523 = vrot.lane.b32.xlu0 %v3125, 32
      %v3524 = vpop.permute.xlu0 %3523
      %3525 = vrot.lane.b32.xlu0 %v3126, 32
      %v3526 = vpop.permute.xlu0 %3525
      %3527 = vrot.lane.b32.xlu0 %v3127, 32
      %v3528 = vpop.permute.xlu0 %3527
      %3529 = vrot.lane.b32.xlu0 %v3128, 32
      %v3530 = vpop.permute.xlu0 %3529
      %3531 = vrot.lane.b32.xlu0 %v3129, 32
      %v3532 = vpop.permute.xlu0 %3531
      %3533 = vrot.lane.b32.xlu0 %v3130, 32
      %v3534 = vpop.permute.xlu0 %3533
      %3535 = vrot.lane.b32.xlu0 %v3131, 32
      %v3536 = vpop.permute.xlu0 %3535
      %3537 = vrot.lane.b32.xlu0 %v3132, 32
      %v3538 = vpop.permute.xlu0 %3537
      %3539 = vrot.lane.b32.xlu0 %v3133, 32
      %v3540 = vpop.permute.xlu0 %3539
      %3541 = vrot.lane.b32.xlu0 %v3134, 32
      %v3542 = vpop.permute.xlu0 %3541
      %3543 = vrot.lane.b32.xlu0 %v3135, 32
      %v3544 = vpop.permute.xlu0 %3543
      %3545 = vrot.lane.b32.xlu0 %v3136, 32
      %v3546 = vpop.permute.xlu0 %3545
      %3547 = vrot.lane.b32.xlu0 %v3137, 32
      %v3548 = vpop.permute.xlu0 %3547
      %3549 = vrot.lane.b32.xlu0 %v3138, 32
      %v3550 = vpop.permute.xlu0 %3549
      %3551 = vrot.lane.b32.xlu0 %v3139, 32
      %v3552 = vpop.permute.xlu0 %3551
      %3553 = vrot.lane.b32.xlu0 %v3140, 32
      %v3554 = vpop.permute.xlu0 %3553
      %3555 = vrot.lane.b32.xlu0 %v3141, 32
      %v3556 = vpop.permute.xlu0 %3555
      %3557 = vrot.lane.b32.xlu0 %v3142, 32
      %v3558 = vpop.permute.xlu0 %3557
      %3559 = vrot.lane.b32.xlu0 %v3143, 32
      %v3560 = vpop.permute.xlu0 %3559
      %3625 = vrot.lane.b32.xlu0 %v3144, 48
      %v3626 = vpop.permute.xlu0 %3625
      %3627 = vrot.lane.b32.xlu0 %v3145, 48
      %v3628 = vpop.permute.xlu0 %3627
      %3629 = vrot.lane.b32.xlu0 %v3146, 48
      %v3630 = vpop.permute.xlu0 %3629
      %3631 = vrot.lane.b32.xlu0 %v3147, 48
      %v3632 = vpop.permute.xlu0 %3631
      %3633 = vrot.lane.b32.xlu0 %v3148, 48
      %v3634 = vpop.permute.xlu0 %3633
      %3635 = vrot.lane.b32.xlu0 %v3149, 48
      %v3636 = vpop.permute.xlu0 %3635
      %3637 = vrot.lane.b32.xlu0 %v3150, 48
      %v3638 = vpop.permute.xlu0 %3637
      %3639 = vrot.lane.b32.xlu0 %v3151, 48
      %v3640 = vpop.permute.xlu0 %3639
      %3641 = vrot.lane.b32.xlu0 %v3152, 48
      %v3642 = vpop.permute.xlu0 %3641
      %3643 = vrot.lane.b32.xlu0 %v3153, 48
      %v3644 = vpop.permute.xlu0 %3643
      %3645 = vrot.lane.b32.xlu0 %v3154, 48
      %v3646 = vpop.permute.xlu0 %3645
      %3647 = vrot.lane.b32.xlu0 %v3155, 48
      %v3648 = vpop.permute.xlu0 %3647
      %3649 = vrot.lane.b32.xlu0 %v3156, 48
      %v3650 = vpop.permute.xlu0 %3649
      %3651 = vrot.lane.b32.xlu0 %v3157, 48
      %v3652 = vpop.permute.xlu0 %3651
      %3653 = vrot.lane.b32.xlu0 %v3158, 48
      %v3654 = vpop.permute.xlu0 %3653
      %3655 = vrot.lane.b32.xlu0 %v3159, 48
      %v3656 = vpop.permute.xlu0 %3655
      %3657 = vrot.lane.b32.xlu0 %v3160, 48
      %v3658 = vpop.permute.xlu0 %3657
      %3659 = vrot.lane.b32.xlu0 %v3161, 48
      %v3660 = vpop.permute.xlu0 %3659
      %3661 = vrot.lane.b32.xlu0 %v3162, 48
      %v3662 = vpop.permute.xlu0 %3661
      %3663 = vrot.lane.b32.xlu0 %v3163, 48
      %v3664 = vpop.permute.xlu0 %3663
      %3665 = vrot.lane.b32.xlu0 %v3164, 48
      %v3666 = vpop.permute.xlu0 %3665
      %3667 = vrot.lane.b32.xlu0 %v3165, 48
      %v3668 = vpop.permute.xlu0 %3667
      %3669 = vrot.lane.b32.xlu0 %v3166, 48
      %v3670 = vpop.permute.xlu0 %3669
      %3671 = vrot.lane.b32.xlu0 %v3167, 48
      %v3672 = vpop.permute.xlu0 %3671
      %3673 = vrot.lane.b32.xlu0 %v3168, 48
      %v3674 = vpop.permute.xlu0 %3673
      %3675 = vrot.lane.b32.xlu0 %v3169, 48
      %v3676 = vpop.permute.xlu0 %3675
      %3677 = vrot.lane.b32.xlu0 %v3170, 48
      %v3678 = vpop.permute.xlu0 %3677
      %3679 = vrot.lane.b32.xlu0 %v3171, 48
      %v3680 = vpop.permute.xlu0 %3679
      %3681 = vrot.lane.b32.xlu0 %v3172, 48
      %v3682 = vpop.permute.xlu0 %3681
      %3683 = vrot.lane.b32.xlu0 %v3173, 48
      %v3684 = vpop.permute.xlu0 %3683
      %3685 = vrot.lane.b32.xlu0 %v3174, 48
      %v3686 = vpop.permute.xlu0 %3685
      %3687 = vrot.lane.b32.xlu0 %v3175, 48
      %v3688 = vpop.permute.xlu0 %3687
      %3753 = vrot.lane.b32.xlu0 %v3176, 64
      %v3754 = vpop.permute.xlu0 %3753
      %3755 = vrot.lane.b32.xlu0 %v3177, 64
      %v3756 = vpop.permute.xlu0 %3755
      %3757 = vrot.lane.b32.xlu0 %v3178, 64
      %v3758 = vpop.permute.xlu0 %3757
      %3759 = vrot.lane.b32.xlu0 %v3179, 64
      %v3760 = vpop.permute.xlu0 %3759
      %3761 = vrot.lane.b32.xlu0 %v3180, 64
      %v3762 = vpop.permute.xlu0 %3761
      %3763 = vrot.lane.b32.xlu0 %v3181, 64
      %v3764 = vpop.permute.xlu0 %3763
      %3765 = vrot.lane.b32.xlu0 %v3182, 64
      %v3766 = vpop.permute.xlu0 %3765
      %3767 = vrot.lane.b32.xlu0 %v3183, 64
      %v3768 = vpop.permute.xlu0 %3767
      %3769 = vrot.lane.b32.xlu0 %v3184, 64
      %v3770 = vpop.permute.xlu0 %3769
      %3771 = vrot.lane.b32.xlu0 %v3185, 64
      %v3772 = vpop.permute.xlu0 %3771
      %3773 = vrot.lane.b32.xlu0 %v3186, 64
      %v3774 = vpop.permute.xlu0 %3773
      %3775 = vrot.lane.b32.xlu0 %v3187, 64
      %v3776 = vpop.permute.xlu0 %3775
      %3777 = vrot.lane.b32.xlu0 %v3188, 64
      %v3778 = vpop.permute.xlu0 %3777
      %3779 = vrot.lane.b32.xlu0 %v3189, 64
      %v3780 = vpop.permute.xlu0 %3779
      %3781 = vrot.lane.b32.xlu0 %v3190, 64
      %v3782 = vpop.permute.xlu0 %3781
      %3783 = vrot.lane.b32.xlu0 %v3191, 64
      %v3784 = vpop.permute.xlu0 %3783
      %3785 = vrot.lane.b32.xlu0 %v3192, 64
      %v3786 = vpop.permute.xlu0 %3785
      %3787 = vrot.lane.b32.xlu0 %v3193, 64
      %v3788 = vpop.permute.xlu0 %3787
      %3789 = vrot.lane.b32.xlu0 %v3194, 64
      %v3790 = vpop.permute.xlu0 %3789
      %3791 = vrot.lane.b32.xlu0 %v3195, 64
      %v3792 = vpop.permute.xlu0 %3791
      %3793 = vrot.lane.b32.xlu0 %v3196, 64
      %v3794 = vpop.permute.xlu0 %3793
      %3795 = vrot.lane.b32.xlu0 %v3197, 64
      %v3796 = vpop.permute.xlu0 %3795
      %3797 = vrot.lane.b32.xlu0 %v3198, 64
      %v3798 = vpop.permute.xlu0 %3797
      %3799 = vrot.lane.b32.xlu0 %v3199, 64
      %v3800 = vpop.permute.xlu0 %3799
      %3801 = vrot.lane.b32.xlu0 %v3200, 64
      %v3802 = vpop.permute.xlu0 %3801
      %3803 = vrot.lane.b32.xlu0 %v3201, 64
      %v3804 = vpop.permute.xlu0 %3803
      %3805 = vrot.lane.b32.xlu0 %v3202, 64
      %v3806 = vpop.permute.xlu0 %3805
      %3807 = vrot.lane.b32.xlu0 %v3203, 64
      %v3808 = vpop.permute.xlu0 %3807
      %3809 = vrot.lane.b32.xlu0 %v3204, 64
      %v3810 = vpop.permute.xlu0 %3809
      %3811 = vrot.lane.b32.xlu0 %v3205, 64
      %v3812 = vpop.permute.xlu0 %3811
      %3813 = vrot.lane.b32.xlu0 %v3206, 64
      %v3814 = vpop.permute.xlu0 %3813
      %3815 = vrot.lane.b32.xlu0 %v3207, 64
      %v3816 = vpop.permute.xlu0 %3815
      %3881 = vrot.lane.b32.xlu0 %v3208, 80
      %v3882 = vpop.permute.xlu0 %3881
      %3883 = vrot.lane.b32.xlu0 %v3209, 80
      %v3884 = vpop.permute.xlu0 %3883
      %3885 = vrot.lane.b32.xlu0 %v3210, 80
      %v3886 = vpop.permute.xlu0 %3885
      %3887 = vrot.lane.b32.xlu0 %v3211, 80
      %v3888 = vpop.permute.xlu0 %3887
      %3889 = vrot.lane.b32.xlu0 %v3212, 80
      %v3890 = vpop.permute.xlu0 %3889
      %3891 = vrot.lane.b32.xlu0 %v3213, 80
      %v3892 = vpop.permute.xlu0 %3891
      %3893 = vrot.lane.b32.xlu0 %v3214, 80
      %v3894 = vpop.permute.xlu0 %3893
      %3895 = vrot.lane.b32.xlu0 %v3215, 80
      %v3896 = vpop.permute.xlu0 %3895
      %3897 = vrot.lane.b32.xlu0 %v3216, 80
      %v3898 = vpop.permute.xlu0 %3897
      %3899 = vrot.lane.b32.xlu0 %v3217, 80
      %v3900 = vpop.permute.xlu0 %3899
      %3901 = vrot.lane.b32.xlu0 %v3218, 80
      %v3902 = vpop.permute.xlu0 %3901
      %3903 = vrot.lane.b32.xlu0 %v3219, 80
      %v3904 = vpop.permute.xlu0 %3903
      %3905 = vrot.lane.b32.xlu0 %v3220, 80
      %v3906 = vpop.permute.xlu0 %3905
      %3907 = vrot.lane.b32.xlu0 %v3221, 80
      %v3908 = vpop.permute.xlu0 %3907
      %3909 = vrot.lane.b32.xlu0 %v3222, 80
      %v3910 = vpop.permute.xlu0 %3909
      %3911 = vrot.lane.b32.xlu0 %v3223, 80
      %v3912 = vpop.permute.xlu0 %3911
      %3913 = vrot.lane.b32.xlu0 %v3224, 80
      %v3914 = vpop.permute.xlu0 %3913
      %3915 = vrot.lane.b32.xlu0 %v3225, 80
      %v3916 = vpop.permute.xlu0 %3915
      %3917 = vrot.lane.b32.xlu0 %v3226, 80
      %v3918 = vpop.permute.xlu0 %3917
      %3919 = vrot.lane.b32.xlu0 %v3227, 80
      %v3920 = vpop.permute.xlu0 %3919
      %3921 = vrot.lane.b32.xlu0 %v3228, 80
      %v3922 = vpop.permute.xlu0 %3921
      %3923 = vrot.lane.b32.xlu0 %v3229, 80
      %v3924 = vpop.permute.xlu0 %3923
      %3925 = vrot.lane.b32.xlu0 %v3230, 80
      %v3926 = vpop.permute.xlu0 %3925
      %3927 = vrot.lane.b32.xlu0 %v3231, 80
      %v3928 = vpop.permute.xlu0 %3927
      %3929 = vrot.lane.b32.xlu0 %v3232, 80
      %v3930 = vpop.permute.xlu0 %3929
      %3931 = vrot.lane.b32.xlu0 %v3233, 80
      %v3932 = vpop.permute.xlu0 %3931
      %3933 = vrot.lane.b32.xlu0 %v3234, 80
      %v3934 = vpop.permute.xlu0 %3933
      %3935 = vrot.lane.b32.xlu0 %v3235, 80
      %v3936 = vpop.permute.xlu0 %3935
      %3937 = vrot.lane.b32.xlu0 %v3236, 80
      %v3938 = vpop.permute.xlu0 %3937
      %3939 = vrot.lane.b32.xlu0 %v3237, 80
      %v3940 = vpop.permute.xlu0 %3939
      %3941 = vrot.lane.b32.xlu0 %v3238, 80
      %v3942 = vpop.permute.xlu0 %3941
      %3943 = vrot.lane.b32.xlu0 %v3239, 80
      %v3944 = vpop.permute.xlu0 %3943
      %4009 = vrot.lane.b32.xlu0 %v3241, 96
      %v4010 = vpop.permute.xlu0 %4009
      %4011 = vrot.lane.b32.xlu0 %v3242, 96
      %v4012 = vpop.permute.xlu0 %4011
      %4013 = vrot.lane.b32.xlu0 %v3243, 96
      %v4014 = vpop.permute.xlu0 %4013
      %4015 = vrot.lane.b32.xlu0 %v3244, 96
      %v4016 = vpop.permute.xlu0 %4015
      %4017 = vrot.lane.b32.xlu0 %v3245, 96
      %v4018 = vpop.permute.xlu0 %4017
      %4019 = vrot.lane.b32.xlu0 %v3246, 96
      %v4020 = vpop.permute.xlu0 %4019
      %4021 = vrot.lane.b32.xlu0 %v3247, 96
      %v4022 = vpop.permute.xlu0 %4021
      %4023 = vrot.lane.b32.xlu0 %v3248, 96
      %v4024 = vpop.permute.xlu0 %4023
      %4025 = vrot.lane.b32.xlu0 %v3249, 96
      %v4026 = vpop.permute.xlu0 %4025
      %4027 = vrot.lane.b32.xlu0 %v3250, 96
      %v4028 = vpop.permute.xlu0 %4027
      %4029 = vrot.lane.b32.xlu0 %v3251, 96
      %v4030 = vpop.permute.xlu0 %4029
      %4031 = vrot.lane.b32.xlu0 %v3252, 96
      %v4032 = vpop.permute.xlu0 %4031
      %4033 = vrot.lane.b32.xlu0 %v3253, 96
      %v4034 = vpop.permute.xlu0 %4033
      %4035 = vrot.lane.b32.xlu0 %v3254, 96
      %v4036 = vpop.permute.xlu0 %4035
      %4037 = vrot.lane.b32.xlu0 %v3255, 96
      %v4038 = vpop.permute.xlu0 %4037
      %4039 = vrot.lane.b32.xlu0 %v3256, 96
      %v4040 = vpop.permute.xlu0 %4039
      %4041 = vrot.lane.b32.xlu0 %v3257, 96
      %v4042 = vpop.permute.xlu0 %4041
      %4043 = vrot.lane.b32.xlu0 %v3258, 96
      %v4044 = vpop.permute.xlu0 %4043
      %4045 = vrot.lane.b32.xlu0 %v3259, 96
      %v4046 = vpop.permute.xlu0 %4045
      %4047 = vrot.lane.b32.xlu0 %v3260, 96
      %v4048 = vpop.permute.xlu0 %4047
      %4049 = vrot.lane.b32.xlu0 %v3261, 96
      %v4050 = vpop.permute.xlu0 %4049
      %4051 = vrot.lane.b32.xlu0 %v3262, 96
      %v4052 = vpop.permute.xlu0 %4051
      %4053 = vrot.lane.b32.xlu0 %v3263, 96
      %v4054 = vpop.permute.xlu0 %4053
      %4055 = vrot.lane.b32.xlu0 %v3264, 96
      %v4056 = vpop.permute.xlu0 %4055
      %4057 = vrot.lane.b32.xlu0 %v3265, 96
      %v4058 = vpop.permute.xlu0 %4057
      %4059 = vrot.lane.b32.xlu0 %v3266, 96
      %v4060 = vpop.permute.xlu0 %4059
      %4061 = vrot.lane.b32.xlu0 %v3267, 96
      %v4062 = vpop.permute.xlu0 %4061
      %4063 = vrot.lane.b32.xlu0 %v3268, 96
      %v4064 = vpop.permute.xlu0 %4063
      %4065 = vrot.lane.b32.xlu0 %v3269, 96
      %v4066 = vpop.permute.xlu0 %4065
      %4067 = vrot.lane.b32.xlu0 %v3270, 96
      %v4068 = vpop.permute.xlu0 %4067
      %4069 = vrot.lane.b32.xlu0 %v3271, 96
      %v4070 = vpop.permute.xlu0 %4069
      %4071 = vrot.lane.b32.xlu0 %v3272, 96
      %v4072 = vpop.permute.xlu0 %4071
      %4137 = vrot.lane.b32.xlu0 %v3273, 112
      %v4138 = vpop.permute.xlu0 %4137
      %4139 = vrot.lane.b32.xlu0 %v3274, 112
      %v4140 = vpop.permute.xlu0 %4139
      %4141 = vrot.lane.b32.xlu0 %v3275, 112
      %v4142 = vpop.permute.xlu0 %4141
      %4143 = vrot.lane.b32.xlu0 %v3276, 112
      %v4144 = vpop.permute.xlu0 %4143
      %4145 = vrot.lane.b32.xlu0 %v3277, 112
      %v4146 = vpop.permute.xlu0 %4145
      %4147 = vrot.lane.b32.xlu0 %v3278, 112
      %v4148 = vpop.permute.xlu0 %4147
      %4149 = vrot.lane.b32.xlu0 %v3279, 112
      %v4150 = vpop.permute.xlu0 %4149
      %4151 = vrot.lane.b32.xlu0 %v3280, 112
      %v4152 = vpop.permute.xlu0 %4151
      %4153 = vrot.lane.b32.xlu0 %v3281, 112
      %v4154 = vpop.permute.xlu0 %4153
      %4155 = vrot.lane.b32.xlu0 %v3282, 112
      %v4156 = vpop.permute.xlu0 %4155
      %4157 = vrot.lane.b32.xlu0 %v3283, 112
      %v4158 = vpop.permute.xlu0 %4157
      %4159 = vrot.lane.b32.xlu0 %v3284, 112
      %v4160 = vpop.permute.xlu0 %4159
      %4161 = vrot.lane.b32.xlu0 %v3285, 112
      %v4162 = vpop.permute.xlu0 %4161
      %4163 = vrot.lane.b32.xlu0 %v3286, 112
      %v4164 = vpop.permute.xlu0 %4163
      %4165 = vrot.lane.b32.xlu0 %v3287, 112
      %v4166 = vpop.permute.xlu0 %4165
      %4167 = vrot.lane.b32.xlu0 %v3288, 112
      %v4168 = vpop.permute.xlu0 %4167
      %4169 = vrot.lane.b32.xlu0 %v3289, 112
      %v4170 = vpop.permute.xlu0 %4169
      %4171 = vrot.lane.b32.xlu0 %v3290, 112
      %v4172 = vpop.permute.xlu0 %4171
      %4173 = vrot.lane.b32.xlu0 %v3291, 112
      %v4174 = vpop.permute.xlu0 %4173
      %4175 = vrot.lane.b32.xlu0 %v3292, 112
      %v4176 = vpop.permute.xlu0 %4175
      %4177 = vrot.lane.b32.xlu0 %v3293, 112
      %v4178 = vpop.permute.xlu0 %4177
      %4179 = vrot.lane.b32.xlu0 %v3294, 112
      %v4180 = vpop.permute.xlu0 %4179
      %4181 = vrot.lane.b32.xlu0 %v3295, 112
      %v4182 = vpop.permute.xlu0 %4181
      %4183 = vrot.lane.b32.xlu0 %v3296, 112
      %v4184 = vpop.permute.xlu0 %4183
      %4185 = vrot.lane.b32.xlu0 %v3297, 112
      %v4186 = vpop.permute.xlu0 %4185
      %4187 = vrot.lane.b32.xlu0 %v3298, 112
      %v4188 = vpop.permute.xlu0 %4187
      %4189 = vrot.lane.b32.xlu0 %v3299, 112
      %v4190 = vpop.permute.xlu0 %4189
      %4191 = vrot.lane.b32.xlu0 %v3300, 112
      %v4192 = vpop.permute.xlu0 %4191
      %4193 = vrot.lane.b32.xlu0 %v3301, 112
      %v4194 = vpop.permute.xlu0 %4193
      %4195 = vrot.lane.b32.xlu0 %v3302, 112
      %v4196 = vpop.permute.xlu0 %4195
      %4197 = vrot.lane.b32.xlu0 %v3303, 112
      %v4198 = vpop.permute.xlu0 %4197
      %4199 = vrot.lane.b32.xlu0 %v3304, 112
      %v4200 = vpop.permute.xlu0 %4199
      %v4233 = vsel %vm498, %v3048, %v3370
      %v4234 = vsel %vm498, %v3049, %v3372
      %v4235 = vsel %vm498, %v3050, %v3374
      %v4236 = vsel %vm498, %v3051, %v3376
      %v4237 = vsel %vm498, %v3052, %v3378
      %v4238 = vsel %vm498, %v3053, %v3380
      %v4239 = vsel %vm498, %v3054, %v3382
      %v4240 = vsel %vm498, %v3055, %v3384
      %v4241 = vsel %vm498, %v3056, %v3386
      %v4242 = vsel %vm498, %v3057, %v3388
      %v4243 = vsel %vm498, %v3058, %v3390
      %v4244 = vsel %vm498, %v3059, %v3392
      %v4245 = vsel %vm498, %v3060, %v3394
      %v4246 = vsel %vm498, %v3061, %v3396
      %v4247 = vsel %vm498, %v3062, %v3398
      %v4248 = vsel %vm498, %v3063, %v3400
      %v4249 = vsel %vm498, %v3064, %v3402
      %v4250 = vsel %vm498, %v3065, %v3404
      %v4251 = vsel %vm498, %v3066, %v3406
      %v4252 = vsel %vm498, %v3067, %v3408
      %v4253 = vsel %vm498, %v3068, %v3410
      %v4254 = vsel %vm498, %v3069, %v3412
      %v4255 = vsel %vm498, %v3070, %v3414
      %v4256 = vsel %vm498, %v3071, %v3416
      %v4257 = vsel %vm498, %v3072, %v3418
      %v4258 = vsel %vm498, %v3073, %v3420
      %v4259 = vsel %vm498, %v3074, %v3422
      %v4260 = vsel %vm498, %v3075, %v3424
      %v4261 = vsel %vm498, %v3076, %v3426
      %v4262 = vsel %vm498, %v3077, %v3428
      %v4263 = vsel %vm498, %v3078, %v3430
      %v4264 = vsel %vm498, %v3079, %v3432
      %v4265 = vsel %vm2463, %v4233, %v3498
      %v4266 = vsel %vm2463, %v4234, %v3500
      %v4267 = vsel %vm2463, %v4235, %v3502
      %v4268 = vsel %vm2463, %v4236, %v3504
      %v4269 = vsel %vm2463, %v4237, %v3506
      %v4270 = vsel %vm2463, %v4238, %v3508
      %v4271 = vsel %vm2463, %v4239, %v3510
      %v4272 = vsel %vm2463, %v4240, %v3512
      %v4273 = vsel %vm2463, %v4241, %v3514
      %v4274 = vsel %vm2463, %v4242, %v3516
      %v4275 = vsel %vm2463, %v4243, %v3518
      %v4276 = vsel %vm2463, %v4244, %v3520
      %v4277 = vsel %vm2463, %v4245, %v3522
      %v4278 = vsel %vm2463, %v4246, %v3524
      %v4279 = vsel %vm2463, %v4247, %v3526
      %v4280 = vsel %vm2463, %v4248, %v3528
      %v4281 = vsel %vm2463, %v4249, %v3530
      %v4282 = vsel %vm2463, %v4250, %v3532
      %v4283 = vsel %vm2463, %v4251, %v3534
      %v4284 = vsel %vm2463, %v4252, %v3536
      %v4285 = vsel %vm2463, %v4253, %v3538
      %v4286 = vsel %vm2463, %v4254, %v3540
      %v4287 = vsel %vm2463, %v4255, %v3542
      %v4288 = vsel %vm2463, %v4256, %v3544
      %v4289 = vsel %vm2463, %v4257, %v3546
      %v4290 = vsel %vm2463, %v4258, %v3548
      %v4291 = vsel %vm2463, %v4259, %v3550
      %v4292 = vsel %vm2463, %v4260, %v3552
      %v4293 = vsel %vm2463, %v4261, %v3554
      %v4294 = vsel %vm2463, %v4262, %v3556
      %v4295 = vsel %vm2463, %v4263, %v3558
      %v4296 = vsel %vm2463, %v4264, %v3560
      %v4297 = vsel %vm2529, %v4265, %v3626
      %v4298 = vsel %vm2529, %v4266, %v3628
      %v4299 = vsel %vm2529, %v4267, %v3630
      %v4300 = vsel %vm2529, %v4268, %v3632
      %v4301 = vsel %vm2529, %v4269, %v3634
      %v4302 = vsel %vm2529, %v4270, %v3636
      %v4303 = vsel %vm2529, %v4271, %v3638
      %v4304 = vsel %vm2529, %v4272, %v3640
      %v4305 = vsel %vm2529, %v4273, %v3642
      %v4306 = vsel %vm2529, %v4274, %v3644
      %v4307 = vsel %vm2529, %v4275, %v3646
      %v4308 = vsel %vm2529, %v4276, %v3648
      %v4309 = vsel %vm2529, %v4277, %v3650
      %v4310 = vsel %vm2529, %v4278, %v3652
      %v4311 = vsel %vm2529, %v4279, %v3654
      %v4312 = vsel %vm2529, %v4280, %v3656
      %v4313 = vsel %vm2529, %v4281, %v3658
      %v4314 = vsel %vm2529, %v4282, %v3660
      %v4315 = vsel %vm2529, %v4283, %v3662
      %v4316 = vsel %vm2529, %v4284, %v3664
      %v4317 = vsel %vm2529, %v4285, %v3666
      %v4318 = vsel %vm2529, %v4286, %v3668
      %v4319 = vsel %vm2529, %v4287, %v3670
      %v4320 = vsel %vm2529, %v4288, %v3672
      %v4321 = vsel %vm2529, %v4289, %v3674
      %v4322 = vsel %vm2529, %v4290, %v3676
      %v4323 = vsel %vm2529, %v4291, %v3678
      %v4324 = vsel %vm2529, %v4292, %v3680
      %v4325 = vsel %vm2529, %v4293, %v3682
      %v4326 = vsel %vm2529, %v4294, %v3684
      %v4327 = vsel %vm2529, %v4295, %v3686
      %v4328 = vsel %vm2529, %v4296, %v3688
      %v4329 = vsel %vm2595, %v4297, %v3754
      %v4330 = vsel %vm2595, %v4298, %v3756
      %v4331 = vsel %vm2595, %v4299, %v3758
      %v4332 = vsel %vm2595, %v4300, %v3760
      %v4333 = vsel %vm2595, %v4301, %v3762
      %v4334 = vsel %vm2595, %v4302, %v3764
      %v4335 = vsel %vm2595, %v4303, %v3766
      %v4336 = vsel %vm2595, %v4304, %v3768
      %v4337 = vsel %vm2595, %v4305, %v3770
      %v4338 = vsel %vm2595, %v4306, %v3772
      %v4339 = vsel %vm2595, %v4307, %v3774
      %v4340 = vsel %vm2595, %v4308, %v3776
      %v4341 = vsel %vm2595, %v4309, %v3778
      %v4342 = vsel %vm2595, %v4310, %v3780
      %v4343 = vsel %vm2595, %v4311, %v3782
      %v4344 = vsel %vm2595, %v4312, %v3784
      %v4345 = vsel %vm2595, %v4313, %v3786
      %v4346 = vsel %vm2595, %v4314, %v3788
      %v4347 = vsel %vm2595, %v4315, %v3790
      %v4348 = vsel %vm2595, %v4316, %v3792
      %v4349 = vsel %vm2595, %v4317, %v3794
      %v4350 = vsel %vm2595, %v4318, %v3796
      %v4351 = vsel %vm2595, %v4319, %v3798
      %v4352 = vsel %vm2595, %v4320, %v3800
      %v4353 = vsel %vm2595, %v4321, %v3802
      %v4354 = vsel %vm2595, %v4322, %v3804
      %v4355 = vsel %vm2595, %v4323, %v3806
      %v4356 = vsel %vm2595, %v4324, %v3808
      %v4357 = vsel %vm2595, %v4325, %v3810
      %v4358 = vsel %vm2595, %v4326, %v3812
      %v4359 = vsel %vm2595, %v4327, %v3814
      %v4360 = vsel %vm2595, %v4328, %v3816
      %vm4361 = vcmask 654336
      %v4362 = vsel %vm4361, %v4329, %v3882
      %v4363 = vsel %vm4361, %v4330, %v3884
      %v4364 = vsel %vm4361, %v4331, %v3886
      %v4365 = vsel %vm4361, %v4332, %v3888
      %v4366 = vsel %vm4361, %v4333, %v3890
      %v4367 = vsel %vm4361, %v4334, %v3892
      %v4368 = vsel %vm4361, %v4335, %v3894
      %v4369 = vsel %vm4361, %v4336, %v3896
      %v4370 = vsel %vm4361, %v4337, %v3898
      %v4371 = vsel %vm4361, %v4338, %v3900
      %v4372 = vsel %vm4361, %v4339, %v3902
      %v4373 = vsel %vm4361, %v4340, %v3904
      %v4374 = vsel %vm4361, %v4341, %v3906
      %v4375 = vsel %vm4361, %v4342, %v3908
      %v4376 = vsel %vm4361, %v4343, %v3910
      %v4377 = vsel %vm4361, %v4344, %v3912
      %v4378 = vsel %vm4361, %v4345, %v3914
      %v4379 = vsel %vm4361, %v4346, %v3916
      %v4380 = vsel %vm4361, %v4347, %v3918
      %v4381 = vsel %vm4361, %v4348, %v3920
      %v4382 = vsel %vm4361, %v4349, %v3922
      %v4383 = vsel %vm4361, %v4350, %v3924
      %v4384 = vsel %vm4361, %v4351, %v3926
      %v4385 = vsel %vm4361, %v4352, %v3928
      %v4386 = vsel %vm4361, %v4353, %v3930
      %v4387 = vsel %vm4361, %v4354, %v3932
      %v4388 = vsel %vm4361, %v4355, %v3934
      %v4389 = vsel %vm4361, %v4356, %v3936
      %v4390 = vsel %vm4361, %v4357, %v3938
      %v4391 = vsel %vm4361, %v4358, %v3940
      %v4392 = vsel %vm4361, %v4359, %v3942
      %v4393 = vsel %vm4361, %v4360, %v3944
      %vm4394 = vcmask 785408
      %v4395 = vsel %vm4394, %v4362, %v4010
      %v4396 = vsel %vm4394, %v4363, %v4012
      %v4397 = vsel %vm4394, %v4364, %v4014
      %v4398 = vsel %vm4394, %v4365, %v4016
      %v4399 = vsel %vm4394, %v4366, %v4018
      %v4400 = vsel %vm4394, %v4367, %v4020
      %v4401 = vsel %vm4394, %v4368, %v4022
      %v4402 = vsel %vm4394, %v4369, %v4024
      %v4403 = vsel %vm4394, %v4370, %v4026
      %v4404 = vsel %vm4394, %v4371, %v4028
      %v4405 = vsel %vm4394, %v4372, %v4030
      %v4406 = vsel %vm4394, %v4373, %v4032
      %v4407 = vsel %vm4394, %v4374, %v4034
      %v4408 = vsel %vm4394, %v4375, %v4036
      %v4409 = vsel %vm4394, %v4376, %v4038
      %v4410 = vsel %vm4394, %v4377, %v4040
      %v4411 = vsel %vm4394, %v4378, %v4042
      %v4412 = vsel %vm4394, %v4379, %v4044
      %v4413 = vsel %vm4394, %v4380, %v4046
      %v4414 = vsel %vm4394, %v4381, %v4048
      %v4415 = vsel %vm4394, %v4382, %v4050
      %v4416 = vsel %vm4394, %v4383, %v4052
      %v4417 = vsel %vm4394, %v4384, %v4054
      %v4418 = vsel %vm4394, %v4385, %v4056
      %v4419 = vsel %vm4394, %v4386, %v4058
      %v4420 = vsel %vm4394, %v4387, %v4060
      %v4421 = vsel %vm4394, %v4388, %v4062
      %v4422 = vsel %vm4394, %v4389, %v4064
      %v4423 = vsel %vm4394, %v4390, %v4066
      %v4424 = vsel %vm4394, %v4391, %v4068
      %v4425 = vsel %vm4394, %v4392, %v4070
      %v4426 = vsel %vm4394, %v4393, %v4072
      %vm4427 = vcmask 916480
      %v4428 = vsel %vm4427, %v4395, %v4138
      %v4429 = vsel %vm4427, %v4396, %v4140
      %v4430 = vsel %vm4427, %v4397, %v4142
      %v4431 = vsel %vm4427, %v4398, %v4144
      %v4432 = vsel %vm4427, %v4399, %v4146
      %v4433 = vsel %vm4427, %v4400, %v4148
      %v4434 = vsel %vm4427, %v4401, %v4150
      %v4435 = vsel %vm4427, %v4402, %v4152
      %v4436 = vsel %vm4427, %v4403, %v4154
      %v4437 = vsel %vm4427, %v4404, %v4156
      %v4438 = vsel %vm4427, %v4405, %v4158
      %v4439 = vsel %vm4427, %v4406, %v4160
      %v4440 = vsel %vm4427, %v4407, %v4162
      %v4441 = vsel %vm4427, %v4408, %v4164
      %v4442 = vsel %vm4427, %v4409, %v4166
      %v4443 = vsel %vm4427, %v4410, %v4168
      %v4444 = vsel %vm4427, %v4411, %v4170
      %v4445 = vsel %vm4427, %v4412, %v4172
      %v4446 = vsel %vm4427, %v4413, %v4174
      %v4447 = vsel %vm4427, %v4414, %v4176
      %v4448 = vsel %vm4427, %v4415, %v4178
      %v4449 = vsel %vm4427, %v4416, %v4180
      %v4450 = vsel %vm4427, %v4417, %v4182
      %v4451 = vsel %vm4427, %v4418, %v4184
      %v4452 = vsel %vm4427, %v4419, %v4186
      %v4453 = vsel %vm4427, %v4420, %v4188
      %v4454 = vsel %vm4427, %v4421, %v4190
      %v4455 = vsel %vm4427, %v4422, %v4192
      %v4456 = vsel %vm4427, %v4423, %v4194
      %v4457 = vsel %vm4427, %v4424, %v4196
      %v4458 = vsel %vm4427, %v4425, %v4198
      %v4459 = vsel %vm4427, %v4426, %v4200
      %v4460 = vpack.c.bf16 %v4429, %v4428
      %v4461 = vpack.c.bf16 %v3306, %v3305
      %v4462 = vpack.c.bf16 %v4431, %v4430
      %v4463 = vpack.c.bf16 %v3308, %v3307
      %v4464 = vpack.c.bf16 %v4433, %v4432
      %v4465 = vpack.c.bf16 %v3310, %v3309
      %v4466 = vpack.c.bf16 %v4435, %v4434
      %v4467 = vpack.c.bf16 %v3312, %v3311
      %v4468 = vpack.c.bf16 %v4437, %v4436
      %v4469 = vpack.c.bf16 %v3314, %v3313
      %v4470 = vpack.c.bf16 %v4439, %v4438
      %v4471 = vpack.c.bf16 %v3316, %v3315
      %v4472 = vpack.c.bf16 %v4441, %v4440
      %v4473 = vpack.c.bf16 %v3318, %v3317
      %v4474 = vpack.c.bf16 %v4443, %v4442
      %v4475 = vpack.c.bf16 %v3320, %v3319
      %v4476 = vpack.c.bf16 %v4445, %v4444
      %v4477 = vpack.c.bf16 %v3322, %v3321
      %v4478 = vpack.c.bf16 %v4447, %v4446
      %v4479 = vpack.c.bf16 %v3324, %v3323
      %v4480 = vpack.c.bf16 %v4449, %v4448
      %v4481 = vpack.c.bf16 %v3326, %v3325
      %v4482 = vpack.c.bf16 %v4451, %v4450
      %v4483 = vpack.c.bf16 %v3328, %v3327
      %v4484 = vpack.c.bf16 %v4453, %v4452
      %v4485 = vpack.c.bf16 %v3330, %v3329
      %v4486 = vpack.c.bf16 %v4455, %v4454
      %v4487 = vpack.c.bf16 %v3332, %v3331
      %v4488 = vpack.c.bf16 %v4457, %v4456
      %v4489 = vpack.c.bf16 %v3334, %v3333
      %v4490 = vpack.c.bf16 %v4459, %v4458
      %v4491 = vpack.c.bf16 %v3336, %v3335
      %v4510 = vunpack.c.l.b16 %v3030
      %v4511 = vunpack.c.l.b16 %v3031
      %v4512 = vunpack.c.l.b16 %v3032
      %v4513 = vunpack.c.l.b16 %v3033
      %v4514 = vunpack.c.l.b16 %v3034
      %v4515 = vunpack.c.l.b16 %v3035
      %v4516 = vunpack.c.l.b16 %v3036
      %v4517 = vunpack.c.l.b16 %v3037
      %v4518 = vunpack.c.l.b16 %v3038
      %v4519 = vunpack.c.l.b16 %v3039
      %v4520 = vunpack.c.l.b16 %v3040
      %v4521 = vunpack.c.l.b16 %v3041
      %v4522 = vunpack.c.l.b16 %v3042
      %v4523 = vunpack.c.l.b16 %v3043
      %v4524 = vunpack.c.l.b16 %v3044
      %v4525 = vunpack.c.l.b16 %v3045
      %v4526 = vunpack.c.l.b16 %v3046
      %v4527 = vunpack.c.l.b16 %v3047
      %v4528 = vpack.c.b16 %v4511, %v4510
      %v4529 = vpack.c.b16 %v4513, %v4512
      %v4530 = vpack.c.b16 %v4515, %v4514
      %v4531 = vpack.c.b16 %v4517, %v4516
      %v4532 = vpack.c.b16 %v4519, %v4518
      %v4533 = vpack.c.b16 %v4521, %v4520
      %v4534 = vpack.c.b16 %v4523, %v4522
      %v4535 = vpack.c.b16 %v4525, %v4524
      %v4536 = vpack.c.b16 %v4527, %v4526
      %v4547 = vsel %vm498, %v4461, 0
      %v4550 = vsel %vm498, %v4463, 0
      %v4553 = vsel %vm498, %v4465, 0
      %v4556 = vsel %vm498, %v4467, 0
      %v4559 = vsel %vm498, %v4469, 0
      %v4562 = vsel %vm498, %v4471, 0
      %v4565 = vsel %vm498, %v4473, 0
      %v4568 = vsel %vm498, %v4475, 0
      %v4571 = vsel %vm498, %v4477, 0
      %v4574 = vsel %vm498, %v4479, 0
      %v4577 = vsel %vm498, %v4481, 0
      %v4580 = vsel %vm498, %v4483, 0
      %v4583 = vsel %vm498, %v4485, 0
      %v4586 = vsel %vm498, %v4487, 0
      %v4589 = vsel %vm498, %v4489, 0
      %v4592 = vsel %vm498, %v4491, 0
      %4594 = vmatprep.subr.bf16.mxu0 0
      %4595 = vmatpush1.bf16.msra.mxu0 %v4528
      %4596 = vmatprep.subr.bf16.mxu0 0
      %4597 = vmatpush1.bf16.msra.mxu0 %v4529
      %4598 = vmatprep.subr.bf16.mxu0 0
      %4599 = vmatpush1.bf16.msra.mxu0 %v4530
      %4600 = vmatprep.subr.bf16.mxu0 0
      %4601 = vmatpush1.bf16.msra.mxu0 %v4531
      %4602 = vmatprep.subr.bf16.mxu0 0
      %4603 = vmatpush1.bf16.msra.mxu0 %v4532
      %4604 = vmatprep.subr.bf16.mxu0 0
      %4605 = vmatpush1.bf16.msra.mxu0 %v4533
      %4606 = vmatprep.subr.bf16.mxu0 0
      %4607 = vmatpush1.bf16.msra.mxu0 %v4534
      %4608 = vmatprep.subr.bf16.mxu0 0
      %4609 = vmatpush1.bf16.msra.mxu0 %v4535
      %4610 = vmatprep.subr.bf16.mxu0 0
      %4611 = vmatpush1.bf16.msra.mxu0 %v4536
      %4612 = vmatprep.subr.bf16.mxu0 0
      %4613 = vmatpush1.bf16.msra.mxu0 0
      %4614 = vmatprep.subr.bf16.mxu0 0
      %4615 = vmatpush1.bf16.msra.mxu0 0
      %4616 = vmatprep.subr.bf16.mxu0 0
      %4617 = vmatpush1.bf16.msra.mxu0 0
      %4618 = vmatprep.subr.bf16.mxu0 0
      %4619 = vmatpush1.bf16.msra.mxu0 0
      %4620 = vmatprep.subr.bf16.mxu0 0
      %4621 = vmatpush1.bf16.msra.mxu0 0
      %4622 = vmatprep.subr.bf16.mxu0 0
      %4623 = vmatpush1.bf16.msra.mxu0 0
      %4624 = vmatprep.subr.bf16.mxu0 0
      %4625 = vmatpush1.bf16.msra.mxu0 0
      %4626 = vmatprep.mubr.bf16.mxu0 %v4547
      %4627 = vmatmul.mubr.bf16.gmra.mrb[0].mxu0 %v4460
      %v4628 = vpop.f32.mrb[0].mxu0
      %v4629 = vadd.f32 0.0, %v4628
      %v4630 = vpop.f32.mrb[0].mxu0
      %v4631 = vpop.f32.mrb[0].mxu0
      %v4632 = vadd.f32 0.0, %v4631
      %v4633 = vpop.f32.mrb[0].mxu0
      %4634 = vmatprep.mubr.bf16.mxu0 %v4550
      %4635 = vmatmul.mubr.bf16.gmra.mrb[0].mxu0 %v4462
      %v4636 = vpop.f32.mrb[0].mxu0
      %v4637 = vadd.f32 0.0, %v4636
      %v4638 = vpop.f32.mrb[0].mxu0
      %v4639 = vpop.f32.mrb[0].mxu0
      %v4640 = vadd.f32 0.0, %v4639
      %v4641 = vpop.f32.mrb[0].mxu0
      %4642 = vmatprep.mubr.bf16.mxu0 %v4553
      %4643 = vmatmul.mubr.bf16.gmra.mrb[0].mxu0 %v4464
      %v4644 = vpop.f32.mrb[0].mxu0
      %v4645 = vadd.f32 0.0, %v4644
      %v4646 = vpop.f32.mrb[0].mxu0
      %v4647 = vpop.f32.mrb[0].mxu0
      %v4648 = vadd.f32 0.0, %v4647
      %v4649 = vpop.f32.mrb[0].mxu0
      %4650 = vmatprep.mubr.bf16.mxu0 %v4556
      %4651 = vmatmul.mubr.bf16.gmra.mrb[0].mxu0 %v4466
      %v4652 = vpop.f32.mrb[0].mxu0
      %v4653 = vadd.f32 0.0, %v4652
      %v4654 = vpop.f32.mrb[0].mxu0
      %v4655 = vpop.f32.mrb[0].mxu0
      %v4656 = vadd.f32 0.0, %v4655
      %v4657 = vpop.f32.mrb[0].mxu0
      %4658 = vmatprep.mubr.bf16.mxu0 %v4559
      %4659 = vmatmul.mubr.bf16.gmra.mrb[0].mxu0 %v4468
      %v4660 = vpop.f32.mrb[0].mxu0
      %v4661 = vadd.f32 0.0, %v4660
      %v4662 = vpop.f32.mrb[0].mxu0
      %v4663 = vpop.f32.mrb[0].mxu0
      %v4664 = vadd.f32 0.0, %v4663
      %v4665 = vpop.f32.mrb[0].mxu0
      %4666 = vmatprep.mubr.bf16.mxu0 %v4562
      %4667 = vmatmul.mubr.bf16.gmra.mrb[0].mxu0 %v4470
      %v4668 = vpop.f32.mrb[0].mxu0
      %v4669 = vadd.f32 0.0, %v4668
      %v4670 = vpop.f32.mrb[0].mxu0
      %v4671 = vpop.f32.mrb[0].mxu0
      %v4672 = vadd.f32 0.0, %v4671
      %v4673 = vpop.f32.mrb[0].mxu0
      %4674 = vmatprep.mubr.bf16.mxu0 %v4565
      %4675 = vmatmul.mubr.bf16.gmra.mrb[0].mxu0 %v4472
      %v4676 = vpop.f32.mrb[0].mxu0
      %v4677 = vadd.f32 0.0, %v4676
      %v4678 = vpop.f32.mrb[0].mxu0
      %v4679 = vpop.f32.mrb[0].mxu0
      %v4680 = vadd.f32 0.0, %v4679
      %v4681 = vpop.f32.mrb[0].mxu0
      %4682 = vmatprep.mubr.bf16.mxu0 %v4568
      %4683 = vmatmul.mubr.bf16.gmra.mrb[0].mxu0 %v4474
      %v4684 = vpop.f32.mrb[0].mxu0
      %v4685 = vadd.f32 0.0, %v4684
      %v4686 = vpop.f32.mrb[0].mxu0
      %v4687 = vpop.f32.mrb[0].mxu0
      %v4688 = vadd.f32 0.0, %v4687
      %v4689 = vpop.f32.mrb[0].mxu0
      %4690 = vmatprep.mubr.bf16.mxu0 %v4571
      %4691 = vmatmul.mubr.bf16.gmra.mrb[0].mxu0 %v4476
      %v4692 = vpop.f32.mrb[0].mxu0
      %v4693 = vadd.f32 0.0, %v4692
      %v4694 = vpop.f32.mrb[0].mxu0
      %v4695 = vpop.f32.mrb[0].mxu0
      %v4696 = vadd.f32 0.0, %v4695
      %v4697 = vpop.f32.mrb[0].mxu0
      %4698 = vmatprep.mubr.bf16.mxu0 %v4574
      %4699 = vmatmul.mubr.bf16.gmra.mrb[0].mxu0 %v4478
      %v4700 = vpop.f32.mrb[0].mxu0
      %v4701 = vadd.f32 0.0, %v4700
      %v4702 = vpop.f32.mrb[0].mxu0
      %v4703 = vpop.f32.mrb[0].mxu0
      %v4704 = vadd.f32 0.0, %v4703
      %v4705 = vpop.f32.mrb[0].mxu0
      %4706 = vmatprep.mubr.bf16.mxu0 %v4577
      %4707 = vmatmul.mubr.bf16.gmra.mrb[0].mxu0 %v4480
      %v4708 = vpop.f32.mrb[0].mxu0
      %v4709 = vadd.f32 0.0, %v4708
      %v4710 = vpop.f32.mrb[0].mxu0
      %v4711 = vpop.f32.mrb[0].mxu0
      %v4712 = vadd.f32 0.0, %v4711
      %v4713 = vpop.f32.mrb[0].mxu0
      %4714 = vmatprep.mubr.bf16.mxu0 %v4580
      %4715 = vmatmul.mubr.bf16.gmra.mrb[0].mxu0 %v4482
      %v4716 = vpop.f32.mrb[0].mxu0
      %v4717 = vadd.f32 0.0, %v4716
      %v4718 = vpop.f32.mrb[0].mxu0
      %v4719 = vpop.f32.mrb[0].mxu0
      %v4720 = vadd.f32 0.0, %v4719
      %v4721 = vpop.f32.mrb[0].mxu0
      %4722 = vmatprep.mubr.bf16.mxu0 %v4583
      %4723 = vmatmul.mubr.bf16.gmra.mrb[0].mxu0 %v4484
      %v4724 = vpop.f32.mrb[0].mxu0
      %v4725 = vadd.f32 0.0, %v4724
      %v4726 = vpop.f32.mrb[0].mxu0
      %v4727 = vpop.f32.mrb[0].mxu0
      %v4728 = vadd.f32 0.0, %v4727
      %v4729 = vpop.f32.mrb[0].mxu0
      %4730 = vmatprep.mubr.bf16.mxu0 %v4586
      %4731 = vmatmul.mubr.bf16.gmra.mrb[0].mxu0 %v4486
      %v4732 = vpop.f32.mrb[0].mxu0
      %v4733 = vadd.f32 0.0, %v4732
      %v4734 = vpop.f32.mrb[0].mxu0
      %v4735 = vpop.f32.mrb[0].mxu0
      %v4736 = vadd.f32 0.0, %v4735
      %v4737 = vpop.f32.mrb[0].mxu0
      %4738 = vmatprep.mubr.bf16.mxu0 %v4589
      %4739 = vmatmul.mubr.bf16.gmra.mrb[0].mxu0 %v4488
      %v4740 = vpop.f32.mrb[0].mxu0
      %v4741 = vadd.f32 0.0, %v4740
      %v4742 = vpop.f32.mrb[0].mxu0
      %v4743 = vpop.f32.mrb[0].mxu0
      %v4744 = vadd.f32 0.0, %v4743
      %v4745 = vpop.f32.mrb[0].mxu0
      %4746 = vmatprep.mubr.bf16.mxu0 %v4592
      %4747 = vmatmul.mubr.bf16.gmra.mrb[0].mxu0 %v4490
      %v4748 = vpop.f32.mrb[0].mxu0
      %v4749 = vadd.f32 0.0, %v4748
      %v4750 = vpop.f32.mrb[0].mxu0
      %v4751 = vpop.f32.mrb[0].mxu0
      %v4752 = vadd.f32 0.0, %v4751
      %v4753 = vpop.f32.mrb[0].mxu0
      %4754 = vdwg.mxu0
      %v4755 = vadd.f32 %v775, %v4629
      %v4756 = vadd.f32 %v778, %v4632
      %v4757 = vadd.f32 %v783, %v4637
      %v4758 = vadd.f32 %v786, %v4640
      %v4759 = vadd.f32 %v791, %v4645
      %v4760 = vadd.f32 %v794, %v4648
      %v4761 = vadd.f32 %v799, %v4653
      %v4762 = vadd.f32 %v802, %v4656
      %v4763 = vadd.f32 %v807, %v4661
      %v4764 = vadd.f32 %v810, %v4664
      %v4765 = vadd.f32 %v815, %v4669
      %v4766 = vadd.f32 %v818, %v4672
      %v4767 = vadd.f32 %v823, %v4677
      %v4768 = vadd.f32 %v826, %v4680
      %v4769 = vadd.f32 %v831, %v4685
      %v4770 = vadd.f32 %v834, %v4688
      %v4771 = vadd.f32 %v839, %v4693
      %v4772 = vadd.f32 %v842, %v4696
      %v4773 = vadd.f32 %v847, %v4701
      %v4774 = vadd.f32 %v850, %v4704
      %v4775 = vadd.f32 %v855, %v4709
      %v4776 = vadd.f32 %v858, %v4712
      %v4777 = vadd.f32 %v863, %v4717
      %v4778 = vadd.f32 %v866, %v4720
      %v4779 = vadd.f32 %v871, %v4725
      %v4780 = vadd.f32 %v874, %v4728
      %v4781 = vadd.f32 %v879, %v4733
      %v4782 = vadd.f32 %v882, %v4736
      %v4783 = vadd.f32 %v887, %v4741
      %v4784 = vadd.f32 %v890, %v4744
      %v4785 = vadd.f32 %v895, %v4749
      %v4786 = vadd.f32 %v898, %v4752
      %v4787 = vld [vmem:[%s12] sm:$0x1]
      %v4788 = vlaneseq
      %v4789 = vshrl.u32 %v4788, 7
      %v4790 = vsub.s32 0, %v4789
      %v4791 = vrot.slane %v4787, %v4790
      %v4792 = vadd.f32 %v4755, %v4791
      %v4793 = vadd.f32 %v4756, %v4791
      %v4794 = vadd.f32 %v4757, %v4791
      %v4795 = vadd.f32 %v4758, %v4791
      %v4796 = vadd.f32 %v4759, %v4791
      %v4797 = vadd.f32 %v4760, %v4791
      %v4798 = vadd.f32 %v4761, %v4791
      %v4799 = vadd.f32 %v4762, %v4791
      %v4800 = vadd.f32 %v4763, %v4791
      %v4801 = vadd.f32 %v4764, %v4791
      %v4802 = vadd.f32 %v4765, %v4791
      %v4803 = vadd.f32 %v4766, %v4791
      %v4804 = vadd.f32 %v4767, %v4791
      %v4805 = vadd.f32 %v4768, %v4791
      %v4806 = vadd.f32 %v4769, %v4791
      %v4807 = vadd.f32 %v4770, %v4791
      %v4808 = vadd.f32 %v4771, %v4791
      %v4809 = vadd.f32 %v4772, %v4791
      %v4810 = vadd.f32 %v4773, %v4791
      %v4811 = vadd.f32 %v4774, %v4791
      %v4812 = vadd.f32 %v4775, %v4791
      %v4813 = vadd.f32 %v4776, %v4791
      %v4814 = vadd.f32 %v4777, %v4791
      %v4815 = vadd.f32 %v4778, %v4791
      %v4816 = vadd.f32 %v4779, %v4791
      %v4817 = vadd.f32 %v4780, %v4791
      %v4818 = vadd.f32 %v4781, %v4791
      %v4819 = vadd.f32 %v4782, %v4791
      %v4820 = vadd.f32 %v4783, %v4791
      %v4821 = vadd.f32 %v4784, %v4791
      %v4822 = vadd.f32 %v4785, %v4791
      %v4823 = vadd.f32 %v4786, %v4791
      %v4824 = vld [vmem:[%s9 + $0x1] sm:$0x1]
      %v4825 = vlaneseq
      %v4826 = vshrl.u32 %v4825, 7
      %v4827 = vsub.s32 0, %v4826
      %v4828 = vrot.slane %v4824, %v4827
      %v4829 = vmul.f32 %v4792, %v4828
      %v4830 = vmul.f32 %v4793, %v4828
      %v4831 = vmul.f32 %v4794, %v4828
      %v4832 = vmul.f32 %v4795, %v4828
      %v4833 = vmul.f32 %v4796, %v4828
      %v4834 = vmul.f32 %v4797, %v4828
      %v4835 = vmul.f32 %v4798, %v4828
      %v4836 = vmul.f32 %v4799, %v4828
      %v4837 = vmul.f32 %v4800, %v4828
      %v4838 = vmul.f32 %v4801, %v4828
      %v4839 = vmul.f32 %v4802, %v4828
      %v4840 = vmul.f32 %v4803, %v4828
      %v4841 = vmul.f32 %v4804, %v4828
      %v4842 = vmul.f32 %v4805, %v4828
      %v4843 = vmul.f32 %v4806, %v4828
      %v4844 = vmul.f32 %v4807, %v4828
      %v4845 = vmul.f32 %v4808, %v4828
      %v4846 = vmul.f32 %v4809, %v4828
      %v4847 = vmul.f32 %v4810, %v4828
      %v4848 = vmul.f32 %v4811, %v4828
      %v4849 = vmul.f32 %v4812, %v4828
      %v4850 = vmul.f32 %v4813, %v4828
      %v4851 = vmul.f32 %v4814, %v4828
      %v4852 = vmul.f32 %v4815, %v4828
      %v4853 = vmul.f32 %v4816, %v4828
      %v4854 = vmul.f32 %v4817, %v4828
      %v4855 = vmul.f32 %v4818, %v4828
      %v4856 = vmul.f32 %v4819, %v4828
      %v4857 = vmul.f32 %v4820, %v4828
      %v4858 = vmul.f32 %v4821, %v4828
      %v4859 = vmul.f32 %v4822, %v4828
      %v4860 = vmul.f32 %v4823, %v4828
      %v4861 = vld [vmem:[%s10 + $0x1] sm:$0x1]
      %v4862 = vlaneseq
      %v4863 = vshrl.u32 %v4862, 7
      %v4864 = vsub.s32 0, %v4863
      %v4865 = vrot.slane %v4861, %v4864
      %v4866 = vadd.f32 %v4829, %v4865
      %v4867 = vadd.f32 %v4830, %v4865
      %v4868 = vadd.f32 %v4831, %v4865
      %v4869 = vadd.f32 %v4832, %v4865
      %v4870 = vadd.f32 %v4833, %v4865
      %v4871 = vadd.f32 %v4834, %v4865
      %v4872 = vadd.f32 %v4835, %v4865
      %v4873 = vadd.f32 %v4836, %v4865
      %v4874 = vadd.f32 %v4837, %v4865
      %v4875 = vadd.f32 %v4838, %v4865
      %v4876 = vadd.f32 %v4839, %v4865
      %v4877 = vadd.f32 %v4840, %v4865
      %v4878 = vadd.f32 %v4841, %v4865
      %v4879 = vadd.f32 %v4842, %v4865
      %v4880 = vadd.f32 %v4843, %v4865
      %v4881 = vadd.f32 %v4844, %v4865
      %v4882 = vadd.f32 %v4845, %v4865
      %v4883 = vadd.f32 %v4846, %v4865
      %v4884 = vadd.f32 %v4847, %v4865
      %v4885 = vadd.f32 %v4848, %v4865
      %v4886 = vadd.f32 %v4849, %v4865
      %v4887 = vadd.f32 %v4850, %v4865
      %v4888 = vadd.f32 %v4851, %v4865
      %v4889 = vadd.f32 %v4852, %v4865
      %v4890 = vadd.f32 %v4853, %v4865
      %v4891 = vadd.f32 %v4854, %v4865
      %v4892 = vadd.f32 %v4855, %v4865
      %v4893 = vadd.f32 %v4856, %v4865
      %v4894 = vadd.f32 %v4857, %v4865
      %v4895 = vadd.f32 %v4858, %v4865
      %v4896 = vadd.f32 %v4859, %v4865
      %v4897 = vadd.f32 %v4860, %v4865
      %v4898 = vmax.f32 %v4866, 0.0
      %v4899 = vmax.f32 %v4867, 0.0
      %v4900 = vmax.f32 %v4868, 0.0
      %v4901 = vmax.f32 %v4869, 0.0
      %v4902 = vmax.f32 %v4870, 0.0
      %v4903 = vmax.f32 %v4871, 0.0
      %v4904 = vmax.f32 %v4872, 0.0
      %v4905 = vmax.f32 %v4873, 0.0
      %v4906 = vmax.f32 %v4874, 0.0
      %v4907 = vmax.f32 %v4875, 0.0
      %v4908 = vmax.f32 %v4876, 0.0
      %v4909 = vmax.f32 %v4877, 0.0
      %v4910 = vmax.f32 %v4878, 0.0
      %v4911 = vmax.f32 %v4879, 0.0
      %v4912 = vmax.f32 %v4880, 0.0
      %v4913 = vmax.f32 %v4881, 0.0
      %v4914 = vmax.f32 %v4882, 0.0
      %v4915 = vmax.f32 %v4883, 0.0
      %v4916 = vmax.f32 %v4884, 0.0
      %v4917 = vmax.f32 %v4885, 0.0
      %v4918 = vmax.f32 %v4886, 0.0
      %v4919 = vmax.f32 %v4887, 0.0
      %v4920 = vmax.f32 %v4888, 0.0
      %v4921 = vmax.f32 %v4889, 0.0
      %v4922 = vmax.f32 %v4890, 0.0
      %v4923 = vmax.f32 %v4891, 0.0
      %v4924 = vmax.f32 %v4892, 0.0
      %v4925 = vmax.f32 %v4893, 0.0
      %v4926 = vmax.f32 %v4894, 0.0
      %v4927 = vmax.f32 %v4895, 0.0
      %v4928 = vmax.f32 %v4896, 0.0
      %v4929 = vmax.f32 %v4897, 0.0
      %4930 = vst.msk [vmem:[%s2997 + $0x1] sm:$0xff] %vm498, %v4898
      %4931 = vst.msk [vmem:[%s2997 + $0x9] sm:$0xff] %vm498, %v4899
      %4932 = vst.msk [vmem:[%s2997 + $0x19] sm:$0xff] %vm498, %v4900
      %4933 = vst.msk [vmem:[%s2997 + $0x21] sm:$0xff] %vm498, %v4901
      %4934 = vst.msk [vmem:[%s2997 + $0x31] sm:$0xff] %vm498, %v4902
      %4935 = vst.msk [vmem:[%s2997 + $0x39] sm:$0xff] %vm498, %v4903
      %4936 = vst.msk [vmem:[%s2997 + $0x49] sm:$0xff] %vm498, %v4904
      %4937 = vst.msk [vmem:[%s2997 + $0x51] sm:$0xff] %vm498, %v4905
      %4938 = vst.msk [vmem:[%s2997 + $0x61] sm:$0xff] %vm498, %v4906
      %4939 = vst.msk [vmem:[%s2997 + $0x69] sm:$0xff] %vm498, %v4907
      %4940 = vst.msk [vmem:[%s2997 + $0x79] sm:$0xff] %vm498, %v4908
      %4941 = vst.msk [vmem:[%s2997 + $0x81] sm:$0xff] %vm498, %v4909
      %4942 = vst.msk [vmem:[%s2997 + $0x91] sm:$0xff] %vm498, %v4910
      %4943 = vst.msk [vmem:[%s2997 + $0x99] sm:$0xff] %vm498, %v4911
      %4944 = vst.msk [vmem:[%s2997 + $0xa9] sm:$0xff] %vm498, %v4912
      %4945 = vst.msk [vmem:[%s2997 + $0xb1] sm:$0xff] %vm498, %v4913
      %4946 = vst.msk [vmem:[%s2997 + $0xc1] sm:$0xff] %vm498, %v4914
      %4947 = vst.msk [vmem:[%s2997 + $0xc9] sm:$0xff] %vm498, %v4915
      %4948 = vst.msk [vmem:[%s2997 + $0xd9] sm:$0xff] %vm498, %v4916
      %4949 = vst.msk [vmem:[%s2997 + $0xe1] sm:$0xff] %vm498, %v4917
      %4950 = vst.msk [vmem:[%s2997 + $0xf1] sm:$0xff] %vm498, %v4918
      %4951 = vst.msk [vmem:[%s2997 + $0xf9] sm:$0xff] %vm498, %v4919
      %4952 = vst.msk [vmem:[%s2997 + $0x109] sm:$0xff] %vm498, %v4920
      %4953 = vst.msk [vmem:[%s2997 + $0x111] sm:$0xff] %vm498, %v4921
      %4954 = vst.msk [vmem:[%s2997 + $0x121] sm:$0xff] %vm498, %v4922
      %4955 = vst.msk [vmem:[%s2997 + $0x129] sm:$0xff] %vm498, %v4923
      %4956 = vst.msk [vmem:[%s2997 + $0x139] sm:$0xff] %vm498, %v4924
      %4957 = vst.msk [vmem:[%s2997 + $0x141] sm:$0xff] %vm498, %v4925
      %4958 = vst.msk [vmem:[%s2997 + $0x151] sm:$0xff] %vm498, %v4926
      %4959 = vst.msk [vmem:[%s2997 + $0x159] sm:$0xff] %vm498, %v4927
      %4960 = vst.msk [vmem:[%s2997 + $0x169] sm:$0xff] %vm498, %v4928
      %4961 = vst.msk [vmem:[%s2997 + $0x171] sm:$0xff] %vm498, %v4929
      %s4962 = scalar_lea.vmem %s11, 72
      %v4963 = vld [vmem:[%s4962] sm:$0xf]
      %v4964 = vld [vmem:[%s4962 + $0x4] sm:$0xf]
      %v4965 = vld [vmem:[%s4962 + $0x8] sm:$0xf]
      %v4966 = vld [vmem:[%s4962 + $0xc] sm:$0xf]
      %v4967 = vld [vmem:[%s4962 + $0x10] sm:$0xf]
      %v4968 = vld [vmem:[%s4962 + $0x14] sm:$0xf]
      %v4969 = vld [vmem:[%s4962 + $0x18] sm:$0xf]
      %v4970 = vld [vmem:[%s4962 + $0x1c] sm:$0xf]
      %v4971 = vld [vmem:[%s4962 + $0x20] sm:$0xf]
      %v4972 = vld [vmem:[%s4962 + $0x24] sm:$0xf]
      %v4973 = vld [vmem:[%s4962 + $0x28] sm:$0xf]
      %v4974 = vld [vmem:[%s4962 + $0x2c] sm:$0xf]
      %v4975 = vld [vmem:[%s4962 + $0x30] sm:$0xf]
      %v4976 = vld [vmem:[%s4962 + $0x34] sm:$0xf]
      %v4977 = vld [vmem:[%s4962 + $0x38] sm:$0xf]
      %v4978 = vld [vmem:[%s4962 + $0x3c] sm:$0xf]
      %v4979 = vld [vmem:[%s4962 + $0x40] sm:$0xf]
      %v4980 = vld [vmem:[%s4962 + $0x44] sm:$0xf]
      %v4981 = vld [vmem:[#allocation3] sm:$0xff]
      %v4982 = vld [vmem:[#allocation3 + $0x8] sm:$0xff]
      %v4983 = vld [vmem:[#allocation3 + $0x18] sm:$0xff]
      %v4984 = vld [vmem:[#allocation3 + $0x20] sm:$0xff]
      %v4985 = vld [vmem:[#allocation3 + $0x30] sm:$0xff]
      %v4986 = vld [vmem:[#allocation3 + $0x38] sm:$0xff]
      %v4987 = vld [vmem:[#allocation3 + $0x48] sm:$0xff]
      %v4988 = vld [vmem:[#allocation3 + $0x50] sm:$0xff]
      %v4989 = vld [vmem:[#allocation3 + $0x60] sm:$0xff]
      %v4990 = vld [vmem:[#allocation3 + $0x68] sm:$0xff]
      %v4991 = vld [vmem:[#allocation3 + $0x78] sm:$0xff]
      %v4992 = vld [vmem:[#allocation3 + $0x80] sm:$0xff]
      %v4993 = vld [vmem:[#allocation3 + $0x90] sm:$0xff]
      %v4994 = vld [vmem:[#allocation3 + $0x98] sm:$0xff]
      %v4995 = vld [vmem:[#allocation3 + $0xa8] sm:$0xff]
      %v4996 = vld [vmem:[#allocation3 + $0xb0] sm:$0xff]
      %v4997 = vld [vmem:[#allocation3 + $0xc0] sm:$0xff]
      %v4998 = vld [vmem:[#allocation3 + $0xc8] sm:$0xff]
      %v4999 = vld [vmem:[#allocation3 + $0xd8] sm:$0xff]
      %v5000 = vld [vmem:[#allocation3 + $0xe0] sm:$0xff]
      %v5001 = vld [vmem:[#allocation3 + $0xf0] sm:$0xff]
      %v5002 = vld [vmem:[#allocation3 + $0xf8] sm:$0xff]
      %v5003 = vld [vmem:[#allocation3 + $0x108] sm:$0xff]
      %v5004 = vld [vmem:[#allocation3 + $0x110] sm:$0xff]
      %v5005 = vld [vmem:[#allocation3 + $0x120] sm:$0xff]
      %v5006 = vld [vmem:[#allocation3 + $0x128] sm:$0xff]
      %v5007 = vld [vmem:[#allocation3 + $0x138] sm:$0xff]
      %v5008 = vld [vmem:[#allocation3 + $0x140] sm:$0xff]
      %v5009 = vld [vmem:[#allocation3 + $0x150] sm:$0xff]
      %v5010 = vld [vmem:[#allocation3 + $0x158] sm:$0xff]
      %v5011 = vld [vmem:[#allocation3 + $0x168] sm:$0xff]
      %v5012 = vld [vmem:[#allocation3 + $0x170] sm:$0xff]
      %v5013 = vld [vmem:[#allocation3 + $0x1] sm:$0xff]
      %v5014 = vld [vmem:[#allocation3 + $0x9] sm:$0xff]
      %v5015 = vld [vmem:[#allocation3 + $0x19] sm:$0xff]
      %v5016 = vld [vmem:[#allocation3 + $0x21] sm:$0xff]
      %v5017 = vld [vmem:[#allocation3 + $0x31] sm:$0xff]
      %v5018 = vld [vmem:[#allocation3 + $0x39] sm:$0xff]
      %v5019 = vld [vmem:[#allocation3 + $0x49] sm:$0xff]
      %v5020 = vld [vmem:[#allocation3 + $0x51] sm:$0xff]
      %v5021 = vld [vmem:[#allocation3 + $0x61] sm:$0xff]
      %v5022 = vld [vmem:[#allocation3 + $0x69] sm:$0xff]
      %v5023 = vld [vmem:[#allocation3 + $0x79] sm:$0xff]
      %v5024 = vld [vmem:[#allocation3 + $0x81] sm:$0xff]
      %v5025 = vld [vmem:[#allocation3 + $0x91] sm:$0xff]
      %v5026 = vld [vmem:[#allocation3 + $0x99] sm:$0xff]
      %v5027 = vld [vmem:[#allocation3 + $0xa9] sm:$0xff]
      %v5028 = vld [vmem:[#allocation3 + $0xb1] sm:$0xff]
      %v5029 = vld [vmem:[#allocation3 + $0xc1] sm:$0xff]
      %v5030 = vld [vmem:[#allocation3 + $0xc9] sm:$0xff]
      %v5031 = vld [vmem:[#allocation3 + $0xd9] sm:$0xff]
      %v5032 = vld [vmem:[#allocation3 + $0xe1] sm:$0xff]
      %v5033 = vld [vmem:[#allocation3 + $0xf1] sm:$0xff]
      %v5034 = vld [vmem:[#allocation3 + $0xf9] sm:$0xff]
      %v5035 = vld [vmem:[#allocation3 + $0x109] sm:$0xff]
      %v5036 = vld [vmem:[#allocation3 + $0x111] sm:$0xff]
      %v5037 = vld [vmem:[#allocation3 + $0x121] sm:$0xff]
      %v5038 = vld [vmem:[#allocation3 + $0x129] sm:$0xff]
      %v5039 = vld [vmem:[#allocation3 + $0x139] sm:$0xff]
      %v5040 = vld [vmem:[#allocation3 + $0x141] sm:$0xff]
      %v5041 = vld [vmem:[#allocation3 + $0x151] sm:$0xff]
      %v5042 = vld [vmem:[#allocation3 + $0x159] sm:$0xff]
      %v5043 = vld [vmem:[#allocation3 + $0x169] sm:$0xff]
      %v5044 = vld [vmem:[#allocation3 + $0x171] sm:$0xff]
      %v5045 = vld [vmem:[#allocation3 + $0x2] sm:$0xff]
      %v5046 = vld [vmem:[#allocation3 + $0xa] sm:$0xff]
      %v5047 = vld [vmem:[#allocation3 + $0x1a] sm:$0xff]
      %v5048 = vld [vmem:[#allocation3 + $0x22] sm:$0xff]
      %v5049 = vld [vmem:[#allocation3 + $0x32] sm:$0xff]
      %v5050 = vld [vmem:[#allocation3 + $0x3a] sm:$0xff]
      %v5051 = vld [vmem:[#allocation3 + $0x4a] sm:$0xff]
      %v5052 = vld [vmem:[#allocation3 + $0x52] sm:$0xff]
      %v5053 = vld [vmem:[#allocation3 + $0x62] sm:$0xff]
      %v5054 = vld [vmem:[#allocation3 + $0x6a] sm:$0xff]
      %v5055 = vld [vmem:[#allocation3 + $0x7a] sm:$0xff]
      %v5056 = vld [vmem:[#allocation3 + $0x82] sm:$0xff]
      %v5057 = vld [vmem:[#allocation3 + $0x92] sm:$0xff]
      %v5058 = vld [vmem:[#allocation3 + $0x9a] sm:$0xff]
      %v5059 = vld [vmem:[#allocation3 + $0xaa] sm:$0xff]
      %v5060 = vld [vmem:[#allocation3 + $0xb2] sm:$0xff]
      %v5061 = vld [vmem:[#allocation3 + $0xc2] sm:$0xff]
      %v5062 = vld [vmem:[#allocation3 + $0xca] sm:$0xff]
      %v5063 = vld [vmem:[#allocation3 + $0xda] sm:$0xff]
      %v5064 = vld [vmem:[#allocation3 + $0xe2] sm:$0xff]
      %v5065 = vld [vmem:[#allocation3 + $0xf2] sm:$0xff]
      %v5066 = vld [vmem:[#allocation3 + $0xfa] sm:$0xff]
      %v5067 = vld [vmem:[#allocation3 + $0x10a] sm:$0xff]
      %v5068 = vld [vmem:[#allocation3 + $0x112] sm:$0xff]
      %v5069 = vld [vmem:[#allocation3 + $0x122] sm:$0xff]
      %v5070 = vld [vmem:[#allocation3 + $0x12a] sm:$0xff]
      %v5071 = vld [vmem:[#allocation3 + $0x13a] sm:$0xff]
      %v5072 = vld [vmem:[#allocation3 + $0x142] sm:$0xff]
      %v5073 = vld [vmem:[#allocation3 + $0x152] sm:$0xff]
      %v5074 = vld [vmem:[#allocation3 + $0x15a] sm:$0xff]
      %v5075 = vld [vmem:[#allocation3 + $0x16a] sm:$0xff]
      %v5076 = vld [vmem:[#allocation3 + $0x172] sm:$0xff]
      %v5077 = vld [vmem:[%s2997] sm:$0xff]
      %v5078 = vld [vmem:[%s2997 + $0x8] sm:$0xff]
      %v5079 = vld [vmem:[%s2997 + $0x18] sm:$0xff]
      %v5080 = vld [vmem:[%s2997 + $0x20] sm:$0xff]
      %v5081 = vld [vmem:[%s2997 + $0x30] sm:$0xff]
      %v5082 = vld [vmem:[%s2997 + $0x38] sm:$0xff]
      %v5083 = vld [vmem:[%s2997 + $0x48] sm:$0xff]
      %v5084 = vld [vmem:[%s2997 + $0x50] sm:$0xff]
      %v5085 = vld [vmem:[%s2997 + $0x60] sm:$0xff]
      %v5086 = vld [vmem:[%s2997 + $0x68] sm:$0xff]
      %v5087 = vld [vmem:[%s2997 + $0x78] sm:$0xff]
      %v5088 = vld [vmem:[%s2997 + $0x80] sm:$0xff]
      %v5089 = vld [vmem:[%s2997 + $0x90] sm:$0xff]
      %v5090 = vld [vmem:[%s2997 + $0x98] sm:$0xff]
      %v5091 = vld [vmem:[%s2997 + $0xa8] sm:$0xff]
      %v5092 = vld [vmem:[%s2997 + $0xb0] sm:$0xff]
      %v5093 = vld [vmem:[%s2997 + $0xc0] sm:$0xff]
      %v5094 = vld [vmem:[%s2997 + $0xc8] sm:$0xff]
      %v5095 = vld [vmem:[%s2997 + $0xd8] sm:$0xff]
      %v5096 = vld [vmem:[%s2997 + $0xe0] sm:$0xff]
      %v5097 = vld [vmem:[%s2997 + $0xf0] sm:$0xff]
      %v5098 = vld [vmem:[%s2997 + $0xf8] sm:$0xff]
      %v5099 = vld [vmem:[%s2997 + $0x108] sm:$0xff]
      %v5100 = vld [vmem:[%s2997 + $0x110] sm:$0xff]
      %v5101 = vld [vmem:[%s2997 + $0x120] sm:$0xff]
      %v5102 = vld [vmem:[%s2997 + $0x128] sm:$0xff]
      %v5103 = vld [vmem:[%s2997 + $0x138] sm:$0xff]
      %v5104 = vld [vmem:[%s2997 + $0x140] sm:$0xff]
      %v5105 = vld [vmem:[%s2997 + $0x150] sm:$0xff]
      %v5106 = vld [vmem:[%s2997 + $0x158] sm:$0xff]
      %v5107 = vld [vmem:[%s2997 + $0x168] sm:$0xff]
      %v5108 = vld [vmem:[%s2997 + $0x170] sm:$0xff]
      %v5109 = vld [vmem:[%s2997 + $0x1] sm:$0xff]
      %v5110 = vld [vmem:[%s2997 + $0x9] sm:$0xff]
      %v5111 = vld [vmem:[%s2997 + $0x19] sm:$0xff]
      %v5112 = vld [vmem:[%s2997 + $0x21] sm:$0xff]
      %v5113 = vld [vmem:[%s2997 + $0x31] sm:$0xff]
      %v5114 = vld [vmem:[%s2997 + $0x39] sm:$0xff]
      %v5115 = vld [vmem:[%s2997 + $0x49] sm:$0xff]
      %v5116 = vld [vmem:[%s2997 + $0x51] sm:$0xff]
      %v5117 = vld [vmem:[%s2997 + $0x61] sm:$0xff]
      %v5118 = vld [vmem:[%s2997 + $0x69] sm:$0xff]
      %v5119 = vld [vmem:[%s2997 + $0x79] sm:$0xff]
      %v5120 = vld [vmem:[%s2997 + $0x81] sm:$0xff]
      %v5121 = vld [vmem:[%s2997 + $0x91] sm:$0xff]
      %v5122 = vld [vmem:[%s2997 + $0x99] sm:$0xff]
      %v5123 = vld [vmem:[%s2997 + $0xa9] sm:$0xff]
      %v5124 = vld [vmem:[%s2997 + $0xb1] sm:$0xff]
      %v5125 = vld [vmem:[%s2997 + $0xc1] sm:$0xff]
      %v5126 = vld [vmem:[%s2997 + $0xc9] sm:$0xff]
      %v5127 = vld [vmem:[%s2997 + $0xd9] sm:$0xff]
      %v5128 = vld [vmem:[%s2997 + $0xe1] sm:$0xff]
      %v5129 = vld [vmem:[%s2997 + $0xf1] sm:$0xff]
      %v5130 = vld [vmem:[%s2997 + $0xf9] sm:$0xff]
      %v5131 = vld [vmem:[%s2997 + $0x109] sm:$0xff]
      %v5132 = vld [vmem:[%s2997 + $0x111] sm:$0xff]
      %v5133 = vld [vmem:[%s2997 + $0x121] sm:$0xff]
      %v5134 = vld [vmem:[%s2997 + $0x129] sm:$0xff]
      %v5135 = vld [vmem:[%s2997 + $0x139] sm:$0xff]
      %v5136 = vld [vmem:[%s2997 + $0x141] sm:$0xff]
      %v5137 = vld [vmem:[%s2997 + $0x151] sm:$0xff]
      %v5138 = vld [vmem:[%s2997 + $0x159] sm:$0xff]
      %v5139 = vld [vmem:[%s2997 + $0x169] sm:$0xff]
      %v5140 = vld [vmem:[%s2997 + $0x171] sm:$0xff]
      %v5141 = vld [vmem:[%s2997 + $0x2] sm:$0xff]
      %v5142 = vld [vmem:[%s2997 + $0xa] sm:$0xff]
      %v5143 = vld [vmem:[%s2997 + $0x1a] sm:$0xff]
      %v5144 = vld [vmem:[%s2997 + $0x22] sm:$0xff]
      %v5145 = vld [vmem:[%s2997 + $0x32] sm:$0xff]
      %v5146 = vld [vmem:[%s2997 + $0x3a] sm:$0xff]
      %v5147 = vld [vmem:[%s2997 + $0x4a] sm:$0xff]
      %v5148 = vld [vmem:[%s2997 + $0x52] sm:$0xff]
      %v5149 = vld [vmem:[%s2997 + $0x62] sm:$0xff]
      %v5150 = vld [vmem:[%s2997 + $0x6a] sm:$0xff]
      %v5151 = vld [vmem:[%s2997 + $0x7a] sm:$0xff]
      %v5152 = vld [vmem:[%s2997 + $0x82] sm:$0xff]
      %v5153 = vld [vmem:[%s2997 + $0x92] sm:$0xff]
      %v5154 = vld [vmem:[%s2997 + $0x9a] sm:$0xff]
      %v5155 = vld [vmem:[%s2997 + $0xaa] sm:$0xff]
      %v5156 = vld [vmem:[%s2997 + $0xb2] sm:$0xff]
      %v5157 = vld [vmem:[%s2997 + $0xc2] sm:$0xff]
      %v5158 = vld [vmem:[%s2997 + $0xca] sm:$0xff]
      %v5159 = vld [vmem:[%s2997 + $0xda] sm:$0xff]
      %v5160 = vld [vmem:[%s2997 + $0xe2] sm:$0xff]
      %v5161 = vld [vmem:[%s2997 + $0xf2] sm:$0xff]
      %v5162 = vld [vmem:[%s2997 + $0xfa] sm:$0xff]
      %v5163 = vld [vmem:[%s2997 + $0x10a] sm:$0xff]
      %v5164 = vld [vmem:[%s2997 + $0x112] sm:$0xff]
      %v5165 = vld [vmem:[%s2997 + $0x122] sm:$0xff]
      %v5166 = vld [vmem:[%s2997 + $0x12a] sm:$0xff]
      %v5167 = vld [vmem:[%s2997 + $0x13a] sm:$0xff]
      %v5168 = vld [vmem:[%s2997 + $0x142] sm:$0xff]
      %v5169 = vld [vmem:[%s2997 + $0x152] sm:$0xff]
      %v5170 = vld [vmem:[%s2997 + $0x15a] sm:$0xff]
      %v5171 = vld [vmem:[%s2997 + $0x16a] sm:$0xff]
      %v5172 = vld [vmem:[%s2997 + $0x172] sm:$0xff]
      %v5173 = vld [vmem:[%s3240] sm:$0xff]
      %v5174 = vld [vmem:[%s3240 + $0x8] sm:$0xff]
      %v5175 = vld [vmem:[%s3240 + $0x18] sm:$0xff]
      %v5176 = vld [vmem:[%s3240 + $0x20] sm:$0xff]
      %v5177 = vld [vmem:[%s3240 + $0x30] sm:$0xff]
      %v5178 = vld [vmem:[%s3240 + $0x38] sm:$0xff]
      %v5179 = vld [vmem:[%s3240 + $0x48] sm:$0xff]
      %v5180 = vld [vmem:[%s3240 + $0x50] sm:$0xff]
      %v5181 = vld [vmem:[%s3240 + $0x60] sm:$0xff]
      %v5182 = vld [vmem:[%s3240 + $0x68] sm:$0xff]
      %v5183 = vld [vmem:[%s3240 + $0x78] sm:$0xff]
      %v5184 = vld [vmem:[%s3240 + $0x80] sm:$0xff]
      %v5185 = vld [vmem:[%s3240 + $0x90] sm:$0xff]
      %v5186 = vld [vmem:[%s3240 + $0x98] sm:$0xff]
      %v5187 = vld [vmem:[%s3240 + $0xa8] sm:$0xff]
      %v5188 = vld [vmem:[%s3240 + $0xb0] sm:$0xff]
      %v5189 = vld [vmem:[%s3240 + $0xc0] sm:$0xff]
      %v5190 = vld [vmem:[%s3240 + $0xc8] sm:$0xff]
      %v5191 = vld [vmem:[%s3240 + $0xd8] sm:$0xff]
      %v5192 = vld [vmem:[%s3240 + $0xe0] sm:$0xff]
      %v5193 = vld [vmem:[%s3240 + $0xf0] sm:$0xff]
      %v5194 = vld [vmem:[%s3240 + $0xf8] sm:$0xff]
      %v5195 = vld [vmem:[%s3240 + $0x108] sm:$0xff]
      %v5196 = vld [vmem:[%s3240 + $0x110] sm:$0xff]
      %v5197 = vld [vmem:[%s3240 + $0x120] sm:$0xff]
      %v5198 = vld [vmem:[%s3240 + $0x128] sm:$0xff]
      %v5199 = vld [vmem:[%s3240 + $0x138] sm:$0xff]
      %v5200 = vld [vmem:[%s3240 + $0x140] sm:$0xff]
      %v5201 = vld [vmem:[%s3240 + $0x150] sm:$0xff]
      %v5202 = vld [vmem:[%s3240 + $0x158] sm:$0xff]
      %v5203 = vld [vmem:[%s3240 + $0x168] sm:$0xff]
      %v5204 = vld [vmem:[%s3240 + $0x170] sm:$0xff]
      %v5205 = vld [vmem:[%s3240 + $0x1] sm:$0xff]
      %v5206 = vld [vmem:[%s3240 + $0x9] sm:$0xff]
      %v5207 = vld [vmem:[%s3240 + $0x19] sm:$0xff]
      %v5208 = vld [vmem:[%s3240 + $0x21] sm:$0xff]
      %v5209 = vld [vmem:[%s3240 + $0x31] sm:$0xff]
      %v5210 = vld [vmem:[%s3240 + $0x39] sm:$0xff]
      %v5211 = vld [vmem:[%s3240 + $0x49] sm:$0xff]
      %v5212 = vld [vmem:[%s3240 + $0x51] sm:$0xff]
      %v5213 = vld [vmem:[%s3240 + $0x61] sm:$0xff]
      %v5214 = vld [vmem:[%s3240 + $0x69] sm:$0xff]
      %v5215 = vld [vmem:[%s3240 + $0x79] sm:$0xff]
      %v5216 = vld [vmem:[%s3240 + $0x81] sm:$0xff]
      %v5217 = vld [vmem:[%s3240 + $0x91] sm:$0xff]
      %v5218 = vld [vmem:[%s3240 + $0x99] sm:$0xff]
      %v5219 = vld [vmem:[%s3240 + $0xa9] sm:$0xff]
      %v5220 = vld [vmem:[%s3240 + $0xb1] sm:$0xff]
      %v5221 = vld [vmem:[%s3240 + $0xc1] sm:$0xff]
      %v5222 = vld [vmem:[%s3240 + $0xc9] sm:$0xff]
      %v5223 = vld [vmem:[%s3240 + $0xd9] sm:$0xff]
      %v5224 = vld [vmem:[%s3240 + $0xe1] sm:$0xff]
      %v5225 = vld [vmem:[%s3240 + $0xf1] sm:$0xff]
      %v5226 = vld [vmem:[%s3240 + $0xf9] sm:$0xff]
      %v5227 = vld [vmem:[%s3240 + $0x109] sm:$0xff]
      %v5228 = vld [vmem:[%s3240 + $0x111] sm:$0xff]
      %v5229 = vld [vmem:[%s3240 + $0x121] sm:$0xff]
      %v5230 = vld [vmem:[%s3240 + $0x129] sm:$0xff]
      %v5231 = vld [vmem:[%s3240 + $0x139] sm:$0xff]
      %v5232 = vld [vmem:[%s3240 + $0x141] sm:$0xff]
      %v5233 = vld [vmem:[%s3240 + $0x151] sm:$0xff]
      %v5234 = vld [vmem:[%s3240 + $0x159] sm:$0xff]
      %v5235 = vld [vmem:[%s3240 + $0x169] sm:$0xff]
      %v5236 = vld [vmem:[%s3240 + $0x171] sm:$0xff]
      %v5237 = vld [vmem:[%s3240 + $0x2] sm:$0xff]
      %v5238 = vld [vmem:[%s3240 + $0xa] sm:$0xff]
      %v5239 = vld [vmem:[%s3240 + $0x1a] sm:$0xff]
      %v5240 = vld [vmem:[%s3240 + $0x22] sm:$0xff]
      %v5241 = vld [vmem:[%s3240 + $0x32] sm:$0xff]
      %v5242 = vld [vmem:[%s3240 + $0x3a] sm:$0xff]
      %v5243 = vld [vmem:[%s3240 + $0x4a] sm:$0xff]
      %v5244 = vld [vmem:[%s3240 + $0x52] sm:$0xff]
      %v5245 = vld [vmem:[%s3240 + $0x62] sm:$0xff]
      %v5246 = vld [vmem:[%s3240 + $0x6a] sm:$0xff]
      %v5247 = vld [vmem:[%s3240 + $0x7a] sm:$0xff]
      %v5248 = vld [vmem:[%s3240 + $0x82] sm:$0xff]
      %v5249 = vld [vmem:[%s3240 + $0x92] sm:$0xff]
      %v5250 = vld [vmem:[%s3240 + $0x9a] sm:$0xff]
      %v5251 = vld [vmem:[%s3240 + $0xaa] sm:$0xff]
      %v5252 = vld [vmem:[%s3240 + $0xb2] sm:$0xff]
      %v5253 = vld [vmem:[%s3240 + $0xc2] sm:$0xff]
      %v5254 = vld [vmem:[%s3240 + $0xca] sm:$0xff]
      %v5255 = vld [vmem:[%s3240 + $0xda] sm:$0xff]
      %v5256 = vld [vmem:[%s3240 + $0xe2] sm:$0xff]
      %v5257 = vld [vmem:[%s3240 + $0xf2] sm:$0xff]
      %v5258 = vld [vmem:[%s3240 + $0xfa] sm:$0xff]
      %v5259 = vld [vmem:[%s3240 + $0x10a] sm:$0xff]
      %v5260 = vld [vmem:[%s3240 + $0x112] sm:$0xff]
      %v5261 = vld [vmem:[%s3240 + $0x122] sm:$0xff]
      %v5262 = vld [vmem:[%s3240 + $0x12a] sm:$0xff]
      %v5263 = vld [vmem:[%s3240 + $0x13a] sm:$0xff]
      %v5264 = vld [vmem:[%s3240 + $0x142] sm:$0xff]
      %v5265 = vld [vmem:[%s3240 + $0x152] sm:$0xff]
      %v5266 = vld [vmem:[%s3240 + $0x15a] sm:$0xff]
      %v5267 = vld [vmem:[%s3240 + $0x16a] sm:$0xff]
      %v5268 = vld [vmem:[%s3240 + $0x172] sm:$0xff]
      %5301 = vrot.lane.b32.xlu0 %v5013, 16
      %v5302 = vpop.permute.xlu0 %5301
      %5303 = vrot.lane.b32.xlu0 %v5014, 16
      %v5304 = vpop.permute.xlu0 %5303
      %5305 = vrot.lane.b32.xlu0 %v5015, 16
      %v5306 = vpop.permute.xlu0 %5305
      %5307 = vrot.lane.b32.xlu0 %v5016, 16
      %v5308 = vpop.permute.xlu0 %5307
      %5309 = vrot.lane.b32.xlu0 %v5017, 16
      %v5310 = vpop.permute.xlu0 %5309
      %5311 = vrot.lane.b32.xlu0 %v5018, 16
      %v5312 = vpop.permute.xlu0 %5311
      %5313 = vrot.lane.b32.xlu0 %v5019, 16
      %v5314 = vpop.permute.xlu0 %5313
      %5315 = vrot.lane.b32.xlu0 %v5020, 16
      %v5316 = vpop.permute.xlu0 %5315
      %5317 = vrot.lane.b32.xlu0 %v5021, 16
      %v5318 = vpop.permute.xlu0 %5317
      %5319 = vrot.lane.b32.xlu0 %v5022, 16
      %v5320 = vpop.permute.xlu0 %5319
      %5321 = vrot.lane.b32.xlu0 %v5023, 16
      %v5322 = vpop.permute.xlu0 %5321
      %5323 = vrot.lane.b32.xlu0 %v5024, 16
      %v5324 = vpop.permute.xlu0 %5323
      %5325 = vrot.lane.b32.xlu0 %v5025, 16
      %v5326 = vpop.permute.xlu0 %5325
      %5327 = vrot.lane.b32.xlu0 %v5026, 16
      %v5328 = vpop.permute.xlu0 %5327
      %5329 = vrot.lane.b32.xlu0 %v5027, 16
      %v5330 = vpop.permute.xlu0 %5329
      %5331 = vrot.lane.b32.xlu0 %v5028, 16
      %v5332 = vpop.permute.xlu0 %5331
      %5333 = vrot.lane.b32.xlu0 %v5029, 16
      %v5334 = vpop.permute.xlu0 %5333
      %5335 = vrot.lane.b32.xlu0 %v5030, 16
      %v5336 = vpop.permute.xlu0 %5335
      %5337 = vrot.lane.b32.xlu0 %v5031, 16
      %v5338 = vpop.permute.xlu0 %5337
      %5339 = vrot.lane.b32.xlu0 %v5032, 16
      %v5340 = vpop.permute.xlu0 %5339
      %5341 = vrot.lane.b32.xlu0 %v5033, 16
      %v5342 = vpop.permute.xlu0 %5341
      %5343 = vrot.lane.b32.xlu0 %v5034, 16
      %v5344 = vpop.permute.xlu0 %5343
      %5345 = vrot.lane.b32.xlu0 %v5035, 16
      %v5346 = vpop.permute.xlu0 %5345
      %5347 = vrot.lane.b32.xlu0 %v5036, 16
      %v5348 = vpop.permute.xlu0 %5347
      %5349 = vrot.lane.b32.xlu0 %v5037, 16
      %v5350 = vpop.permute.xlu0 %5349
      %5351 = vrot.lane.b32.xlu0 %v5038, 16
      %v5352 = vpop.permute.xlu0 %5351
      %5353 = vrot.lane.b32.xlu0 %v5039, 16
      %v5354 = vpop.permute.xlu0 %5353
      %5355 = vrot.lane.b32.xlu0 %v5040, 16
      %v5356 = vpop.permute.xlu0 %5355
      %5357 = vrot.lane.b32.xlu0 %v5041, 16
      %v5358 = vpop.permute.xlu0 %5357
      %5359 = vrot.lane.b32.xlu0 %v5042, 16
      %v5360 = vpop.permute.xlu0 %5359
      %5361 = vrot.lane.b32.xlu0 %v5043, 16
      %v5362 = vpop.permute.xlu0 %5361
      %5363 = vrot.lane.b32.xlu0 %v5044, 16
      %v5364 = vpop.permute.xlu0 %5363
      %5429 = vrot.lane.b32.xlu0 %v5045, 32
      %v5430 = vpop.permute.xlu0 %5429
      %5431 = vrot.lane.b32.xlu0 %v5046, 32
      %v5432 = vpop.permute.xlu0 %5431
      %5433 = vrot.lane.b32.xlu0 %v5047, 32
      %v5434 = vpop.permute.xlu0 %5433
      %5435 = vrot.lane.b32.xlu0 %v5048, 32
      %v5436 = vpop.permute.xlu0 %5435
      %5437 = vrot.lane.b32.xlu0 %v5049, 32
      %v5438 = vpop.permute.xlu0 %5437
      %5439 = vrot.lane.b32.xlu0 %v5050, 32
      %v5440 = vpop.permute.xlu0 %5439
      %5441 = vrot.lane.b32.xlu0 %v5051, 32
      %v5442 = vpop.permute.xlu0 %5441
      %5443 = vrot.lane.b32.xlu0 %v5052, 32
      %v5444 = vpop.permute.xlu0 %5443
      %5445 = vrot.lane.b32.xlu0 %v5053, 32
      %v5446 = vpop.permute.xlu0 %5445
      %5447 = vrot.lane.b32.xlu0 %v5054, 32
      %v5448 = vpop.permute.xlu0 %5447
      %5449 = vrot.lane.b32.xlu0 %v5055, 32
      %v5450 = vpop.permute.xlu0 %5449
      %5451 = vrot.lane.b32.xlu0 %v5056, 32
      %v5452 = vpop.permute.xlu0 %5451
      %5453 = vrot.lane.b32.xlu0 %v5057, 32
      %v5454 = vpop.permute.xlu0 %5453
      %5455 = vrot.lane.b32.xlu0 %v5058, 32
      %v5456 = vpop.permute.xlu0 %5455
      %5457 = vrot.lane.b32.xlu0 %v5059, 32
      %v5458 = vpop.permute.xlu0 %5457
      %5459 = vrot.lane.b32.xlu0 %v5060, 32
      %v5460 = vpop.permute.xlu0 %5459
      %5461 = vrot.lane.b32.xlu0 %v5061, 32
      %v5462 = vpop.permute.xlu0 %5461
      %5463 = vrot.lane.b32.xlu0 %v5062, 32
      %v5464 = vpop.permute.xlu0 %5463
      %5465 = vrot.lane.b32.xlu0 %v5063, 32
      %v5466 = vpop.permute.xlu0 %5465
      %5467 = vrot.lane.b32.xlu0 %v5064, 32
      %v5468 = vpop.permute.xlu0 %5467
      %5469 = vrot.lane.b32.xlu0 %v5065, 32
      %v5470 = vpop.permute.xlu0 %5469
      %5471 = vrot.lane.b32.xlu0 %v5066, 32
      %v5472 = vpop.permute.xlu0 %5471
      %5473 = vrot.lane.b32.xlu0 %v5067, 32
      %v5474 = vpop.permute.xlu0 %5473
      %5475 = vrot.lane.b32.xlu0 %v5068, 32
      %v5476 = vpop.permute.xlu0 %5475
      %5477 = vrot.lane.b32.xlu0 %v5069, 32
      %v5478 = vpop.permute.xlu0 %5477
      %5479 = vrot.lane.b32.xlu0 %v5070, 32
      %v5480 = vpop.permute.xlu0 %5479
      %5481 = vrot.lane.b32.xlu0 %v5071, 32
      %v5482 = vpop.permute.xlu0 %5481
      %5483 = vrot.lane.b32.xlu0 %v5072, 32
      %v5484 = vpop.permute.xlu0 %5483
      %5485 = vrot.lane.b32.xlu0 %v5073, 32
      %v5486 = vpop.permute.xlu0 %5485
      %5487 = vrot.lane.b32.xlu0 %v5074, 32
      %v5488 = vpop.permute.xlu0 %5487
      %5489 = vrot.lane.b32.xlu0 %v5075, 32
      %v5490 = vpop.permute.xlu0 %5489
      %5491 = vrot.lane.b32.xlu0 %v5076, 32
      %v5492 = vpop.permute.xlu0 %5491
      %5557 = vrot.lane.b32.xlu0 %v5077, 48
      %v5558 = vpop.permute.xlu0 %5557
      %5559 = vrot.lane.b32.xlu0 %v5078, 48
      %v5560 = vpop.permute.xlu0 %5559
      %5561 = vrot.lane.b32.xlu0 %v5079, 48
      %v5562 = vpop.permute.xlu0 %5561
      %5563 = vrot.lane.b32.xlu0 %v5080, 48
      %v5564 = vpop.permute.xlu0 %5563
      %5565 = vrot.lane.b32.xlu0 %v5081, 48
      %v5566 = vpop.permute.xlu0 %5565
      %5567 = vrot.lane.b32.xlu0 %v5082, 48
      %v5568 = vpop.permute.xlu0 %5567
      %5569 = vrot.lane.b32.xlu0 %v5083, 48
      %v5570 = vpop.permute.xlu0 %5569
      %5571 = vrot.lane.b32.xlu0 %v5084, 48
      %v5572 = vpop.permute.xlu0 %5571
      %5573 = vrot.lane.b32.xlu0 %v5085, 48
      %v5574 = vpop.permute.xlu0 %5573
      %5575 = vrot.lane.b32.xlu0 %v5086, 48
      %v5576 = vpop.permute.xlu0 %5575
      %5577 = vrot.lane.b32.xlu0 %v5087, 48
      %v5578 = vpop.permute.xlu0 %5577
      %5579 = vrot.lane.b32.xlu0 %v5088, 48
      %v5580 = vpop.permute.xlu0 %5579
      %5581 = vrot.lane.b32.xlu0 %v5089, 48
      %v5582 = vpop.permute.xlu0 %5581
      %5583 = vrot.lane.b32.xlu0 %v5090, 48
      %v5584 = vpop.permute.xlu0 %5583
      %5585 = vrot.lane.b32.xlu0 %v5091, 48
      %v5586 = vpop.permute.xlu0 %5585
      %5587 = vrot.lane.b32.xlu0 %v5092, 48
      %v5588 = vpop.permute.xlu0 %5587
      %5589 = vrot.lane.b32.xlu0 %v5093, 48
      %v5590 = vpop.permute.xlu0 %5589
      %5591 = vrot.lane.b32.xlu0 %v5094, 48
      %v5592 = vpop.permute.xlu0 %5591
      %5593 = vrot.lane.b32.xlu0 %v5095, 48
      %v5594 = vpop.permute.xlu0 %5593
      %5595 = vrot.lane.b32.xlu0 %v5096, 48
      %v5596 = vpop.permute.xlu0 %5595
      %5597 = vrot.lane.b32.xlu0 %v5097, 48
      %v5598 = vpop.permute.xlu0 %5597
      %5599 = vrot.lane.b32.xlu0 %v5098, 48
      %v5600 = vpop.permute.xlu0 %5599
      %5601 = vrot.lane.b32.xlu0 %v5099, 48
      %v5602 = vpop.permute.xlu0 %5601
      %5603 = vrot.lane.b32.xlu0 %v5100, 48
      %v5604 = vpop.permute.xlu0 %5603
      %5605 = vrot.lane.b32.xlu0 %v5101, 48
      %v5606 = vpop.permute.xlu0 %5605
      %5607 = vrot.lane.b32.xlu0 %v5102, 48
      %v5608 = vpop.permute.xlu0 %5607
      %5609 = vrot.lane.b32.xlu0 %v5103, 48
      %v5610 = vpop.permute.xlu0 %5609
      %5611 = vrot.lane.b32.xlu0 %v5104, 48
      %v5612 = vpop.permute.xlu0 %5611
      %5613 = vrot.lane.b32.xlu0 %v5105, 48
      %v5614 = vpop.permute.xlu0 %5613
      %5615 = vrot.lane.b32.xlu0 %v5106, 48
      %v5616 = vpop.permute.xlu0 %5615
      %5617 = vrot.lane.b32.xlu0 %v5107, 48
      %v5618 = vpop.permute.xlu0 %5617
      %5619 = vrot.lane.b32.xlu0 %v5108, 48
      %v5620 = vpop.permute.xlu0 %5619
      %5685 = vrot.lane.b32.xlu0 %v5109, 64
      %v5686 = vpop.permute.xlu0 %5685
      %5687 = vrot.lane.b32.xlu0 %v5110, 64
      %v5688 = vpop.permute.xlu0 %5687
      %5689 = vrot.lane.b32.xlu0 %v5111, 64
      %v5690 = vpop.permute.xlu0 %5689
      %5691 = vrot.lane.b32.xlu0 %v5112, 64
      %v5692 = vpop.permute.xlu0 %5691
      %5693 = vrot.lane.b32.xlu0 %v5113, 64
      %v5694 = vpop.permute.xlu0 %5693
      %5695 = vrot.lane.b32.xlu0 %v5114, 64
      %v5696 = vpop.permute.xlu0 %5695
      %5697 = vrot.lane.b32.xlu0 %v5115, 64
      %v5698 = vpop.permute.xlu0 %5697
      %5699 = vrot.lane.b32.xlu0 %v5116, 64
      %v5700 = vpop.permute.xlu0 %5699
      %5701 = vrot.lane.b32.xlu0 %v5117, 64
      %v5702 = vpop.permute.xlu0 %5701
      %5703 = vrot.lane.b32.xlu0 %v5118, 64
      %v5704 = vpop.permute.xlu0 %5703
      %5705 = vrot.lane.b32.xlu0 %v5119, 64
      %v5706 = vpop.permute.xlu0 %5705
      %5707 = vrot.lane.b32.xlu0 %v5120, 64
      %v5708 = vpop.permute.xlu0 %5707
      %5709 = vrot.lane.b32.xlu0 %v5121, 64
      %v5710 = vpop.permute.xlu0 %5709
      %5711 = vrot.lane.b32.xlu0 %v5122, 64
      %v5712 = vpop.permute.xlu0 %5711
      %5713 = vrot.lane.b32.xlu0 %v5123, 64
      %v5714 = vpop.permute.xlu0 %5713
      %5715 = vrot.lane.b32.xlu0 %v5124, 64
      %v5716 = vpop.permute.xlu0 %5715
      %5717 = vrot.lane.b32.xlu0 %v5125, 64
      %v5718 = vpop.permute.xlu0 %5717
      %5719 = vrot.lane.b32.xlu0 %v5126, 64
      %v5720 = vpop.permute.xlu0 %5719
      %5721 = vrot.lane.b32.xlu0 %v5127, 64
      %v5722 = vpop.permute.xlu0 %5721
      %5723 = vrot.lane.b32.xlu0 %v5128, 64
      %v5724 = vpop.permute.xlu0 %5723
      %5725 = vrot.lane.b32.xlu0 %v5129, 64
      %v5726 = vpop.permute.xlu0 %5725
      %5727 = vrot.lane.b32.xlu0 %v5130, 64
      %v5728 = vpop.permute.xlu0 %5727
      %5729 = vrot.lane.b32.xlu0 %v5131, 64
      %v5730 = vpop.permute.xlu0 %5729
      %5731 = vrot.lane.b32.xlu0 %v5132, 64
      %v5732 = vpop.permute.xlu0 %5731
      %5733 = vrot.lane.b32.xlu0 %v5133, 64
      %v5734 = vpop.permute.xlu0 %5733
      %5735 = vrot.lane.b32.xlu0 %v5134, 64
      %v5736 = vpop.permute.xlu0 %5735
      %5737 = vrot.lane.b32.xlu0 %v5135, 64
      %v5738 = vpop.permute.xlu0 %5737
      %5739 = vrot.lane.b32.xlu0 %v5136, 64
      %v5740 = vpop.permute.xlu0 %5739
      %5741 = vrot.lane.b32.xlu0 %v5137, 64
      %v5742 = vpop.permute.xlu0 %5741
      %5743 = vrot.lane.b32.xlu0 %v5138, 64
      %v5744 = vpop.permute.xlu0 %5743
      %5745 = vrot.lane.b32.xlu0 %v5139, 64
      %v5746 = vpop.permute.xlu0 %5745
      %5747 = vrot.lane.b32.xlu0 %v5140, 64
      %v5748 = vpop.permute.xlu0 %5747
      %5813 = vrot.lane.b32.xlu0 %v5141, 80
      %v5814 = vpop.permute.xlu0 %5813
      %5815 = vrot.lane.b32.xlu0 %v5142, 80
      %v5816 = vpop.permute.xlu0 %5815
      %5817 = vrot.lane.b32.xlu0 %v5143, 80
      %v5818 = vpop.permute.xlu0 %5817
      %5819 = vrot.lane.b32.xlu0 %v5144, 80
      %v5820 = vpop.permute.xlu0 %5819
      %5821 = vrot.lane.b32.xlu0 %v5145, 80
      %v5822 = vpop.permute.xlu0 %5821
      %5823 = vrot.lane.b32.xlu0 %v5146, 80
      %v5824 = vpop.permute.xlu0 %5823
      %5825 = vrot.lane.b32.xlu0 %v5147, 80
      %v5826 = vpop.permute.xlu0 %5825
      %5827 = vrot.lane.b32.xlu0 %v5148, 80
      %v5828 = vpop.permute.xlu0 %5827
      %5829 = vrot.lane.b32.xlu0 %v5149, 80
      %v5830 = vpop.permute.xlu0 %5829
      %5831 = vrot.lane.b32.xlu0 %v5150, 80
      %v5832 = vpop.permute.xlu0 %5831
      %5833 = vrot.lane.b32.xlu0 %v5151, 80
      %v5834 = vpop.permute.xlu0 %5833
      %5835 = vrot.lane.b32.xlu0 %v5152, 80
      %v5836 = vpop.permute.xlu0 %5835
      %5837 = vrot.lane.b32.xlu0 %v5153, 80
      %v5838 = vpop.permute.xlu0 %5837
      %5839 = vrot.lane.b32.xlu0 %v5154, 80
      %v5840 = vpop.permute.xlu0 %5839
      %5841 = vrot.lane.b32.xlu0 %v5155, 80
      %v5842 = vpop.permute.xlu0 %5841
      %5843 = vrot.lane.b32.xlu0 %v5156, 80
      %v5844 = vpop.permute.xlu0 %5843
      %5845 = vrot.lane.b32.xlu0 %v5157, 80
      %v5846 = vpop.permute.xlu0 %5845
      %5847 = vrot.lane.b32.xlu0 %v5158, 80
      %v5848 = vpop.permute.xlu0 %5847
      %5849 = vrot.lane.b32.xlu0 %v5159, 80
      %v5850 = vpop.permute.xlu0 %5849
      %5851 = vrot.lane.b32.xlu0 %v5160, 80
      %v5852 = vpop.permute.xlu0 %5851
      %5853 = vrot.lane.b32.xlu0 %v5161, 80
      %v5854 = vpop.permute.xlu0 %5853
      %5855 = vrot.lane.b32.xlu0 %v5162, 80
      %v5856 = vpop.permute.xlu0 %5855
      %5857 = vrot.lane.b32.xlu0 %v5163, 80
      %v5858 = vpop.permute.xlu0 %5857
      %5859 = vrot.lane.b32.xlu0 %v5164, 80
      %v5860 = vpop.permute.xlu0 %5859
      %5861 = vrot.lane.b32.xlu0 %v5165, 80
      %v5862 = vpop.permute.xlu0 %5861
      %5863 = vrot.lane.b32.xlu0 %v5166, 80
      %v5864 = vpop.permute.xlu0 %5863
      %5865 = vrot.lane.b32.xlu0 %v5167, 80
      %v5866 = vpop.permute.xlu0 %5865
      %5867 = vrot.lane.b32.xlu0 %v5168, 80
      %v5868 = vpop.permute.xlu0 %5867
      %5869 = vrot.lane.b32.xlu0 %v5169, 80
      %v5870 = vpop.permute.xlu0 %5869
      %5871 = vrot.lane.b32.xlu0 %v5170, 80
      %v5872 = vpop.permute.xlu0 %5871
      %5873 = vrot.lane.b32.xlu0 %v5171, 80
      %v5874 = vpop.permute.xlu0 %5873
      %5875 = vrot.lane.b32.xlu0 %v5172, 80
      %v5876 = vpop.permute.xlu0 %5875
      %5941 = vrot.lane.b32.xlu0 %v5173, 96
      %v5942 = vpop.permute.xlu0 %5941
      %5943 = vrot.lane.b32.xlu0 %v5174, 96
      %v5944 = vpop.permute.xlu0 %5943
      %5945 = vrot.lane.b32.xlu0 %v5175, 96
      %v5946 = vpop.permute.xlu0 %5945
      %5947 = vrot.lane.b32.xlu0 %v5176, 96
      %v5948 = vpop.permute.xlu0 %5947
      %5949 = vrot.lane.b32.xlu0 %v5177, 96
      %v5950 = vpop.permute.xlu0 %5949
      %5951 = vrot.lane.b32.xlu0 %v5178, 96
      %v5952 = vpop.permute.xlu0 %5951
      %5953 = vrot.lane.b32.xlu0 %v5179, 96
      %v5954 = vpop.permute.xlu0 %5953
      %5955 = vrot.lane.b32.xlu0 %v5180, 96
      %v5956 = vpop.permute.xlu0 %5955
      %5957 = vrot.lane.b32.xlu0 %v5181, 96
      %v5958 = vpop.permute.xlu0 %5957
      %5959 = vrot.lane.b32.xlu0 %v5182, 96
      %v5960 = vpop.permute.xlu0 %5959
      %5961 = vrot.lane.b32.xlu0 %v5183, 96
      %v5962 = vpop.permute.xlu0 %5961
      %5963 = vrot.lane.b32.xlu0 %v5184, 96
      %v5964 = vpop.permute.xlu0 %5963
      %5965 = vrot.lane.b32.xlu0 %v5185, 96
      %v5966 = vpop.permute.xlu0 %5965
      %5967 = vrot.lane.b32.xlu0 %v5186, 96
      %v5968 = vpop.permute.xlu0 %5967
      %5969 = vrot.lane.b32.xlu0 %v5187, 96
      %v5970 = vpop.permute.xlu0 %5969
      %5971 = vrot.lane.b32.xlu0 %v5188, 96
      %v5972 = vpop.permute.xlu0 %5971
      %5973 = vrot.lane.b32.xlu0 %v5189, 96
      %v5974 = vpop.permute.xlu0 %5973
      %5975 = vrot.lane.b32.xlu0 %v5190, 96
      %v5976 = vpop.permute.xlu0 %5975
      %5977 = vrot.lane.b32.xlu0 %v5191, 96
      %v5978 = vpop.permute.xlu0 %5977
      %5979 = vrot.lane.b32.xlu0 %v5192, 96
      %v5980 = vpop.permute.xlu0 %5979
      %5981 = vrot.lane.b32.xlu0 %v5193, 96
      %v5982 = vpop.permute.xlu0 %5981
      %5983 = vrot.lane.b32.xlu0 %v5194, 96
      %v5984 = vpop.permute.xlu0 %5983
      %5985 = vrot.lane.b32.xlu0 %v5195, 96
      %v5986 = vpop.permute.xlu0 %5985
      %5987 = vrot.lane.b32.xlu0 %v5196, 96
      %v5988 = vpop.permute.xlu0 %5987
      %5989 = vrot.lane.b32.xlu0 %v5197, 96
      %v5990 = vpop.permute.xlu0 %5989
      %5991 = vrot.lane.b32.xlu0 %v5198, 96
      %v5992 = vpop.permute.xlu0 %5991
      %5993 = vrot.lane.b32.xlu0 %v5199, 96
      %v5994 = vpop.permute.xlu0 %5993
      %5995 = vrot.lane.b32.xlu0 %v5200, 96
      %v5996 = vpop.permute.xlu0 %5995
      %5997 = vrot.lane.b32.xlu0 %v5201, 96
      %v5998 = vpop.permute.xlu0 %5997
      %5999 = vrot.lane.b32.xlu0 %v5202, 96
      %v6000 = vpop.permute.xlu0 %5999
      %6001 = vrot.lane.b32.xlu0 %v5203, 96
      %v6002 = vpop.permute.xlu0 %6001
      %6003 = vrot.lane.b32.xlu0 %v5204, 96
      %v6004 = vpop.permute.xlu0 %6003
      %6069 = vrot.lane.b32.xlu0 %v5205, 112
      %v6070 = vpop.permute.xlu0 %6069
      %6071 = vrot.lane.b32.xlu0 %v5206, 112
      %v6072 = vpop.permute.xlu0 %6071
      %6073 = vrot.lane.b32.xlu0 %v5207, 112
      %v6074 = vpop.permute.xlu0 %6073
      %6075 = vrot.lane.b32.xlu0 %v5208, 112
      %v6076 = vpop.permute.xlu0 %6075
      %6077 = vrot.lane.b32.xlu0 %v5209, 112
      %v6078 = vpop.permute.xlu0 %6077
      %6079 = vrot.lane.b32.xlu0 %v5210, 112
      %v6080 = vpop.permute.xlu0 %6079
      %6081 = vrot.lane.b32.xlu0 %v5211, 112
      %v6082 = vpop.permute.xlu0 %6081
      %6083 = vrot.lane.b32.xlu0 %v5212, 112
      %v6084 = vpop.permute.xlu0 %6083
      %6085 = vrot.lane.b32.xlu0 %v5213, 112
      %v6086 = vpop.permute.xlu0 %6085
      %6087 = vrot.lane.b32.xlu0 %v5214, 112
      %v6088 = vpop.permute.xlu0 %6087
      %6089 = vrot.lane.b32.xlu0 %v5215, 112
      %v6090 = vpop.permute.xlu0 %6089
      %6091 = vrot.lane.b32.xlu0 %v5216, 112
      %v6092 = vpop.permute.xlu0 %6091
      %6093 = vrot.lane.b32.xlu0 %v5217, 112
      %v6094 = vpop.permute.xlu0 %6093
      %6095 = vrot.lane.b32.xlu0 %v5218, 112
      %v6096 = vpop.permute.xlu0 %6095
      %6097 = vrot.lane.b32.xlu0 %v5219, 112
      %v6098 = vpop.permute.xlu0 %6097
      %6099 = vrot.lane.b32.xlu0 %v5220, 112
      %v6100 = vpop.permute.xlu0 %6099
      %6101 = vrot.lane.b32.xlu0 %v5221, 112
      %v6102 = vpop.permute.xlu0 %6101
      %6103 = vrot.lane.b32.xlu0 %v5222, 112
      %v6104 = vpop.permute.xlu0 %6103
      %6105 = vrot.lane.b32.xlu0 %v5223, 112
      %v6106 = vpop.permute.xlu0 %6105
      %6107 = vrot.lane.b32.xlu0 %v5224, 112
      %v6108 = vpop.permute.xlu0 %6107
      %6109 = vrot.lane.b32.xlu0 %v5225, 112
      %v6110 = vpop.permute.xlu0 %6109
      %6111 = vrot.lane.b32.xlu0 %v5226, 112
      %v6112 = vpop.permute.xlu0 %6111
      %6113 = vrot.lane.b32.xlu0 %v5227, 112
      %v6114 = vpop.permute.xlu0 %6113
      %6115 = vrot.lane.b32.xlu0 %v5228, 112
      %v6116 = vpop.permute.xlu0 %6115
      %6117 = vrot.lane.b32.xlu0 %v5229, 112
      %v6118 = vpop.permute.xlu0 %6117
      %6119 = vrot.lane.b32.xlu0 %v5230, 112
      %v6120 = vpop.permute.xlu0 %6119
      %6121 = vrot.lane.b32.xlu0 %v5231, 112
      %v6122 = vpop.permute.xlu0 %6121
      %6123 = vrot.lane.b32.xlu0 %v5232, 112
      %v6124 = vpop.permute.xlu0 %6123
      %6125 = vrot.lane.b32.xlu0 %v5233, 112
      %v6126 = vpop.permute.xlu0 %6125
      %6127 = vrot.lane.b32.xlu0 %v5234, 112
      %v6128 = vpop.permute.xlu0 %6127
      %6129 = vrot.lane.b32.xlu0 %v5235, 112
      %v6130 = vpop.permute.xlu0 %6129
      %6131 = vrot.lane.b32.xlu0 %v5236, 112
      %v6132 = vpop.permute.xlu0 %6131
      %v6165 = vsel %vm498, %v4981, %v5302
      %v6166 = vsel %vm498, %v4982, %v5304
      %v6167 = vsel %vm498, %v4983, %v5306
      %v6168 = vsel %vm498, %v4984, %v5308
      %v6169 = vsel %vm498, %v4985, %v5310
      %v6170 = vsel %vm498, %v4986, %v5312
      %v6171 = vsel %vm498, %v4987, %v5314
      %v6172 = vsel %vm498, %v4988, %v5316
      %v6173 = vsel %vm498, %v4989, %v5318
      %v6174 = vsel %vm498, %v4990, %v5320
      %v6175 = vsel %vm498, %v4991, %v5322
      %v6176 = vsel %vm498, %v4992, %v5324
      %v6177 = vsel %vm498, %v4993, %v5326
      %v6178 = vsel %vm498, %v4994, %v5328
      %v6179 = vsel %vm498, %v4995, %v5330
      %v6180 = vsel %vm498, %v4996, %v5332
      %v6181 = vsel %vm498, %v4997, %v5334
      %v6182 = vsel %vm498, %v4998, %v5336
      %v6183 = vsel %vm498, %v4999, %v5338
      %v6184 = vsel %vm498, %v5000, %v5340
      %v6185 = vsel %vm498, %v5001, %v5342
      %v6186 = vsel %vm498, %v5002, %v5344
      %v6187 = vsel %vm498, %v5003, %v5346
      %v6188 = vsel %vm498, %v5004, %v5348
      %v6189 = vsel %vm498, %v5005, %v5350
      %v6190 = vsel %vm498, %v5006, %v5352
      %v6191 = vsel %vm498, %v5007, %v5354
      %v6192 = vsel %vm498, %v5008, %v5356
      %v6193 = vsel %vm498, %v5009, %v5358
      %v6194 = vsel %vm498, %v5010, %v5360
      %v6195 = vsel %vm498, %v5011, %v5362
      %v6196 = vsel %vm498, %v5012, %v5364
      %v6197 = vsel %vm2463, %v6165, %v5430
      %v6198 = vsel %vm2463, %v6166, %v5432
      %v6199 = vsel %vm2463, %v6167, %v5434
      %v6200 = vsel %vm2463, %v6168, %v5436
      %v6201 = vsel %vm2463, %v6169, %v5438
      %v6202 = vsel %vm2463, %v6170, %v5440
      %v6203 = vsel %vm2463, %v6171, %v5442
      %v6204 = vsel %vm2463, %v6172, %v5444
      %v6205 = vsel %vm2463, %v6173, %v5446
      %v6206 = vsel %vm2463, %v6174, %v5448
      %v6207 = vsel %vm2463, %v6175, %v5450
      %v6208 = vsel %vm2463, %v6176, %v5452
      %v6209 = vsel %vm2463, %v6177, %v5454
      %v6210 = vsel %vm2463, %v6178, %v5456
      %v6211 = vsel %vm2463, %v6179, %v5458
      %v6212 = vsel %vm2463, %v6180, %v5460
      %v6213 = vsel %vm2463, %v6181, %v5462
      %v6214 = vsel %vm2463, %v6182, %v5464
      %v6215 = vsel %vm2463, %v6183, %v5466
      %v6216 = vsel %vm2463, %v6184, %v5468
      %v6217 = vsel %vm2463, %v6185, %v5470
      %v6218 = vsel %vm2463, %v6186, %v5472
      %v6219 = vsel %vm2463, %v6187, %v5474
      %v6220 = vsel %vm2463, %v6188, %v5476
      %v6221 = vsel %vm2463, %v6189, %v5478
      %v6222 = vsel %vm2463, %v6190, %v5480
      %v6223 = vsel %vm2463, %v6191, %v5482
      %v6224 = vsel %vm2463, %v6192, %v5484
      %v6225 = vsel %vm2463, %v6193, %v5486
      %v6226 = vsel %vm2463, %v6194, %v5488
      %v6227 = vsel %vm2463, %v6195, %v5490
      %v6228 = vsel %vm2463, %v6196, %v5492
      %v6229 = vsel %vm2529, %v6197, %v5558
      %v6230 = vsel %vm2529, %v6198, %v5560
      %v6231 = vsel %vm2529, %v6199, %v5562
      %v6232 = vsel %vm2529, %v6200, %v5564
      %v6233 = vsel %vm2529, %v6201, %v5566
      %v6234 = vsel %vm2529, %v6202, %v5568
      %v6235 = vsel %vm2529, %v6203, %v5570
      %v6236 = vsel %vm2529, %v6204, %v5572
      %v6237 = vsel %vm2529, %v6205, %v5574
      %v6238 = vsel %vm2529, %v6206, %v5576
      %v6239 = vsel %vm2529, %v6207, %v5578
      %v6240 = vsel %vm2529, %v6208, %v5580
      %v6241 = vsel %vm2529, %v6209, %v5582
      %v6242 = vsel %vm2529, %v6210, %v5584
      %v6243 = vsel %vm2529, %v6211, %v5586
      %v6244 = vsel %vm2529, %v6212, %v5588
      %v6245 = vsel %vm2529, %v6213, %v5590
      %v6246 = vsel %vm2529, %v6214, %v5592
      %v6247 = vsel %vm2529, %v6215, %v5594
      %v6248 = vsel %vm2529, %v6216, %v5596
      %v6249 = vsel %vm2529, %v6217, %v5598
      %v6250 = vsel %vm2529, %v6218, %v5600
      %v6251 = vsel %vm2529, %v6219, %v5602
      %v6252 = vsel %vm2529, %v6220, %v5604
      %v6253 = vsel %vm2529, %v6221, %v5606
      %v6254 = vsel %vm2529, %v6222, %v5608
      %v6255 = vsel %vm2529, %v6223, %v5610
      %v6256 = vsel %vm2529, %v6224, %v5612
      %v6257 = vsel %vm2529, %v6225, %v5614
      %v6258 = vsel %vm2529, %v6226, %v5616
      %v6259 = vsel %vm2529, %v6227, %v5618
      %v6260 = vsel %vm2529, %v6228, %v5620
      %v6261 = vsel %vm2595, %v6229, %v5686
      %v6262 = vsel %vm2595, %v6230, %v5688
      %v6263 = vsel %vm2595, %v6231, %v5690
      %v6264 = vsel %vm2595, %v6232, %v5692
      %v6265 = vsel %vm2595, %v6233, %v5694
      %v6266 = vsel %vm2595, %v6234, %v5696
      %v6267 = vsel %vm2595, %v6235, %v5698
      %v6268 = vsel %vm2595, %v6236, %v5700
      %v6269 = vsel %vm2595, %v6237, %v5702
      %v6270 = vsel %vm2595, %v6238, %v5704
      %v6271 = vsel %vm2595, %v6239, %v5706
      %v6272 = vsel %vm2595, %v6240, %v5708
      %v6273 = vsel %vm2595, %v6241, %v5710
      %v6274 = vsel %vm2595, %v6242, %v5712
      %v6275 = vsel %vm2595, %v6243, %v5714
      %v6276 = vsel %vm2595, %v6244, %v5716
      %v6277 = vsel %vm2595, %v6245, %v5718
      %v6278 = vsel %vm2595, %v6246, %v5720
      %v6279 = vsel %vm2595, %v6247, %v5722
      %v6280 = vsel %vm2595, %v6248, %v5724
      %v6281 = vsel %vm2595, %v6249, %v5726
      %v6282 = vsel %vm2595, %v6250, %v5728
      %v6283 = vsel %vm2595, %v6251, %v5730
      %v6284 = vsel %vm2595, %v6252, %v5732
      %v6285 = vsel %vm2595, %v6253, %v5734
      %v6286 = vsel %vm2595, %v6254, %v5736
      %v6287 = vsel %vm2595, %v6255, %v5738
      %v6288 = vsel %vm2595, %v6256, %v5740
      %v6289 = vsel %vm2595, %v6257, %v5742
      %v6290 = vsel %vm2595, %v6258, %v5744
      %v6291 = vsel %vm2595, %v6259, %v5746
      %v6292 = vsel %vm2595, %v6260, %v5748
      %v6293 = vsel %vm4361, %v6261, %v5814
      %v6294 = vsel %vm4361, %v6262, %v5816
      %v6295 = vsel %vm4361, %v6263, %v5818
      %v6296 = vsel %vm4361, %v6264, %v5820
      %v6297 = vsel %vm4361, %v6265, %v5822
      %v6298 = vsel %vm4361, %v6266, %v5824
      %v6299 = vsel %vm4361, %v6267, %v5826
      %v6300 = vsel %vm4361, %v6268, %v5828
      %v6301 = vsel %vm4361, %v6269, %v5830
      %v6302 = vsel %vm4361, %v6270, %v5832
      %v6303 = vsel %vm4361, %v6271, %v5834
      %v6304 = vsel %vm4361, %v6272, %v5836
      %v6305 = vsel %vm4361, %v6273, %v5838
      %v6306 = vsel %vm4361, %v6274, %v5840
      %v6307 = vsel %vm4361, %v6275, %v5842
      %v6308 = vsel %vm4361, %v6276, %v5844
      %v6309 = vsel %vm4361, %v6277, %v5846
      %v6310 = vsel %vm4361, %v6278, %v5848
      %v6311 = vsel %vm4361, %v6279, %v5850
      %v6312 = vsel %vm4361, %v6280, %v5852
      %v6313 = vsel %vm4361, %v6281, %v5854
      %v6314 = vsel %vm4361, %v6282, %v5856
      %v6315 = vsel %vm4361, %v6283, %v5858
      %v6316 = vsel %vm4361, %v6284, %v5860
      %v6317 = vsel %vm4361, %v6285, %v5862
      %v6318 = vsel %vm4361, %v6286, %v5864
      %v6319 = vsel %vm4361, %v6287, %v5866
      %v6320 = vsel %vm4361, %v6288, %v5868
      %v6321 = vsel %vm4361, %v6289, %v5870
      %v6322 = vsel %vm4361, %v6290, %v5872
      %v6323 = vsel %vm4361, %v6291, %v5874
      %v6324 = vsel %vm4361, %v6292, %v5876
      %v6325 = vsel %vm4394, %v6293, %v5942
      %v6326 = vsel %vm4394, %v6294, %v5944
      %v6327 = vsel %vm4394, %v6295, %v5946
      %v6328 = vsel %vm4394, %v6296, %v5948
      %v6329 = vsel %vm4394, %v6297, %v5950
      %v6330 = vsel %vm4394, %v6298, %v5952
      %v6331 = vsel %vm4394, %v6299, %v5954
      %v6332 = vsel %vm4394, %v6300, %v5956
      %v6333 = vsel %vm4394, %v6301, %v5958
      %v6334 = vsel %vm4394, %v6302, %v5960
      %v6335 = vsel %vm4394, %v6303, %v5962
      %v6336 = vsel %vm4394, %v6304, %v5964
      %v6337 = vsel %vm4394, %v6305, %v5966
      %v6338 = vsel %vm4394, %v6306, %v5968
      %v6339 = vsel %vm4394, %v6307, %v5970
      %v6340 = vsel %vm4394, %v6308, %v5972
      %v6341 = vsel %vm4394, %v6309, %v5974
      %v6342 = vsel %vm4394, %v6310, %v5976
      %v6343 = vsel %vm4394, %v6311, %v5978
      %v6344 = vsel %vm4394, %v6312, %v5980
      %v6345 = vsel %vm4394, %v6313, %v5982
      %v6346 = vsel %vm4394, %v6314, %v5984
      %v6347 = vsel %vm4394, %v6315, %v5986
      %v6348 = vsel %vm4394, %v6316, %v5988
      %v6349 = vsel %vm4394, %v6317, %v5990
      %v6350 = vsel %vm4394, %v6318, %v5992
      %v6351 = vsel %vm4394, %v6319, %v5994
      %v6352 = vsel %vm4394, %v6320, %v5996
      %v6353 = vsel %vm4394, %v6321, %v5998
      %v6354 = vsel %vm4394, %v6322, %v6000
      %v6355 = vsel %vm4394, %v6323, %v6002
      %v6356 = vsel %vm4394, %v6324, %v6004
      %v6357 = vsel %vm4427, %v6325, %v6070
      %v6358 = vsel %vm4427, %v6326, %v6072
      %v6359 = vsel %vm4427, %v6327, %v6074
      %v6360 = vsel %vm4427, %v6328, %v6076
      %v6361 = vsel %vm4427, %v6329, %v6078
      %v6362 = vsel %vm4427, %v6330, %v6080
      %v6363 = vsel %vm4427, %v6331, %v6082
      %v6364 = vsel %vm4427, %v6332, %v6084
      %v6365 = vsel %vm4427, %v6333, %v6086
      %v6366 = vsel %vm4427, %v6334, %v6088
      %v6367 = vsel %vm4427, %v6335, %v6090
      %v6368 = vsel %vm4427, %v6336, %v6092
      %v6369 = vsel %vm4427, %v6337, %v6094
      %v6370 = vsel %vm4427, %v6338, %v6096
      %v6371 = vsel %vm4427, %v6339, %v6098
      %v6372 = vsel %vm4427, %v6340, %v6100
      %v6373 = vsel %vm4427, %v6341, %v6102
      %v6374 = vsel %vm4427, %v6342, %v6104
      %v6375 = vsel %vm4427, %v6343, %v6106
      %v6376 = vsel %vm4427, %v6344, %v6108
      %v6377 = vsel %vm4427, %v6345, %v6110
      %v6378 = vsel %vm4427, %v6346, %v6112
      %v6379 = vsel %vm4427, %v6347, %v6114
      %v6380 = vsel %vm4427, %v6348, %v6116
      %v6381 = vsel %vm4427, %v6349, %v6118
      %v6382 = vsel %vm4427, %v6350, %v6120
      %v6383 = vsel %vm4427, %v6351, %v6122
      %v6384 = vsel %vm4427, %v6352, %v6124
      %v6385 = vsel %vm4427, %v6353, %v6126
      %v6386 = vsel %vm4427, %v6354, %v6128
      %v6387 = vsel %vm4427, %v6355, %v6130
      %v6388 = vsel %vm4427, %v6356, %v6132
      %v6389 = vpack.c.bf16 %v6358, %v6357
      %v6390 = vpack.c.bf16 %v5238, %v5237
      %v6391 = vpack.c.bf16 %v6360, %v6359
      %v6392 = vpack.c.bf16 %v5240, %v5239
      %v6393 = vpack.c.bf16 %v6362, %v6361
      %v6394 = vpack.c.bf16 %v5242, %v5241
      %v6395 = vpack.c.bf16 %v6364, %v6363
      %v6396 = vpack.c.bf16 %v5244, %v5243
      %v6397 = vpack.c.bf16 %v6366, %v6365
      %v6398 = vpack.c.bf16 %v5246, %v5245
      %v6399 = vpack.c.bf16 %v6368, %v6367
      %v6400 = vpack.c.bf16 %v5248, %v5247
      %v6401 = vpack.c.bf16 %v6370, %v6369
      %v6402 = vpack.c.bf16 %v5250, %v5249
      %v6403 = vpack.c.bf16 %v6372, %v6371
      %v6404 = vpack.c.bf16 %v5252, %v5251
      %v6405 = vpack.c.bf16 %v6374, %v6373
      %v6406 = vpack.c.bf16 %v5254, %v5253
      %v6407 = vpack.c.bf16 %v6376, %v6375
      %v6408 = vpack.c.bf16 %v5256, %v5255
      %v6409 = vpack.c.bf16 %v6378, %v6377
      %v6410 = vpack.c.bf16 %v5258, %v5257
      %v6411 = vpack.c.bf16 %v6380, %v6379
      %v6412 = vpack.c.bf16 %v5260, %v5259
      %v6413 = vpack.c.bf16 %v6382, %v6381
      %v6414 = vpack.c.bf16 %v5262, %v5261
      %v6415 = vpack.c.bf16 %v6384, %v6383
      %v6416 = vpack.c.bf16 %v5264, %v5263
      %v6417 = vpack.c.bf16 %v6386, %v6385
      %v6418 = vpack.c.bf16 %v5266, %v5265
      %v6419 = vpack.c.bf16 %v6388, %v6387
      %v6420 = vpack.c.bf16 %v5268, %v5267
      %v6421 = vld [vmem:[%s12 + $0x1] sm:$0x1]
      %v6422 = vlaneseq
      %v6423 = vshrl.u32 %v6422, 7
      %v6424 = vsub.s32 0, %v6423
      %v6425 = vrot.slane %v6421, %v6424
      %v6444 = vunpack.c.l.b16 %v4963
      %v6445 = vunpack.c.l.b16 %v4964
      %v6446 = vunpack.c.l.b16 %v4965
      %v6447 = vunpack.c.l.b16 %v4966
      %v6448 = vunpack.c.l.b16 %v4967
      %v6449 = vunpack.c.l.b16 %v4968
      %v6450 = vunpack.c.l.b16 %v4969
      %v6451 = vunpack.c.l.b16 %v4970
      %v6452 = vunpack.c.l.b16 %v4971
      %v6453 = vunpack.c.l.b16 %v4972
      %v6454 = vunpack.c.l.b16 %v4973
      %v6455 = vunpack.c.l.b16 %v4974
      %v6456 = vunpack.c.l.b16 %v4975
      %v6457 = vunpack.c.l.b16 %v4976
      %v6458 = vunpack.c.l.b16 %v4977
      %v6459 = vunpack.c.l.b16 %v4978
      %v6460 = vunpack.c.l.b16 %v4979
      %v6461 = vunpack.c.l.b16 %v4980
      %v6462 = vpack.c.b16 %v6445, %v6444
      %v6463 = vpack.c.b16 %v6447, %v6446
      %v6464 = vpack.c.b16 %v6449, %v6448
      %v6465 = vpack.c.b16 %v6451, %v6450
      %v6466 = vpack.c.b16 %v6453, %v6452
      %v6467 = vpack.c.b16 %v6455, %v6454
      %v6468 = vpack.c.b16 %v6457, %v6456
      %v6469 = vpack.c.b16 %v6459, %v6458
      %v6470 = vpack.c.b16 %v6461, %v6460
      %v6481 = vsel %vm498, %v6390, 0
      %v6484 = vsel %vm498, %v6392, 0
      %v6487 = vsel %vm498, %v6394, 0
      %v6490 = vsel %vm498, %v6396, 0
      %v6493 = vsel %vm498, %v6398, 0
      %v6496 = vsel %vm498, %v6400, 0
      %v6499 = vsel %vm498, %v6402, 0
      %v6502 = vsel %vm498, %v6404, 0
      %v6505 = vsel %vm498, %v6406, 0
      %v6508 = vsel %vm498, %v6408, 0
      %v6511 = vsel %vm498, %v6410, 0
      %v6514 = vsel %vm498, %v6412, 0
      %v6517 = vsel %vm498, %v6414, 0
      %v6520 = vsel %vm498, %v6416, 0
      %v6523 = vsel %vm498, %v6418, 0
      %v6526 = vsel %vm498, %v6420, 0
      %6528 = vmatprep.subr.bf16.mxu0 0
      %6529 = vmatpush1.bf16.msra.mxu0 %v6462
      %6530 = vmatprep.subr.bf16.mxu0 0
      %6531 = vmatpush1.bf16.msra.mxu0 %v6463
      %6532 = vmatprep.subr.bf16.mxu0 0
      %6533 = vmatpush1.bf16.msra.mxu0 %v6464
      %6534 = vmatprep.subr.bf16.mxu0 0
      %6535 = vmatpush1.bf16.msra.mxu0 %v6465
      %6536 = vmatprep.subr.bf16.mxu0 0
      %6537 = vmatpush1.bf16.msra.mxu0 %v6466
      %6538 = vmatprep.subr.bf16.mxu0 0
      %6539 = vmatpush1.bf16.msra.mxu0 %v6467
      %6540 = vmatprep.subr.bf16.mxu0 0
      %6541 = vmatpush1.bf16.msra.mxu0 %v6468
      %6542 = vmatprep.subr.bf16.mxu0 0
      %6543 = vmatpush1.bf16.msra.mxu0 %v6469
      %6544 = vmatprep.subr.bf16.mxu0 0
      %6545 = vmatpush1.bf16.msra.mxu0 %v6470
      %6546 = vmatprep.subr.bf16.mxu0 0
      %6547 = vmatpush1.bf16.msra.mxu0 0
      %6548 = vmatprep.subr.bf16.mxu0 0
      %6549 = vmatpush1.bf16.msra.mxu0 0
      %6550 = vmatprep.subr.bf16.mxu0 0
      %6551 = vmatpush1.bf16.msra.mxu0 0
      %6552 = vmatprep.subr.bf16.mxu0 0
      %6553 = vmatpush1.bf16.msra.mxu0 0
      %6554 = vmatprep.subr.bf16.mxu0 0
      %6555 = vmatpush1.bf16.msra.mxu0 0
      %6556 = vmatprep.subr.bf16.mxu0 0
      %6557 = vmatpush1.bf16.msra.mxu0 0
      %6558 = vmatprep.subr.bf16.mxu0 0
      %6559 = vmatpush1.bf16.msra.mxu0 0
      %6560 = vmatprep.mubr.bf16.mxu0 %v6481
      %6561 = vmatmul.mubr.bf16.gmra.mrb[0].mxu0 %v6389
      %v6562 = vpop.f32.mrb[0].mxu0
      %v6563 = vadd.f32 %v6425, %v6562
      %v6564 = vpop.f32.mrb[0].mxu0
      %v6565 = vpop.f32.mrb[0].mxu0
      %v6566 = vadd.f32 %v6425, %v6565
      %v6567 = vpop.f32.mrb[0].mxu0
      %6568 = vmatprep.mubr.bf16.mxu0 %v6484
      %6569 = vmatmul.mubr.bf16.gmra.mrb[0].mxu0 %v6391
      %v6570 = vpop.f32.mrb[0].mxu0
      %v6571 = vadd.f32 %v6425, %v6570
      %v6572 = vpop.f32.mrb[0].mxu0
      %v6573 = vpop.f32.mrb[0].mxu0
      %v6574 = vadd.f32 %v6425, %v6573
      %v6575 = vpop.f32.mrb[0].mxu0
      %6576 = vmatprep.mubr.bf16.mxu0 %v6487
      %6577 = vmatmul.mubr.bf16.gmra.mrb[0].mxu0 %v6393
      %v6578 = vpop.f32.mrb[0].mxu0
      %v6579 = vadd.f32 %v6425, %v6578
      %v6580 = vpop.f32.mrb[0].mxu0
      %v6581 = vpop.f32.mrb[0].mxu0
      %v6582 = vadd.f32 %v6425, %v6581
      %v6583 = vpop.f32.mrb[0].mxu0
      %6584 = vmatprep.mubr.bf16.mxu0 %v6490
      %6585 = vmatmul.mubr.bf16.gmra.mrb[0].mxu0 %v6395
      %v6586 = vpop.f32.mrb[0].mxu0
      %v6587 = vadd.f32 %v6425, %v6586
      %v6588 = vpop.f32.mrb[0].mxu0
      %v6589 = vpop.f32.mrb[0].mxu0
      %v6590 = vadd.f32 %v6425, %v6589
      %v6591 = vpop.f32.mrb[0].mxu0
      %6592 = vmatprep.mubr.bf16.mxu0 %v6493
      %6593 = vmatmul.mubr.bf16.gmra.mrb[0].mxu0 %v6397
      %v6594 = vpop.f32.mrb[0].mxu0
      %v6595 = vadd.f32 %v6425, %v6594
      %v6596 = vpop.f32.mrb[0].mxu0
      %v6597 = vpop.f32.mrb[0].mxu0
      %v6598 = vadd.f32 %v6425, %v6597
      %v6599 = vpop.f32.mrb[0].mxu0
      %6600 = vmatprep.mubr.bf16.mxu0 %v6496
      %6601 = vmatmul.mubr.bf16.gmra.mrb[0].mxu0 %v6399
      %v6602 = vpop.f32.mrb[0].mxu0
      %v6603 = vadd.f32 %v6425, %v6602
      %v6604 = vpop.f32.mrb[0].mxu0
      %v6605 = vpop.f32.mrb[0].mxu0
      %v6606 = vadd.f32 %v6425, %v6605
      %v6607 = vpop.f32.mrb[0].mxu0
      %6608 = vmatprep.mubr.bf16.mxu0 %v6499
      %6609 = vmatmul.mubr.bf16.gmra.mrb[0].mxu0 %v6401
      %v6610 = vpop.f32.mrb[0].mxu0
      %v6611 = vadd.f32 %v6425, %v6610
      %v6612 = vpop.f32.mrb[0].mxu0
      %v6613 = vpop.f32.mrb[0].mxu0
      %v6614 = vadd.f32 %v6425, %v6613
      %v6615 = vpop.f32.mrb[0].mxu0
      %6616 = vmatprep.mubr.bf16.mxu0 %v6502
      %6617 = vmatmul.mubr.bf16.gmra.mrb[0].mxu0 %v6403
      %v6618 = vpop.f32.mrb[0].mxu0
      %v6619 = vadd.f32 %v6425, %v6618
      %v6620 = vpop.f32.mrb[0].mxu0
      %v6621 = vpop.f32.mrb[0].mxu0
      %v6622 = vadd.f32 %v6425, %v6621
      %v6623 = vpop.f32.mrb[0].mxu0
      %6624 = vmatprep.mubr.bf16.mxu0 %v6505
      %6625 = vmatmul.mubr.bf16.gmra.mrb[0].mxu0 %v6405
      %v6626 = vpop.f32.mrb[0].mxu0
      %v6627 = vadd.f32 %v6425, %v6626
      %v6628 = vpop.f32.mrb[0].mxu0
      %v6629 = vpop.f32.mrb[0].mxu0
      %v6630 = vadd.f32 %v6425, %v6629
      %v6631 = vpop.f32.mrb[0].mxu0
      %6632 = vmatprep.mubr.bf16.mxu0 %v6508
      %6633 = vmatmul.mubr.bf16.gmra.mrb[0].mxu0 %v6407
      %v6634 = vpop.f32.mrb[0].mxu0
      %v6635 = vadd.f32 %v6425, %v6634
      %v6636 = vpop.f32.mrb[0].mxu0
      %v6637 = vpop.f32.mrb[0].mxu0
      %v6638 = vadd.f32 %v6425, %v6637
      %v6639 = vpop.f32.mrb[0].mxu0
      %6640 = vmatprep.mubr.bf16.mxu0 %v6511
      %6641 = vmatmul.mubr.bf16.gmra.mrb[0].mxu0 %v6409
      %v6642 = vpop.f32.mrb[0].mxu0
      %v6643 = vadd.f32 %v6425, %v6642
      %v6644 = vpop.f32.mrb[0].mxu0
      %v6645 = vpop.f32.mrb[0].mxu0
      %v6646 = vadd.f32 %v6425, %v6645
      %v6647 = vpop.f32.mrb[0].mxu0
      %6648 = vmatprep.mubr.bf16.mxu0 %v6514
      %6649 = vmatmul.mubr.bf16.gmra.mrb[0].mxu0 %v6411
      %v6650 = vpop.f32.mrb[0].mxu0
      %v6651 = vadd.f32 %v6425, %v6650
      %v6652 = vpop.f32.mrb[0].mxu0
      %v6653 = vpop.f32.mrb[0].mxu0
      %v6654 = vadd.f32 %v6425, %v6653
      %v6655 = vpop.f32.mrb[0].mxu0
      %6656 = vmatprep.mubr.bf16.mxu0 %v6517
      %6657 = vmatmul.mubr.bf16.gmra.mrb[0].mxu0 %v6413
      %v6658 = vpop.f32.mrb[0].mxu0
      %v6659 = vadd.f32 %v6425, %v6658
      %v6660 = vpop.f32.mrb[0].mxu0
      %v6661 = vpop.f32.mrb[0].mxu0
      %v6662 = vadd.f32 %v6425, %v6661
      %v6663 = vpop.f32.mrb[0].mxu0
      %6664 = vmatprep.mubr.bf16.mxu0 %v6520
      %6665 = vmatmul.mubr.bf16.gmra.mrb[0].mxu0 %v6415
      %v6666 = vpop.f32.mrb[0].mxu0
      %v6667 = vadd.f32 %v6425, %v6666
      %v6668 = vpop.f32.mrb[0].mxu0
      %v6669 = vpop.f32.mrb[0].mxu0
      %v6670 = vadd.f32 %v6425, %v6669
      %v6671 = vpop.f32.mrb[0].mxu0
      %6672 = vmatprep.mubr.bf16.mxu0 %v6523
      %6673 = vmatmul.mubr.bf16.gmra.mrb[0].mxu0 %v6417
      %v6674 = vpop.f32.mrb[0].mxu0
      %v6675 = vadd.f32 %v6425, %v6674
      %v6676 = vpop.f32.mrb[0].mxu0
      %v6677 = vpop.f32.mrb[0].mxu0
      %v6678 = vadd.f32 %v6425, %v6677
      %v6679 = vpop.f32.mrb[0].mxu0
      %6680 = vmatprep.mubr.bf16.mxu0 %v6526
      %6681 = vmatmul.mubr.bf16.gmra.mrb[0].mxu0 %v6419
      %v6682 = vpop.f32.mrb[0].mxu0
      %v6683 = vadd.f32 %v6425, %v6682
      %v6684 = vpop.f32.mrb[0].mxu0
      %v6685 = vpop.f32.mrb[0].mxu0
      %v6686 = vadd.f32 %v6425, %v6685
      %v6687 = vpop.f32.mrb[0].mxu0
      %6688 = vdwg.mxu0
      %v6689 = vld [vmem:[%s9 + $0x2] sm:$0x1]
      %v6690 = vlaneseq
      %v6691 = vshrl.u32 %v6690, 7
      %v6692 = vsub.s32 0, %v6691
      %v6693 = vrot.slane %v6689, %v6692
      %v6694 = vmul.f32 %v6563, %v6693
      %v6695 = vmul.f32 %v6566, %v6693
      %v6696 = vmul.f32 %v6571, %v6693
      %v6697 = vmul.f32 %v6574, %v6693
      %v6698 = vmul.f32 %v6579, %v6693
      %v6699 = vmul.f32 %v6582, %v6693
      %v6700 = vmul.f32 %v6587, %v6693
      %v6701 = vmul.f32 %v6590, %v6693
      %v6702 = vmul.f32 %v6595, %v6693
      %v6703 = vmul.f32 %v6598, %v6693
      %v6704 = vmul.f32 %v6603, %v6693
      %v6705 = vmul.f32 %v6606, %v6693
      %v6706 = vmul.f32 %v6611, %v6693
      %v6707 = vmul.f32 %v6614, %v6693
      %v6708 = vmul.f32 %v6619, %v6693
      %v6709 = vmul.f32 %v6622, %v6693
      %v6710 = vmul.f32 %v6627, %v6693
      %v6711 = vmul.f32 %v6630, %v6693
      %v6712 = vmul.f32 %v6635, %v6693
      %v6713 = vmul.f32 %v6638, %v6693
      %v6714 = vmul.f32 %v6643, %v6693
      %v6715 = vmul.f32 %v6646, %v6693
      %v6716 = vmul.f32 %v6651, %v6693
      %v6717 = vmul.f32 %v6654, %v6693
      %v6718 = vmul.f32 %v6659, %v6693
      %v6719 = vmul.f32 %v6662, %v6693
      %v6720 = vmul.f32 %v6667, %v6693
      %v6721 = vmul.f32 %v6670, %v6693
      %v6722 = vmul.f32 %v6675, %v6693
      %v6723 = vmul.f32 %v6678, %v6693
      %v6724 = vmul.f32 %v6683, %v6693
      %v6725 = vmul.f32 %v6686, %v6693
      %v6726 = vld [vmem:[%s10 + $0x2] sm:$0x1]
      %v6727 = vlaneseq
      %v6728 = vshrl.u32 %v6727, 7
      %v6729 = vsub.s32 0, %v6728
      %v6730 = vrot.slane %v6726, %v6729
      %v6731 = vadd.f32 %v6694, %v6730
      %v6732 = vadd.f32 %v6695, %v6730
      %v6733 = vadd.f32 %v6696, %v6730
      %v6734 = vadd.f32 %v6697, %v6730
      %v6735 = vadd.f32 %v6698, %v6730
      %v6736 = vadd.f32 %v6699, %v6730
      %v6737 = vadd.f32 %v6700, %v6730
      %v6738 = vadd.f32 %v6701, %v6730
      %v6739 = vadd.f32 %v6702, %v6730
      %v6740 = vadd.f32 %v6703, %v6730
      %v6741 = vadd.f32 %v6704, %v6730
      %v6742 = vadd.f32 %v6705, %v6730
      %v6743 = vadd.f32 %v6706, %v6730
      %v6744 = vadd.f32 %v6707, %v6730
      %v6745 = vadd.f32 %v6708, %v6730
      %v6746 = vadd.f32 %v6709, %v6730
      %v6747 = vadd.f32 %v6710, %v6730
      %v6748 = vadd.f32 %v6711, %v6730
      %v6749 = vadd.f32 %v6712, %v6730
      %v6750 = vadd.f32 %v6713, %v6730
      %v6751 = vadd.f32 %v6714, %v6730
      %v6752 = vadd.f32 %v6715, %v6730
      %v6753 = vadd.f32 %v6716, %v6730
      %v6754 = vadd.f32 %v6717, %v6730
      %v6755 = vadd.f32 %v6718, %v6730
      %v6756 = vadd.f32 %v6719, %v6730
      %v6757 = vadd.f32 %v6720, %v6730
      %v6758 = vadd.f32 %v6721, %v6730
      %v6759 = vadd.f32 %v6722, %v6730
      %v6760 = vadd.f32 %v6723, %v6730
      %v6761 = vadd.f32 %v6724, %v6730
      %v6762 = vadd.f32 %v6725, %v6730
      %v6763 = vmax.f32 %v6731, 0.0
      %v6764 = vmax.f32 %v6732, 0.0
      %v6765 = vmax.f32 %v6733, 0.0
      %v6766 = vmax.f32 %v6734, 0.0
      %v6767 = vmax.f32 %v6735, 0.0
      %v6768 = vmax.f32 %v6736, 0.0
      %v6769 = vmax.f32 %v6737, 0.0
      %v6770 = vmax.f32 %v6738, 0.0
      %v6771 = vmax.f32 %v6739, 0.0
      %v6772 = vmax.f32 %v6740, 0.0
      %v6773 = vmax.f32 %v6741, 0.0
      %v6774 = vmax.f32 %v6742, 0.0
      %v6775 = vmax.f32 %v6743, 0.0
      %v6776 = vmax.f32 %v6744, 0.0
      %v6777 = vmax.f32 %v6745, 0.0
      %v6778 = vmax.f32 %v6746, 0.0
      %v6779 = vmax.f32 %v6747, 0.0
      %v6780 = vmax.f32 %v6748, 0.0
      %v6781 = vmax.f32 %v6749, 0.0
      %v6782 = vmax.f32 %v6750, 0.0
      %v6783 = vmax.f32 %v6751, 0.0
      %v6784 = vmax.f32 %v6752, 0.0
      %v6785 = vmax.f32 %v6753, 0.0
      %v6786 = vmax.f32 %v6754, 0.0
      %v6787 = vmax.f32 %v6755, 0.0
      %v6788 = vmax.f32 %v6756, 0.0
      %v6789 = vmax.f32 %v6757, 0.0
      %v6790 = vmax.f32 %v6758, 0.0
      %v6791 = vmax.f32 %v6759, 0.0
      %v6792 = vmax.f32 %v6760, 0.0
      %v6793 = vmax.f32 %v6761, 0.0
      %v6794 = vmax.f32 %v6762, 0.0
      %6795 = vst.msk [vmem:[%s2997 + $0x1] sm:$0xff] %vm498, %v6763
      %6796 = vst.msk [vmem:[%s2997 + $0x9] sm:$0xff] %vm498, %v6764
      %6797 = vst.msk [vmem:[%s2997 + $0x19] sm:$0xff] %vm498, %v6765
      %6798 = vst.msk [vmem:[%s2997 + $0x21] sm:$0xff] %vm498, %v6766
      %6799 = vst.msk [vmem:[%s2997 + $0x31] sm:$0xff] %vm498, %v6767
      %6800 = vst.msk [vmem:[%s2997 + $0x39] sm:$0xff] %vm498, %v6768
      %6801 = vst.msk [vmem:[%s2997 + $0x49] sm:$0xff] %vm498, %v6769
      %6802 = vst.msk [vmem:[%s2997 + $0x51] sm:$0xff] %vm498, %v6770
      %6803 = vst.msk [vmem:[%s2997 + $0x61] sm:$0xff] %vm498, %v6771
      %6804 = vst.msk [vmem:[%s2997 + $0x69] sm:$0xff] %vm498, %v6772
      %6805 = vst.msk [vmem:[%s2997 + $0x79] sm:$0xff] %vm498, %v6773
      %6806 = vst.msk [vmem:[%s2997 + $0x81] sm:$0xff] %vm498, %v6774
      %6807 = vst.msk [vmem:[%s2997 + $0x91] sm:$0xff] %vm498, %v6775
      %6808 = vst.msk [vmem:[%s2997 + $0x99] sm:$0xff] %vm498, %v6776
      %6809 = vst.msk [vmem:[%s2997 + $0xa9] sm:$0xff] %vm498, %v6777
      %6810 = vst.msk [vmem:[%s2997 + $0xb1] sm:$0xff] %vm498, %v6778
      %6811 = vst.msk [vmem:[%s2997 + $0xc1] sm:$0xff] %vm498, %v6779
      %6812 = vst.msk [vmem:[%s2997 + $0xc9] sm:$0xff] %vm498, %v6780
      %6813 = vst.msk [vmem:[%s2997 + $0xd9] sm:$0xff] %vm498, %v6781
      %6814 = vst.msk [vmem:[%s2997 + $0xe1] sm:$0xff] %vm498, %v6782
      %6815 = vst.msk [vmem:[%s2997 + $0xf1] sm:$0xff] %vm498, %v6783
      %6816 = vst.msk [vmem:[%s2997 + $0xf9] sm:$0xff] %vm498, %v6784
      %6817 = vst.msk [vmem:[%s2997 + $0x109] sm:$0xff] %vm498, %v6785
      %6818 = vst.msk [vmem:[%s2997 + $0x111] sm:$0xff] %vm498, %v6786
      %6819 = vst.msk [vmem:[%s2997 + $0x121] sm:$0xff] %vm498, %v6787
      %6820 = vst.msk [vmem:[%s2997 + $0x129] sm:$0xff] %vm498, %v6788
      %6821 = vst.msk [vmem:[%s2997 + $0x139] sm:$0xff] %vm498, %v6789
      %6822 = vst.msk [vmem:[%s2997 + $0x141] sm:$0xff] %vm498, %v6790
      %6823 = vst.msk [vmem:[%s2997 + $0x151] sm:$0xff] %vm498, %v6791
      %6824 = vst.msk [vmem:[%s2997 + $0x159] sm:$0xff] %vm498, %v6792
      %6825 = vst.msk [vmem:[%s2997 + $0x169] sm:$0xff] %vm498, %v6793
      %6826 = vst.msk [vmem:[%s2997 + $0x171] sm:$0xff] %vm498, %v6794
      %s6827 = scalar_lea.vmem %s11, 144
      %v6828 = vld [vmem:[%s6827] sm:$0xf]
      %v6829 = vld [vmem:[%s6827 + $0x4] sm:$0xf]
      %v6830 = vld [vmem:[%s6827 + $0x8] sm:$0xf]
      %v6831 = vld [vmem:[%s6827 + $0xc] sm:$0xf]
      %v6832 = vld [vmem:[%s6827 + $0x10] sm:$0xf]
      %v6833 = vld [vmem:[%s6827 + $0x14] sm:$0xf]
      %v6834 = vld [vmem:[%s6827 + $0x18] sm:$0xf]
      %v6835 = vld [vmem:[%s6827 + $0x1c] sm:$0xf]
      %v6836 = vld [vmem:[%s6827 + $0x20] sm:$0xf]
      %v6837 = vld [vmem:[%s6827 + $0x24] sm:$0xf]
      %v6838 = vld [vmem:[%s6827 + $0x28] sm:$0xf]
      %v6839 = vld [vmem:[%s6827 + $0x2c] sm:$0xf]
      %v6840 = vld [vmem:[%s6827 + $0x30] sm:$0xf]
      %v6841 = vld [vmem:[%s6827 + $0x34] sm:$0xf]
      %v6842 = vld [vmem:[%s6827 + $0x38] sm:$0xf]
      %v6843 = vld [vmem:[%s6827 + $0x3c] sm:$0xf]
      %v6844 = vld [vmem:[%s6827 + $0x40] sm:$0xf]
      %v6845 = vld [vmem:[%s6827 + $0x44] sm:$0xf]
      %v6846 = vld [vmem:[#allocation3] sm:$0xff]
      %v6847 = vld [vmem:[#allocation3 + $0x8] sm:$0xff]
      %v6848 = vld [vmem:[#allocation3 + $0x18] sm:$0xff]
      %v6849 = vld [vmem:[#allocation3 + $0x20] sm:$0xff]
      %v6850 = vld [vmem:[#allocation3 + $0x30] sm:$0xff]
      %v6851 = vld [vmem:[#allocation3 + $0x38] sm:$0xff]
      %v6852 = vld [vmem:[#allocation3 + $0x48] sm:$0xff]
      %v6853 = vld [vmem:[#allocation3 + $0x50] sm:$0xff]
      %v6854 = vld [vmem:[#allocation3 + $0x60] sm:$0xff]
      %v6855 = vld [vmem:[#allocation3 + $0x68] sm:$0xff]
      %v6856 = vld [vmem:[#allocation3 + $0x78] sm:$0xff]
      %v6857 = vld [vmem:[#allocation3 + $0x80] sm:$0xff]
      %v6858 = vld [vmem:[#allocation3 + $0x90] sm:$0xff]
      %v6859 = vld [vmem:[#allocation3 + $0x98] sm:$0xff]
      %v6860 = vld [vmem:[#allocation3 + $0xa8] sm:$0xff]
      %v6861 = vld [vmem:[#allocation3 + $0xb0] sm:$0xff]
      %v6862 = vld [vmem:[#allocation3 + $0xc0] sm:$0xff]
      %v6863 = vld [vmem:[#allocation3 + $0xc8] sm:$0xff]
      %v6864 = vld [vmem:[#allocation3 + $0xd8] sm:$0xff]
      %v6865 = vld [vmem:[#allocation3 + $0xe0] sm:$0xff]
      %v6866 = vld [vmem:[#allocation3 + $0xf0] sm:$0xff]
      %v6867 = vld [vmem:[#allocation3 + $0xf8] sm:$0xff]
      %v6868 = vld [vmem:[#allocation3 + $0x108] sm:$0xff]
      %v6869 = vld [vmem:[#allocation3 + $0x110] sm:$0xff]
      %v6870 = vld [vmem:[#allocation3 + $0x120] sm:$0xff]
      %v6871 = vld [vmem:[#allocation3 + $0x128] sm:$0xff]
      %v6872 = vld [vmem:[#allocation3 + $0x138] sm:$0xff]
      %v6873 = vld [vmem:[#allocation3 + $0x140] sm:$0xff]
      %v6874 = vld [vmem:[#allocation3 + $0x150] sm:$0xff]
      %v6875 = vld [vmem:[#allocation3 + $0x158] sm:$0xff]
      %v6876 = vld [vmem:[#allocation3 + $0x168] sm:$0xff]
      %v6877 = vld [vmem:[#allocation3 + $0x170] sm:$0xff]
      %v6878 = vld [vmem:[#allocation3 + $0x1] sm:$0xff]
      %v6879 = vld [vmem:[#allocation3 + $0x9] sm:$0xff]
      %v6880 = vld [vmem:[#allocation3 + $0x19] sm:$0xff]
      %v6881 = vld [vmem:[#allocation3 + $0x21] sm:$0xff]
      %v6882 = vld [vmem:[#allocation3 + $0x31] sm:$0xff]
      %v6883 = vld [vmem:[#allocation3 + $0x39] sm:$0xff]
      %v6884 = vld [vmem:[#allocation3 + $0x49] sm:$0xff]
      %v6885 = vld [vmem:[#allocation3 + $0x51] sm:$0xff]
      %v6886 = vld [vmem:[#allocation3 + $0x61] sm:$0xff]
      %v6887 = vld [vmem:[#allocation3 + $0x69] sm:$0xff]
      %v6888 = vld [vmem:[#allocation3 + $0x79] sm:$0xff]
      %v6889 = vld [vmem:[#allocation3 + $0x81] sm:$0xff]
      %v6890 = vld [vmem:[#allocation3 + $0x91] sm:$0xff]
      %v6891 = vld [vmem:[#allocation3 + $0x99] sm:$0xff]
      %v6892 = vld [vmem:[#allocation3 + $0xa9] sm:$0xff]
      %v6893 = vld [vmem:[#allocation3 + $0xb1] sm:$0xff]
      %v6894 = vld [vmem:[#allocation3 + $0xc1] sm:$0xff]
      %v6895 = vld [vmem:[#allocation3 + $0xc9] sm:$0xff]
      %v6896 = vld [vmem:[#allocation3 + $0xd9] sm:$0xff]
      %v6897 = vld [vmem:[#allocation3 + $0xe1] sm:$0xff]
      %v6898 = vld [vmem:[#allocation3 + $0xf1] sm:$0xff]
      %v6899 = vld [vmem:[#allocation3 + $0xf9] sm:$0xff]
      %v6900 = vld [vmem:[#allocation3 + $0x109] sm:$0xff]
      %v6901 = vld [vmem:[#allocation3 + $0x111] sm:$0xff]
      %v6902 = vld [vmem:[#allocation3 + $0x121] sm:$0xff]
      %v6903 = vld [vmem:[#allocation3 + $0x129] sm:$0xff]
      %v6904 = vld [vmem:[#allocation3 + $0x139] sm:$0xff]
      %v6905 = vld [vmem:[#allocation3 + $0x141] sm:$0xff]
      %v6906 = vld [vmem:[#allocation3 + $0x151] sm:$0xff]
      %v6907 = vld [vmem:[#allocation3 + $0x159] sm:$0xff]
      %v6908 = vld [vmem:[#allocation3 + $0x169] sm:$0xff]
      %v6909 = vld [vmem:[#allocation3 + $0x171] sm:$0xff]
      %v6910 = vld [vmem:[#allocation3 + $0x2] sm:$0xff]
      %v6911 = vld [vmem:[#allocation3 + $0xa] sm:$0xff]
      %v6912 = vld [vmem:[#allocation3 + $0x1a] sm:$0xff]
      %v6913 = vld [vmem:[#allocation3 + $0x22] sm:$0xff]
      %v6914 = vld [vmem:[#allocation3 + $0x32] sm:$0xff]
      %v6915 = vld [vmem:[#allocation3 + $0x3a] sm:$0xff]
      %v6916 = vld [vmem:[#allocation3 + $0x4a] sm:$0xff]
      %v6917 = vld [vmem:[#allocation3 + $0x52] sm:$0xff]
      %v6918 = vld [vmem:[#allocation3 + $0x62] sm:$0xff]
      %v6919 = vld [vmem:[#allocation3 + $0x6a] sm:$0xff]
      %v6920 = vld [vmem:[#allocation3 + $0x7a] sm:$0xff]
      %v6921 = vld [vmem:[#allocation3 + $0x82] sm:$0xff]
      %v6922 = vld [vmem:[#allocation3 + $0x92] sm:$0xff]
      %v6923 = vld [vmem:[#allocation3 + $0x9a] sm:$0xff]
      %v6924 = vld [vmem:[#allocation3 + $0xaa] sm:$0xff]
      %v6925 = vld [vmem:[#allocation3 + $0xb2] sm:$0xff]
      %v6926 = vld [vmem:[#allocation3 + $0xc2] sm:$0xff]
      %v6927 = vld [vmem:[#allocation3 + $0xca] sm:$0xff]
      %v6928 = vld [vmem:[#allocation3 + $0xda] sm:$0xff]
      %v6929 = vld [vmem:[#allocation3 + $0xe2] sm:$0xff]
      %v6930 = vld [vmem:[#allocation3 + $0xf2] sm:$0xff]
      %v6931 = vld [vmem:[#allocation3 + $0xfa] sm:$0xff]
      %v6932 = vld [vmem:[#allocation3 + $0x10a] sm:$0xff]
      %v6933 = vld [vmem:[#allocation3 + $0x112] sm:$0xff]
      %v6934 = vld [vmem:[#allocation3 + $0x122] sm:$0xff]
      %v6935 = vld [vmem:[#allocation3 + $0x12a] sm:$0xff]
      %v6936 = vld [vmem:[#allocation3 + $0x13a] sm:$0xff]
      %v6937 = vld [vmem:[#allocation3 + $0x142] sm:$0xff]
      %v6938 = vld [vmem:[#allocation3 + $0x152] sm:$0xff]
      %v6939 = vld [vmem:[#allocation3 + $0x15a] sm:$0xff]
      %v6940 = vld [vmem:[#allocation3 + $0x16a] sm:$0xff]
      %v6941 = vld [vmem:[#allocation3 + $0x172] sm:$0xff]
      %v6942 = vld [vmem:[%s2997] sm:$0xff]
      %v6943 = vld [vmem:[%s2997 + $0x8] sm:$0xff]
      %v6944 = vld [vmem:[%s2997 + $0x18] sm:$0xff]
      %v6945 = vld [vmem:[%s2997 + $0x20] sm:$0xff]
      %v6946 = vld [vmem:[%s2997 + $0x30] sm:$0xff]
      %v6947 = vld [vmem:[%s2997 + $0x38] sm:$0xff]
      %v6948 = vld [vmem:[%s2997 + $0x48] sm:$0xff]
      %v6949 = vld [vmem:[%s2997 + $0x50] sm:$0xff]
      %v6950 = vld [vmem:[%s2997 + $0x60] sm:$0xff]
      %v6951 = vld [vmem:[%s2997 + $0x68] sm:$0xff]
      %v6952 = vld [vmem:[%s2997 + $0x78] sm:$0xff]
      %v6953 = vld [vmem:[%s2997 + $0x80] sm:$0xff]
      %v6954 = vld [vmem:[%s2997 + $0x90] sm:$0xff]
      %v6955 = vld [vmem:[%s2997 + $0x98] sm:$0xff]
      %v6956 = vld [vmem:[%s2997 + $0xa8] sm:$0xff]
      %v6957 = vld [vmem:[%s2997 + $0xb0] sm:$0xff]
      %v6958 = vld [vmem:[%s2997 + $0xc0] sm:$0xff]
      %v6959 = vld [vmem:[%s2997 + $0xc8] sm:$0xff]
      %v6960 = vld [vmem:[%s2997 + $0xd8] sm:$0xff]
      %v6961 = vld [vmem:[%s2997 + $0xe0] sm:$0xff]
      %v6962 = vld [vmem:[%s2997 + $0xf0] sm:$0xff]
      %v6963 = vld [vmem:[%s2997 + $0xf8] sm:$0xff]
      %v6964 = vld [vmem:[%s2997 + $0x108] sm:$0xff]
      %v6965 = vld [vmem:[%s2997 + $0x110] sm:$0xff]
      %v6966 = vld [vmem:[%s2997 + $0x120] sm:$0xff]
      %v6967 = vld [vmem:[%s2997 + $0x128] sm:$0xff]
      %v6968 = vld [vmem:[%s2997 + $0x138] sm:$0xff]
      %v6969 = vld [vmem:[%s2997 + $0x140] sm:$0xff]
      %v6970 = vld [vmem:[%s2997 + $0x150] sm:$0xff]
      %v6971 = vld [vmem:[%s2997 + $0x158] sm:$0xff]
      %v6972 = vld [vmem:[%s2997 + $0x168] sm:$0xff]
      %v6973 = vld [vmem:[%s2997 + $0x170] sm:$0xff]
      %v6974 = vld [vmem:[%s2997 + $0x1] sm:$0xff]
      %v6975 = vld [vmem:[%s2997 + $0x9] sm:$0xff]
      %v6976 = vld [vmem:[%s2997 + $0x19] sm:$0xff]
      %v6977 = vld [vmem:[%s2997 + $0x21] sm:$0xff]
      %v6978 = vld [vmem:[%s2997 + $0x31] sm:$0xff]
      %v6979 = vld [vmem:[%s2997 + $0x39] sm:$0xff]
      %v6980 = vld [vmem:[%s2997 + $0x49] sm:$0xff]
      %v6981 = vld [vmem:[%s2997 + $0x51] sm:$0xff]
      %v6982 = vld [vmem:[%s2997 + $0x61] sm:$0xff]
      %v6983 = vld [vmem:[%s2997 + $0x69] sm:$0xff]
      %v6984 = vld [vmem:[%s2997 + $0x79] sm:$0xff]
      %v6985 = vld [vmem:[%s2997 + $0x81] sm:$0xff]
      %v6986 = vld [vmem:[%s2997 + $0x91] sm:$0xff]
      %v6987 = vld [vmem:[%s2997 + $0x99] sm:$0xff]
      %v6988 = vld [vmem:[%s2997 + $0xa9] sm:$0xff]
      %v6989 = vld [vmem:[%s2997 + $0xb1] sm:$0xff]
      %v6990 = vld [vmem:[%s2997 + $0xc1] sm:$0xff]
      %v6991 = vld [vmem:[%s2997 + $0xc9] sm:$0xff]
      %v6992 = vld [vmem:[%s2997 + $0xd9] sm:$0xff]
      %v6993 = vld [vmem:[%s2997 + $0xe1] sm:$0xff]
      %v6994 = vld [vmem:[%s2997 + $0xf1] sm:$0xff]
      %v6995 = vld [vmem:[%s2997 + $0xf9] sm:$0xff]
      %v6996 = vld [vmem:[%s2997 + $0x109] sm:$0xff]
      %v6997 = vld [vmem:[%s2997 + $0x111] sm:$0xff]
      %v6998 = vld [vmem:[%s2997 + $0x121] sm:$0xff]
      %v6999 = vld [vmem:[%s2997 + $0x129] sm:$0xff]
      %v7000 = vld [vmem:[%s2997 + $0x139] sm:$0xff]
      %v7001 = vld [vmem:[%s2997 + $0x141] sm:$0xff]
      %v7002 = vld [vmem:[%s2997 + $0x151] sm:$0xff]
      %v7003 = vld [vmem:[%s2997 + $0x159] sm:$0xff]
      %v7004 = vld [vmem:[%s2997 + $0x169] sm:$0xff]
      %v7005 = vld [vmem:[%s2997 + $0x171] sm:$0xff]
      %v7006 = vld [vmem:[%s2997 + $0x2] sm:$0xff]
      %v7007 = vld [vmem:[%s2997 + $0xa] sm:$0xff]
      %v7008 = vld [vmem:[%s2997 + $0x1a] sm:$0xff]
      %v7009 = vld [vmem:[%s2997 + $0x22] sm:$0xff]
      %v7010 = vld [vmem:[%s2997 + $0x32] sm:$0xff]
      %v7011 = vld [vmem:[%s2997 + $0x3a] sm:$0xff]
      %v7012 = vld [vmem:[%s2997 + $0x4a] sm:$0xff]
      %v7013 = vld [vmem:[%s2997 + $0x52] sm:$0xff]
      %v7014 = vld [vmem:[%s2997 + $0x62] sm:$0xff]
      %v7015 = vld [vmem:[%s2997 + $0x6a] sm:$0xff]
      %v7016 = vld [vmem:[%s2997 + $0x7a] sm:$0xff]
      %v7017 = vld [vmem:[%s2997 + $0x82] sm:$0xff]
      %v7018 = vld [vmem:[%s2997 + $0x92] sm:$0xff]
      %v7019 = vld [vmem:[%s2997 + $0x9a] sm:$0xff]
      %v7020 = vld [vmem:[%s2997 + $0xaa] sm:$0xff]
      %v7021 = vld [vmem:[%s2997 + $0xb2] sm:$0xff]
      %v7022 = vld [vmem:[%s2997 + $0xc2] sm:$0xff]
      %v7023 = vld [vmem:[%s2997 + $0xca] sm:$0xff]
      %v7024 = vld [vmem:[%s2997 + $0xda] sm:$0xff]
      %v7025 = vld [vmem:[%s2997 + $0xe2] sm:$0xff]
      %v7026 = vld [vmem:[%s2997 + $0xf2] sm:$0xff]
      %v7027 = vld [vmem:[%s2997 + $0xfa] sm:$0xff]
      %v7028 = vld [vmem:[%s2997 + $0x10a] sm:$0xff]
      %v7029 = vld [vmem:[%s2997 + $0x112] sm:$0xff]
      %v7030 = vld [vmem:[%s2997 + $0x122] sm:$0xff]
      %v7031 = vld [vmem:[%s2997 + $0x12a] sm:$0xff]
      %v7032 = vld [vmem:[%s2997 + $0x13a] sm:$0xff]
      %v7033 = vld [vmem:[%s2997 + $0x142] sm:$0xff]
      %v7034 = vld [vmem:[%s2997 + $0x152] sm:$0xff]
      %v7035 = vld [vmem:[%s2997 + $0x15a] sm:$0xff]
      %v7036 = vld [vmem:[%s2997 + $0x16a] sm:$0xff]
      %v7037 = vld [vmem:[%s2997 + $0x172] sm:$0xff]
      %v7038 = vld [vmem:[%s3240] sm:$0xff]
      %v7039 = vld [vmem:[%s3240 + $0x8] sm:$0xff]
      %v7040 = vld [vmem:[%s3240 + $0x18] sm:$0xff]
      %v7041 = vld [vmem:[%s3240 + $0x20] sm:$0xff]
      %v7042 = vld [vmem:[%s3240 + $0x30] sm:$0xff]
      %v7043 = vld [vmem:[%s3240 + $0x38] sm:$0xff]
      %v7044 = vld [vmem:[%s3240 + $0x48] sm:$0xff]
      %v7045 = vld [vmem:[%s3240 + $0x50] sm:$0xff]
      %v7046 = vld [vmem:[%s3240 + $0x60] sm:$0xff]
      %v7047 = vld [vmem:[%s3240 + $0x68] sm:$0xff]
      %v7048 = vld [vmem:[%s3240 + $0x78] sm:$0xff]
      %v7049 = vld [vmem:[%s3240 + $0x80] sm:$0xff]
      %v7050 = vld [vmem:[%s3240 + $0x90] sm:$0xff]
      %v7051 = vld [vmem:[%s3240 + $0x98] sm:$0xff]
      %v7052 = vld [vmem:[%s3240 + $0xa8] sm:$0xff]
      %v7053 = vld [vmem:[%s3240 + $0xb0] sm:$0xff]
      %v7054 = vld [vmem:[%s3240 + $0xc0] sm:$0xff]
      %v7055 = vld [vmem:[%s3240 + $0xc8] sm:$0xff]
      %v7056 = vld [vmem:[%s3240 + $0xd8] sm:$0xff]
      %v7057 = vld [vmem:[%s3240 + $0xe0] sm:$0xff]
      %v7058 = vld [vmem:[%s3240 + $0xf0] sm:$0xff]
      %v7059 = vld [vmem:[%s3240 + $0xf8] sm:$0xff]
      %v7060 = vld [vmem:[%s3240 + $0x108] sm:$0xff]
      %v7061 = vld [vmem:[%s3240 + $0x110] sm:$0xff]
      %v7062 = vld [vmem:[%s3240 + $0x120] sm:$0xff]
      %v7063 = vld [vmem:[%s3240 + $0x128] sm:$0xff]
      %v7064 = vld [vmem:[%s3240 + $0x138] sm:$0xff]
      %v7065 = vld [vmem:[%s3240 + $0x140] sm:$0xff]
      %v7066 = vld [vmem:[%s3240 + $0x150] sm:$0xff]
      %v7067 = vld [vmem:[%s3240 + $0x158] sm:$0xff]
      %v7068 = vld [vmem:[%s3240 + $0x168] sm:$0xff]
      %v7069 = vld [vmem:[%s3240 + $0x170] sm:$0xff]
      %v7070 = vld [vmem:[%s3240 + $0x1] sm:$0xff]
      %v7071 = vld [vmem:[%s3240 + $0x9] sm:$0xff]
      %v7072 = vld [vmem:[%s3240 + $0x19] sm:$0xff]
      %v7073 = vld [vmem:[%s3240 + $0x21] sm:$0xff]
      %v7074 = vld [vmem:[%s3240 + $0x31] sm:$0xff]
      %v7075 = vld [vmem:[%s3240 + $0x39] sm:$0xff]
      %v7076 = vld [vmem:[%s3240 + $0x49] sm:$0xff]
      %v7077 = vld [vmem:[%s3240 + $0x51] sm:$0xff]
      %v7078 = vld [vmem:[%s3240 + $0x61] sm:$0xff]
      %v7079 = vld [vmem:[%s3240 + $0x69] sm:$0xff]
      %v7080 = vld [vmem:[%s3240 + $0x79] sm:$0xff]
      %v7081 = vld [vmem:[%s3240 + $0x81] sm:$0xff]
      %v7082 = vld [vmem:[%s3240 + $0x91] sm:$0xff]
      %v7083 = vld [vmem:[%s3240 + $0x99] sm:$0xff]
      %v7084 = vld [vmem:[%s3240 + $0xa9] sm:$0xff]
      %v7085 = vld [vmem:[%s3240 + $0xb1] sm:$0xff]
      %v7086 = vld [vmem:[%s3240 + $0xc1] sm:$0xff]
      %v7087 = vld [vmem:[%s3240 + $0xc9] sm:$0xff]
      %v7088 = vld [vmem:[%s3240 + $0xd9] sm:$0xff]
      %v7089 = vld [vmem:[%s3240 + $0xe1] sm:$0xff]
      %v7090 = vld [vmem:[%s3240 + $0xf1] sm:$0xff]
      %v7091 = vld [vmem:[%s3240 + $0xf9] sm:$0xff]
      %v7092 = vld [vmem:[%s3240 + $0x109] sm:$0xff]
      %v7093 = vld [vmem:[%s3240 + $0x111] sm:$0xff]
      %v7094 = vld [vmem:[%s3240 + $0x121] sm:$0xff]
      %v7095 = vld [vmem:[%s3240 + $0x129] sm:$0xff]
      %v7096 = vld [vmem:[%s3240 + $0x139] sm:$0xff]
      %v7097 = vld [vmem:[%s3240 + $0x141] sm:$0xff]
      %v7098 = vld [vmem:[%s3240 + $0x151] sm:$0xff]
      %v7099 = vld [vmem:[%s3240 + $0x159] sm:$0xff]
      %v7100 = vld [vmem:[%s3240 + $0x169] sm:$0xff]
      %v7101 = vld [vmem:[%s3240 + $0x171] sm:$0xff]
      %v7102 = vld [vmem:[%s3240 + $0x2] sm:$0xff]
      %v7103 = vld [vmem:[%s3240 + $0xa] sm:$0xff]
      %v7104 = vld [vmem:[%s3240 + $0x1a] sm:$0xff]
      %v7105 = vld [vmem:[%s3240 + $0x22] sm:$0xff]
      %v7106 = vld [vmem:[%s3240 + $0x32] sm:$0xff]
      %v7107 = vld [vmem:[%s3240 + $0x3a] sm:$0xff]
      %v7108 = vld [vmem:[%s3240 + $0x4a] sm:$0xff]
      %v7109 = vld [vmem:[%s3240 + $0x52] sm:$0xff]
      %v7110 = vld [vmem:[%s3240 + $0x62] sm:$0xff]
      %v7111 = vld [vmem:[%s3240 + $0x6a] sm:$0xff]
      %v7112 = vld [vmem:[%s3240 + $0x7a] sm:$0xff]
      %v7113 = vld [vmem:[%s3240 + $0x82] sm:$0xff]
      %v7114 = vld [vmem:[%s3240 + $0x92] sm:$0xff]
      %v7115 = vld [vmem:[%s3240 + $0x9a] sm:$0xff]
      %v7116 = vld [vmem:[%s3240 + $0xaa] sm:$0xff]
      %v7117 = vld [vmem:[%s3240 + $0xb2] sm:$0xff]
      %v7118 = vld [vmem:[%s3240 + $0xc2] sm:$0xff]
      %v7119 = vld [vmem:[%s3240 + $0xca] sm:$0xff]
      %v7120 = vld [vmem:[%s3240 + $0xda] sm:$0xff]
      %v7121 = vld [vmem:[%s3240 + $0xe2] sm:$0xff]
      %v7122 = vld [vmem:[%s3240 + $0xf2] sm:$0xff]
      %v7123 = vld [vmem:[%s3240 + $0xfa] sm:$0xff]
      %v7124 = vld [vmem:[%s3240 + $0x10a] sm:$0xff]
      %v7125 = vld [vmem:[%s3240 + $0x112] sm:$0xff]
      %v7126 = vld [vmem:[%s3240 + $0x122] sm:$0xff]
      %v7127 = vld [vmem:[%s3240 + $0x12a] sm:$0xff]
      %v7128 = vld [vmem:[%s3240 + $0x13a] sm:$0xff]
      %v7129 = vld [vmem:[%s3240 + $0x142] sm:$0xff]
      %v7130 = vld [vmem:[%s3240 + $0x152] sm:$0xff]
      %v7131 = vld [vmem:[%s3240 + $0x15a] sm:$0xff]
      %v7132 = vld [vmem:[%s3240 + $0x16a] sm:$0xff]
      %v7133 = vld [vmem:[%s3240 + $0x172] sm:$0xff]
      %7166 = vrot.lane.b32.xlu0 %v6878, 16
      %v7167 = vpop.permute.xlu0 %7166
      %7168 = vrot.lane.b32.xlu0 %v6879, 16
      %v7169 = vpop.permute.xlu0 %7168
      %7170 = vrot.lane.b32.xlu0 %v6880, 16
      %v7171 = vpop.permute.xlu0 %7170
      %7172 = vrot.lane.b32.xlu0 %v6881, 16
      %v7173 = vpop.permute.xlu0 %7172
      %7174 = vrot.lane.b32.xlu0 %v6882, 16
      %v7175 = vpop.permute.xlu0 %7174
      %7176 = vrot.lane.b32.xlu0 %v6883, 16
      %v7177 = vpop.permute.xlu0 %7176
      %7178 = vrot.lane.b32.xlu0 %v6884, 16
      %v7179 = vpop.permute.xlu0 %7178
      %7180 = vrot.lane.b32.xlu0 %v6885, 16
      %v7181 = vpop.permute.xlu0 %7180
      %7182 = vrot.lane.b32.xlu0 %v6886, 16
      %v7183 = vpop.permute.xlu0 %7182
      %7184 = vrot.lane.b32.xlu0 %v6887, 16
      %v7185 = vpop.permute.xlu0 %7184
      %7186 = vrot.lane.b32.xlu0 %v6888, 16
      %v7187 = vpop.permute.xlu0 %7186
      %7188 = vrot.lane.b32.xlu0 %v6889, 16
      %v7189 = vpop.permute.xlu0 %7188
      %7190 = vrot.lane.b32.xlu0 %v6890, 16
      %v7191 = vpop.permute.xlu0 %7190
      %7192 = vrot.lane.b32.xlu0 %v6891, 16
      %v7193 = vpop.permute.xlu0 %7192
      %7194 = vrot.lane.b32.xlu0 %v6892, 16
      %v7195 = vpop.permute.xlu0 %7194
      %7196 = vrot.lane.b32.xlu0 %v6893, 16
      %v7197 = vpop.permute.xlu0 %7196
      %7198 = vrot.lane.b32.xlu0 %v6894, 16
      %v7199 = vpop.permute.xlu0 %7198
      %7200 = vrot.lane.b32.xlu0 %v6895, 16
      %v7201 = vpop.permute.xlu0 %7200
      %7202 = vrot.lane.b32.xlu0 %v6896, 16
      %v7203 = vpop.permute.xlu0 %7202
      %7204 = vrot.lane.b32.xlu0 %v6897, 16
      %v7205 = vpop.permute.xlu0 %7204
      %7206 = vrot.lane.b32.xlu0 %v6898, 16
      %v7207 = vpop.permute.xlu0 %7206
      %7208 = vrot.lane.b32.xlu0 %v6899, 16
      %v7209 = vpop.permute.xlu0 %7208
      %7210 = vrot.lane.b32.xlu0 %v6900, 16
      %v7211 = vpop.permute.xlu0 %7210
      %7212 = vrot.lane.b32.xlu0 %v6901, 16
      %v7213 = vpop.permute.xlu0 %7212
      %7214 = vrot.lane.b32.xlu0 %v6902, 16
      %v7215 = vpop.permute.xlu0 %7214
      %7216 = vrot.lane.b32.xlu0 %v6903, 16
      %v7217 = vpop.permute.xlu0 %7216
      %7218 = vrot.lane.b32.xlu0 %v6904, 16
      %v7219 = vpop.permute.xlu0 %7218
      %7220 = vrot.lane.b32.xlu0 %v6905, 16
      %v7221 = vpop.permute.xlu0 %7220
      %7222 = vrot.lane.b32.xlu0 %v6906, 16
      %v7223 = vpop.permute.xlu0 %7222
      %7224 = vrot.lane.b32.xlu0 %v6907, 16
      %v7225 = vpop.permute.xlu0 %7224
      %7226 = vrot.lane.b32.xlu0 %v6908, 16
      %v7227 = vpop.permute.xlu0 %7226
      %7228 = vrot.lane.b32.xlu0 %v6909, 16
      %v7229 = vpop.permute.xlu0 %7228
      %7294 = vrot.lane.b32.xlu0 %v6910, 32
      %v7295 = vpop.permute.xlu0 %7294
      %7296 = vrot.lane.b32.xlu0 %v6911, 32
      %v7297 = vpop.permute.xlu0 %7296
      %7298 = vrot.lane.b32.xlu0 %v6912, 32
      %v7299 = vpop.permute.xlu0 %7298
      %7300 = vrot.lane.b32.xlu0 %v6913, 32
      %v7301 = vpop.permute.xlu0 %7300
      %7302 = vrot.lane.b32.xlu0 %v6914, 32
      %v7303 = vpop.permute.xlu0 %7302
      %7304 = vrot.lane.b32.xlu0 %v6915, 32
      %v7305 = vpop.permute.xlu0 %7304
      %7306 = vrot.lane.b32.xlu0 %v6916, 32
      %v7307 = vpop.permute.xlu0 %7306
      %7308 = vrot.lane.b32.xlu0 %v6917, 32
      %v7309 = vpop.permute.xlu0 %7308
      %7310 = vrot.lane.b32.xlu0 %v6918, 32
      %v7311 = vpop.permute.xlu0 %7310
      %7312 = vrot.lane.b32.xlu0 %v6919, 32
      %v7313 = vpop.permute.xlu0 %7312
      %7314 = vrot.lane.b32.xlu0 %v6920, 32
      %v7315 = vpop.permute.xlu0 %7314
      %7316 = vrot.lane.b32.xlu0 %v6921, 32
      %v7317 = vpop.permute.xlu0 %7316
      %7318 = vrot.lane.b32.xlu0 %v6922, 32
      %v7319 = vpop.permute.xlu0 %7318
      %7320 = vrot.lane.b32.xlu0 %v6923, 32
      %v7321 = vpop.permute.xlu0 %7320
      %7322 = vrot.lane.b32.xlu0 %v6924, 32
      %v7323 = vpop.permute.xlu0 %7322
      %7324 = vrot.lane.b32.xlu0 %v6925, 32
      %v7325 = vpop.permute.xlu0 %7324
      %7326 = vrot.lane.b32.xlu0 %v6926, 32
      %v7327 = vpop.permute.xlu0 %7326
      %7328 = vrot.lane.b32.xlu0 %v6927, 32
      %v7329 = vpop.permute.xlu0 %7328
      %7330 = vrot.lane.b32.xlu0 %v6928, 32
      %v7331 = vpop.permute.xlu0 %7330
      %7332 = vrot.lane.b32.xlu0 %v6929, 32
      %v7333 = vpop.permute.xlu0 %7332
      %7334 = vrot.lane.b32.xlu0 %v6930, 32
      %v7335 = vpop.permute.xlu0 %7334
      %7336 = vrot.lane.b32.xlu0 %v6931, 32
      %v7337 = vpop.permute.xlu0 %7336
      %7338 = vrot.lane.b32.xlu0 %v6932, 32
      %v7339 = vpop.permute.xlu0 %7338
      %7340 = vrot.lane.b32.xlu0 %v6933, 32
      %v7341 = vpop.permute.xlu0 %7340
      %7342 = vrot.lane.b32.xlu0 %v6934, 32
      %v7343 = vpop.permute.xlu0 %7342
      %7344 = vrot.lane.b32.xlu0 %v6935, 32
      %v7345 = vpop.permute.xlu0 %7344
      %7346 = vrot.lane.b32.xlu0 %v6936, 32
      %v7347 = vpop.permute.xlu0 %7346
      %7348 = vrot.lane.b32.xlu0 %v6937, 32
      %v7349 = vpop.permute.xlu0 %7348
      %7350 = vrot.lane.b32.xlu0 %v6938, 32
      %v7351 = vpop.permute.xlu0 %7350
      %7352 = vrot.lane.b32.xlu0 %v6939, 32
      %v7353 = vpop.permute.xlu0 %7352
      %7354 = vrot.lane.b32.xlu0 %v6940, 32
      %v7355 = vpop.permute.xlu0 %7354
      %7356 = vrot.lane.b32.xlu0 %v6941, 32
      %v7357 = vpop.permute.xlu0 %7356
      %7422 = vrot.lane.b32.xlu0 %v6942, 48
      %v7423 = vpop.permute.xlu0 %7422
      %7424 = vrot.lane.b32.xlu0 %v6943, 48
      %v7425 = vpop.permute.xlu0 %7424
      %7426 = vrot.lane.b32.xlu0 %v6944, 48
      %v7427 = vpop.permute.xlu0 %7426
      %7428 = vrot.lane.b32.xlu0 %v6945, 48
      %v7429 = vpop.permute.xlu0 %7428
      %7430 = vrot.lane.b32.xlu0 %v6946, 48
      %v7431 = vpop.permute.xlu0 %7430
      %7432 = vrot.lane.b32.xlu0 %v6947, 48
      %v7433 = vpop.permute.xlu0 %7432
      %7434 = vrot.lane.b32.xlu0 %v6948, 48
      %v7435 = vpop.permute.xlu0 %7434
      %7436 = vrot.lane.b32.xlu0 %v6949, 48
      %v7437 = vpop.permute.xlu0 %7436
      %7438 = vrot.lane.b32.xlu0 %v6950, 48
      %v7439 = vpop.permute.xlu0 %7438
      %7440 = vrot.lane.b32.xlu0 %v6951, 48
      %v7441 = vpop.permute.xlu0 %7440
      %7442 = vrot.lane.b32.xlu0 %v6952, 48
      %v7443 = vpop.permute.xlu0 %7442
      %7444 = vrot.lane.b32.xlu0 %v6953, 48
      %v7445 = vpop.permute.xlu0 %7444
      %7446 = vrot.lane.b32.xlu0 %v6954, 48
      %v7447 = vpop.permute.xlu0 %7446
      %7448 = vrot.lane.b32.xlu0 %v6955, 48
      %v7449 = vpop.permute.xlu0 %7448
      %7450 = vrot.lane.b32.xlu0 %v6956, 48
      %v7451 = vpop.permute.xlu0 %7450
      %7452 = vrot.lane.b32.xlu0 %v6957, 48
      %v7453 = vpop.permute.xlu0 %7452
      %7454 = vrot.lane.b32.xlu0 %v6958, 48
      %v7455 = vpop.permute.xlu0 %7454
      %7456 = vrot.lane.b32.xlu0 %v6959, 48
      %v7457 = vpop.permute.xlu0 %7456
      %7458 = vrot.lane.b32.xlu0 %v6960, 48
      %v7459 = vpop.permute.xlu0 %7458
      %7460 = vrot.lane.b32.xlu0 %v6961, 48
      %v7461 = vpop.permute.xlu0 %7460
      %7462 = vrot.lane.b32.xlu0 %v6962, 48
      %v7463 = vpop.permute.xlu0 %7462
      %7464 = vrot.lane.b32.xlu0 %v6963, 48
      %v7465 = vpop.permute.xlu0 %7464
      %7466 = vrot.lane.b32.xlu0 %v6964, 48
      %v7467 = vpop.permute.xlu0 %7466
      %7468 = vrot.lane.b32.xlu0 %v6965, 48
      %v7469 = vpop.permute.xlu0 %7468
      %7470 = vrot.lane.b32.xlu0 %v6966, 48
      %v7471 = vpop.permute.xlu0 %7470
      %7472 = vrot.lane.b32.xlu0 %v6967, 48
      %v7473 = vpop.permute.xlu0 %7472
      %7474 = vrot.lane.b32.xlu0 %v6968, 48
      %v7475 = vpop.permute.xlu0 %7474
      %7476 = vrot.lane.b32.xlu0 %v6969, 48
      %v7477 = vpop.permute.xlu0 %7476
      %7478 = vrot.lane.b32.xlu0 %v6970, 48
      %v7479 = vpop.permute.xlu0 %7478
      %7480 = vrot.lane.b32.xlu0 %v6971, 48
      %v7481 = vpop.permute.xlu0 %7480
      %7482 = vrot.lane.b32.xlu0 %v6972, 48
      %v7483 = vpop.permute.xlu0 %7482
      %7484 = vrot.lane.b32.xlu0 %v6973, 48
      %v7485 = vpop.permute.xlu0 %7484
      %7550 = vrot.lane.b32.xlu0 %v6974, 64
      %v7551 = vpop.permute.xlu0 %7550
      %7552 = vrot.lane.b32.xlu0 %v6975, 64
      %v7553 = vpop.permute.xlu0 %7552
      %7554 = vrot.lane.b32.xlu0 %v6976, 64
      %v7555 = vpop.permute.xlu0 %7554
      %7556 = vrot.lane.b32.xlu0 %v6977, 64
      %v7557 = vpop.permute.xlu0 %7556
      %7558 = vrot.lane.b32.xlu0 %v6978, 64
      %v7559 = vpop.permute.xlu0 %7558
      %7560 = vrot.lane.b32.xlu0 %v6979, 64
      %v7561 = vpop.permute.xlu0 %7560
      %7562 = vrot.lane.b32.xlu0 %v6980, 64
      %v7563 = vpop.permute.xlu0 %7562
      %7564 = vrot.lane.b32.xlu0 %v6981, 64
      %v7565 = vpop.permute.xlu0 %7564
      %7566 = vrot.lane.b32.xlu0 %v6982, 64
      %v7567 = vpop.permute.xlu0 %7566
      %7568 = vrot.lane.b32.xlu0 %v6983, 64
      %v7569 = vpop.permute.xlu0 %7568
      %7570 = vrot.lane.b32.xlu0 %v6984, 64
      %v7571 = vpop.permute.xlu0 %7570
      %7572 = vrot.lane.b32.xlu0 %v6985, 64
      %v7573 = vpop.permute.xlu0 %7572
      %7574 = vrot.lane.b32.xlu0 %v6986, 64
      %v7575 = vpop.permute.xlu0 %7574
      %7576 = vrot.lane.b32.xlu0 %v6987, 64
      %v7577 = vpop.permute.xlu0 %7576
      %7578 = vrot.lane.b32.xlu0 %v6988, 64
      %v7579 = vpop.permute.xlu0 %7578
      %7580 = vrot.lane.b32.xlu0 %v6989, 64
      %v7581 = vpop.permute.xlu0 %7580
      %7582 = vrot.lane.b32.xlu0 %v6990, 64
      %v7583 = vpop.permute.xlu0 %7582
      %7584 = vrot.lane.b32.xlu0 %v6991, 64
      %v7585 = vpop.permute.xlu0 %7584
      %7586 = vrot.lane.b32.xlu0 %v6992, 64
      %v7587 = vpop.permute.xlu0 %7586
      %7588 = vrot.lane.b32.xlu0 %v6993, 64
      %v7589 = vpop.permute.xlu0 %7588
      %7590 = vrot.lane.b32.xlu0 %v6994, 64
      %v7591 = vpop.permute.xlu0 %7590
      %7592 = vrot.lane.b32.xlu0 %v6995, 64
      %v7593 = vpop.permute.xlu0 %7592
      %7594 = vrot.lane.b32.xlu0 %v6996, 64
      %v7595 = vpop.permute.xlu0 %7594
      %7596 = vrot.lane.b32.xlu0 %v6997, 64
      %v7597 = vpop.permute.xlu0 %7596
      %7598 = vrot.lane.b32.xlu0 %v6998, 64
      %v7599 = vpop.permute.xlu0 %7598
      %7600 = vrot.lane.b32.xlu0 %v6999, 64
      %v7601 = vpop.permute.xlu0 %7600
      %7602 = vrot.lane.b32.xlu0 %v7000, 64
      %v7603 = vpop.permute.xlu0 %7602
      %7604 = vrot.lane.b32.xlu0 %v7001, 64
      %v7605 = vpop.permute.xlu0 %7604
      %7606 = vrot.lane.b32.xlu0 %v7002, 64
      %v7607 = vpop.permute.xlu0 %7606
      %7608 = vrot.lane.b32.xlu0 %v7003, 64
      %v7609 = vpop.permute.xlu0 %7608
      %7610 = vrot.lane.b32.xlu0 %v7004, 64
      %v7611 = vpop.permute.xlu0 %7610
      %7612 = vrot.lane.b32.xlu0 %v7005, 64
      %v7613 = vpop.permute.xlu0 %7612
      %7678 = vrot.lane.b32.xlu0 %v7006, 80
      %v7679 = vpop.permute.xlu0 %7678
      %7680 = vrot.lane.b32.xlu0 %v7007, 80
      %v7681 = vpop.permute.xlu0 %7680
      %7682 = vrot.lane.b32.xlu0 %v7008, 80
      %v7683 = vpop.permute.xlu0 %7682
      %7684 = vrot.lane.b32.xlu0 %v7009, 80
      %v7685 = vpop.permute.xlu0 %7684
      %7686 = vrot.lane.b32.xlu0 %v7010, 80
      %v7687 = vpop.permute.xlu0 %7686
      %7688 = vrot.lane.b32.xlu0 %v7011, 80
      %v7689 = vpop.permute.xlu0 %7688
      %7690 = vrot.lane.b32.xlu0 %v7012, 80
      %v7691 = vpop.permute.xlu0 %7690
      %7692 = vrot.lane.b32.xlu0 %v7013, 80
      %v7693 = vpop.permute.xlu0 %7692
      %7694 = vrot.lane.b32.xlu0 %v7014, 80
      %v7695 = vpop.permute.xlu0 %7694
      %7696 = vrot.lane.b32.xlu0 %v7015, 80
      %v7697 = vpop.permute.xlu0 %7696
      %7698 = vrot.lane.b32.xlu0 %v7016, 80
      %v7699 = vpop.permute.xlu0 %7698
      %7700 = vrot.lane.b32.xlu0 %v7017, 80
      %v7701 = vpop.permute.xlu0 %7700
      %7702 = vrot.lane.b32.xlu0 %v7018, 80
      %v7703 = vpop.permute.xlu0 %7702
      %7704 = vrot.lane.b32.xlu0 %v7019, 80
      %v7705 = vpop.permute.xlu0 %7704
      %7706 = vrot.lane.b32.xlu0 %v7020, 80
      %v7707 = vpop.permute.xlu0 %7706
      %7708 = vrot.lane.b32.xlu0 %v7021, 80
      %v7709 = vpop.permute.xlu0 %7708
      %7710 = vrot.lane.b32.xlu0 %v7022, 80
      %v7711 = vpop.permute.xlu0 %7710
      %7712 = vrot.lane.b32.xlu0 %v7023, 80
      %v7713 = vpop.permute.xlu0 %7712
      %7714 = vrot.lane.b32.xlu0 %v7024, 80
      %v7715 = vpop.permute.xlu0 %7714
      %7716 = vrot.lane.b32.xlu0 %v7025, 80
      %v7717 = vpop.permute.xlu0 %7716
      %7718 = vrot.lane.b32.xlu0 %v7026, 80
      %v7719 = vpop.permute.xlu0 %7718
      %7720 = vrot.lane.b32.xlu0 %v7027, 80
      %v7721 = vpop.permute.xlu0 %7720
      %7722 = vrot.lane.b32.xlu0 %v7028, 80
      %v7723 = vpop.permute.xlu0 %7722
      %7724 = vrot.lane.b32.xlu0 %v7029, 80
      %v7725 = vpop.permute.xlu0 %7724
      %7726 = vrot.lane.b32.xlu0 %v7030, 80
      %v7727 = vpop.permute.xlu0 %7726
      %7728 = vrot.lane.b32.xlu0 %v7031, 80
      %v7729 = vpop.permute.xlu0 %7728
      %7730 = vrot.lane.b32.xlu0 %v7032, 80
      %v7731 = vpop.permute.xlu0 %7730
      %7732 = vrot.lane.b32.xlu0 %v7033, 80
      %v7733 = vpop.permute.xlu0 %7732
      %7734 = vrot.lane.b32.xlu0 %v7034, 80
      %v7735 = vpop.permute.xlu0 %7734
      %7736 = vrot.lane.b32.xlu0 %v7035, 80
      %v7737 = vpop.permute.xlu0 %7736
      %7738 = vrot.lane.b32.xlu0 %v7036, 80
      %v7739 = vpop.permute.xlu0 %7738
      %7740 = vrot.lane.b32.xlu0 %v7037, 80
      %v7741 = vpop.permute.xlu0 %7740
      %7806 = vrot.lane.b32.xlu0 %v7038, 96
      %v7807 = vpop.permute.xlu0 %7806
      %7808 = vrot.lane.b32.xlu0 %v7039, 96
      %v7809 = vpop.permute.xlu0 %7808
      %7810 = vrot.lane.b32.xlu0 %v7040, 96
      %v7811 = vpop.permute.xlu0 %7810
      %7812 = vrot.lane.b32.xlu0 %v7041, 96
      %v7813 = vpop.permute.xlu0 %7812
      %7814 = vrot.lane.b32.xlu0 %v7042, 96
      %v7815 = vpop.permute.xlu0 %7814
      %7816 = vrot.lane.b32.xlu0 %v7043, 96
      %v7817 = vpop.permute.xlu0 %7816
      %7818 = vrot.lane.b32.xlu0 %v7044, 96
      %v7819 = vpop.permute.xlu0 %7818
      %7820 = vrot.lane.b32.xlu0 %v7045, 96
      %v7821 = vpop.permute.xlu0 %7820
      %7822 = vrot.lane.b32.xlu0 %v7046, 96
      %v7823 = vpop.permute.xlu0 %7822
      %7824 = vrot.lane.b32.xlu0 %v7047, 96
      %v7825 = vpop.permute.xlu0 %7824
      %7826 = vrot.lane.b32.xlu0 %v7048, 96
      %v7827 = vpop.permute.xlu0 %7826
      %7828 = vrot.lane.b32.xlu0 %v7049, 96
      %v7829 = vpop.permute.xlu0 %7828
      %7830 = vrot.lane.b32.xlu0 %v7050, 96
      %v7831 = vpop.permute.xlu0 %7830
      %7832 = vrot.lane.b32.xlu0 %v7051, 96
      %v7833 = vpop.permute.xlu0 %7832
      %7834 = vrot.lane.b32.xlu0 %v7052, 96
      %v7835 = vpop.permute.xlu0 %7834
      %7836 = vrot.lane.b32.xlu0 %v7053, 96
      %v7837 = vpop.permute.xlu0 %7836
      %7838 = vrot.lane.b32.xlu0 %v7054, 96
      %v7839 = vpop.permute.xlu0 %7838
      %7840 = vrot.lane.b32.xlu0 %v7055, 96
      %v7841 = vpop.permute.xlu0 %7840
      %7842 = vrot.lane.b32.xlu0 %v7056, 96
      %v7843 = vpop.permute.xlu0 %7842
      %7844 = vrot.lane.b32.xlu0 %v7057, 96
      %v7845 = vpop.permute.xlu0 %7844
      %7846 = vrot.lane.b32.xlu0 %v7058, 96
      %v7847 = vpop.permute.xlu0 %7846
      %7848 = vrot.lane.b32.xlu0 %v7059, 96
      %v7849 = vpop.permute.xlu0 %7848
      %7850 = vrot.lane.b32.xlu0 %v7060, 96
      %v7851 = vpop.permute.xlu0 %7850
      %7852 = vrot.lane.b32.xlu0 %v7061, 96
      %v7853 = vpop.permute.xlu0 %7852
      %7854 = vrot.lane.b32.xlu0 %v7062, 96
      %v7855 = vpop.permute.xlu0 %7854
      %7856 = vrot.lane.b32.xlu0 %v7063, 96
      %v7857 = vpop.permute.xlu0 %7856
      %7858 = vrot.lane.b32.xlu0 %v7064, 96
      %v7859 = vpop.permute.xlu0 %7858
      %7860 = vrot.lane.b32.xlu0 %v7065, 96
      %v7861 = vpop.permute.xlu0 %7860
      %7862 = vrot.lane.b32.xlu0 %v7066, 96
      %v7863 = vpop.permute.xlu0 %7862
      %7864 = vrot.lane.b32.xlu0 %v7067, 96
      %v7865 = vpop.permute.xlu0 %7864
      %7866 = vrot.lane.b32.xlu0 %v7068, 96
      %v7867 = vpop.permute.xlu0 %7866
      %7868 = vrot.lane.b32.xlu0 %v7069, 96
      %v7869 = vpop.permute.xlu0 %7868
      %7934 = vrot.lane.b32.xlu0 %v7070, 112
      %v7935 = vpop.permute.xlu0 %7934
      %7936 = vrot.lane.b32.xlu0 %v7071, 112
      %v7937 = vpop.permute.xlu0 %7936
      %7938 = vrot.lane.b32.xlu0 %v7072, 112
      %v7939 = vpop.permute.xlu0 %7938
      %7940 = vrot.lane.b32.xlu0 %v7073, 112
      %v7941 = vpop.permute.xlu0 %7940
      %7942 = vrot.lane.b32.xlu0 %v7074, 112
      %v7943 = vpop.permute.xlu0 %7942
      %7944 = vrot.lane.b32.xlu0 %v7075, 112
      %v7945 = vpop.permute.xlu0 %7944
      %7946 = vrot.lane.b32.xlu0 %v7076, 112
      %v7947 = vpop.permute.xlu0 %7946
      %7948 = vrot.lane.b32.xlu0 %v7077, 112
      %v7949 = vpop.permute.xlu0 %7948
      %7950 = vrot.lane.b32.xlu0 %v7078, 112
      %v7951 = vpop.permute.xlu0 %7950
      %7952 = vrot.lane.b32.xlu0 %v7079, 112
      %v7953 = vpop.permute.xlu0 %7952
      %7954 = vrot.lane.b32.xlu0 %v7080, 112
      %v7955 = vpop.permute.xlu0 %7954
      %7956 = vrot.lane.b32.xlu0 %v7081, 112
      %v7957 = vpop.permute.xlu0 %7956
      %7958 = vrot.lane.b32.xlu0 %v7082, 112
      %v7959 = vpop.permute.xlu0 %7958
      %7960 = vrot.lane.b32.xlu0 %v7083, 112
      %v7961 = vpop.permute.xlu0 %7960
      %7962 = vrot.lane.b32.xlu0 %v7084, 112
      %v7963 = vpop.permute.xlu0 %7962
      %7964 = vrot.lane.b32.xlu0 %v7085, 112
      %v7965 = vpop.permute.xlu0 %7964
      %7966 = vrot.lane.b32.xlu0 %v7086, 112
      %v7967 = vpop.permute.xlu0 %7966
      %7968 = vrot.lane.b32.xlu0 %v7087, 112
      %v7969 = vpop.permute.xlu0 %7968
      %7970 = vrot.lane.b32.xlu0 %v7088, 112
      %v7971 = vpop.permute.xlu0 %7970
      %7972 = vrot.lane.b32.xlu0 %v7089, 112
      %v7973 = vpop.permute.xlu0 %7972
      %7974 = vrot.lane.b32.xlu0 %v7090, 112
      %v7975 = vpop.permute.xlu0 %7974
      %7976 = vrot.lane.b32.xlu0 %v7091, 112
      %v7977 = vpop.permute.xlu0 %7976
      %7978 = vrot.lane.b32.xlu0 %v7092, 112
      %v7979 = vpop.permute.xlu0 %7978
      %7980 = vrot.lane.b32.xlu0 %v7093, 112
      %v7981 = vpop.permute.xlu0 %7980
      %7982 = vrot.lane.b32.xlu0 %v7094, 112
      %v7983 = vpop.permute.xlu0 %7982
      %7984 = vrot.lane.b32.xlu0 %v7095, 112
      %v7985 = vpop.permute.xlu0 %7984
      %7986 = vrot.lane.b32.xlu0 %v7096, 112
      %v7987 = vpop.permute.xlu0 %7986
      %7988 = vrot.lane.b32.xlu0 %v7097, 112
      %v7989 = vpop.permute.xlu0 %7988
      %7990 = vrot.lane.b32.xlu0 %v7098, 112
      %v7991 = vpop.permute.xlu0 %7990
      %7992 = vrot.lane.b32.xlu0 %v7099, 112
      %v7993 = vpop.permute.xlu0 %7992
      %7994 = vrot.lane.b32.xlu0 %v7100, 112
      %v7995 = vpop.permute.xlu0 %7994
      %7996 = vrot.lane.b32.xlu0 %v7101, 112
      %v7997 = vpop.permute.xlu0 %7996
      %v8030 = vsel %vm498, %v6846, %v7167
      %v8031 = vsel %vm498, %v6847, %v7169
      %v8032 = vsel %vm498, %v6848, %v7171
      %v8033 = vsel %vm498, %v6849, %v7173
      %v8034 = vsel %vm498, %v6850, %v7175
      %v8035 = vsel %vm498, %v6851, %v7177
      %v8036 = vsel %vm498, %v6852, %v7179
      %v8037 = vsel %vm498, %v6853, %v7181
      %v8038 = vsel %vm498, %v6854, %v7183
      %v8039 = vsel %vm498, %v6855, %v7185
      %v8040 = vsel %vm498, %v6856, %v7187
      %v8041 = vsel %vm498, %v6857, %v7189
      %v8042 = vsel %vm498, %v6858, %v7191
      %v8043 = vsel %vm498, %v6859, %v7193
      %v8044 = vsel %vm498, %v6860, %v7195
      %v8045 = vsel %vm498, %v6861, %v7197
      %v8046 = vsel %vm498, %v6862, %v7199
      %v8047 = vsel %vm498, %v6863, %v7201
      %v8048 = vsel %vm498, %v6864, %v7203
      %v8049 = vsel %vm498, %v6865, %v7205
      %v8050 = vsel %vm498, %v6866, %v7207
      %v8051 = vsel %vm498, %v6867, %v7209
      %v8052 = vsel %vm498, %v6868, %v7211
      %v8053 = vsel %vm498, %v6869, %v7213
      %v8054 = vsel %vm498, %v6870, %v7215
      %v8055 = vsel %vm498, %v6871, %v7217
      %v8056 = vsel %vm498, %v6872, %v7219
      %v8057 = vsel %vm498, %v6873, %v7221
      %v8058 = vsel %vm498, %v6874, %v7223
      %v8059 = vsel %vm498, %v6875, %v7225
      %v8060 = vsel %vm498, %v6876, %v7227
      %v8061 = vsel %vm498, %v6877, %v7229
      %v8062 = vsel %vm2463, %v8030, %v7295
      %v8063 = vsel %vm2463, %v8031, %v7297
      %v8064 = vsel %vm2463, %v8032, %v7299
      %v8065 = vsel %vm2463, %v8033, %v7301
      %v8066 = vsel %vm2463, %v8034, %v7303
      %v8067 = vsel %vm2463, %v8035, %v7305
      %v8068 = vsel %vm2463, %v8036, %v7307
      %v8069 = vsel %vm2463, %v8037, %v7309
      %v8070 = vsel %vm2463, %v8038, %v7311
      %v8071 = vsel %vm2463, %v8039, %v7313
      %v8072 = vsel %vm2463, %v8040, %v7315
      %v8073 = vsel %vm2463, %v8041, %v7317
      %v8074 = vsel %vm2463, %v8042, %v7319
      %v8075 = vsel %vm2463, %v8043, %v7321
      %v8076 = vsel %vm2463, %v8044, %v7323
      %v8077 = vsel %vm2463, %v8045, %v7325
      %v8078 = vsel %vm2463, %v8046, %v7327
      %v8079 = vsel %vm2463, %v8047, %v7329
      %v8080 = vsel %vm2463, %v8048, %v7331
      %v8081 = vsel %vm2463, %v8049, %v7333
      %v8082 = vsel %vm2463, %v8050, %v7335
      %v8083 = vsel %vm2463, %v8051, %v7337
      %v8084 = vsel %vm2463, %v8052, %v7339
      %v8085 = vsel %vm2463, %v8053, %v7341
      %v8086 = vsel %vm2463, %v8054, %v7343
      %v8087 = vsel %vm2463, %v8055, %v7345
      %v8088 = vsel %vm2463, %v8056, %v7347
      %v8089 = vsel %vm2463, %v8057, %v7349
      %v8090 = vsel %vm2463, %v8058, %v7351
      %v8091 = vsel %vm2463, %v8059, %v7353
      %v8092 = vsel %vm2463, %v8060, %v7355
      %v8093 = vsel %vm2463, %v8061, %v7357
      %v8094 = vsel %vm2529, %v8062, %v7423
      %v8095 = vsel %vm2529, %v8063, %v7425
      %v8096 = vsel %vm2529, %v8064, %v7427
      %v8097 = vsel %vm2529, %v8065, %v7429
      %v8098 = vsel %vm2529, %v8066, %v7431
      %v8099 = vsel %vm2529, %v8067, %v7433
      %v8100 = vsel %vm2529, %v8068, %v7435
      %v8101 = vsel %vm2529, %v8069, %v7437
      %v8102 = vsel %vm2529, %v8070, %v7439
      %v8103 = vsel %vm2529, %v8071, %v7441
      %v8104 = vsel %vm2529, %v8072, %v7443
      %v8105 = vsel %vm2529, %v8073, %v7445
      %v8106 = vsel %vm2529, %v8074, %v7447
      %v8107 = vsel %vm2529, %v8075, %v7449
      %v8108 = vsel %vm2529, %v8076, %v7451
      %v8109 = vsel %vm2529, %v8077, %v7453
      %v8110 = vsel %vm2529, %v8078, %v7455
      %v8111 = vsel %vm2529, %v8079, %v7457
      %v8112 = vsel %vm2529, %v8080, %v7459
      %v8113 = vsel %vm2529, %v8081, %v7461
      %v8114 = vsel %vm2529, %v8082, %v7463
      %v8115 = vsel %vm2529, %v8083, %v7465
      %v8116 = vsel %vm2529, %v8084, %v7467
      %v8117 = vsel %vm2529, %v8085, %v7469
      %v8118 = vsel %vm2529, %v8086, %v7471
      %v8119 = vsel %vm2529, %v8087, %v7473
      %v8120 = vsel %vm2529, %v8088, %v7475
      %v8121 = vsel %vm2529, %v8089, %v7477
      %v8122 = vsel %vm2529, %v8090, %v7479
      %v8123 = vsel %vm2529, %v8091, %v7481
      %v8124 = vsel %vm2529, %v8092, %v7483
      %v8125 = vsel %vm2529, %v8093, %v7485
      %v8126 = vsel %vm2595, %v8094, %v7551
      %v8127 = vsel %vm2595, %v8095, %v7553
      %v8128 = vsel %vm2595, %v8096, %v7555
      %v8129 = vsel %vm2595, %v8097, %v7557
      %v8130 = vsel %vm2595, %v8098, %v7559
      %v8131 = vsel %vm2595, %v8099, %v7561
      %v8132 = vsel %vm2595, %v8100, %v7563
      %v8133 = vsel %vm2595, %v8101, %v7565
      %v8134 = vsel %vm2595, %v8102, %v7567
      %v8135 = vsel %vm2595, %v8103, %v7569
      %v8136 = vsel %vm2595, %v8104, %v7571
      %v8137 = vsel %vm2595, %v8105, %v7573
      %v8138 = vsel %vm2595, %v8106, %v7575
      %v8139 = vsel %vm2595, %v8107, %v7577
      %v8140 = vsel %vm2595, %v8108, %v7579
      %v8141 = vsel %vm2595, %v8109, %v7581
      %v8142 = vsel %vm2595, %v8110, %v7583
      %v8143 = vsel %vm2595, %v8111, %v7585
      %v8144 = vsel %vm2595, %v8112, %v7587
      %v8145 = vsel %vm2595, %v8113, %v7589
      %v8146 = vsel %vm2595, %v8114, %v7591
      %v8147 = vsel %vm2595, %v8115, %v7593
      %v8148 = vsel %vm2595, %v8116, %v7595
      %v8149 = vsel %vm2595, %v8117, %v7597
      %v8150 = vsel %vm2595, %v8118, %v7599
      %v8151 = vsel %vm2595, %v8119, %v7601
      %v8152 = vsel %vm2595, %v8120, %v7603
      %v8153 = vsel %vm2595, %v8121, %v7605
      %v8154 = vsel %vm2595, %v8122, %v7607
      %v8155 = vsel %vm2595, %v8123, %v7609
      %v8156 = vsel %vm2595, %v8124, %v7611
      %v8157 = vsel %vm2595, %v8125, %v7613
      %v8158 = vsel %vm4361, %v8126, %v7679
      %v8159 = vsel %vm4361, %v8127, %v7681
      %v8160 = vsel %vm4361, %v8128, %v7683
      %v8161 = vsel %vm4361, %v8129, %v7685
      %v8162 = vsel %vm4361, %v8130, %v7687
      %v8163 = vsel %vm4361, %v8131, %v7689
      %v8164 = vsel %vm4361, %v8132, %v7691
      %v8165 = vsel %vm4361, %v8133, %v7693
      %v8166 = vsel %vm4361, %v8134, %v7695
      %v8167 = vsel %vm4361, %v8135, %v7697
      %v8168 = vsel %vm4361, %v8136, %v7699
      %v8169 = vsel %vm4361, %v8137, %v7701
      %v8170 = vsel %vm4361, %v8138, %v7703
      %v8171 = vsel %vm4361, %v8139, %v7705
      %v8172 = vsel %vm4361, %v8140, %v7707
      %v8173 = vsel %vm4361, %v8141, %v7709
      %v8174 = vsel %vm4361, %v8142, %v7711
      %v8175 = vsel %vm4361, %v8143, %v7713
      %v8176 = vsel %vm4361, %v8144, %v7715
      %v8177 = vsel %vm4361, %v8145, %v7717
      %v8178 = vsel %vm4361, %v8146, %v7719
      %v8179 = vsel %vm4361, %v8147, %v7721
      %v8180 = vsel %vm4361, %v8148, %v7723
      %v8181 = vsel %vm4361, %v8149, %v7725
      %v8182 = vsel %vm4361, %v8150, %v7727
      %v8183 = vsel %vm4361, %v8151, %v7729
      %v8184 = vsel %vm4361, %v8152, %v7731
      %v8185 = vsel %vm4361, %v8153, %v7733
      %v8186 = vsel %vm4361, %v8154, %v7735
      %v8187 = vsel %vm4361, %v8155, %v7737
      %v8188 = vsel %vm4361, %v8156, %v7739
      %v8189 = vsel %vm4361, %v8157, %v7741
      %v8190 = vsel %vm4394, %v8158, %v7807
      %v8191 = vsel %vm4394, %v8159, %v7809
      %v8192 = vsel %vm4394, %v8160, %v7811
      %v8193 = vsel %vm4394, %v8161, %v7813
      %v8194 = vsel %vm4394, %v8162, %v7815
      %v8195 = vsel %vm4394, %v8163, %v7817
      %v8196 = vsel %vm4394, %v8164, %v7819
      %v8197 = vsel %vm4394, %v8165, %v7821
      %v8198 = vsel %vm4394, %v8166, %v7823
      %v8199 = vsel %vm4394, %v8167, %v7825
      %v8200 = vsel %vm4394, %v8168, %v7827
      %v8201 = vsel %vm4394, %v8169, %v7829
      %v8202 = vsel %vm4394, %v8170, %v7831
      %v8203 = vsel %vm4394, %v8171, %v7833
      %v8204 = vsel %vm4394, %v8172, %v7835
      %v8205 = vsel %vm4394, %v8173, %v7837
      %v8206 = vsel %vm4394, %v8174, %v7839
      %v8207 = vsel %vm4394, %v8175, %v7841
      %v8208 = vsel %vm4394, %v8176, %v7843
      %v8209 = vsel %vm4394, %v8177, %v7845
      %v8210 = vsel %vm4394, %v8178, %v7847
      %v8211 = vsel %vm4394, %v8179, %v7849
      %v8212 = vsel %vm4394, %v8180, %v7851
      %v8213 = vsel %vm4394, %v8181, %v7853
      %v8214 = vsel %vm4394, %v8182, %v7855
      %v8215 = vsel %vm4394, %v8183, %v7857
      %v8216 = vsel %vm4394, %v8184, %v7859
      %v8217 = vsel %vm4394, %v8185, %v7861
      %v8218 = vsel %vm4394, %v8186, %v7863
      %v8219 = vsel %vm4394, %v8187, %v7865
      %v8220 = vsel %vm4394, %v8188, %v7867
      %v8221 = vsel %vm4394, %v8189, %v7869
      %v8222 = vsel %vm4427, %v8190, %v7935
      %v8223 = vsel %vm4427, %v8191, %v7937
      %v8224 = vsel %vm4427, %v8192, %v7939
      %v8225 = vsel %vm4427, %v8193, %v7941
      %v8226 = vsel %vm4427, %v8194, %v7943
      %v8227 = vsel %vm4427, %v8195, %v7945
      %v8228 = vsel %vm4427, %v8196, %v7947
      %v8229 = vsel %vm4427, %v8197, %v7949
      %v8230 = vsel %vm4427, %v8198, %v7951
      %v8231 = vsel %vm4427, %v8199, %v7953
      %v8232 = vsel %vm4427, %v8200, %v7955
      %v8233 = vsel %vm4427, %v8201, %v7957
      %v8234 = vsel %vm4427, %v8202, %v7959
      %v8235 = vsel %vm4427, %v8203, %v7961
      %v8236 = vsel %vm4427, %v8204, %v7963
      %v8237 = vsel %vm4427, %v8205, %v7965
      %v8238 = vsel %vm4427, %v8206, %v7967
      %v8239 = vsel %vm4427, %v8207, %v7969
      %v8240 = vsel %vm4427, %v8208, %v7971
      %v8241 = vsel %vm4427, %v8209, %v7973
      %v8242 = vsel %vm4427, %v8210, %v7975
      %v8243 = vsel %vm4427, %v8211, %v7977
      %v8244 = vsel %vm4427, %v8212, %v7979
      %v8245 = vsel %vm4427, %v8213, %v7981
      %v8246 = vsel %vm4427, %v8214, %v7983
      %v8247 = vsel %vm4427, %v8215, %v7985
      %v8248 = vsel %vm4427, %v8216, %v7987
      %v8249 = vsel %vm4427, %v8217, %v7989
      %v8250 = vsel %vm4427, %v8218, %v7991
      %v8251 = vsel %vm4427, %v8219, %v7993
      %v8252 = vsel %vm4427, %v8220, %v7995
      %v8253 = vsel %vm4427, %v8221, %v7997
      %v8254 = vpack.c.bf16 %v8223, %v8222
      %v8255 = vpack.c.bf16 %v7103, %v7102
      %v8256 = vpack.c.bf16 %v8225, %v8224
      %v8257 = vpack.c.bf16 %v7105, %v7104
      %v8258 = vpack.c.bf16 %v8227, %v8226
      %v8259 = vpack.c.bf16 %v7107, %v7106
      %v8260 = vpack.c.bf16 %v8229, %v8228
      %v8261 = vpack.c.bf16 %v7109, %v7108
      %v8262 = vpack.c.bf16 %v8231, %v8230
      %v8263 = vpack.c.bf16 %v7111, %v7110
      %v8264 = vpack.c.bf16 %v8233, %v8232
      %v8265 = vpack.c.bf16 %v7113, %v7112
      %v8266 = vpack.c.bf16 %v8235, %v8234
      %v8267 = vpack.c.bf16 %v7115, %v7114
      %v8268 = vpack.c.bf16 %v8237, %v8236
      %v8269 = vpack.c.bf16 %v7117, %v7116
      %v8270 = vpack.c.bf16 %v8239, %v8238
      %v8271 = vpack.c.bf16 %v7119, %v7118
      %v8272 = vpack.c.bf16 %v8241, %v8240
      %v8273 = vpack.c.bf16 %v7121, %v7120
      %v8274 = vpack.c.bf16 %v8243, %v8242
      %v8275 = vpack.c.bf16 %v7123, %v7122
      %v8276 = vpack.c.bf16 %v8245, %v8244
      %v8277 = vpack.c.bf16 %v7125, %v7124
      %v8278 = vpack.c.bf16 %v8247, %v8246
      %v8279 = vpack.c.bf16 %v7127, %v7126
      %v8280 = vpack.c.bf16 %v8249, %v8248
      %v8281 = vpack.c.bf16 %v7129, %v7128
      %v8282 = vpack.c.bf16 %v8251, %v8250
      %v8283 = vpack.c.bf16 %v7131, %v7130
      %v8284 = vpack.c.bf16 %v8253, %v8252
      %v8285 = vpack.c.bf16 %v7133, %v7132
      %v8304 = vunpack.c.l.b16 %v6828
      %v8305 = vunpack.c.l.b16 %v6829
      %v8306 = vunpack.c.l.b16 %v6830
      %v8307 = vunpack.c.l.b16 %v6831
      %v8308 = vunpack.c.l.b16 %v6832
      %v8309 = vunpack.c.l.b16 %v6833
      %v8310 = vunpack.c.l.b16 %v6834
      %v8311 = vunpack.c.l.b16 %v6835
      %v8312 = vunpack.c.l.b16 %v6836
      %v8313 = vunpack.c.l.b16 %v6837
      %v8314 = vunpack.c.l.b16 %v6838
      %v8315 = vunpack.c.l.b16 %v6839
      %v8316 = vunpack.c.l.b16 %v6840
      %v8317 = vunpack.c.l.b16 %v6841
      %v8318 = vunpack.c.l.b16 %v6842
      %v8319 = vunpack.c.l.b16 %v6843
      %v8320 = vunpack.c.l.b16 %v6844
      %v8321 = vunpack.c.l.b16 %v6845
      %v8322 = vpack.c.b16 %v8305, %v8304
      %v8323 = vpack.c.b16 %v8307, %v8306
      %v8324 = vpack.c.b16 %v8309, %v8308
      %v8325 = vpack.c.b16 %v8311, %v8310
      %v8326 = vpack.c.b16 %v8313, %v8312
      %v8327 = vpack.c.b16 %v8315, %v8314
      %v8328 = vpack.c.b16 %v8317, %v8316
      %v8329 = vpack.c.b16 %v8319, %v8318
      %v8330 = vpack.c.b16 %v8321, %v8320
      %v8341 = vsel %vm498, %v8255, 0
      %v8344 = vsel %vm498, %v8257, 0
      %v8347 = vsel %vm498, %v8259, 0
      %v8350 = vsel %vm498, %v8261, 0
      %v8353 = vsel %vm498, %v8263, 0
      %v8356 = vsel %vm498, %v8265, 0
      %v8359 = vsel %vm498, %v8267, 0
      %v8362 = vsel %vm498, %v8269, 0
      %v8365 = vsel %vm498, %v8271, 0
      %v8368 = vsel %vm498, %v8273, 0
      %v8371 = vsel %vm498, %v8275, 0
      %v8374 = vsel %vm498, %v8277, 0
      %v8377 = vsel %vm498, %v8279, 0
      %v8380 = vsel %vm498, %v8281, 0
      %v8383 = vsel %vm498, %v8283, 0
      %v8386 = vsel %vm498, %v8285, 0
      %8388 = vmatprep.subr.bf16.mxu0 0
      %8389 = vmatpush1.bf16.msra.mxu0 %v8322
      %8390 = vmatprep.subr.bf16.mxu0 0
      %8391 = vmatpush1.bf16.msra.mxu0 %v8323
      %8392 = vmatprep.subr.bf16.mxu0 0
      %8393 = vmatpush1.bf16.msra.mxu0 %v8324
      %8394 = vmatprep.subr.bf16.mxu0 0
      %8395 = vmatpush1.bf16.msra.mxu0 %v8325
      %8396 = vmatprep.subr.bf16.mxu0 0
      %8397 = vmatpush1.bf16.msra.mxu0 %v8326
      %8398 = vmatprep.subr.bf16.mxu0 0
      %8399 = vmatpush1.bf16.msra.mxu0 %v8327
      %8400 = vmatprep.subr.bf16.mxu0 0
      %8401 = vmatpush1.bf16.msra.mxu0 %v8328
      %8402 = vmatprep.subr.bf16.mxu0 0
      %8403 = vmatpush1.bf16.msra.mxu0 %v8329
      %8404 = vmatprep.subr.bf16.mxu0 0
      %8405 = vmatpush1.bf16.msra.mxu0 %v8330
      %8406 = vmatprep.subr.bf16.mxu0 0
      %8407 = vmatpush1.bf16.msra.mxu0 0
      %8408 = vmatprep.subr.bf16.mxu0 0
      %8409 = vmatpush1.bf16.msra.mxu0 0
      %8410 = vmatprep.subr.bf16.mxu0 0
      %8411 = vmatpush1.bf16.msra.mxu0 0
      %8412 = vmatprep.subr.bf16.mxu0 0
      %8413 = vmatpush1.bf16.msra.mxu0 0
      %8414 = vmatprep.subr.bf16.mxu0 0
      %8415 = vmatpush1.bf16.msra.mxu0 0
      %8416 = vmatprep.subr.bf16.mxu0 0
      %8417 = vmatpush1.bf16.msra.mxu0 0
      %8418 = vmatprep.subr.bf16.mxu0 0
      %8419 = vmatpush1.bf16.msra.mxu0 0
      %8420 = vmatprep.mubr.bf16.mxu0 %v8341
      %8421 = vmatmul.mubr.bf16.gmra.mrb[0].mxu0 %v8254
      %v8422 = vpop.f32.mrb[0].mxu0
      %v8423 = vadd.f32 0.0, %v8422
      %v8424 = vpop.f32.mrb[0].mxu0
      %v8425 = vpop.f32.mrb[0].mxu0
      %v8426 = vadd.f32 0.0, %v8425
      %v8427 = vpop.f32.mrb[0].mxu0
      %8428 = vmatprep.mubr.bf16.mxu0 %v8344
      %8429 = vmatmul.mubr.bf16.gmra.mrb[0].mxu0 %v8256
      %v8430 = vpop.f32.mrb[0].mxu0
      %v8431 = vadd.f32 0.0, %v8430
      %v8432 = vpop.f32.mrb[0].mxu0
      %v8433 = vpop.f32.mrb[0].mxu0
      %v8434 = vadd.f32 0.0, %v8433
      %v8435 = vpop.f32.mrb[0].mxu0
      %8436 = vmatprep.mubr.bf16.mxu0 %v8347
      %8437 = vmatmul.mubr.bf16.gmra.mrb[0].mxu0 %v8258
      %v8438 = vpop.f32.mrb[0].mxu0
      %v8439 = vadd.f32 0.0, %v8438
      %v8440 = vpop.f32.mrb[0].mxu0
      %v8441 = vpop.f32.mrb[0].mxu0
      %v8442 = vadd.f32 0.0, %v8441
      %v8443 = vpop.f32.mrb[0].mxu0
      %8444 = vmatprep.mubr.bf16.mxu0 %v8350
      %8445 = vmatmul.mubr.bf16.gmra.mrb[0].mxu0 %v8260
      %v8446 = vpop.f32.mrb[0].mxu0
      %v8447 = vadd.f32 0.0, %v8446
      %v8448 = vpop.f32.mrb[0].mxu0
      %v8449 = vpop.f32.mrb[0].mxu0
      %v8450 = vadd.f32 0.0, %v8449
      %v8451 = vpop.f32.mrb[0].mxu0
      %8452 = vmatprep.mubr.bf16.mxu0 %v8353
      %8453 = vmatmul.mubr.bf16.gmra.mrb[0].mxu0 %v8262
      %v8454 = vpop.f32.mrb[0].mxu0
      %v8455 = vadd.f32 0.0, %v8454
      %v8456 = vpop.f32.mrb[0].mxu0
      %v8457 = vpop.f32.mrb[0].mxu0
      %v8458 = vadd.f32 0.0, %v8457
      %v8459 = vpop.f32.mrb[0].mxu0
      %8460 = vmatprep.mubr.bf16.mxu0 %v8356
      %8461 = vmatmul.mubr.bf16.gmra.mrb[0].mxu0 %v8264
      %v8462 = vpop.f32.mrb[0].mxu0
      %v8463 = vadd.f32 0.0, %v8462
      %v8464 = vpop.f32.mrb[0].mxu0
      %v8465 = vpop.f32.mrb[0].mxu0
      %v8466 = vadd.f32 0.0, %v8465
      %v8467 = vpop.f32.mrb[0].mxu0
      %8468 = vmatprep.mubr.bf16.mxu0 %v8359
      %8469 = vmatmul.mubr.bf16.gmra.mrb[0].mxu0 %v8266
      %v8470 = vpop.f32.mrb[0].mxu0
      %v8471 = vadd.f32 0.0, %v8470
      %v8472 = vpop.f32.mrb[0].mxu0
      %v8473 = vpop.f32.mrb[0].mxu0
      %v8474 = vadd.f32 0.0, %v8473
      %v8475 = vpop.f32.mrb[0].mxu0
      %8476 = vmatprep.mubr.bf16.mxu0 %v8362
      %8477 = vmatmul.mubr.bf16.gmra.mrb[0].mxu0 %v8268
      %v8478 = vpop.f32.mrb[0].mxu0
      %v8479 = vadd.f32 0.0, %v8478
      %v8480 = vpop.f32.mrb[0].mxu0
      %v8481 = vpop.f32.mrb[0].mxu0
      %v8482 = vadd.f32 0.0, %v8481
      %v8483 = vpop.f32.mrb[0].mxu0
      %8484 = vmatprep.mubr.bf16.mxu0 %v8365
      %8485 = vmatmul.mubr.bf16.gmra.mrb[0].mxu0 %v8270
      %v8486 = vpop.f32.mrb[0].mxu0
      %v8487 = vadd.f32 0.0, %v8486
      %v8488 = vpop.f32.mrb[0].mxu0
      %v8489 = vpop.f32.mrb[0].mxu0
      %v8490 = vadd.f32 0.0, %v8489
      %v8491 = vpop.f32.mrb[0].mxu0
      %8492 = vmatprep.mubr.bf16.mxu0 %v8368
      %8493 = vmatmul.mubr.bf16.gmra.mrb[0].mxu0 %v8272
      %v8494 = vpop.f32.mrb[0].mxu0
      %v8495 = vadd.f32 0.0, %v8494
      %v8496 = vpop.f32.mrb[0].mxu0
      %v8497 = vpop.f32.mrb[0].mxu0
      %v8498 = vadd.f32 0.0, %v8497
      %v8499 = vpop.f32.mrb[0].mxu0
      %8500 = vmatprep.mubr.bf16.mxu0 %v8371
      %8501 = vmatmul.mubr.bf16.gmra.mrb[0].mxu0 %v8274
      %v8502 = vpop.f32.mrb[0].mxu0
      %v8503 = vadd.f32 0.0, %v8502
      %v8504 = vpop.f32.mrb[0].mxu0
      %v8505 = vpop.f32.mrb[0].mxu0
      %v8506 = vadd.f32 0.0, %v8505
      %v8507 = vpop.f32.mrb[0].mxu0
      %8508 = vmatprep.mubr.bf16.mxu0 %v8374
      %8509 = vmatmul.mubr.bf16.gmra.mrb[0].mxu0 %v8276
      %v8510 = vpop.f32.mrb[0].mxu0
      %v8511 = vadd.f32 0.0, %v8510
      %v8512 = vpop.f32.mrb[0].mxu0
      %v8513 = vpop.f32.mrb[0].mxu0
      %v8514 = vadd.f32 0.0, %v8513
      %v8515 = vpop.f32.mrb[0].mxu0
      %8516 = vmatprep.mubr.bf16.mxu0 %v8377
      %8517 = vmatmul.mubr.bf16.gmra.mrb[0].mxu0 %v8278
      %v8518 = vpop.f32.mrb[0].mxu0
      %v8519 = vadd.f32 0.0, %v8518
      %v8520 = vpop.f32.mrb[0].mxu0
      %v8521 = vpop.f32.mrb[0].mxu0
      %v8522 = vadd.f32 0.0, %v8521
      %v8523 = vpop.f32.mrb[0].mxu0
      %8524 = vmatprep.mubr.bf16.mxu0 %v8380
      %8525 = vmatmul.mubr.bf16.gmra.mrb[0].mxu0 %v8280
      %v8526 = vpop.f32.mrb[0].mxu0
      %v8527 = vadd.f32 0.0, %v8526
      %v8528 = vpop.f32.mrb[0].mxu0
      %v8529 = vpop.f32.mrb[0].mxu0
      %v8530 = vadd.f32 0.0, %v8529
      %v8531 = vpop.f32.mrb[0].mxu0
      %8532 = vmatprep.mubr.bf16.mxu0 %v8383
      %8533 = vmatmul.mubr.bf16.gmra.mrb[0].mxu0 %v8282
      %v8534 = vpop.f32.mrb[0].mxu0
      %v8535 = vadd.f32 0.0, %v8534
      %v8536 = vpop.f32.mrb[0].mxu0
      %v8537 = vpop.f32.mrb[0].mxu0
      %v8538 = vadd.f32 0.0, %v8537
      %v8539 = vpop.f32.mrb[0].mxu0
      %8540 = vmatprep.mubr.bf16.mxu0 %v8386
      %8541 = vmatmul.mubr.bf16.gmra.mrb[0].mxu0 %v8284
      %v8542 = vpop.f32.mrb[0].mxu0
      %v8543 = vadd.f32 0.0, %v8542
      %v8544 = vpop.f32.mrb[0].mxu0
      %v8545 = vpop.f32.mrb[0].mxu0
      %v8546 = vadd.f32 0.0, %v8545
      %v8547 = vpop.f32.mrb[0].mxu0
      %8548 = vdwg.mxu0
      %v8549 = vadd.f32 %v4792, %v8423
      %v8550 = vadd.f32 %v4793, %v8426
      %v8551 = vadd.f32 %v4794, %v8431
      %v8552 = vadd.f32 %v4795, %v8434
      %v8553 = vadd.f32 %v4796, %v8439
      %v8554 = vadd.f32 %v4797, %v8442
      %v8555 = vadd.f32 %v4798, %v8447
      %v8556 = vadd.f32 %v4799, %v8450
      %v8557 = vadd.f32 %v4800, %v8455
      %v8558 = vadd.f32 %v4801, %v8458
      %v8559 = vadd.f32 %v4802, %v8463
      %v8560 = vadd.f32 %v4803, %v8466
      %v8561 = vadd.f32 %v4804, %v8471
      %v8562 = vadd.f32 %v4805, %v8474
      %v8563 = vadd.f32 %v4806, %v8479
      %v8564 = vadd.f32 %v4807, %v8482
      %v8565 = vadd.f32 %v4808, %v8487
      %v8566 = vadd.f32 %v4809, %v8490
      %v8567 = vadd.f32 %v4810, %v8495
      %v8568 = vadd.f32 %v4811, %v8498
      %v8569 = vadd.f32 %v4812, %v8503
      %v8570 = vadd.f32 %v4813, %v8506
      %v8571 = vadd.f32 %v4814, %v8511
      %v8572 = vadd.f32 %v4815, %v8514
      %v8573 = vadd.f32 %v4816, %v8519
      %v8574 = vadd.f32 %v4817, %v8522
      %v8575 = vadd.f32 %v4818, %v8527
      %v8576 = vadd.f32 %v4819, %v8530
      %v8577 = vadd.f32 %v4820, %v8535
      %v8578 = vadd.f32 %v4821, %v8538
      %v8579 = vadd.f32 %v4822, %v8543
      %v8580 = vadd.f32 %v4823, %v8546
      %v8581 = vld [vmem:[%s12 + $0x2] sm:$0x1]
      %v8582 = vlaneseq
      %v8583 = vshrl.u32 %v8582, 7
      %v8584 = vsub.s32 0, %v8583
      %v8585 = vrot.slane %v8581, %v8584
      %v8586 = vadd.f32 %v8549, %v8585
      %v8587 = vadd.f32 %v8550, %v8585
      %v8588 = vadd.f32 %v8551, %v8585
      %v8589 = vadd.f32 %v8552, %v8585
      %v8590 = vadd.f32 %v8553, %v8585
      %v8591 = vadd.f32 %v8554, %v8585
      %v8592 = vadd.f32 %v8555, %v8585
      %v8593 = vadd.f32 %v8556, %v8585
      %v8594 = vadd.f32 %v8557, %v8585
      %v8595 = vadd.f32 %v8558, %v8585
      %v8596 = vadd.f32 %v8559, %v8585
      %v8597 = vadd.f32 %v8560, %v8585
      %v8598 = vadd.f32 %v8561, %v8585
      %v8599 = vadd.f32 %v8562, %v8585
      %v8600 = vadd.f32 %v8563, %v8585
      %v8601 = vadd.f32 %v8564, %v8585
      %v8602 = vadd.f32 %v8565, %v8585
      %v8603 = vadd.f32 %v8566, %v8585
      %v8604 = vadd.f32 %v8567, %v8585
      %v8605 = vadd.f32 %v8568, %v8585
      %v8606 = vadd.f32 %v8569, %v8585
      %v8607 = vadd.f32 %v8570, %v8585
      %v8608 = vadd.f32 %v8571, %v8585
      %v8609 = vadd.f32 %v8572, %v8585
      %v8610 = vadd.f32 %v8573, %v8585
      %v8611 = vadd.f32 %v8574, %v8585
      %v8612 = vadd.f32 %v8575, %v8585
      %v8613 = vadd.f32 %v8576, %v8585
      %v8614 = vadd.f32 %v8577, %v8585
      %v8615 = vadd.f32 %v8578, %v8585
      %v8616 = vadd.f32 %v8579, %v8585
      %v8617 = vadd.f32 %v8580, %v8585
      %8618 = vst.msk [vmem:[%s440] sm:$0xff] %vm498, %v8586
      %8619 = vst.msk [vmem:[%s440 + $0x8] sm:$0xff] %vm498, %v8587
      %8620 = vst.msk [vmem:[%s440 + $0x10] sm:$0xff] %vm498, %v8588
      %8621 = vst.msk [vmem:[%s440 + $0x18] sm:$0xff] %vm498, %v8589
      %8622 = vst.msk [vmem:[%s440 + $0x20] sm:$0xff] %vm498, %v8590
      %8623 = vst.msk [vmem:[%s440 + $0x28] sm:$0xff] %vm498, %v8591
      %8624 = vst.msk [vmem:[%s440 + $0x30] sm:$0xff] %vm498, %v8592
      %8625 = vst.msk [vmem:[%s440 + $0x38] sm:$0xff] %vm498, %v8593
      %8626 = vst.msk [vmem:[%s440 + $0x40] sm:$0xff] %vm498, %v8594
      %8627 = vst.msk [vmem:[%s440 + $0x48] sm:$0xff] %vm498, %v8595
      %8628 = vst.msk [vmem:[%s440 + $0x50] sm:$0xff] %vm498, %v8596
      %8629 = vst.msk [vmem:[%s440 + $0x58] sm:$0xff] %vm498, %v8597
      %8630 = vst.msk [vmem:[%s440 + $0x60] sm:$0xff] %vm498, %v8598
      %8631 = vst.msk [vmem:[%s440 + $0x68] sm:$0xff] %vm498, %v8599
      %8632 = vst.msk [vmem:[%s440 + $0x70] sm:$0xff] %vm498, %v8600
      %8633 = vst.msk [vmem:[%s440 + $0x78] sm:$0xff] %vm498, %v8601
      %8634 = vst.msk [vmem:[%s440 + $0x80] sm:$0xff] %vm498, %v8602
      %8635 = vst.msk [vmem:[%s440 + $0x88] sm:$0xff] %vm498, %v8603
      %8636 = vst.msk [vmem:[%s440 + $0x90] sm:$0xff] %vm498, %v8604
      %8637 = vst.msk [vmem:[%s440 + $0x98] sm:$0xff] %vm498, %v8605
      %8638 = vst.msk [vmem:[%s440 + $0xa0] sm:$0xff] %vm498, %v8606
      %8639 = vst.msk [vmem:[%s440 + $0xa8] sm:$0xff] %vm498, %v8607
      %8640 = vst.msk [vmem:[%s440 + $0xb0] sm:$0xff] %vm498, %v8608
      %8641 = vst.msk [vmem:[%s440 + $0xb8] sm:$0xff] %vm498, %v8609
      %8642 = vst.msk [vmem:[%s440 + $0xc0] sm:$0xff] %vm498, %v8610
      %8643 = vst.msk [vmem:[%s440 + $0xc8] sm:$0xff] %vm498, %v8611
      %8644 = vst.msk [vmem:[%s440 + $0xd0] sm:$0xff] %vm498, %v8612
      %8645 = vst.msk [vmem:[%s440 + $0xd8] sm:$0xff] %vm498, %v8613
      %8646 = vst.msk [vmem:[%s440 + $0xe0] sm:$0xff] %vm498, %v8614
      %8647 = vst.msk [vmem:[%s440 + $0xe8] sm:$0xff] %vm498, %v8615
      %8648 = vst.msk [vmem:[%s440 + $0xf0] sm:$0xff] %vm498, %v8616
      %8649 = vst.msk [vmem:[%s440 + $0xf8] sm:$0xff] %vm498, %v8617
      %p8650 = scmp.lt.s32.totalorder %s24, 1
      %s8651 = scalar_select %p8650, %s24, 1
      %s8652 = smul.addr %s8651, 32
      %s8653 = smul.addr %s8652, 8
      %s8654 = scalar_lea.vmem %s13, %s8653
      // Predicated region
      $region73: #{tpu_custom_call.1} parent=71 // pred_check
        %p8655 = pneg %p320
      $region74: #{tpu_custom_call.1} parent=71 // pred_check_branch
        %8657 = sbr.rel (%p8655) target = $region76
      $region75: #{tpu_custom_call.1} parent=71 // pred_region
        _
      $region76: #{tpu_custom_call.1} parent=71 // pred_fallthru
        _
    $region72: #{tpu_custom_call.1} parent=5 // pred_fallthru
      _
    %p8658 = scmp.le.s32.totalorder 2, %s19
    // Predicated region
    $region77: #{tpu_custom_call.1} parent=5 // pred_check
      %p8659 = pneg %p8658
    $region78: #{tpu_custom_call.1} parent=5 // pred_check_branch
      %8661 = sbr.rel (%p8659) target = $region80
    $region79: #{tpu_custom_call.1} parent=5 // pred_region
      %s8662 = ssub.s32 %s19, 2
      // Predicated region
      $region81: #{tpu_custom_call.1} parent=79 // pred_check
        %p8663 = pneg %p326
      $region82: #{tpu_custom_call.1} parent=79 // pred_check_branch
        %8665 = sbr.rel (%p8663) target = $region84
      $region83: #{tpu_custom_call.1} parent=79 // pred_region
        %p8666 = scmp.lt.s32.totalorder %s25, 1
        %s8667 = scalar_select %p8666, %s25, 1
        %s8668 = smul.addr %s8667, 32
        %s8669 = smul.addr %s8668, 8
        %s8670 = scalar_lea.vmem %s13, %s8669
      $region84: #{tpu_custom_call.1} parent=79 // pred_fallthru
        _
    $region80: #{tpu_custom_call.1} parent=5 // pred_fallthru
      _
  $region6: #{tpu_custom_call.1} parent=0 // loop_footer
    %s23 = sadd.s32 1, %s19
  $region7: #{tpu_custom_call.1} parent=0 // loop_footer_branch
    %18 = sbr.rel target = $region3
  $region8: #{tpu_custom_call.1} parent=0 // loop_exit
    _

</llo_original>
